<compile_context>
chip_gen: v5e
topology: v5e:2x2
jax: 0.10.0
libtpu: 0.0.40
codegen_flags: <defaults>
</compile_context>

<pallas_src>
import math

import jax
import jax.numpy as jnp
from jax.experimental import pallas as pl
from jax.experimental.pallas import tpu as pltpu

D_IN, H1, H2, H3, D_OUT = 2800, 512, 256, 128, 28
D_OUT_PAD = 128  # lane-dense output width (zero-padded, sliced to 28 outside)


def _round_up(n, m):
    return ((n + m - 1) // m) * m


def _prelu(x, alpha):
    # PyTorch nn.PReLU() default: a single shared parameter (num_parameters=1)
    return jnp.where(x >= 0, x, alpha * x)


def encoder_kernel(x_ref,
                   w1_ref, b1_ref, a1_ref,
                   w2_ref, b2_ref, a2_ref,
                   w3_ref, b3_ref, a3_ref,
                   w4_ref, b4_ref,
                   o_ref):
    # bf16 operands into the MXU, f32 accumulation; bias/PReLU stay in f32.
    x = x_ref[...].astype(jnp.bfloat16)

    h = jnp.dot(x, w1_ref[...], preferred_element_type=jnp.float32) + b1_ref[...]
    h = _prelu(h, a1_ref[0])

    h = jnp.dot(h.astype(jnp.bfloat16), w2_ref[...],
                preferred_element_type=jnp.float32) + b2_ref[...]
    h = _prelu(h, a2_ref[0])

    h = jnp.dot(h.astype(jnp.bfloat16), w3_ref[...],
                preferred_element_type=jnp.float32) + b3_ref[...]
    h = _prelu(h, a3_ref[0])

    h = jnp.dot(h.astype(jnp.bfloat16), w4_ref[...],
                preferred_element_type=jnp.float32) + b4_ref[...]
    o_ref[...] = h.astype(o_ref.dtype)


def init_params(key):
    """Deterministic init mimicking PyTorch defaults:
    Linear: W, b ~ U(-1/sqrt(fan_in), 1/sqrt(fan_in)); PReLU alpha = 0.25.
    Weights stored [in, out] (transpose of PyTorch's [out, in]) in bf16; the
    last layer is zero-padded to 128 output lanes."""
    dims = [(D_IN, H1), (H1, H2), (H2, H3), (H3, D_OUT)]
    ws, bs = [], []
    for fan_in, fan_out in dims:
        key, kw, kb = jax.random.split(key, 3)
        bound = 1.0 / math.sqrt(fan_in)
        w = jax.random.uniform(kw, (fan_in, fan_out), jnp.float32, -bound, bound)
        b = jax.random.uniform(kb, (1, fan_out), jnp.float32, -bound, bound)
        ws.append(w)
        bs.append(b)

    # Pad layer-4 output width 28 -> 128 with zero columns (lane-dense stores).
    w4 = jnp.zeros((H3, D_OUT_PAD), jnp.float32).at[:, :D_OUT].set(ws[3])
    b4 = jnp.zeros((1, D_OUT_PAD), jnp.float32).at[:, :D_OUT].set(bs[3])
    ws[3], bs[3] = w4, b4

    # bf16 weight storage: halves weight HBM traffic, bf16 MXU on v6e/v7x.
    ws = [w.astype(jnp.bfloat16) for w in ws]

    a1, a2, a3 = (jnp.full((1,), 0.25, jnp.float32) for _ in range(3))
    return (ws[0], bs[0], a1, ws[1], bs[1], a2, ws[2], bs[2], a3, ws[3], bs[3])


def _pick_tile_and_vmem(B, tm_max, x_itemsize):
    """Generation-aware batch tile + scoped-VMEM limit."""
    try:
        vmem_bytes = int(pltpu.get_tpu_info().vmem_capacity_bytes)
    except Exception:
        vmem_bytes = 64 << 20  # conservative (v7x per-TC VMEM)
    vmem_limit = (96 << 20) if vmem_bytes >= (100 << 20) else (48 << 20)

    # Keep the double-buffered x tile within ~half the scoped limit.
    x_budget = vmem_limit // 2
    tm_mem = max(8, (x_budget // (2 * D_IN * x_itemsize)) // 8 * 8)

    tm = min(tm_max, tm_mem, _round_up(B, 8))
    # >= 2 grid steps for larger batches so v7x megacore has work on both TCs.
    if B > 16:
        tm = min(tm, _round_up(pl.cdiv(B, 2), 8))
    return max(tm, 8), vmem_limit


def encoder_forward(x, params, *, tm=2048):
    """x: (B, 2800); pass bf16 (preferred — halves the dominant HBM stream on
    v6e/v7x) or f32. Returns (B, 28) f32."""
    B = x.shape[0]
    TM, vmem_limit = _pick_tile_and_vmem(B, tm, x.dtype.itemsize)
    grid = (pl.cdiv(B, TM),)

    w1, b1, a1, w2, b2, a2, w3, b3, a3, w4, b4 = params

    flops = 2 * B * (D_IN * H1 + H1 * H2 + H2 * H3 + H3 * D_OUT_PAD)
    bytes_accessed = (
        int(x.size) * x.dtype.itemsize
        + sum(int(p.size) * p.dtype.itemsize for p in params)
        + B * D_OUT_PAD * 4
    )

    out_specs = pl.BlockSpec((TM, D_OUT_PAD), lambda i: (i, 0))
    smem = pl.BlockSpec(memory_space=pltpu.MemorySpace.SMEM)

    def build_in_specs(single_buffer_weights):
        pmode = pl.Buffered(1) if single_buffer_weights else None

        def full_spec(arr):
            nd = arr.ndim
            return pl.BlockSpec(arr.shape, lambda i, _nd=nd: (0,) * _nd,
                                pipeline_mode=pmode)

        return [
            pl.BlockSpec((TM, D_IN), lambda i: (i, 0)),   # x: batch-tiled
            full_spec(w1), full_spec(b1), smem,            # layer 1
            full_spec(w2), full_spec(b2), smem,            # layer 2
            full_spec(w3), full_spec(b3), smem,            # layer 3
            full_spec(w4), full_spec(b4),                  # layer 4 (padded)
        ]

    def run(single_buffer_weights):
        return pl.pallas_call(
            encoder_kernel,
            out_shape=jax.ShapeDtypeStruct((B, D_OUT_PAD), jnp.float32),
            grid=grid,
            in_specs=build_in_specs(single_buffer_weights),
            out_specs=out_specs,
            compiler_params=pltpu.CompilerParams(
                dimension_semantics=("parallel",),   # megacore sharding on v7x
                vmem_limit_bytes=vmem_limit,
            ),
            cost_estimate=pl.CostEstimate(
                flops=flops, transcendentals=0, bytes_accessed=bytes_accessed),
        )(x, *params)

    try:
        # Single-buffer the resident weights/biases (frees ~3.3 MiB of VMEM).
        out_padded = run(True)
    except Exception:
        # Fallback: default double-buffering if Buffered(1) is unsupported.
        out_padded = run(False)
    return out_padded[:, :D_OUT]


def encoder_reference(x, params):
    """Pure-JAX reference emulating the kernel's bf16-operand / f32-accumulate
    numerics (weights are already stored in bf16)."""
    w1, b1, a1, w2, b2, a2, w3, b3, a3, w4, b4 = params
    hp = jax.lax.Precision.HIGHEST

    def dot_bf16(h, w):
        return jnp.dot(h.astype(jnp.bfloat16).astype(jnp.float32),
                       w.astype(jnp.float32), precision=hp)

    h = dot_bf16(x.astype(jnp.float32), w1) + b1
    h = jnp.where(h >= 0, h, a1[0] * h)
    h = dot_bf16(h, w2) + b2
    h = jnp.where(h >= 0, h, a2[0] * h)
    h = dot_bf16(h, w3) + b3
    h = jnp.where(h >= 0, h, a3[0] * h)
    h = dot_bf16(h, w4) + b4
    return h[:, :D_OUT]


if __name__ == "__main__":
    key = jax.random.PRNGKey(0)
    key, kx1, kx2 = jax.random.split(key, 3)
    params = init_params(key)

    # Test 1: small batch, single tile. Producer emits bf16 x (perf contract).
    B1 = 8
    x1 = jax.random.normal(kx1, (B1, D_IN), jnp.float32).astype(jnp.bfloat16)
    out1 = jax.block_until_ready(encoder_forward(x1, params))
    ref1 = encoder_reference(x1, params)
    assert out1.shape == (B1, D_OUT)
    assert jnp.allclose(out1, ref1, atol=2e-3, rtol=2e-3), "mismatch (B=8)"

    # Test 2: multi-tile grid with a ragged last block (B not multiple of TM).
    B2 = 20
    x2 = jax.random.normal(kx2, (B2, D_IN), jnp.float32).astype(jnp.bfloat16)
    out2 = jax.block_until_ready(encoder_forward(x2, params, tm=8))
    ref2 = encoder_reference(x2, params)
    assert out2.shape == (B2, D_OUT)
    assert jnp.allclose(out2, ref2, atol=2e-3, rtol=2e-3), "mismatch (B=20)"

    print("KERNEL_OK")
</pallas_src>

<mosaic_0001>
module attributes {stable_mosaic.version = 11 : i64} {
  func.func @encoder_kernel(%arg0: i32, %arg1: memref<8x2800xbf16, #tpu.memory_space<vmem>>, %arg2: memref<2800x512xbf16, #tpu.memory_space<vmem>>, %arg3: memref<1x512xf32, #tpu.memory_space<vmem>>, %arg4: memref<1xf32, #tpu.memory_space<smem>>, %arg5: memref<512x256xbf16, #tpu.memory_space<vmem>>, %arg6: memref<1x256xf32, #tpu.memory_space<vmem>>, %arg7: memref<1xf32, #tpu.memory_space<smem>>, %arg8: memref<256x128xbf16, #tpu.memory_space<vmem>>, %arg9: memref<1x128xf32, #tpu.memory_space<vmem>>, %arg10: memref<1xf32, #tpu.memory_space<smem>>, %arg11: memref<128x128xbf16, #tpu.memory_space<vmem>>, %arg12: memref<1x128xf32, #tpu.memory_space<vmem>>, %arg13: memref<8x128xf32, #tpu.memory_space<vmem>>) attributes {dimension_semantics = [#tpu.dimension_semantics<parallel>], iteration_bounds = array<i64: 1>, scalar_prefetch = 0 : i64, scratch_operands = 0 : i64, tpu.core_type = #tpu.core_type<tc>, window_params = [{transform_indices = @transform_0, window_bounds = array<i64: 8, 2800>}, {pipeline_mode = #tpu.pipeline_mode<synchronous>, transform_indices = @transform_1, window_bounds = array<i64: 2800, 512>}, {pipeline_mode = #tpu.pipeline_mode<synchronous>, transform_indices = @transform_2, window_bounds = array<i64: 1, 512>}, {transform_indices = @transform_3, window_bounds = array<i64: 1>}, {pipeline_mode = #tpu.pipeline_mode<synchronous>, transform_indices = @transform_4, window_bounds = array<i64: 512, 256>}, {pipeline_mode = #tpu.pipeline_mode<synchronous>, transform_indices = @transform_5, window_bounds = array<i64: 1, 256>}, {transform_indices = @transform_6, window_bounds = array<i64: 1>}, {pipeline_mode = #tpu.pipeline_mode<synchronous>, transform_indices = @transform_7, window_bounds = array<i64: 256, 128>}, {pipeline_mode = #tpu.pipeline_mode<synchronous>, transform_indices = @transform_8, window_bounds = array<i64: 1, 128>}, {transform_indices = @transform_9, window_bounds = array<i64: 1>}, {pipeline_mode = #tpu.pipeline_mode<synchronous>, transform_indices = @transform_10, window_bounds = array<i64: 128, 128>}, {pipeline_mode = #tpu.pipeline_mode<synchronous>, transform_indices = @transform_11, window_bounds = array<i64: 1, 128>}, {transform_indices = @transform_12, window_bounds = array<i64: 8, 128>}]} {
    %c0 = arith.constant 0 : index
    %c0_0 = arith.constant 0 : index
    %0 = vector.load %arg1[%c0, %c0_0] : memref<8x2800xbf16, #tpu.memory_space<vmem>>, vector<8x2800xbf16>
    %c0_1 = arith.constant 0 : index
    %c0_2 = arith.constant 0 : index
    %1 = vector.load %arg2[%c0_1, %c0_2] : memref<2800x512xbf16, #tpu.memory_space<vmem>>, vector<2800x512xbf16>
    %cst = arith.constant dense<0.000000e+00> : vector<8x512xf32>
    %2 = tpu.matmul %0, %1, %cst {dimension_numbers = #tpu.dot_dimension_numbers<[1], [0], [0], [1], [0, 0, 1, 1], [], []>} : vector<8x2800xbf16>, vector<2800x512xbf16>, vector<8x512xf32> -> vector<8x512xf32>
    %c0_3 = arith.constant 0 : index
    %c0_4 = arith.constant 0 : index
    %3 = vector.load %arg3[%c0_3, %c0_4] : memref<1x512xf32, #tpu.memory_space<vmem>>, vector<1x512xf32>
    %4 = vector.broadcast %3 : vector<1x512xf32> to vector<8x512xf32>
    %5 = arith.addf %2, %4 : vector<8x512xf32>
    %c0_5 = arith.constant 0 : index
    %6 = memref.load %arg4[%c0_5] : memref<1xf32, #tpu.memory_space<smem>>
    %cst_6 = arith.constant 0.000000e+00 : f32
    %7 = vector.broadcast %cst_6 : f32 to vector<8x512xf32>
    %8 = arith.cmpf oge, %5, %7 : vector<8x512xf32>
    %9 = vector.broadcast %6 : f32 to vector<8x512xf32>
    %10 = arith.mulf %9, %5 : vector<8x512xf32>
    %11 = arith.select %8, %5, %10 : vector<8x512xi1>, vector<8x512xf32>
    %12 = arith.truncf %11 : vector<8x512xf32> to vector<8x512xbf16>
    %c0_7 = arith.constant 0 : index
    %c0_8 = arith.constant 0 : index
    %13 = vector.load %arg5[%c0_7, %c0_8] : memref<512x256xbf16, #tpu.memory_space<vmem>>, vector<512x256xbf16>
    %cst_9 = arith.constant dense<0.000000e+00> : vector<8x256xf32>
    %14 = tpu.matmul %12, %13, %cst_9 {dimension_numbers = #tpu.dot_dimension_numbers<[1], [0], [0], [1], [0, 0, 1, 1], [], []>} : vector<8x512xbf16>, vector<512x256xbf16>, vector<8x256xf32> -> vector<8x256xf32>
    %c0_10 = arith.constant 0 : index
    %c0_11 = arith.constant 0 : index
    %15 = vector.load %arg6[%c0_10, %c0_11] : memref<1x256xf32, #tpu.memory_space<vmem>>, vector<1x256xf32>
    %16 = vector.broadcast %15 : vector<1x256xf32> to vector<8x256xf32>
    %17 = arith.addf %14, %16 : vector<8x256xf32>
    %c0_12 = arith.constant 0 : index
    %18 = memref.load %arg7[%c0_12] : memref<1xf32, #tpu.memory_space<smem>>
    %cst_13 = arith.constant 0.000000e+00 : f32
    %19 = vector.broadcast %cst_13 : f32 to vector<8x256xf32>
    %20 = arith.cmpf oge, %17, %19 : vector<8x256xf32>
    %21 = vector.broadcast %18 : f32 to vector<8x256xf32>
    %22 = arith.mulf %21, %17 : vector<8x256xf32>
    %23 = arith.select %20, %17, %22 : vector<8x256xi1>, vector<8x256xf32>
    %24 = arith.truncf %23 : vector<8x256xf32> to vector<8x256xbf16>
    %c0_14 = arith.constant 0 : index
    %c0_15 = arith.constant 0 : index
    %25 = vector.load %arg8[%c0_14, %c0_15] : memref<256x128xbf16, #tpu.memory_space<vmem>>, vector<256x128xbf16>
    %cst_16 = arith.constant dense<0.000000e+00> : vector<8x128xf32>
    %26 = tpu.matmul %24, %25, %cst_16 {dimension_numbers = #tpu.dot_dimension_numbers<[1], [0], [0], [1], [0, 0, 1, 1], [], []>} : vector<8x256xbf16>, vector<256x128xbf16>, vector<8x128xf32> -> vector<8x128xf32>
    %c0_17 = arith.constant 0 : index
    %c0_18 = arith.constant 0 : index
    %27 = vector.load %arg9[%c0_17, %c0_18] : memref<1x128xf32, #tpu.memory_space<vmem>>, vector<1x128xf32>
    %28 = vector.broadcast %27 : vector<1x128xf32> to vector<8x128xf32>
    %29 = arith.addf %26, %28 : vector<8x128xf32>
    %c0_19 = arith.constant 0 : index
    %30 = memref.load %arg10[%c0_19] : memref<1xf32, #tpu.memory_space<smem>>
    %cst_20 = arith.constant 0.000000e+00 : f32
    %31 = vector.broadcast %cst_20 : f32 to vector<8x128xf32>
    %32 = arith.cmpf oge, %29, %31 : vector<8x128xf32>
    %33 = vector.broadcast %30 : f32 to vector<8x128xf32>
    %34 = arith.mulf %33, %29 : vector<8x128xf32>
    %35 = arith.select %32, %29, %34 : vector<8x128xi1>, vector<8x128xf32>
    %36 = arith.truncf %35 : vector<8x128xf32> to vector<8x128xbf16>
    %c0_21 = arith.constant 0 : index
    %c0_22 = arith.constant 0 : index
    %37 = vector.load %arg11[%c0_21, %c0_22] : memref<128x128xbf16, #tpu.memory_space<vmem>>, vector<128x128xbf16>
    %cst_23 = arith.constant dense<0.000000e+00> : vector<8x128xf32>
    %38 = tpu.matmul %36, %37, %cst_23 {dimension_numbers = #tpu.dot_dimension_numbers<[1], [0], [0], [1], [0, 0, 1, 1], [], []>} : vector<8x128xbf16>, vector<128x128xbf16>, vector<8x128xf32> -> vector<8x128xf32>
    %c0_24 = arith.constant 0 : index
    %c0_25 = arith.constant 0 : index
    %39 = vector.load %arg12[%c0_24, %c0_25] : memref<1x128xf32, #tpu.memory_space<vmem>>, vector<1x128xf32>
    %40 = vector.broadcast %39 : vector<1x128xf32> to vector<8x128xf32>
    %41 = arith.addf %38, %40 : vector<8x128xf32>
    %c0_26 = arith.constant 0 : index
    %c0_27 = arith.constant 0 : index
    %42 = vector.load %arg13[%c0_26, %c0_27] : memref<8x128xf32, #tpu.memory_space<vmem>>, vector<8x128xf32>
    tpu.vector_store %arg13[%c0_26, %c0_27], %41 {strides = array<i32>} : memref<8x128xf32, #tpu.memory_space<vmem>>, vector<8x128xf32>,
    return
  }
  func.func @transform_0(%arg0: i32) -> (i32, i32) {
    %c0_i32 = arith.constant 0 : i32
    %c0_i32_0 = arith.constant 0 : i32
    return %arg0, %c0_i32 : i32, i32
  }
  func.func @transform_1(%arg0: i32) -> (i32, i32) {
    %c0_i32 = arith.constant 0 : i32
    %c0_i32_0 = arith.constant 0 : i32
    %c0_i32_1 = arith.constant 0 : i32
    return %c0_i32, %c0_i32_0 : i32, i32
  }
  func.func @transform_2(%arg0: i32) -> (i32, i32) {
    %c0_i32 = arith.constant 0 : i32
    %c0_i32_0 = arith.constant 0 : i32
    %c0_i32_1 = arith.constant 0 : i32
    return %c0_i32, %c0_i32_0 : i32, i32
  }
  func.func @transform_3(%arg0: i32) -> i32 {
    %c0_i32 = arith.constant 0 : i32
    %c0_i32_0 = arith.constant 0 : i32
    return %c0_i32 : i32
  }
  func.func @transform_4(%arg0: i32) -> (i32, i32) {
    %c0_i32 = arith.constant 0 : i32
    %c0_i32_0 = arith.constant 0 : i32
    %c0_i32_1 = arith.constant 0 : i32
    return %c0_i32, %c0_i32_0 : i32, i32
  }
  func.func @transform_5(%arg0: i32) -> (i32, i32) {
    %c0_i32 = arith.constant 0 : i32
    %c0_i32_0 = arith.constant 0 : i32
    %c0_i32_1 = arith.constant 0 : i32
    return %c0_i32, %c0_i32_0 : i32, i32
  }
  func.func @transform_6(%arg0: i32) -> i32 {
    %c0_i32 = arith.constant 0 : i32
    %c0_i32_0 = arith.constant 0 : i32
    return %c0_i32 : i32
  }
  func.func @transform_7(%arg0: i32) -> (i32, i32) {
    %c0_i32 = arith.constant 0 : i32
    %c0_i32_0 = arith.constant 0 : i32
    %c0_i32_1 = arith.constant 0 : i32
    return %c0_i32, %c0_i32_0 : i32, i32
  }
  func.func @transform_8(%arg0: i32) -> (i32, i32) {
    %c0_i32 = arith.constant 0 : i32
    %c0_i32_0 = arith.constant 0 : i32
    %c0_i32_1 = arith.constant 0 : i32
    return %c0_i32, %c0_i32_0 : i32, i32
  }
  func.func @transform_9(%arg0: i32) -> i32 {
    %c0_i32 = arith.constant 0 : i32
    %c0_i32_0 = arith.constant 0 : i32
    return %c0_i32 : i32
  }
  func.func @transform_10(%arg0: i32) -> (i32, i32) {
    %c0_i32 = arith.constant 0 : i32
    %c0_i32_0 = arith.constant 0 : i32
    %c0_i32_1 = arith.constant 0 : i32
    return %c0_i32, %c0_i32_0 : i32, i32
  }
  func.func @transform_11(%arg0: i32) -> (i32, i32) {
    %c0_i32 = arith.constant 0 : i32
    %c0_i32_0 = arith.constant 0 : i32
    %c0_i32_1 = arith.constant 0 : i32
    return %c0_i32, %c0_i32_0 : i32, i32
  }
  func.func @transform_12(%arg0: i32) -> (i32, i32) {
    %c0_i32 = arith.constant 0 : i32
    %c0_i32_0 = arith.constant 0 : i32
    return %arg0, %c0_i32 : i32, i32
  }
}

module attributes {stable_mosaic.version = 11 : i64} {
  func.func @encoder_kernel(%arg0: i32, %arg1: memref<8x2800xbf16, #tpu.memory_space<vmem>>, %arg2: memref<2800x512xbf16, #tpu.memory_space<vmem>>, %arg3: memref<1x512xf32, #tpu.memory_space<vmem>>, %arg4: memref<1xf32, #tpu.memory_space<smem>>, %arg5: memref<512x256xbf16, #tpu.memory_space<vmem>>, %arg6: memref<1x256xf32, #tpu.memory_space<vmem>>, %arg7: memref<1xf32, #tpu.memory_space<smem>>, %arg8: memref<256x128xbf16, #tpu.memory_space<vmem>>, %arg9: memref<1x128xf32, #tpu.memory_space<vmem>>, %arg10: memref<1xf32, #tpu.memory_space<smem>>, %arg11: memref<128x128xbf16, #tpu.memory_space<vmem>>, %arg12: memref<1x128xf32, #tpu.memory_space<vmem>>, %arg13: memref<8x128xf32, #tpu.memory_space<vmem>>) attributes {dimension_semantics = [#tpu.dimension_semantics<parallel>], iteration_bounds = array<i64: 1>, scalar_prefetch = 0 : i64, scratch_operands = 0 : i64, tpu.core_type = #tpu.core_type<tc>, window_params = [{transform_indices = @transform_0, window_bounds = array<i64: 8, 2800>}, {pipeline_mode = #tpu.pipeline_mode<synchronous>, transform_indices = @transform_1, window_bounds = array<i64: 2800, 512>}, {pipeline_mode = #tpu.pipeline_mode<synchronous>, transform_indices = @transform_2, window_bounds = array<i64: 1, 512>}, {transform_indices = @transform_3, window_bounds = array<i64: 1>}, {pipeline_mode = #tpu.pipeline_mode<synchronous>, transform_indices = @transform_4, window_bounds = array<i64: 512, 256>}, {pipeline_mode = #tpu.pipeline_mode<synchronous>, transform_indices = @transform_5, window_bounds = array<i64: 1, 256>}, {transform_indices = @transform_6, window_bounds = array<i64: 1>}, {pipeline_mode = #tpu.pipeline_mode<synchronous>, transform_indices = @transform_7, window_bounds = array<i64: 256, 128>}, {pipeline_mode = #tpu.pipeline_mode<synchronous>, transform_indices = @transform_8, window_bounds = array<i64: 1, 128>}, {transform_indices = @transform_9, window_bounds = array<i64: 1>}, {pipeline_mode = #tpu.pipeline_mode<synchronous>, transform_indices = @transform_10, window_bounds = array<i64: 128, 128>}, {pipeline_mode = #tpu.pipeline_mode<synchronous>, transform_indices = @transform_11, window_bounds = array<i64: 1, 128>}, {transform_indices = @transform_12, window_bounds = array<i64: 8, 128>}]} {
    %c0 = arith.constant 0 : index
    %c0_0 = arith.constant 0 : index
    %0 = vector.load %arg1[%c0, %c0_0] : memref<8x2800xbf16, #tpu.memory_space<vmem>>, vector<8x2800xbf16>
    %c0_1 = arith.constant 0 : index
    %c0_2 = arith.constant 0 : index
    %1 = vector.load %arg2[%c0_1, %c0_2] : memref<2800x512xbf16, #tpu.memory_space<vmem>>, vector<2800x512xbf16>
    %cst = arith.constant dense<0.000000e+00> : vector<8x512xf32>
    %2 = tpu.matmul %0, %1, %cst {dimension_numbers = #tpu.dot_dimension_numbers<[1], [0], [0], [1], [0, 0, 1, 1], [], []>} : vector<8x2800xbf16>, vector<2800x512xbf16>, vector<8x512xf32> -> vector<8x512xf32>
    %c0_3 = arith.constant 0 : index
    %c0_4 = arith.constant 0 : index
    %3 = vector.load %arg3[%c0_3, %c0_4] : memref<1x512xf32, #tpu.memory_space<vmem>>, vector<1x512xf32>
    %4 = vector.broadcast %3 : vector<1x512xf32> to vector<8x512xf32>
    %5 = arith.addf %2, %4 : vector<8x512xf32>
    %c0_5 = arith.constant 0 : index
    %6 = memref.load %arg4[%c0_5] : memref<1xf32, #tpu.memory_space<smem>>
    %cst_6 = arith.constant 0.000000e+00 : f32
    %7 = vector.broadcast %cst_6 : f32 to vector<8x512xf32>
    %8 = arith.cmpf oge, %5, %7 : vector<8x512xf32>
    %9 = vector.broadcast %6 : f32 to vector<8x512xf32>
    %10 = arith.mulf %9, %5 : vector<8x512xf32>
    %11 = arith.select %8, %5, %10 : vector<8x512xi1>, vector<8x512xf32>
    %12 = arith.truncf %11 : vector<8x512xf32> to vector<8x512xbf16>
    %c0_7 = arith.constant 0 : index
    %c0_8 = arith.constant 0 : index
    %13 = vector.load %arg5[%c0_7, %c0_8] : memref<512x256xbf16, #tpu.memory_space<vmem>>, vector<512x256xbf16>
    %cst_9 = arith.constant dense<0.000000e+00> : vector<8x256xf32>
    %14 = tpu.matmul %12, %13, %cst_9 {dimension_numbers = #tpu.dot_dimension_numbers<[1], [0], [0], [1], [0, 0, 1, 1], [], []>} : vector<8x512xbf16>, vector<512x256xbf16>, vector<8x256xf32> -> vector<8x256xf32>
    %c0_10 = arith.constant 0 : index
    %c0_11 = arith.constant 0 : index
    %15 = vector.load %arg6[%c0_10, %c0_11] : memref<1x256xf32, #tpu.memory_space<vmem>>, vector<1x256xf32>
    %16 = vector.broadcast %15 : vector<1x256xf32> to vector<8x256xf32>
    %17 = arith.addf %14, %16 : vector<8x256xf32>
    %c0_12 = arith.constant 0 : index
    %18 = memref.load %arg7[%c0_12] : memref<1xf32, #tpu.memory_space<smem>>
    %cst_13 = arith.constant 0.000000e+00 : f32
    %19 = vector.broadcast %cst_13 : f32 to vector<8x256xf32>
    %20 = arith.cmpf oge, %17, %19 : vector<8x256xf32>
    %21 = vector.broadcast %18 : f32 to vector<8x256xf32>
    %22 = arith.mulf %21, %17 : vector<8x256xf32>
    %23 = arith.select %20, %17, %22 : vector<8x256xi1>, vector<8x256xf32>
    %24 = arith.truncf %23 : vector<8x256xf32> to vector<8x256xbf16>
    %c0_14 = arith.constant 0 : index
    %c0_15 = arith.constant 0 : index
    %25 = vector.load %arg8[%c0_14, %c0_15] : memref<256x128xbf16, #tpu.memory_space<vmem>>, vector<256x128xbf16>
    %cst_16 = arith.constant dense<0.000000e+00> : vector<8x128xf32>
    %26 = tpu.matmul %24, %25, %cst_16 {dimension_numbers = #tpu.dot_dimension_numbers<[1], [0], [0], [1], [0, 0, 1, 1], [], []>} : vector<8x256xbf16>, vector<256x128xbf16>, vector<8x128xf32> -> vector<8x128xf32>
    %c0_17 = arith.constant 0 : index
    %c0_18 = arith.constant 0 : index
    %27 = vector.load %arg9[%c0_17, %c0_18] : memref<1x128xf32, #tpu.memory_space<vmem>>, vector<1x128xf32>
    %28 = vector.broadcast %27 : vector<1x128xf32> to vector<8x128xf32>
    %29 = arith.addf %26, %28 : vector<8x128xf32>
    %c0_19 = arith.constant 0 : index
    %30 = memref.load %arg10[%c0_19] : memref<1xf32, #tpu.memory_space<smem>>
    %cst_20 = arith.constant 0.000000e+00 : f32
    %31 = vector.broadcast %cst_20 : f32 to vector<8x128xf32>
    %32 = arith.cmpf oge, %29, %31 : vector<8x128xf32>
    %33 = vector.broadcast %30 : f32 to vector<8x128xf32>
    %34 = arith.mulf %33, %29 : vector<8x128xf32>
    %35 = arith.select %32, %29, %34 : vector<8x128xi1>, vector<8x128xf32>
    %36 = arith.truncf %35 : vector<8x128xf32> to vector<8x128xbf16>
    %c0_21 = arith.constant 0 : index
    %c0_22 = arith.constant 0 : index
    %37 = vector.load %arg11[%c0_21, %c0_22] : memref<128x128xbf16, #tpu.memory_space<vmem>>, vector<128x128xbf16>
    %cst_23 = arith.constant dense<0.000000e+00> : vector<8x128xf32>
    %38 = tpu.matmul %36, %37, %cst_23 {dimension_numbers = #tpu.dot_dimension_numbers<[1], [0], [0], [1], [0, 0, 1, 1], [], []>} : vector<8x128xbf16>, vector<128x128xbf16>, vector<8x128xf32> -> vector<8x128xf32>
    %c0_24 = arith.constant 0 : index
    %c0_25 = arith.constant 0 : index
    %39 = vector.load %arg12[%c0_24, %c0_25] : memref<1x128xf32, #tpu.memory_space<vmem>>, vector<1x128xf32>
    %40 = vector.broadcast %39 : vector<1x128xf32> to vector<8x128xf32>
    %41 = arith.addf %38, %40 : vector<8x128xf32>
    %c0_26 = arith.constant 0 : index
    %c0_27 = arith.constant 0 : index
    %42 = vector.load %arg13[%c0_26, %c0_27] : memref<8x128xf32, #tpu.memory_space<vmem>>, vector<8x128xf32>
    tpu.vector_store %arg13[%c0_26, %c0_27], %41 {strides = array<i32>} : memref<8x128xf32, #tpu.memory_space<vmem>>, vector<8x128xf32>,
    return
  }
  func.func @transform_0(%arg0: i32) -> (i32, i32) {
    %c0_i32 = arith.constant 0 : i32
    %c0_i32_0 = arith.constant 0 : i32
    return %arg0, %c0_i32 : i32, i32
  }
  func.func @transform_1(%arg0: i32) -> (i32, i32) {
    %c0_i32 = arith.constant 0 : i32
    %c0_i32_0 = arith.constant 0 : i32
    %c0_i32_1 = arith.constant 0 : i32
    return %c0_i32, %c0_i32_0 : i32, i32
  }
  func.func @transform_2(%arg0: i32) -> (i32, i32) {
    %c0_i32 = arith.constant 0 : i32
    %c0_i32_0 = arith.constant 0 : i32
    %c0_i32_1 = arith.constant 0 : i32
    return %c0_i32, %c0_i32_0 : i32, i32
  }
  func.func @transform_3(%arg0: i32) -> i32 {
    %c0_i32 = arith.constant 0 : i32
    %c0_i32_0 = arith.constant 0 : i32
    return %c0_i32 : i32
  }
  func.func @transform_4(%arg0: i32) -> (i32, i32) {
    %c0_i32 = arith.constant 0 : i32
    %c0_i32_0 = arith.constant 0 : i32
    %c0_i32_1 = arith.constant 0 : i32
    return %c0_i32, %c0_i32_0 : i32, i32
  }
  func.func @transform_5(%arg0: i32) -> (i32, i32) {
    %c0_i32 = arith.constant 0 : i32
    %c0_i32_0 = arith.constant 0 : i32
    %c0_i32_1 = arith.constant 0 : i32
    return %c0_i32, %c0_i32_0 : i32, i32
  }
  func.func @transform_6(%arg0: i32) -> i32 {
    %c0_i32 = arith.constant 0 : i32
    %c0_i32_0 = arith.constant 0 : i32
    return %c0_i32 : i32
  }
  func.func @transform_7(%arg0: i32) -> (i32, i32) {
    %c0_i32 = arith.constant 0 : i32
    %c0_i32_0 = arith.constant 0 : i32
    %c0_i32_1 = arith.constant 0 : i32
    return %c0_i32, %c0_i32_0 : i32, i32
  }
  func.func @transform_8(%arg0: i32) -> (i32, i32) {
    %c0_i32 = arith.constant 0 : i32
    %c0_i32_0 = arith.constant 0 : i32
    %c0_i32_1 = arith.constant 0 : i32
    return %c0_i32, %c0_i32_0 : i32, i32
  }
  func.func @transform_9(%arg0: i32) -> i32 {
    %c0_i32 = arith.constant 0 : i32
    %c0_i32_0 = arith.constant 0 : i32
    return %c0_i32 : i32
  }
  func.func @transform_10(%arg0: i32) -> (i32, i32) {
    %c0_i32 = arith.constant 0 : i32
    %c0_i32_0 = arith.constant 0 : i32
    %c0_i32_1 = arith.constant 0 : i32
    return %c0_i32, %c0_i32_0 : i32, i32
  }
  func.func @transform_11(%arg0: i32) -> (i32, i32) {
    %c0_i32 = arith.constant 0 : i32
    %c0_i32_0 = arith.constant 0 : i32
    %c0_i32_1 = arith.constant 0 : i32
    return %c0_i32, %c0_i32_0 : i32, i32
  }
  func.func @transform_12(%arg0: i32) -> (i32, i32) {
    %c0_i32 = arith.constant 0 : i32
    %c0_i32_0 = arith.constant 0 : i32
    return %arg0, %c0_i32 : i32, i32
  }
}

</mosaic_0001>

<llo_original>
// kernel: tpu_custom_call.1
$region0: #{tpu_custom_call.1}
  #allocation0 [shape = 'u32[]', space=smem, size = 0x4, offset = 0x4, fixed_abs, tag = 'smem constant byte address 0x4 - core index']
  #allocation1 [shape = 'u32[72,128]{1,0:T(1,128)}', space=vmem, size = 0x9000, scoped, tag = 'internal scratch']
  #allocation2 [shape = 'f32[1]{0:T(128)S(6)}', space=smem, size = 0x200, scoped, tag = 'scoped memory for tpu_custom_call.1']
  #allocation3 [shape = 'f32[1]{0:T(128)S(6)}', space=smem, size = 0x200, scoped, tag = 'scoped memory for tpu_custom_call.1']
  #allocation4 [shape = 'f32[1]{0:T(128)S(6)}', space=smem, size = 0x200, scoped, tag = 'scoped memory for tpu_custom_call.1']
  %s0 = inlined_call_operand.hbm [shape: bf16[8,2800], index: 0, kind: input, shape index: {}]
  %s1 = inlined_call_operand.hbm [shape: bf16[2800,512], index: 1, kind: input, shape index: {}]
  %s2 = inlined_call_operand.hbm [shape: f32[1,512], index: 2, kind: input, shape index: {}]
  %s3 = inlined_call_operand.<no memory space> [shape: f32[1], index: 3, kind: input, shape index: {}]
  %s4 = inlined_call_operand.hbm [shape: bf16[512,256], index: 4, kind: input, shape index: {}]
  %s5 = inlined_call_operand.hbm [shape: f32[1,256], index: 5, kind: input, shape index: {}]
  %s6 = inlined_call_operand.<no memory space> [shape: f32[1], index: 6, kind: input, shape index: {}]
  %s7 = inlined_call_operand.hbm [shape: bf16[256,128], index: 7, kind: input, shape index: {}]
  %s8 = inlined_call_operand.hbm [shape: f32[1,128], index: 8, kind: input, shape index: {}]
  %s9 = inlined_call_operand.<no memory space> [shape: f32[1], index: 9, kind: input, shape index: {}]
  %s10 = inlined_call_operand.hbm [shape: bf16[128,128], index: 10, kind: input, shape index: {}]
  %s11 = inlined_call_operand.hbm [shape: f32[1,128], index: 11, kind: input, shape index: {}]
  %s12 = inlined_call_operand.hbm [shape: f32[8,128], index: 12, kind: output, shape index: {}]
  %s13 = sld [smem:[#allocation0]]
  $region94: #{tpu_custom_call.1} parent=0
    _
  %s15 = ssub.s32 1, %s13
  %s16 = scalar_select 0, %s15, %s13
  %17 = sst [smem:[#allocation2]] %s3
  %18 = sst [smem:[#allocation3]] %s6
  %19 = sst [smem:[#allocation4]] %s9
  $region1: #{tpu_custom_call.1} parent=0
    #allocation5 [shape = 'u8[45056]{0}', space=vmem, size = 0xb000, scoped, tag = 'input window, operand 0, single buffered']
    #allocation6 [shape = 's32[1]{0}', space=sflag, size = 0x4, scoped, tag = 'scoped memory for tpu_custom_call.1']
    #allocation7 [shape = 's32[1]{0}', space=sflag, size = 0x4, scoped, tag = 'scoped memory for tpu_custom_call.1']
    #allocation8 [shape = 'u8[2867200]{0}', space=vmem, size = 0x2bc000, scoped, tag = 'input window, operand 1, single buffered']
    #allocation9 [shape = 's32[1]{0}', space=sflag, size = 0x4, scoped, tag = 'scoped memory for tpu_custom_call.1']
    #allocation10 [shape = 'u8[2048]{0}', space=vmem, size = 0x800, scoped, tag = 'input window, operand 2, single buffered']
    #allocation11 [shape = 'u8[262144]{0}', space=vmem, size = 0x40000, scoped, tag = 'input window, operand 4, single buffered']
    #allocation12 [shape = 's32[1]{0}', space=sflag, size = 0x4, scoped, tag = 'scoped memory for tpu_custom_call.1']
    #allocation13 [shape = 'u8[1024]{0}', space=vmem, size = 0x400, scoped, tag = 'input window, operand 5, single buffered']
    #allocation14 [shape = 'u8[65536]{0}', space=vmem, size = 0x10000, scoped, tag = 'input window, operand 7, single buffered']
    #allocation15 [shape = 's32[1]{0}', space=sflag, size = 0x4, scoped, tag = 'scoped memory for tpu_custom_call.1']
    #allocation16 [shape = 'u8[512]{0}', space=vmem, size = 0x400, scoped, tag = 'input window, operand 8, single buffered']
    #allocation17 [shape = 'u8[32768]{0}', space=vmem, size = 0x8000, scoped, tag = 'input window, operand 10, single buffered']
    #allocation18 [shape = 's32[1]{0}', space=sflag, size = 0x4, scoped, tag = 'scoped memory for tpu_custom_call.1']
    #allocation19 [shape = 'u8[512]{0}', space=vmem, size = 0x400, scoped, tag = 'input window, operand 11, single buffered']
    #allocation20 [shape = 'u8[4096]{0}', space=vmem, size = 0x1000, scoped, tag = 'output window, operand 0, single buffered']
    %20 = vsyncpa [#allocation6], 0
    %21 = vsyncpa [#allocation9], 0
    %22 = vsyncpa [#allocation12], 0
    %23 = vsyncpa [#allocation15], 0
    %24 = vsyncpa [#allocation18], 0
    %25 = vsyncpa [#allocation7], 0
    // Predicated region
    $region2: #{tpu_custom_call.1} parent=1 // pred_check
      _
    $region3: #{tpu_custom_call.1} parent=1 // pred_check_branch
      %27 = sbr.rel (0) target = $region5
    $region4: #{tpu_custom_call.1} parent=1 // pred_region
      %29 = vsyncadd [#allocation6], 0
      %s31 = sshll.u32 %s0, 4
      %s32 = int_to_ptr.hbm [resolvable:$true] %s31
      %s33 = sshll.u32 [#allocation5], 4
      %s34 = int_to_ptr.vmem [resolvable:$true] %s33
      %36 = dma.hbm_to_vmem [thread:$0]  %s32, 1408, %s34, [#allocation6]
    $region5: #{tpu_custom_call.1} parent=1 // pred_fallthru
      _
    // Predicated region
    $region6: #{tpu_custom_call.1} parent=1 // pred_check
      _
    $region7: #{tpu_custom_call.1} parent=1 // pred_check_branch
      %38 = sbr.rel (0) target = $region9
    $region8: #{tpu_custom_call.1} parent=1 // pred_region
      %40 = vsyncadd [#allocation9], 0
      %s41 = sshll.u32 %s1, 4
      %s42 = int_to_ptr.hbm [resolvable:$true] %s41
      %s43 = sshll.u32 [#allocation8], 4
      %s44 = int_to_ptr.vmem [resolvable:$true] %s43
      %49 = dma.hbm_to_vmem [thread:$0]  %s42, 89600, %s44, [#allocation9], 256, 256, 16
    $region9: #{tpu_custom_call.1} parent=1 // pred_fallthru
      _
    // Predicated region
    $region10: #{tpu_custom_call.1} parent=1 // pred_check
      _
    $region11: #{tpu_custom_call.1} parent=1 // pred_check_branch
      %51 = sbr.rel (0) target = $region13
    $region12: #{tpu_custom_call.1} parent=1 // pred_region
      %53 = vsyncadd [#allocation9], 0
      %s55 = sshll.u32 %s2, 4
      %s56 = int_to_ptr.hbm [resolvable:$true] %s55
      %s57 = sshll.u32 [#allocation10], 4
      %s58 = int_to_ptr.vmem [resolvable:$true] %s57
      %60 = dma.hbm_to_vmem [thread:$0]  %s56, 64, %s58, [#allocation9]
    $region13: #{tpu_custom_call.1} parent=1 // pred_fallthru
      _
    // Predicated region
    $region14: #{tpu_custom_call.1} parent=1 // pred_check
      _
    $region15: #{tpu_custom_call.1} parent=1 // pred_check_branch
      %62 = sbr.rel (0) target = $region17
    $region16: #{tpu_custom_call.1} parent=1 // pred_region
      _
    $region17: #{tpu_custom_call.1} parent=1 // pred_fallthru
      _
    // Predicated region
    $region18: #{tpu_custom_call.1} parent=1 // pred_check
      _
    $region19: #{tpu_custom_call.1} parent=1 // pred_check_branch
      %64 = sbr.rel (0) target = $region21
    $region20: #{tpu_custom_call.1} parent=1 // pred_region
      %66 = vsyncadd [#allocation12], 0
      %s67 = sshll.u32 %s4, 4
      %s68 = int_to_ptr.hbm [resolvable:$true] %s67
      %s69 = sshll.u32 [#allocation11], 4
      %s70 = int_to_ptr.vmem [resolvable:$true] %s69
      %75 = dma.hbm_to_vmem [thread:$0]  %s68, 8192, %s70, [#allocation12], 128, 128, 8
    $region21: #{tpu_custom_call.1} parent=1 // pred_fallthru
      _
    // Predicated region
    $region22: #{tpu_custom_call.1} parent=1 // pred_check
      _
    $region23: #{tpu_custom_call.1} parent=1 // pred_check_branch
      %77 = sbr.rel (0) target = $region25
    $region24: #{tpu_custom_call.1} parent=1 // pred_region
      %79 = vsyncadd [#allocation12], 0
      %s81 = sshll.u32 %s5, 4
      %s82 = int_to_ptr.hbm [resolvable:$true] %s81
      %s83 = sshll.u32 [#allocation13], 4
      %s84 = int_to_ptr.vmem [resolvable:$true] %s83
      %86 = dma.hbm_to_vmem [thread:$0]  %s82, 32, %s84, [#allocation12]
    $region25: #{tpu_custom_call.1} parent=1 // pred_fallthru
      _
    // Predicated region
    $region26: #{tpu_custom_call.1} parent=1 // pred_check
      _
    $region27: #{tpu_custom_call.1} parent=1 // pred_check_branch
      %88 = sbr.rel (0) target = $region29
    $region28: #{tpu_custom_call.1} parent=1 // pred_region
      _
    $region29: #{tpu_custom_call.1} parent=1 // pred_fallthru
      _
    // Predicated region
    $region30: #{tpu_custom_call.1} parent=1 // pred_check
      _
    $region31: #{tpu_custom_call.1} parent=1 // pred_check_branch
      %90 = sbr.rel (0) target = $region33
    $region32: #{tpu_custom_call.1} parent=1 // pred_region
      %92 = vsyncadd [#allocation15], 0
      %s93 = sshll.u32 %s7, 4
      %s94 = int_to_ptr.hbm [resolvable:$true] %s93
      %s95 = sshll.u32 [#allocation14], 4
      %s96 = int_to_ptr.vmem [resolvable:$true] %s95
      %101 = dma.hbm_to_vmem [thread:$0]  %s94, 2048, %s96, [#allocation15], 64, 64, 4
    $region33: #{tpu_custom_call.1} parent=1 // pred_fallthru
      _
    // Predicated region
    $region34: #{tpu_custom_call.1} parent=1 // pred_check
      _
    $region35: #{tpu_custom_call.1} parent=1 // pred_check_branch
      %103 = sbr.rel (0) target = $region37
    $region36: #{tpu_custom_call.1} parent=1 // pred_region
      %105 = vsyncadd [#allocation15], 0
      %s107 = sshll.u32 %s8, 4
      %s108 = int_to_ptr.hbm [resolvable:$true] %s107
      %s109 = sshll.u32 [#allocation16], 4
      %s110 = int_to_ptr.vmem [resolvable:$true] %s109
      %112 = dma.hbm_to_vmem [thread:$0]  %s108, 16, %s110, [#allocation15]
    $region37: #{tpu_custom_call.1} parent=1 // pred_fallthru
      _
    // Predicated region
    $region38: #{tpu_custom_call.1} parent=1 // pred_check
      _
    $region39: #{tpu_custom_call.1} parent=1 // pred_check_branch
      %114 = sbr.rel (0) target = $region41
    $region40: #{tpu_custom_call.1} parent=1 // pred_region
      _
    $region41: #{tpu_custom_call.1} parent=1 // pred_fallthru
      _
    // Predicated region
    $region42: #{tpu_custom_call.1} parent=1 // pred_check
      _
    $region43: #{tpu_custom_call.1} parent=1 // pred_check_branch
      %116 = sbr.rel (0) target = $region45
    $region44: #{tpu_custom_call.1} parent=1 // pred_region
      %118 = vsyncadd [#allocation18], 0
      %s119 = sshll.u32 %s10, 4
      %s120 = int_to_ptr.hbm [resolvable:$true] %s119
      %s121 = sshll.u32 [#allocation17], 4
      %s122 = int_to_ptr.vmem [resolvable:$true] %s121
      %127 = dma.hbm_to_vmem [thread:$0]  %s120, 1024, %s122, [#allocation18], 64, 64, 4
    $region45: #{tpu_custom_call.1} parent=1 // pred_fallthru
      _
    // Predicated region
    $region46: #{tpu_custom_call.1} parent=1 // pred_check
      _
    $region47: #{tpu_custom_call.1} parent=1 // pred_check_branch
      %129 = sbr.rel (0) target = $region49
    $region48: #{tpu_custom_call.1} parent=1 // pred_region
      %131 = vsyncadd [#allocation18], 0
      %s133 = sshll.u32 %s11, 4
      %s134 = int_to_ptr.hbm [resolvable:$true] %s133
      %s135 = sshll.u32 [#allocation19], 4
      %s136 = int_to_ptr.vmem [resolvable:$true] %s135
      %138 = dma.hbm_to_vmem [thread:$0]  %s134, 16, %s136, [#allocation18]
    $region49: #{tpu_custom_call.1} parent=1 // pred_fallthru
      _
    // Predicated region
    $region50: #{tpu_custom_call.1} parent=1 // pred_check
      _
    $region51: #{tpu_custom_call.1} parent=1 // pred_check_branch
      %140 = sbr.rel (0) target = $region53
    $region52: #{tpu_custom_call.1} parent=1 // pred_region
      %142 = dma.done [#allocation6], 1408
    $region53: #{tpu_custom_call.1} parent=1 // pred_fallthru
      _
    // Predicated region
    $region54: #{tpu_custom_call.1} parent=1 // pred_check
      _
    $region55: #{tpu_custom_call.1} parent=1 // pred_check_branch
      %144 = sbr.rel (0) target = $region57
    $region56: #{tpu_custom_call.1} parent=1 // pred_region
      %146 = dma.done [#allocation9], 89600
    $region57: #{tpu_custom_call.1} parent=1 // pred_fallthru
      _
    // Predicated region
    $region58: #{tpu_custom_call.1} parent=1 // pred_check
      _
    $region59: #{tpu_custom_call.1} parent=1 // pred_check_branch
      %148 = sbr.rel (0) target = $region61
    $region60: #{tpu_custom_call.1} parent=1 // pred_region
      %150 = dma.done [#allocation9], 64
    $region61: #{tpu_custom_call.1} parent=1 // pred_fallthru
      _
    // Predicated region
    $region62: #{tpu_custom_call.1} parent=1 // pred_check
      _
    $region63: #{tpu_custom_call.1} parent=1 // pred_check_branch
      %152 = sbr.rel (0) target = $region65
    $region64: #{tpu_custom_call.1} parent=1 // pred_region
      %154 = dma.done [#allocation12], 8192
    $region65: #{tpu_custom_call.1} parent=1 // pred_fallthru
      _
    // Predicated region
    $region66: #{tpu_custom_call.1} parent=1 // pred_check
      _
    $region67: #{tpu_custom_call.1} parent=1 // pred_check_branch
      %156 = sbr.rel (0) target = $region69
    $region68: #{tpu_custom_call.1} parent=1 // pred_region
      %158 = dma.done [#allocation12], 32
    $region69: #{tpu_custom_call.1} parent=1 // pred_fallthru
      _
    // Predicated region
    $region70: #{tpu_custom_call.1} parent=1 // pred_check
      _
    $region71: #{tpu_custom_call.1} parent=1 // pred_check_branch
      %160 = sbr.rel (0) target = $region73
    $region72: #{tpu_custom_call.1} parent=1 // pred_region
      %162 = dma.done [#allocation15], 2048
    $region73: #{tpu_custom_call.1} parent=1 // pred_fallthru
      _
    // Predicated region
    $region74: #{tpu_custom_call.1} parent=1 // pred_check
      _
    $region75: #{tpu_custom_call.1} parent=1 // pred_check_branch
      %164 = sbr.rel (0) target = $region77
    $region76: #{tpu_custom_call.1} parent=1 // pred_region
      %166 = dma.done [#allocation15], 16
    $region77: #{tpu_custom_call.1} parent=1 // pred_fallthru
      _
    // Predicated region
    $region78: #{tpu_custom_call.1} parent=1 // pred_check
      _
    $region79: #{tpu_custom_call.1} parent=1 // pred_check_branch
      %168 = sbr.rel (0) target = $region81
    $region80: #{tpu_custom_call.1} parent=1 // pred_region
      %170 = dma.done [#allocation18], 1024
    $region81: #{tpu_custom_call.1} parent=1 // pred_fallthru
      _
    // Predicated region
    $region82: #{tpu_custom_call.1} parent=1 // pred_check
      _
    $region83: #{tpu_custom_call.1} parent=1 // pred_check_branch
      %172 = sbr.rel (0) target = $region85
    $region84: #{tpu_custom_call.1} parent=1 // pred_region
      %174 = dma.done [#allocation18], 16
    $region85: #{tpu_custom_call.1} parent=1 // pred_fallthru
      _
    %v176 = vld [vmem:[#allocation5] sm:$0xff]
    %v177 = vld [vmem:[#allocation5 + $0x8] sm:$0xff]
    %v178 = vld [vmem:[#allocation5 + $0x10] sm:$0xff]
    %v179 = vld [vmem:[#allocation5 + $0x18] sm:$0xff]
    %v180 = vld [vmem:[#allocation5 + $0x20] sm:$0xff]
    %v181 = vld [vmem:[#allocation5 + $0x28] sm:$0xff]
    %v182 = vld [vmem:[#allocation5 + $0x30] sm:$0xff]
    %v183 = vld [vmem:[#allocation5 + $0x38] sm:$0xff]
    %v184 = vld [vmem:[#allocation5 + $0x40] sm:$0xff]
    %v185 = vld [vmem:[#allocation5 + $0x48] sm:$0xff]
    %v186 = vld [vmem:[#allocation5 + $0x50] sm:$0xff]
    %v187 = vld [vmem:[#allocation8] sm:$0xff]
    %v188 = vld [vmem:[#allocation8 + $0x8] sm:$0xff]
    %v189 = vld [vmem:[#allocation8 + $0x10] sm:$0xff]
    %v190 = vld [vmem:[#allocation8 + $0x18] sm:$0xff]
    %v191 = vld [vmem:[#allocation8 + $0x20] sm:$0xff]
    %v192 = vld [vmem:[#allocation8 + $0x28] sm:$0xff]
    %v193 = vld [vmem:[#allocation8 + $0x30] sm:$0xff]
    %v194 = vld [vmem:[#allocation8 + $0x38] sm:$0xff]
    %v195 = vld [vmem:[#allocation8 + $0x40] sm:$0xff]
    %v196 = vld [vmem:[#allocation8 + $0x48] sm:$0xff]
    %v197 = vld [vmem:[#allocation8 + $0x50] sm:$0xff]
    %v198 = vld [vmem:[#allocation8 + $0x58] sm:$0xff]
    %v199 = vld [vmem:[#allocation8 + $0x60] sm:$0xff]
    %v200 = vld [vmem:[#allocation8 + $0x68] sm:$0xff]
    %v201 = vld [vmem:[#allocation8 + $0x70] sm:$0xff]
    %v202 = vld [vmem:[#allocation8 + $0x78] sm:$0xff]
    %v203 = vld [vmem:[#allocation8 + $0x80] sm:$0xff]
    %v204 = vld [vmem:[#allocation8 + $0x88] sm:$0xff]
    %v205 = vld [vmem:[#allocation8 + $0x90] sm:$0xff]
    %v206 = vld [vmem:[#allocation8 + $0x98] sm:$0xff]
    %v207 = vld [vmem:[#allocation8 + $0xa0] sm:$0xff]
    %v208 = vld [vmem:[#allocation8 + $0xa8] sm:$0xff]
    %v209 = vld [vmem:[#allocation8 + $0xb0] sm:$0xff]
    %v210 = vld [vmem:[#allocation8 + $0xb8] sm:$0xff]
    %v211 = vld [vmem:[#allocation8 + $0xc0] sm:$0xff]
    %v212 = vld [vmem:[#allocation8 + $0xc8] sm:$0xff]
    %v213 = vld [vmem:[#allocation8 + $0xd0] sm:$0xff]
    %v214 = vld [vmem:[#allocation8 + $0xd8] sm:$0xff]
    %v215 = vld [vmem:[#allocation8 + $0xe0] sm:$0xff]
    %v216 = vld [vmem:[#allocation8 + $0xe8] sm:$0xff]
    %v217 = vld [vmem:[#allocation8 + $0xf0] sm:$0xff]
    %v218 = vld [vmem:[#allocation8 + $0xf8] sm:$0xff]
    %v219 = vld [vmem:[#allocation8 + $0x100] sm:$0xff]
    %v220 = vld [vmem:[#allocation8 + $0x108] sm:$0xff]
    %v221 = vld [vmem:[#allocation8 + $0x110] sm:$0xff]
    %v222 = vld [vmem:[#allocation8 + $0x118] sm:$0xff]
    %v223 = vld [vmem:[#allocation8 + $0x120] sm:$0xff]
    %v224 = vld [vmem:[#allocation8 + $0x128] sm:$0xff]
    %v225 = vld [vmem:[#allocation8 + $0x130] sm:$0xff]
    %v226 = vld [vmem:[#allocation8 + $0x138] sm:$0xff]
    %v227 = vld [vmem:[#allocation8 + $0x140] sm:$0xff]
    %v228 = vld [vmem:[#allocation8 + $0x148] sm:$0xff]
    %v229 = vld [vmem:[#allocation8 + $0x150] sm:$0xff]
    %v230 = vld [vmem:[#allocation8 + $0x158] sm:$0xff]
    %v231 = vld [vmem:[#allocation8 + $0x160] sm:$0xff]
    %v232 = vld [vmem:[#allocation8 + $0x168] sm:$0xff]
    %v233 = vld [vmem:[#allocation8 + $0x170] sm:$0xff]
    %v234 = vld [vmem:[#allocation8 + $0x178] sm:$0xff]
    %v235 = vld [vmem:[#allocation8 + $0x180] sm:$0xff]
    %v236 = vld [vmem:[#allocation8 + $0x188] sm:$0xff]
    %v237 = vld [vmem:[#allocation8 + $0x190] sm:$0xff]
    %v238 = vld [vmem:[#allocation8 + $0x198] sm:$0xff]
    %v239 = vld [vmem:[#allocation8 + $0x1a0] sm:$0xff]
    %v240 = vld [vmem:[#allocation8 + $0x1a8] sm:$0xff]
    %v241 = vld [vmem:[#allocation8 + $0x1b0] sm:$0xff]
    %v242 = vld [vmem:[#allocation8 + $0x1b8] sm:$0xff]
    %v243 = vld [vmem:[#allocation8 + $0x1c0] sm:$0xff]
    %v244 = vld [vmem:[#allocation8 + $0x1c8] sm:$0xff]
    %v245 = vld [vmem:[#allocation8 + $0x1d0] sm:$0xff]
    %v246 = vld [vmem:[#allocation8 + $0x1d8] sm:$0xff]
    %v247 = vld [vmem:[#allocation8 + $0x1e0] sm:$0xff]
    %v248 = vld [vmem:[#allocation8 + $0x1e8] sm:$0xff]
    %v249 = vld [vmem:[#allocation8 + $0x1f0] sm:$0xff]
    %v250 = vld [vmem:[#allocation8 + $0x1f8] sm:$0xff]
    %v251 = vld [vmem:[#allocation8 + $0x200] sm:$0xff]
    %v252 = vld [vmem:[#allocation8 + $0x208] sm:$0xff]
    %v253 = vld [vmem:[#allocation8 + $0x210] sm:$0xff]
    %v254 = vld [vmem:[#allocation8 + $0x218] sm:$0xff]
    %v255 = vld [vmem:[#allocation8 + $0x220] sm:$0xff]
    %v256 = vld [vmem:[#allocation8 + $0x228] sm:$0xff]
    %v257 = vld [vmem:[#allocation8 + $0x230] sm:$0xff]
    %v258 = vld [vmem:[#allocation8 + $0x238] sm:$0xff]
    %v259 = vld [vmem:[#allocation8 + $0x240] sm:$0xff]
    %v260 = vld [vmem:[#allocation8 + $0x248] sm:$0xff]
    %v261 = vld [vmem:[#allocation8 + $0x250] sm:$0xff]
    %v262 = vld [vmem:[#allocation8 + $0x258] sm:$0xff]
    %v263 = vld [vmem:[#allocation8 + $0x260] sm:$0xff]
    %v264 = vld [vmem:[#allocation8 + $0x268] sm:$0xff]
    %v265 = vld [vmem:[#allocation8 + $0x270] sm:$0xff]
    %v266 = vld [vmem:[#allocation8 + $0x278] sm:$0xff]
    %v267 = vld [vmem:[#allocation8 + $0x280] sm:$0xff]
    %v268 = vld [vmem:[#allocation8 + $0x288] sm:$0xff]
    %v269 = vld [vmem:[#allocation8 + $0x290] sm:$0xff]
    %v270 = vld [vmem:[#allocation8 + $0x298] sm:$0xff]
    %v271 = vld [vmem:[#allocation8 + $0x2a0] sm:$0xff]
    %v272 = vld [vmem:[#allocation8 + $0x2a8] sm:$0xff]
    %v273 = vld [vmem:[#allocation8 + $0x2b0] sm:$0xff]
    %v274 = vld [vmem:[#allocation8 + $0x2b8] sm:$0xff]
    %v275 = vld [vmem:[#allocation8 + $0x2c0] sm:$0xff]
    %v276 = vld [vmem:[#allocation8 + $0x2c8] sm:$0xff]
    %v277 = vld [vmem:[#allocation8 + $0x2d0] sm:$0xff]
    %v278 = vld [vmem:[#allocation8 + $0x2d8] sm:$0xff]
    %v279 = vld [vmem:[#allocation8 + $0x2e0] sm:$0xff]
    %v280 = vld [vmem:[#allocation8 + $0x2e8] sm:$0xff]
    %v281 = vld [vmem:[#allocation8 + $0x2f0] sm:$0xff]
    %v282 = vld [vmem:[#allocation8 + $0x2f8] sm:$0xff]
    %v283 = vld [vmem:[#allocation8 + $0x300] sm:$0xff]
    %v284 = vld [vmem:[#allocation8 + $0x308] sm:$0xff]
    %v285 = vld [vmem:[#allocation8 + $0x310] sm:$0xff]
    %v286 = vld [vmem:[#allocation8 + $0x318] sm:$0xff]
    %v287 = vld [vmem:[#allocation8 + $0x320] sm:$0xff]
    %v288 = vld [vmem:[#allocation8 + $0x328] sm:$0xff]
    %v289 = vld [vmem:[#allocation8 + $0x330] sm:$0xff]
    %v290 = vld [vmem:[#allocation8 + $0x338] sm:$0xff]
    %v291 = vld [vmem:[#allocation8 + $0x340] sm:$0xff]
    %v292 = vld [vmem:[#allocation8 + $0x348] sm:$0xff]
    %v293 = vld [vmem:[#allocation8 + $0x350] sm:$0xff]
    %v294 = vld [vmem:[#allocation8 + $0x358] sm:$0xff]
    %v295 = vld [vmem:[#allocation8 + $0x360] sm:$0xff]
    %v296 = vld [vmem:[#allocation8 + $0x368] sm:$0xff]
    %v297 = vld [vmem:[#allocation8 + $0x370] sm:$0xff]
    %v298 = vld [vmem:[#allocation8 + $0x378] sm:$0xff]
    %v299 = vld [vmem:[#allocation8 + $0x380] sm:$0xff]
    %v300 = vld [vmem:[#allocation8 + $0x388] sm:$0xff]
    %v301 = vld [vmem:[#allocation8 + $0x390] sm:$0xff]
    %v302 = vld [vmem:[#allocation8 + $0x398] sm:$0xff]
    %v303 = vld [vmem:[#allocation8 + $0x3a0] sm:$0xff]
    %v304 = vld [vmem:[#allocation8 + $0x3a8] sm:$0xff]
    %v305 = vld [vmem:[#allocation8 + $0x3b0] sm:$0xff]
    %v306 = vld [vmem:[#allocation8 + $0x3b8] sm:$0xff]
    %v307 = vld [vmem:[#allocation8 + $0x3c0] sm:$0xff]
    %v308 = vld [vmem:[#allocation8 + $0x3c8] sm:$0xff]
    %v309 = vld [vmem:[#allocation8 + $0x3d0] sm:$0xff]
    %v310 = vld [vmem:[#allocation8 + $0x3d8] sm:$0xff]
    %v311 = vld [vmem:[#allocation8 + $0x3e0] sm:$0xff]
    %v312 = vld [vmem:[#allocation8 + $0x3e8] sm:$0xff]
    %v313 = vld [vmem:[#allocation8 + $0x3f0] sm:$0xff]
    %v314 = vld [vmem:[#allocation8 + $0x3f8] sm:$0xff]
    %v315 = vld [vmem:[#allocation8 + $0x400] sm:$0xff]
    %v316 = vld [vmem:[#allocation8 + $0x408] sm:$0xff]
    %v317 = vld [vmem:[#allocation8 + $0x410] sm:$0xff]
    %v318 = vld [vmem:[#allocation8 + $0x418] sm:$0xff]
    %v319 = vld [vmem:[#allocation8 + $0x420] sm:$0xff]
    %v320 = vld [vmem:[#allocation8 + $0x428] sm:$0xff]
    %v321 = vld [vmem:[#allocation8 + $0x430] sm:$0xff]
    %v322 = vld [vmem:[#allocation8 + $0x438] sm:$0xff]
    %v323 = vld [vmem:[#allocation8 + $0x440] sm:$0xff]
    %v324 = vld [vmem:[#allocation8 + $0x448] sm:$0xff]
    %v325 = vld [vmem:[#allocation8 + $0x450] sm:$0xff]
    %v326 = vld [vmem:[#allocation8 + $0x458] sm:$0xff]
    %v327 = vld [vmem:[#allocation8 + $0x460] sm:$0xff]
    %v328 = vld [vmem:[#allocation8 + $0x468] sm:$0xff]
    %v329 = vld [vmem:[#allocation8 + $0x470] sm:$0xff]
    %v330 = vld [vmem:[#allocation8 + $0x478] sm:$0xff]
    %v331 = vld [vmem:[#allocation8 + $0x480] sm:$0xff]
    %v332 = vld [vmem:[#allocation8 + $0x488] sm:$0xff]
    %v333 = vld [vmem:[#allocation8 + $0x490] sm:$0xff]
    %v334 = vld [vmem:[#allocation8 + $0x498] sm:$0xff]
    %v335 = vld [vmem:[#allocation8 + $0x4a0] sm:$0xff]
    %v336 = vld [vmem:[#allocation8 + $0x4a8] sm:$0xff]
    %v337 = vld [vmem:[#allocation8 + $0x4b0] sm:$0xff]
    %v338 = vld [vmem:[#allocation8 + $0x4b8] sm:$0xff]
    %v339 = vld [vmem:[#allocation8 + $0x4c0] sm:$0xff]
    %v340 = vld [vmem:[#allocation8 + $0x4c8] sm:$0xff]
    %v341 = vld [vmem:[#allocation8 + $0x4d0] sm:$0xff]
    %v342 = vld [vmem:[#allocation8 + $0x4d8] sm:$0xff]
    %v343 = vld [vmem:[#allocation8 + $0x4e0] sm:$0xff]
    %v344 = vld [vmem:[#allocation8 + $0x4e8] sm:$0xff]
    %v345 = vld [vmem:[#allocation8 + $0x4f0] sm:$0xff]
    %v346 = vld [vmem:[#allocation8 + $0x4f8] sm:$0xff]
    %v347 = vld [vmem:[#allocation8 + $0x500] sm:$0xff]
    %v348 = vld [vmem:[#allocation8 + $0x508] sm:$0xff]
    %v349 = vld [vmem:[#allocation8 + $0x510] sm:$0xff]
    %v350 = vld [vmem:[#allocation8 + $0x518] sm:$0xff]
    %v351 = vld [vmem:[#allocation8 + $0x520] sm:$0xff]
    %v352 = vld [vmem:[#allocation8 + $0x528] sm:$0xff]
    %v353 = vld [vmem:[#allocation8 + $0x530] sm:$0xff]
    %v354 = vld [vmem:[#allocation8 + $0x538] sm:$0xff]
    %v355 = vld [vmem:[#allocation8 + $0x540] sm:$0xff]
    %v356 = vld [vmem:[#allocation8 + $0x548] sm:$0xff]
    %v357 = vld [vmem:[#allocation8 + $0x550] sm:$0xff]
    %v358 = vld [vmem:[#allocation8 + $0x558] sm:$0xff]
    %v359 = vld [vmem:[#allocation8 + $0x560] sm:$0xff]
    %v360 = vld [vmem:[#allocation8 + $0x568] sm:$0xff]
    %v361 = vld [vmem:[#allocation8 + $0x570] sm:$0xff]
    %v362 = vld [vmem:[#allocation8 + $0x578] sm:$0xff]
    %v363 = vld [vmem:[#allocation8 + $0x580] sm:$0xff]
    %v364 = vld [vmem:[#allocation8 + $0x588] sm:$0xff]
    %v365 = vld [vmem:[#allocation8 + $0x590] sm:$0xff]
    %v366 = vld [vmem:[#allocation8 + $0x598] sm:$0xff]
    %v367 = vld [vmem:[#allocation8 + $0x5a0] sm:$0xff]
    %v368 = vld [vmem:[#allocation8 + $0x5a8] sm:$0xff]
    %v369 = vld [vmem:[#allocation8 + $0x5b0] sm:$0xff]
    %v370 = vld [vmem:[#allocation8 + $0x5b8] sm:$0xff]
    %v371 = vld [vmem:[#allocation8 + $0x5c0] sm:$0xff]
    %v372 = vld [vmem:[#allocation8 + $0x5c8] sm:$0xff]
    %v373 = vld [vmem:[#allocation8 + $0x5d0] sm:$0xff]
    %v374 = vld [vmem:[#allocation8 + $0x5d8] sm:$0xff]
    %v375 = vld [vmem:[#allocation8 + $0x5e0] sm:$0xff]
    %v376 = vld [vmem:[#allocation8 + $0x5e8] sm:$0xff]
    %v377 = vld [vmem:[#allocation8 + $0x5f0] sm:$0xff]
    %v378 = vld [vmem:[#allocation8 + $0x5f8] sm:$0xff]
    %v379 = vld [vmem:[#allocation8 + $0x600] sm:$0xff]
    %v380 = vld [vmem:[#allocation8 + $0x608] sm:$0xff]
    %v381 = vld [vmem:[#allocation8 + $0x610] sm:$0xff]
    %v382 = vld [vmem:[#allocation8 + $0x618] sm:$0xff]
    %v383 = vld [vmem:[#allocation8 + $0x620] sm:$0xff]
    %v384 = vld [vmem:[#allocation8 + $0x628] sm:$0xff]
    %v385 = vld [vmem:[#allocation8 + $0x630] sm:$0xff]
    %v386 = vld [vmem:[#allocation8 + $0x638] sm:$0xff]
    %v387 = vld [vmem:[#allocation8 + $0x640] sm:$0xff]
    %v388 = vld [vmem:[#allocation8 + $0x648] sm:$0xff]
    %v389 = vld [vmem:[#allocation8 + $0x650] sm:$0xff]
    %v390 = vld [vmem:[#allocation8 + $0x658] sm:$0xff]
    %v391 = vld [vmem:[#allocation8 + $0x660] sm:$0xff]
    %v392 = vld [vmem:[#allocation8 + $0x668] sm:$0xff]
    %v393 = vld [vmem:[#allocation8 + $0x670] sm:$0xff]
    %v394 = vld [vmem:[#allocation8 + $0x678] sm:$0xff]
    %v395 = vld [vmem:[#allocation8 + $0x680] sm:$0xff]
    %v396 = vld [vmem:[#allocation8 + $0x688] sm:$0xff]
    %v397 = vld [vmem:[#allocation8 + $0x690] sm:$0xff]
    %v398 = vld [vmem:[#allocation8 + $0x698] sm:$0xff]
    %v399 = vld [vmem:[#allocation8 + $0x6a0] sm:$0xff]
    %v400 = vld [vmem:[#allocation8 + $0x6a8] sm:$0xff]
    %v401 = vld [vmem:[#allocation8 + $0x6b0] sm:$0xff]
    %v402 = vld [vmem:[#allocation8 + $0x6b8] sm:$0xff]
    %v403 = vld [vmem:[#allocation8 + $0x6c0] sm:$0xff]
    %v404 = vld [vmem:[#allocation8 + $0x6c8] sm:$0xff]
    %v405 = vld [vmem:[#allocation8 + $0x6d0] sm:$0xff]
    %v406 = vld [vmem:[#allocation8 + $0x6d8] sm:$0xff]
    %v407 = vld [vmem:[#allocation8 + $0x6e0] sm:$0xff]
    %v408 = vld [vmem:[#allocation8 + $0x6e8] sm:$0xff]
    %v409 = vld [vmem:[#allocation8 + $0x6f0] sm:$0xff]
    %v410 = vld [vmem:[#allocation8 + $0x6f8] sm:$0xff]
    %v411 = vld [vmem:[#allocation8 + $0x700] sm:$0xff]
    %v412 = vld [vmem:[#allocation8 + $0x708] sm:$0xff]
    %v413 = vld [vmem:[#allocation8 + $0x710] sm:$0xff]
    %v414 = vld [vmem:[#allocation8 + $0x718] sm:$0xff]
    %v415 = vld [vmem:[#allocation8 + $0x720] sm:$0xff]
    %v416 = vld [vmem:[#allocation8 + $0x728] sm:$0xff]
    %v417 = vld [vmem:[#allocation8 + $0x730] sm:$0xff]
    %v418 = vld [vmem:[#allocation8 + $0x738] sm:$0xff]
    %v419 = vld [vmem:[#allocation8 + $0x740] sm:$0xff]
    %v420 = vld [vmem:[#allocation8 + $0x748] sm:$0xff]
    %v421 = vld [vmem:[#allocation8 + $0x750] sm:$0xff]
    %v422 = vld [vmem:[#allocation8 + $0x758] sm:$0xff]
    %v423 = vld [vmem:[#allocation8 + $0x760] sm:$0xff]
    %v424 = vld [vmem:[#allocation8 + $0x768] sm:$0xff]
    %v425 = vld [vmem:[#allocation8 + $0x770] sm:$0xff]
    %v426 = vld [vmem:[#allocation8 + $0x778] sm:$0xff]
    %v427 = vld [vmem:[#allocation8 + $0x780] sm:$0xff]
    %v428 = vld [vmem:[#allocation8 + $0x788] sm:$0xff]
    %v429 = vld [vmem:[#allocation8 + $0x790] sm:$0xff]
    %v430 = vld [vmem:[#allocation8 + $0x798] sm:$0xff]
    %v431 = vld [vmem:[#allocation8 + $0x7a0] sm:$0xff]
    %v432 = vld [vmem:[#allocation8 + $0x7a8] sm:$0xff]
    %v433 = vld [vmem:[#allocation8 + $0x7b0] sm:$0xff]
    %v434 = vld [vmem:[#allocation8 + $0x7b8] sm:$0xff]
    %v435 = vld [vmem:[#allocation8 + $0x7c0] sm:$0xff]
    %v436 = vld [vmem:[#allocation8 + $0x7c8] sm:$0xff]
    %v437 = vld [vmem:[#allocation8 + $0x7d0] sm:$0xff]
    %v438 = vld [vmem:[#allocation8 + $0x7d8] sm:$0xff]
    %v439 = vld [vmem:[#allocation8 + $0x7e0] sm:$0xff]
    %v440 = vld [vmem:[#allocation8 + $0x7e8] sm:$0xff]
    %v441 = vld [vmem:[#allocation8 + $0x7f0] sm:$0xff]
    %v442 = vld [vmem:[#allocation8 + $0x7f8] sm:$0xff]
    %v443 = vld [vmem:[#allocation8 + $0x800] sm:$0xff]
    %v444 = vld [vmem:[#allocation8 + $0x808] sm:$0xff]
    %v445 = vld [vmem:[#allocation8 + $0x810] sm:$0xff]
    %v446 = vld [vmem:[#allocation8 + $0x818] sm:$0xff]
    %v447 = vld [vmem:[#allocation8 + $0x820] sm:$0xff]
    %v448 = vld [vmem:[#allocation8 + $0x828] sm:$0xff]
    %v449 = vld [vmem:[#allocation8 + $0x830] sm:$0xff]
    %v450 = vld [vmem:[#allocation8 + $0x838] sm:$0xff]
    %v451 = vld [vmem:[#allocation8 + $0x840] sm:$0xff]
    %v452 = vld [vmem:[#allocation8 + $0x848] sm:$0xff]
    %v453 = vld [vmem:[#allocation8 + $0x850] sm:$0xff]
    %v454 = vld [vmem:[#allocation8 + $0x858] sm:$0xff]
    %v455 = vld [vmem:[#allocation8 + $0x860] sm:$0xff]
    %v456 = vld [vmem:[#allocation8 + $0x868] sm:$0xff]
    %v457 = vld [vmem:[#allocation8 + $0x870] sm:$0xff]
    %v458 = vld [vmem:[#allocation8 + $0x878] sm:$0xff]
    %v459 = vld [vmem:[#allocation8 + $0x880] sm:$0xff]
    %v460 = vld [vmem:[#allocation8 + $0x888] sm:$0xff]
    %v461 = vld [vmem:[#allocation8 + $0x890] sm:$0xff]
    %v462 = vld [vmem:[#allocation8 + $0x898] sm:$0xff]
    %v463 = vld [vmem:[#allocation8 + $0x8a0] sm:$0xff]
    %v464 = vld [vmem:[#allocation8 + $0x8a8] sm:$0xff]
    %v465 = vld [vmem:[#allocation8 + $0x8b0] sm:$0xff]
    %v466 = vld [vmem:[#allocation8 + $0x8b8] sm:$0xff]
    %v467 = vld [vmem:[#allocation8 + $0x8c0] sm:$0xff]
    %v468 = vld [vmem:[#allocation8 + $0x8c8] sm:$0xff]
    %v469 = vld [vmem:[#allocation8 + $0x8d0] sm:$0xff]
    %v470 = vld [vmem:[#allocation8 + $0x8d8] sm:$0xff]
    %v471 = vld [vmem:[#allocation8 + $0x8e0] sm:$0xff]
    %v472 = vld [vmem:[#allocation8 + $0x8e8] sm:$0xff]
    %v473 = vld [vmem:[#allocation8 + $0x8f0] sm:$0xff]
    %v474 = vld [vmem:[#allocation8 + $0x8f8] sm:$0xff]
    %v475 = vld [vmem:[#allocation8 + $0x900] sm:$0xff]
    %v476 = vld [vmem:[#allocation8 + $0x908] sm:$0xff]
    %v477 = vld [vmem:[#allocation8 + $0x910] sm:$0xff]
    %v478 = vld [vmem:[#allocation8 + $0x918] sm:$0xff]
    %v479 = vld [vmem:[#allocation8 + $0x920] sm:$0xff]
    %v480 = vld [vmem:[#allocation8 + $0x928] sm:$0xff]
    %v481 = vld [vmem:[#allocation8 + $0x930] sm:$0xff]
    %v482 = vld [vmem:[#allocation8 + $0x938] sm:$0xff]
    %v483 = vld [vmem:[#allocation8 + $0x940] sm:$0xff]
    %v484 = vld [vmem:[#allocation8 + $0x948] sm:$0xff]
    %v485 = vld [vmem:[#allocation8 + $0x950] sm:$0xff]
    %v486 = vld [vmem:[#allocation8 + $0x958] sm:$0xff]
    %v487 = vld [vmem:[#allocation8 + $0x960] sm:$0xff]
    %v488 = vld [vmem:[#allocation8 + $0x968] sm:$0xff]
    %v489 = vld [vmem:[#allocation8 + $0x970] sm:$0xff]
    %v490 = vld [vmem:[#allocation8 + $0x978] sm:$0xff]
    %v491 = vld [vmem:[#allocation8 + $0x980] sm:$0xff]
    %v492 = vld [vmem:[#allocation8 + $0x988] sm:$0xff]
    %v493 = vld [vmem:[#allocation8 + $0x990] sm:$0xff]
    %v494 = vld [vmem:[#allocation8 + $0x998] sm:$0xff]
    %v495 = vld [vmem:[#allocation8 + $0x9a0] sm:$0xff]
    %v496 = vld [vmem:[#allocation8 + $0x9a8] sm:$0xff]
    %v497 = vld [vmem:[#allocation8 + $0x9b0] sm:$0xff]
    %v498 = vld [vmem:[#allocation8 + $0x9b8] sm:$0xff]
    %v499 = vld [vmem:[#allocation8 + $0x9c0] sm:$0xff]
    %v500 = vld [vmem:[#allocation8 + $0x9c8] sm:$0xff]
    %v501 = vld [vmem:[#allocation8 + $0x9d0] sm:$0xff]
    %v502 = vld [vmem:[#allocation8 + $0x9d8] sm:$0xff]
    %v503 = vld [vmem:[#allocation8 + $0x9e0] sm:$0xff]
    %v504 = vld [vmem:[#allocation8 + $0x9e8] sm:$0xff]
    %v505 = vld [vmem:[#allocation8 + $0x9f0] sm:$0xff]
    %v506 = vld [vmem:[#allocation8 + $0x9f8] sm:$0xff]
    %v507 = vld [vmem:[#allocation8 + $0xa00] sm:$0xff]
    %v508 = vld [vmem:[#allocation8 + $0xa08] sm:$0xff]
    %v509 = vld [vmem:[#allocation8 + $0xa10] sm:$0xff]
    %v510 = vld [vmem:[#allocation8 + $0xa18] sm:$0xff]
    %v511 = vld [vmem:[#allocation8 + $0xa20] sm:$0xff]
    %v512 = vld [vmem:[#allocation8 + $0xa28] sm:$0xff]
    %v513 = vld [vmem:[#allocation8 + $0xa30] sm:$0xff]
    %v514 = vld [vmem:[#allocation8 + $0xa38] sm:$0xff]
    %v515 = vld [vmem:[#allocation8 + $0xa40] sm:$0xff]
    %v516 = vld [vmem:[#allocation8 + $0xa48] sm:$0xff]
    %v517 = vld [vmem:[#allocation8 + $0xa50] sm:$0xff]
    %v518 = vld [vmem:[#allocation8 + $0xa58] sm:$0xff]
    %v519 = vld [vmem:[#allocation8 + $0xa60] sm:$0xff]
    %v520 = vld [vmem:[#allocation8 + $0xa68] sm:$0xff]
    %v521 = vld [vmem:[#allocation8 + $0xa70] sm:$0xff]
    %v522 = vld [vmem:[#allocation8 + $0xa78] sm:$0xff]
    %v523 = vld [vmem:[#allocation8 + $0xa80] sm:$0xff]
    %v524 = vld [vmem:[#allocation8 + $0xa88] sm:$0xff]
    %v525 = vld [vmem:[#allocation8 + $0xa90] sm:$0xff]
    %v526 = vld [vmem:[#allocation8 + $0xa98] sm:$0xff]
    %v527 = vld [vmem:[#allocation8 + $0xaa0] sm:$0xff]
    %v528 = vld [vmem:[#allocation8 + $0xaa8] sm:$0xff]
    %v529 = vld [vmem:[#allocation8 + $0xab0] sm:$0xff]
    %v530 = vld [vmem:[#allocation8 + $0xab8] sm:$0xff]
    %v531 = vld [vmem:[#allocation8 + $0xac0] sm:$0xff]
    %v532 = vld [vmem:[#allocation8 + $0xac8] sm:$0xff]
    %v533 = vld [vmem:[#allocation8 + $0xad0] sm:$0xff]
    %v534 = vld [vmem:[#allocation8 + $0xad8] sm:$0xff]
    %v535 = vld [vmem:[#allocation8 + $0xae0] sm:$0xff]
    %v536 = vld [vmem:[#allocation8 + $0xae8] sm:$0xff]
    %v537 = vld [vmem:[#allocation8 + $0xaf0] sm:$0xff]
    %v538 = vld [vmem:[#allocation8 + $0xaf8] sm:$0xff]
    %v539 = vld [vmem:[#allocation8 + $0xb00] sm:$0xff]
    %v540 = vld [vmem:[#allocation8 + $0xb08] sm:$0xff]
    %v541 = vld [vmem:[#allocation8 + $0xb10] sm:$0xff]
    %v542 = vld [vmem:[#allocation8 + $0xb18] sm:$0xff]
    %v543 = vld [vmem:[#allocation8 + $0xb20] sm:$0xff]
    %v544 = vld [vmem:[#allocation8 + $0xb28] sm:$0xff]
    %v545 = vld [vmem:[#allocation8 + $0xb30] sm:$0xff]
    %v546 = vld [vmem:[#allocation8 + $0xb38] sm:$0xff]
    %v547 = vld [vmem:[#allocation8 + $0xb40] sm:$0xff]
    %v548 = vld [vmem:[#allocation8 + $0xb48] sm:$0xff]
    %v549 = vld [vmem:[#allocation8 + $0xb50] sm:$0xff]
    %v550 = vld [vmem:[#allocation8 + $0xb58] sm:$0xff]
    %v551 = vld [vmem:[#allocation8 + $0xb60] sm:$0xff]
    %v552 = vld [vmem:[#allocation8 + $0xb68] sm:$0xff]
    %v553 = vld [vmem:[#allocation8 + $0xb70] sm:$0xff]
    %v554 = vld [vmem:[#allocation8 + $0xb78] sm:$0xff]
    %v555 = vld [vmem:[#allocation8 + $0xb80] sm:$0xff]
    %v556 = vld [vmem:[#allocation8 + $0xb88] sm:$0xff]
    %v557 = vld [vmem:[#allocation8 + $0xb90] sm:$0xff]
    %v558 = vld [vmem:[#allocation8 + $0xb98] sm:$0xff]
    %v559 = vld [vmem:[#allocation8 + $0xba0] sm:$0xff]
    %v560 = vld [vmem:[#allocation8 + $0xba8] sm:$0xff]
    %v561 = vld [vmem:[#allocation8 + $0xbb0] sm:$0xff]
    %v562 = vld [vmem:[#allocation8 + $0xbb8] sm:$0xff]
    %v563 = vld [vmem:[#allocation8 + $0xbc0] sm:$0xff]
    %v564 = vld [vmem:[#allocation8 + $0xbc8] sm:$0xff]
    %v565 = vld [vmem:[#allocation8 + $0xbd0] sm:$0xff]
    %v566 = vld [vmem:[#allocation8 + $0xbd8] sm:$0xff]
    %v567 = vld [vmem:[#allocation8 + $0xbe0] sm:$0xff]
    %v568 = vld [vmem:[#allocation8 + $0xbe8] sm:$0xff]
    %v569 = vld [vmem:[#allocation8 + $0xbf0] sm:$0xff]
    %v570 = vld [vmem:[#allocation8 + $0xbf8] sm:$0xff]
    %v571 = vld [vmem:[#allocation8 + $0xc00] sm:$0xff]
    %v572 = vld [vmem:[#allocation8 + $0xc08] sm:$0xff]
    %v573 = vld [vmem:[#allocation8 + $0xc10] sm:$0xff]
    %v574 = vld [vmem:[#allocation8 + $0xc18] sm:$0xff]
    %v575 = vld [vmem:[#allocation8 + $0xc20] sm:$0xff]
    %v576 = vld [vmem:[#allocation8 + $0xc28] sm:$0xff]
    %v577 = vld [vmem:[#allocation8 + $0xc30] sm:$0xff]
    %v578 = vld [vmem:[#allocation8 + $0xc38] sm:$0xff]
    %v579 = vld [vmem:[#allocation8 + $0xc40] sm:$0xff]
    %v580 = vld [vmem:[#allocation8 + $0xc48] sm:$0xff]
    %v581 = vld [vmem:[#allocation8 + $0xc50] sm:$0xff]
    %v582 = vld [vmem:[#allocation8 + $0xc58] sm:$0xff]
    %v583 = vld [vmem:[#allocation8 + $0xc60] sm:$0xff]
    %v584 = vld [vmem:[#allocation8 + $0xc68] sm:$0xff]
    %v585 = vld [vmem:[#allocation8 + $0xc70] sm:$0xff]
    %v586 = vld [vmem:[#allocation8 + $0xc78] sm:$0xff]
    %v587 = vld [vmem:[#allocation8 + $0xc80] sm:$0xff]
    %v588 = vld [vmem:[#allocation8 + $0xc88] sm:$0xff]
    %v589 = vld [vmem:[#allocation8 + $0xc90] sm:$0xff]
    %v590 = vld [vmem:[#allocation8 + $0xc98] sm:$0xff]
    %v591 = vld [vmem:[#allocation8 + $0xca0] sm:$0xff]
    %v592 = vld [vmem:[#allocation8 + $0xca8] sm:$0xff]
    %v593 = vld [vmem:[#allocation8 + $0xcb0] sm:$0xff]
    %v594 = vld [vmem:[#allocation8 + $0xcb8] sm:$0xff]
    %v595 = vld [vmem:[#allocation8 + $0xcc0] sm:$0xff]
    %v596 = vld [vmem:[#allocation8 + $0xcc8] sm:$0xff]
    %v597 = vld [vmem:[#allocation8 + $0xcd0] sm:$0xff]
    %v598 = vld [vmem:[#allocation8 + $0xcd8] sm:$0xff]
    %v599 = vld [vmem:[#allocation8 + $0xce0] sm:$0xff]
    %v600 = vld [vmem:[#allocation8 + $0xce8] sm:$0xff]
    %v601 = vld [vmem:[#allocation8 + $0xcf0] sm:$0xff]
    %v602 = vld [vmem:[#allocation8 + $0xcf8] sm:$0xff]
    %v603 = vld [vmem:[#allocation8 + $0xd00] sm:$0xff]
    %v604 = vld [vmem:[#allocation8 + $0xd08] sm:$0xff]
    %v605 = vld [vmem:[#allocation8 + $0xd10] sm:$0xff]
    %v606 = vld [vmem:[#allocation8 + $0xd18] sm:$0xff]
    %v607 = vld [vmem:[#allocation8 + $0xd20] sm:$0xff]
    %v608 = vld [vmem:[#allocation8 + $0xd28] sm:$0xff]
    %v609 = vld [vmem:[#allocation8 + $0xd30] sm:$0xff]
    %v610 = vld [vmem:[#allocation8 + $0xd38] sm:$0xff]
    %v611 = vld [vmem:[#allocation8 + $0xd40] sm:$0xff]
    %v612 = vld [vmem:[#allocation8 + $0xd48] sm:$0xff]
    %v613 = vld [vmem:[#allocation8 + $0xd50] sm:$0xff]
    %v614 = vld [vmem:[#allocation8 + $0xd58] sm:$0xff]
    %v615 = vld [vmem:[#allocation8 + $0xd60] sm:$0xff]
    %v616 = vld [vmem:[#allocation8 + $0xd68] sm:$0xff]
    %v617 = vld [vmem:[#allocation8 + $0xd70] sm:$0xff]
    %v618 = vld [vmem:[#allocation8 + $0xd78] sm:$0xff]
    %v619 = vld [vmem:[#allocation8 + $0xd80] sm:$0xff]
    %v620 = vld [vmem:[#allocation8 + $0xd88] sm:$0xff]
    %v621 = vld [vmem:[#allocation8 + $0xd90] sm:$0xff]
    %v622 = vld [vmem:[#allocation8 + $0xd98] sm:$0xff]
    %v623 = vld [vmem:[#allocation8 + $0xda0] sm:$0xff]
    %v624 = vld [vmem:[#allocation8 + $0xda8] sm:$0xff]
    %v625 = vld [vmem:[#allocation8 + $0xdb0] sm:$0xff]
    %v626 = vld [vmem:[#allocation8 + $0xdb8] sm:$0xff]
    %v627 = vld [vmem:[#allocation8 + $0xdc0] sm:$0xff]
    %v628 = vld [vmem:[#allocation8 + $0xdc8] sm:$0xff]
    %v629 = vld [vmem:[#allocation8 + $0xdd0] sm:$0xff]
    %v630 = vld [vmem:[#allocation8 + $0xdd8] sm:$0xff]
    %v631 = vld [vmem:[#allocation8 + $0xde0] sm:$0xff]
    %v632 = vld [vmem:[#allocation8 + $0xde8] sm:$0xff]
    %v633 = vld [vmem:[#allocation8 + $0xdf0] sm:$0xff]
    %v634 = vld [vmem:[#allocation8 + $0xdf8] sm:$0xff]
    %v635 = vld [vmem:[#allocation8 + $0xe00] sm:$0xff]
    %v636 = vld [vmem:[#allocation8 + $0xe08] sm:$0xff]
    %v637 = vld [vmem:[#allocation8 + $0xe10] sm:$0xff]
    %v638 = vld [vmem:[#allocation8 + $0xe18] sm:$0xff]
    %v639 = vld [vmem:[#allocation8 + $0xe20] sm:$0xff]
    %v640 = vld [vmem:[#allocation8 + $0xe28] sm:$0xff]
    %v641 = vld [vmem:[#allocation8 + $0xe30] sm:$0xff]
    %v642 = vld [vmem:[#allocation8 + $0xe38] sm:$0xff]
    %v643 = vld [vmem:[#allocation8 + $0xe40] sm:$0xff]
    %v644 = vld [vmem:[#allocation8 + $0xe48] sm:$0xff]
    %v645 = vld [vmem:[#allocation8 + $0xe50] sm:$0xff]
    %v646 = vld [vmem:[#allocation8 + $0xe58] sm:$0xff]
    %v647 = vld [vmem:[#allocation8 + $0xe60] sm:$0xff]
    %v648 = vld [vmem:[#allocation8 + $0xe68] sm:$0xff]
    %v649 = vld [vmem:[#allocation8 + $0xe70] sm:$0xff]
    %v650 = vld [vmem:[#allocation8 + $0xe78] sm:$0xff]
    %v651 = vld [vmem:[#allocation8 + $0xe80] sm:$0xff]
    %v652 = vld [vmem:[#allocation8 + $0xe88] sm:$0xff]
    %v653 = vld [vmem:[#allocation8 + $0xe90] sm:$0xff]
    %v654 = vld [vmem:[#allocation8 + $0xe98] sm:$0xff]
    %v655 = vld [vmem:[#allocation8 + $0xea0] sm:$0xff]
    %v656 = vld [vmem:[#allocation8 + $0xea8] sm:$0xff]
    %v657 = vld [vmem:[#allocation8 + $0xeb0] sm:$0xff]
    %v658 = vld [vmem:[#allocation8 + $0xeb8] sm:$0xff]
    %v659 = vld [vmem:[#allocation8 + $0xec0] sm:$0xff]
    %v660 = vld [vmem:[#allocation8 + $0xec8] sm:$0xff]
    %v661 = vld [vmem:[#allocation8 + $0xed0] sm:$0xff]
    %v662 = vld [vmem:[#allocation8 + $0xed8] sm:$0xff]
    %v663 = vld [vmem:[#allocation8 + $0xee0] sm:$0xff]
    %v664 = vld [vmem:[#allocation8 + $0xee8] sm:$0xff]
    %v665 = vld [vmem:[#allocation8 + $0xef0] sm:$0xff]
    %v666 = vld [vmem:[#allocation8 + $0xef8] sm:$0xff]
    %v667 = vld [vmem:[#allocation8 + $0xf00] sm:$0xff]
    %v668 = vld [vmem:[#allocation8 + $0xf08] sm:$0xff]
    %v669 = vld [vmem:[#allocation8 + $0xf10] sm:$0xff]
    %v670 = vld [vmem:[#allocation8 + $0xf18] sm:$0xff]
    %v671 = vld [vmem:[#allocation8 + $0xf20] sm:$0xff]
    %v672 = vld [vmem:[#allocation8 + $0xf28] sm:$0xff]
    %v673 = vld [vmem:[#allocation8 + $0xf30] sm:$0xff]
    %v674 = vld [vmem:[#allocation8 + $0xf38] sm:$0xff]
    %v675 = vld [vmem:[#allocation8 + $0xf40] sm:$0xff]
    %v676 = vld [vmem:[#allocation8 + $0xf48] sm:$0xff]
    %v677 = vld [vmem:[#allocation8 + $0xf50] sm:$0xff]
    %v678 = vld [vmem:[#allocation8 + $0xf58] sm:$0xff]
    %v679 = vld [vmem:[#allocation8 + $0xf60] sm:$0xff]
    %v680 = vld [vmem:[#allocation8 + $0xf68] sm:$0xff]
    %v681 = vld [vmem:[#allocation8 + $0xf70] sm:$0xff]
    %v682 = vld [vmem:[#allocation8 + $0xf78] sm:$0xff]
    %v683 = vld [vmem:[#allocation8 + $0xf80] sm:$0xff]
    %v684 = vld [vmem:[#allocation8 + $0xf88] sm:$0xff]
    %v685 = vld [vmem:[#allocation8 + $0xf90] sm:$0xff]
    %v686 = vld [vmem:[#allocation8 + $0xf98] sm:$0xff]
    %v687 = vld [vmem:[#allocation8 + $0xfa0] sm:$0xff]
    %v688 = vld [vmem:[#allocation8 + $0xfa8] sm:$0xff]
    %v689 = vld [vmem:[#allocation8 + $0xfb0] sm:$0xff]
    %v690 = vld [vmem:[#allocation8 + $0xfb8] sm:$0xff]
    %v691 = vld [vmem:[#allocation8 + $0xfc0] sm:$0xff]
    %v692 = vld [vmem:[#allocation8 + $0xfc8] sm:$0xff]
    %v693 = vld [vmem:[#allocation8 + $0xfd0] sm:$0xff]
    %v694 = vld [vmem:[#allocation8 + $0xfd8] sm:$0xff]
    %v695 = vld [vmem:[#allocation8 + $0xfe0] sm:$0xff]
    %v696 = vld [vmem:[#allocation8 + $0xfe8] sm:$0xff]
    %v697 = vld [vmem:[#allocation8 + $0xff0] sm:$0xff]
    %v698 = vld [vmem:[#allocation8 + $0xff8] sm:$0xff]
    %v699 = vld [vmem:[#allocation8 + $0x1000] sm:$0xff]
    %v700 = vld [vmem:[#allocation8 + $0x1008] sm:$0xff]
    %v701 = vld [vmem:[#allocation8 + $0x1010] sm:$0xff]
    %v702 = vld [vmem:[#allocation8 + $0x1018] sm:$0xff]
    %v703 = vld [vmem:[#allocation8 + $0x1020] sm:$0xff]
    %v704 = vld [vmem:[#allocation8 + $0x1028] sm:$0xff]
    %v705 = vld [vmem:[#allocation8 + $0x1030] sm:$0xff]
    %v706 = vld [vmem:[#allocation8 + $0x1038] sm:$0xff]
    %v707 = vld [vmem:[#allocation8 + $0x1040] sm:$0xff]
    %v708 = vld [vmem:[#allocation8 + $0x1048] sm:$0xff]
    %v709 = vld [vmem:[#allocation8 + $0x1050] sm:$0xff]
    %v710 = vld [vmem:[#allocation8 + $0x1058] sm:$0xff]
    %v711 = vld [vmem:[#allocation8 + $0x1060] sm:$0xff]
    %v712 = vld [vmem:[#allocation8 + $0x1068] sm:$0xff]
    %v713 = vld [vmem:[#allocation8 + $0x1070] sm:$0xff]
    %v714 = vld [vmem:[#allocation8 + $0x1078] sm:$0xff]
    %v715 = vld [vmem:[#allocation8 + $0x1080] sm:$0xff]
    %v716 = vld [vmem:[#allocation8 + $0x1088] sm:$0xff]
    %v717 = vld [vmem:[#allocation8 + $0x1090] sm:$0xff]
    %v718 = vld [vmem:[#allocation8 + $0x1098] sm:$0xff]
    %v719 = vld [vmem:[#allocation8 + $0x10a0] sm:$0xff]
    %v720 = vld [vmem:[#allocation8 + $0x10a8] sm:$0xff]
    %v721 = vld [vmem:[#allocation8 + $0x10b0] sm:$0xff]
    %v722 = vld [vmem:[#allocation8 + $0x10b8] sm:$0xff]
    %v723 = vld [vmem:[#allocation8 + $0x10c0] sm:$0xff]
    %v724 = vld [vmem:[#allocation8 + $0x10c8] sm:$0xff]
    %v725 = vld [vmem:[#allocation8 + $0x10d0] sm:$0xff]
    %v726 = vld [vmem:[#allocation8 + $0x10d8] sm:$0xff]
    %v727 = vld [vmem:[#allocation8 + $0x10e0] sm:$0xff]
    %v728 = vld [vmem:[#allocation8 + $0x10e8] sm:$0xff]
    %v729 = vld [vmem:[#allocation8 + $0x10f0] sm:$0xff]
    %v730 = vld [vmem:[#allocation8 + $0x10f8] sm:$0xff]
    %v731 = vld [vmem:[#allocation8 + $0x1100] sm:$0xff]
    %v732 = vld [vmem:[#allocation8 + $0x1108] sm:$0xff]
    %v733 = vld [vmem:[#allocation8 + $0x1110] sm:$0xff]
    %v734 = vld [vmem:[#allocation8 + $0x1118] sm:$0xff]
    %v735 = vld [vmem:[#allocation8 + $0x1120] sm:$0xff]
    %v736 = vld [vmem:[#allocation8 + $0x1128] sm:$0xff]
    %v737 = vld [vmem:[#allocation8 + $0x1130] sm:$0xff]
    %v738 = vld [vmem:[#allocation8 + $0x1138] sm:$0xff]
    %v739 = vld [vmem:[#allocation8 + $0x1140] sm:$0xff]
    %v740 = vld [vmem:[#allocation8 + $0x1148] sm:$0xff]
    %v741 = vld [vmem:[#allocation8 + $0x1150] sm:$0xff]
    %v742 = vld [vmem:[#allocation8 + $0x1158] sm:$0xff]
    %v743 = vld [vmem:[#allocation8 + $0x1160] sm:$0xff]
    %v744 = vld [vmem:[#allocation8 + $0x1168] sm:$0xff]
    %v745 = vld [vmem:[#allocation8 + $0x1170] sm:$0xff]
    %v746 = vld [vmem:[#allocation8 + $0x1178] sm:$0xff]
    %v747 = vld [vmem:[#allocation8 + $0x1180] sm:$0xff]
    %v748 = vld [vmem:[#allocation8 + $0x1188] sm:$0xff]
    %v749 = vld [vmem:[#allocation8 + $0x1190] sm:$0xff]
    %v750 = vld [vmem:[#allocation8 + $0x1198] sm:$0xff]
    %v751 = vld [vmem:[#allocation8 + $0x11a0] sm:$0xff]
    %v752 = vld [vmem:[#allocation8 + $0x11a8] sm:$0xff]
    %v753 = vld [vmem:[#allocation8 + $0x11b0] sm:$0xff]
    %v754 = vld [vmem:[#allocation8 + $0x11b8] sm:$0xff]
    %v755 = vld [vmem:[#allocation8 + $0x11c0] sm:$0xff]
    %v756 = vld [vmem:[#allocation8 + $0x11c8] sm:$0xff]
    %v757 = vld [vmem:[#allocation8 + $0x11d0] sm:$0xff]
    %v758 = vld [vmem:[#allocation8 + $0x11d8] sm:$0xff]
    %v759 = vld [vmem:[#allocation8 + $0x11e0] sm:$0xff]
    %v760 = vld [vmem:[#allocation8 + $0x11e8] sm:$0xff]
    %v761 = vld [vmem:[#allocation8 + $0x11f0] sm:$0xff]
    %v762 = vld [vmem:[#allocation8 + $0x11f8] sm:$0xff]
    %v763 = vld [vmem:[#allocation8 + $0x1200] sm:$0xff]
    %v764 = vld [vmem:[#allocation8 + $0x1208] sm:$0xff]
    %v765 = vld [vmem:[#allocation8 + $0x1210] sm:$0xff]
    %v766 = vld [vmem:[#allocation8 + $0x1218] sm:$0xff]
    %v767 = vld [vmem:[#allocation8 + $0x1220] sm:$0xff]
    %v768 = vld [vmem:[#allocation8 + $0x1228] sm:$0xff]
    %v769 = vld [vmem:[#allocation8 + $0x1230] sm:$0xff]
    %v770 = vld [vmem:[#allocation8 + $0x1238] sm:$0xff]
    %v771 = vld [vmem:[#allocation8 + $0x1240] sm:$0xff]
    %v772 = vld [vmem:[#allocation8 + $0x1248] sm:$0xff]
    %v773 = vld [vmem:[#allocation8 + $0x1250] sm:$0xff]
    %v774 = vld [vmem:[#allocation8 + $0x1258] sm:$0xff]
    %v775 = vld [vmem:[#allocation8 + $0x1260] sm:$0xff]
    %v776 = vld [vmem:[#allocation8 + $0x1268] sm:$0xff]
    %v777 = vld [vmem:[#allocation8 + $0x1270] sm:$0xff]
    %v778 = vld [vmem:[#allocation8 + $0x1278] sm:$0xff]
    %v779 = vld [vmem:[#allocation8 + $0x1280] sm:$0xff]
    %v780 = vld [vmem:[#allocation8 + $0x1288] sm:$0xff]
    %v781 = vld [vmem:[#allocation8 + $0x1290] sm:$0xff]
    %v782 = vld [vmem:[#allocation8 + $0x1298] sm:$0xff]
    %v783 = vld [vmem:[#allocation8 + $0x12a0] sm:$0xff]
    %v784 = vld [vmem:[#allocation8 + $0x12a8] sm:$0xff]
    %v785 = vld [vmem:[#allocation8 + $0x12b0] sm:$0xff]
    %v786 = vld [vmem:[#allocation8 + $0x12b8] sm:$0xff]
    %v787 = vld [vmem:[#allocation8 + $0x12c0] sm:$0xff]
    %v788 = vld [vmem:[#allocation8 + $0x12c8] sm:$0xff]
    %v789 = vld [vmem:[#allocation8 + $0x12d0] sm:$0xff]
    %v790 = vld [vmem:[#allocation8 + $0x12d8] sm:$0xff]
    %v791 = vld [vmem:[#allocation8 + $0x12e0] sm:$0xff]
    %v792 = vld [vmem:[#allocation8 + $0x12e8] sm:$0xff]
    %v793 = vld [vmem:[#allocation8 + $0x12f0] sm:$0xff]
    %v794 = vld [vmem:[#allocation8 + $0x12f8] sm:$0xff]
    %v795 = vld [vmem:[#allocation8 + $0x1300] sm:$0xff]
    %v796 = vld [vmem:[#allocation8 + $0x1308] sm:$0xff]
    %v797 = vld [vmem:[#allocation8 + $0x1310] sm:$0xff]
    %v798 = vld [vmem:[#allocation8 + $0x1318] sm:$0xff]
    %v799 = vld [vmem:[#allocation8 + $0x1320] sm:$0xff]
    %v800 = vld [vmem:[#allocation8 + $0x1328] sm:$0xff]
    %v801 = vld [vmem:[#allocation8 + $0x1330] sm:$0xff]
    %v802 = vld [vmem:[#allocation8 + $0x1338] sm:$0xff]
    %v803 = vld [vmem:[#allocation8 + $0x1340] sm:$0xff]
    %v804 = vld [vmem:[#allocation8 + $0x1348] sm:$0xff]
    %v805 = vld [vmem:[#allocation8 + $0x1350] sm:$0xff]
    %v806 = vld [vmem:[#allocation8 + $0x1358] sm:$0xff]
    %v807 = vld [vmem:[#allocation8 + $0x1360] sm:$0xff]
    %v808 = vld [vmem:[#allocation8 + $0x1368] sm:$0xff]
    %v809 = vld [vmem:[#allocation8 + $0x1370] sm:$0xff]
    %v810 = vld [vmem:[#allocation8 + $0x1378] sm:$0xff]
    %v811 = vld [vmem:[#allocation8 + $0x1380] sm:$0xff]
    %v812 = vld [vmem:[#allocation8 + $0x1388] sm:$0xff]
    %v813 = vld [vmem:[#allocation8 + $0x1390] sm:$0xff]
    %v814 = vld [vmem:[#allocation8 + $0x1398] sm:$0xff]
    %v815 = vld [vmem:[#allocation8 + $0x13a0] sm:$0xff]
    %v816 = vld [vmem:[#allocation8 + $0x13a8] sm:$0xff]
    %v817 = vld [vmem:[#allocation8 + $0x13b0] sm:$0xff]
    %v818 = vld [vmem:[#allocation8 + $0x13b8] sm:$0xff]
    %v819 = vld [vmem:[#allocation8 + $0x13c0] sm:$0xff]
    %v820 = vld [vmem:[#allocation8 + $0x13c8] sm:$0xff]
    %v821 = vld [vmem:[#allocation8 + $0x13d0] sm:$0xff]
    %v822 = vld [vmem:[#allocation8 + $0x13d8] sm:$0xff]
    %v823 = vld [vmem:[#allocation8 + $0x13e0] sm:$0xff]
    %v824 = vld [vmem:[#allocation8 + $0x13e8] sm:$0xff]
    %v825 = vld [vmem:[#allocation8 + $0x13f0] sm:$0xff]
    %v826 = vld [vmem:[#allocation8 + $0x13f8] sm:$0xff]
    %v827 = vld [vmem:[#allocation8 + $0x1400] sm:$0xff]
    %v828 = vld [vmem:[#allocation8 + $0x1408] sm:$0xff]
    %v829 = vld [vmem:[#allocation8 + $0x1410] sm:$0xff]
    %v830 = vld [vmem:[#allocation8 + $0x1418] sm:$0xff]
    %v831 = vld [vmem:[#allocation8 + $0x1420] sm:$0xff]
    %v832 = vld [vmem:[#allocation8 + $0x1428] sm:$0xff]
    %v833 = vld [vmem:[#allocation8 + $0x1430] sm:$0xff]
    %v834 = vld [vmem:[#allocation8 + $0x1438] sm:$0xff]
    %v835 = vld [vmem:[#allocation8 + $0x1440] sm:$0xff]
    %v836 = vld [vmem:[#allocation8 + $0x1448] sm:$0xff]
    %v837 = vld [vmem:[#allocation8 + $0x1450] sm:$0xff]
    %v838 = vld [vmem:[#allocation8 + $0x1458] sm:$0xff]
    %v839 = vld [vmem:[#allocation8 + $0x1460] sm:$0xff]
    %v840 = vld [vmem:[#allocation8 + $0x1468] sm:$0xff]
    %v841 = vld [vmem:[#allocation8 + $0x1470] sm:$0xff]
    %v842 = vld [vmem:[#allocation8 + $0x1478] sm:$0xff]
    %v843 = vld [vmem:[#allocation8 + $0x1480] sm:$0xff]
    %v844 = vld [vmem:[#allocation8 + $0x1488] sm:$0xff]
    %v845 = vld [vmem:[#allocation8 + $0x1490] sm:$0xff]
    %v846 = vld [vmem:[#allocation8 + $0x1498] sm:$0xff]
    %v847 = vld [vmem:[#allocation8 + $0x14a0] sm:$0xff]
    %v848 = vld [vmem:[#allocation8 + $0x14a8] sm:$0xff]
    %v849 = vld [vmem:[#allocation8 + $0x14b0] sm:$0xff]
    %v850 = vld [vmem:[#allocation8 + $0x14b8] sm:$0xff]
    %v851 = vld [vmem:[#allocation8 + $0x14c0] sm:$0xff]
    %v852 = vld [vmem:[#allocation8 + $0x14c8] sm:$0xff]
    %v853 = vld [vmem:[#allocation8 + $0x14d0] sm:$0xff]
    %v854 = vld [vmem:[#allocation8 + $0x14d8] sm:$0xff]
    %v855 = vld [vmem:[#allocation8 + $0x14e0] sm:$0xff]
    %v856 = vld [vmem:[#allocation8 + $0x14e8] sm:$0xff]
    %v857 = vld [vmem:[#allocation8 + $0x14f0] sm:$0xff]
    %v858 = vld [vmem:[#allocation8 + $0x14f8] sm:$0xff]
    %v859 = vld [vmem:[#allocation8 + $0x1500] sm:$0xff]
    %v860 = vld [vmem:[#allocation8 + $0x1508] sm:$0xff]
    %v861 = vld [vmem:[#allocation8 + $0x1510] sm:$0xff]
    %v862 = vld [vmem:[#allocation8 + $0x1518] sm:$0xff]
    %v863 = vld [vmem:[#allocation8 + $0x1520] sm:$0xff]
    %v864 = vld [vmem:[#allocation8 + $0x1528] sm:$0xff]
    %v865 = vld [vmem:[#allocation8 + $0x1530] sm:$0xff]
    %v866 = vld [vmem:[#allocation8 + $0x1538] sm:$0xff]
    %v867 = vld [vmem:[#allocation8 + $0x1540] sm:$0xff]
    %v868 = vld [vmem:[#allocation8 + $0x1548] sm:$0xff]
    %v869 = vld [vmem:[#allocation8 + $0x1550] sm:$0xff]
    %v870 = vld [vmem:[#allocation8 + $0x1558] sm:$0xff]
    %v871 = vld [vmem:[#allocation8 + $0x1560] sm:$0xff]
    %v872 = vld [vmem:[#allocation8 + $0x1568] sm:$0xff]
    %v873 = vld [vmem:[#allocation8 + $0x1570] sm:$0xff]
    %v874 = vld [vmem:[#allocation8 + $0x1578] sm:$0xff]
    %v875 = vld [vmem:[#allocation8 + $0x1580] sm:$0xff]
    %v876 = vld [vmem:[#allocation8 + $0x1588] sm:$0xff]
    %v877 = vld [vmem:[#allocation8 + $0x1590] sm:$0xff]
    %v878 = vld [vmem:[#allocation8 + $0x1598] sm:$0xff]
    %v879 = vld [vmem:[#allocation8 + $0x15a0] sm:$0xff]
    %v880 = vld [vmem:[#allocation8 + $0x15a8] sm:$0xff]
    %v881 = vld [vmem:[#allocation8 + $0x15b0] sm:$0xff]
    %v882 = vld [vmem:[#allocation8 + $0x15b8] sm:$0xff]
    %v883 = vld [vmem:[#allocation8 + $0x15c0] sm:$0xff]
    %v884 = vld [vmem:[#allocation8 + $0x15c8] sm:$0xff]
    %v885 = vld [vmem:[#allocation8 + $0x15d0] sm:$0xff]
    %v886 = vld [vmem:[#allocation8 + $0x15d8] sm:$0xff]
    %v887 = vld [vmem:[#allocation10] sm:$0xf]
    %v889 = vperm.slane %v887, 0
    %v890 = vperm.slane %v887, 1
    %v891 = vperm.slane %v887, 2
    %v892 = vperm.slane %v887, 3
    %v908 = vunpack.c.l.b16 %v176
    %v909 = vunpack.c.h.b16 %v176
    %v910 = vunpack.c.l.b16 %v177
    %v911 = vunpack.c.h.b16 %v177
    %v912 = vunpack.c.l.b16 %v178
    %v913 = vunpack.c.h.b16 %v178
    %v914 = vunpack.c.l.b16 %v179
    %v915 = vunpack.c.h.b16 %v179
    %v916 = vunpack.c.l.b16 %v180
    %v917 = vunpack.c.h.b16 %v180
    %v918 = vunpack.c.l.b16 %v181
    %v919 = vunpack.c.h.b16 %v181
    %v920 = vunpack.c.l.b16 %v182
    %v921 = vunpack.c.h.b16 %v182
    %v922 = vunpack.c.l.b16 %v183
    %v923 = vunpack.c.h.b16 %v183
    %v924 = vunpack.c.l.b16 %v184
    %v925 = vunpack.c.h.b16 %v184
    %v926 = vunpack.c.l.b16 %v185
    %v927 = vunpack.c.h.b16 %v185
    %v928 = vunpack.c.l.b16 %v186
    %v929 = vunpack.c.h.b16 %v186
    %v930 = vpack.c.b16 %v908, %v908
    %v931 = vpack.c.b16 %v909, %v909
    %v932 = vpack.c.b16 %v910, %v910
    %v933 = vpack.c.b16 %v911, %v911
    %v934 = vpack.c.b16 %v912, %v912
    %v935 = vpack.c.b16 %v913, %v913
    %v936 = vpack.c.b16 %v914, %v914
    %v937 = vpack.c.b16 %v915, %v915
    %v938 = vpack.c.b16 %v916, %v916
    %v939 = vpack.c.b16 %v917, %v917
    %v940 = vpack.c.b16 %v918, %v918
    %v941 = vpack.c.b16 %v919, %v919
    %v942 = vpack.c.b16 %v920, %v920
    %v943 = vpack.c.b16 %v921, %v921
    %v944 = vpack.c.b16 %v922, %v922
    %v945 = vpack.c.b16 %v923, %v923
    %v946 = vpack.c.b16 %v924, %v924
    %v947 = vpack.c.b16 %v925, %v925
    %v948 = vpack.c.b16 %v926, %v926
    %v949 = vpack.c.b16 %v927, %v927
    %v950 = vpack.c.b16 %v928, %v928
    %v951 = vpack.c.b16 %v929, %v929
    %v1673 = vunpack.c.l.b16 %v187
    %v1674 = vunpack.c.h.b16 %v187
    %v1675 = vunpack.c.l.b16 %v188
    %v1676 = vunpack.c.h.b16 %v188
    %v1677 = vunpack.c.l.b16 %v189
    %v1678 = vunpack.c.h.b16 %v189
    %v1679 = vunpack.c.l.b16 %v190
    %v1680 = vunpack.c.h.b16 %v190
    %v1681 = vunpack.c.l.b16 %v191
    %v1682 = vunpack.c.h.b16 %v191
    %v1683 = vunpack.c.l.b16 %v192
    %v1684 = vunpack.c.h.b16 %v192
    %v1685 = vunpack.c.l.b16 %v193
    %v1686 = vunpack.c.h.b16 %v193
    %v1687 = vunpack.c.l.b16 %v194
    %v1688 = vunpack.c.h.b16 %v194
    %v1689 = vunpack.c.l.b16 %v195
    %v1690 = vunpack.c.h.b16 %v195
    %v1691 = vunpack.c.l.b16 %v196
    %v1692 = vunpack.c.h.b16 %v196
    %v1693 = vunpack.c.l.b16 %v197
    %v1694 = vunpack.c.h.b16 %v197
    %v1695 = vunpack.c.l.b16 %v198
    %v1696 = vunpack.c.h.b16 %v198
    %v1697 = vunpack.c.l.b16 %v199
    %v1698 = vunpack.c.h.b16 %v199
    %v1699 = vunpack.c.l.b16 %v200
    %v1700 = vunpack.c.h.b16 %v200
    %v1701 = vunpack.c.l.b16 %v201
    %v1702 = vunpack.c.h.b16 %v201
    %v1703 = vunpack.c.l.b16 %v202
    %v1704 = vunpack.c.h.b16 %v202
    %v1705 = vunpack.c.l.b16 %v203
    %v1706 = vunpack.c.h.b16 %v203
    %v1707 = vunpack.c.l.b16 %v204
    %v1708 = vunpack.c.h.b16 %v204
    %v1709 = vunpack.c.l.b16 %v205
    %v1710 = vunpack.c.h.b16 %v205
    %v1711 = vunpack.c.l.b16 %v206
    %v1712 = vunpack.c.h.b16 %v206
    %v1713 = vunpack.c.l.b16 %v207
    %v1714 = vunpack.c.h.b16 %v207
    %v1715 = vunpack.c.l.b16 %v208
    %v1716 = vunpack.c.h.b16 %v208
    %v1717 = vunpack.c.l.b16 %v209
    %v1718 = vunpack.c.h.b16 %v209
    %v1719 = vunpack.c.l.b16 %v210
    %v1720 = vunpack.c.h.b16 %v210
    %v1721 = vunpack.c.l.b16 %v211
    %v1722 = vunpack.c.h.b16 %v211
    %v1723 = vunpack.c.l.b16 %v212
    %v1724 = vunpack.c.h.b16 %v212
    %v1725 = vunpack.c.l.b16 %v213
    %v1726 = vunpack.c.h.b16 %v213
    %v1727 = vunpack.c.l.b16 %v214
    %v1728 = vunpack.c.h.b16 %v214
    %v1729 = vunpack.c.l.b16 %v215
    %v1730 = vunpack.c.h.b16 %v215
    %v1731 = vunpack.c.l.b16 %v216
    %v1732 = vunpack.c.h.b16 %v216
    %v1733 = vunpack.c.l.b16 %v217
    %v1734 = vunpack.c.h.b16 %v217
    %v1735 = vunpack.c.l.b16 %v218
    %v1736 = vunpack.c.h.b16 %v218
    %v1737 = vunpack.c.l.b16 %v219
    %v1738 = vunpack.c.h.b16 %v219
    %v1739 = vunpack.c.l.b16 %v220
    %v1740 = vunpack.c.h.b16 %v220
    %v1741 = vunpack.c.l.b16 %v221
    %v1742 = vunpack.c.h.b16 %v221
    %v1743 = vunpack.c.l.b16 %v222
    %v1744 = vunpack.c.h.b16 %v222
    %v1745 = vunpack.c.l.b16 %v223
    %v1746 = vunpack.c.h.b16 %v223
    %v1747 = vunpack.c.l.b16 %v224
    %v1748 = vunpack.c.h.b16 %v224
    %v1749 = vunpack.c.l.b16 %v225
    %v1750 = vunpack.c.h.b16 %v225
    %v1751 = vunpack.c.l.b16 %v226
    %v1752 = vunpack.c.h.b16 %v226
    %v1753 = vunpack.c.l.b16 %v227
    %v1754 = vunpack.c.h.b16 %v227
    %v1755 = vunpack.c.l.b16 %v228
    %v1756 = vunpack.c.h.b16 %v228
    %v1757 = vunpack.c.l.b16 %v229
    %v1758 = vunpack.c.h.b16 %v229
    %v1759 = vunpack.c.l.b16 %v230
    %v1760 = vunpack.c.h.b16 %v230
    %v1761 = vunpack.c.l.b16 %v231
    %v1762 = vunpack.c.h.b16 %v231
    %v1763 = vunpack.c.l.b16 %v232
    %v1764 = vunpack.c.h.b16 %v232
    %v1765 = vunpack.c.l.b16 %v233
    %v1766 = vunpack.c.h.b16 %v233
    %v1767 = vunpack.c.l.b16 %v234
    %v1768 = vunpack.c.h.b16 %v234
    %v1769 = vunpack.c.l.b16 %v235
    %v1770 = vunpack.c.h.b16 %v235
    %v1771 = vunpack.c.l.b16 %v236
    %v1772 = vunpack.c.h.b16 %v236
    %v1773 = vunpack.c.l.b16 %v237
    %v1774 = vunpack.c.h.b16 %v237
    %v1775 = vunpack.c.l.b16 %v238
    %v1776 = vunpack.c.h.b16 %v238
    %v1777 = vunpack.c.l.b16 %v239
    %v1778 = vunpack.c.h.b16 %v239
    %v1779 = vunpack.c.l.b16 %v240
    %v1780 = vunpack.c.h.b16 %v240
    %v1781 = vunpack.c.l.b16 %v241
    %v1782 = vunpack.c.h.b16 %v241
    %v1783 = vunpack.c.l.b16 %v242
    %v1784 = vunpack.c.h.b16 %v242
    %v1785 = vunpack.c.l.b16 %v243
    %v1786 = vunpack.c.h.b16 %v243
    %v1787 = vunpack.c.l.b16 %v244
    %v1788 = vunpack.c.h.b16 %v244
    %v1789 = vunpack.c.l.b16 %v245
    %v1790 = vunpack.c.h.b16 %v245
    %v1791 = vunpack.c.l.b16 %v246
    %v1792 = vunpack.c.h.b16 %v246
    %v1793 = vunpack.c.l.b16 %v247
    %v1794 = vunpack.c.h.b16 %v247
    %v1795 = vunpack.c.l.b16 %v248
    %v1796 = vunpack.c.h.b16 %v248
    %v1797 = vunpack.c.l.b16 %v249
    %v1798 = vunpack.c.h.b16 %v249
    %v1799 = vunpack.c.l.b16 %v250
    %v1800 = vunpack.c.h.b16 %v250
    %v1801 = vunpack.c.l.b16 %v251
    %v1802 = vunpack.c.h.b16 %v251
    %v1803 = vunpack.c.l.b16 %v252
    %v1804 = vunpack.c.h.b16 %v252
    %v1805 = vunpack.c.l.b16 %v253
    %v1806 = vunpack.c.h.b16 %v253
    %v1807 = vunpack.c.l.b16 %v254
    %v1808 = vunpack.c.h.b16 %v254
    %v1809 = vunpack.c.l.b16 %v255
    %v1810 = vunpack.c.h.b16 %v255
    %v1811 = vunpack.c.l.b16 %v256
    %v1812 = vunpack.c.h.b16 %v256
    %v1813 = vunpack.c.l.b16 %v257
    %v1814 = vunpack.c.h.b16 %v257
    %v1815 = vunpack.c.l.b16 %v258
    %v1816 = vunpack.c.h.b16 %v258
    %v1817 = vunpack.c.l.b16 %v259
    %v1818 = vunpack.c.h.b16 %v259
    %v1819 = vunpack.c.l.b16 %v260
    %v1820 = vunpack.c.h.b16 %v260
    %v1821 = vunpack.c.l.b16 %v261
    %v1822 = vunpack.c.h.b16 %v261
    %v1823 = vunpack.c.l.b16 %v262
    %v1824 = vunpack.c.h.b16 %v262
    %v1825 = vunpack.c.l.b16 %v263
    %v1826 = vunpack.c.h.b16 %v263
    %v1827 = vunpack.c.l.b16 %v264
    %v1828 = vunpack.c.h.b16 %v264
    %v1829 = vunpack.c.l.b16 %v265
    %v1830 = vunpack.c.h.b16 %v265
    %v1831 = vunpack.c.l.b16 %v266
    %v1832 = vunpack.c.h.b16 %v266
    %v1833 = vunpack.c.l.b16 %v267
    %v1834 = vunpack.c.h.b16 %v267
    %v1835 = vunpack.c.l.b16 %v268
    %v1836 = vunpack.c.h.b16 %v268
    %v1837 = vunpack.c.l.b16 %v269
    %v1838 = vunpack.c.h.b16 %v269
    %v1839 = vunpack.c.l.b16 %v270
    %v1840 = vunpack.c.h.b16 %v270
    %v1841 = vunpack.c.l.b16 %v271
    %v1842 = vunpack.c.h.b16 %v271
    %v1843 = vunpack.c.l.b16 %v272
    %v1844 = vunpack.c.h.b16 %v272
    %v1845 = vunpack.c.l.b16 %v273
    %v1846 = vunpack.c.h.b16 %v273
    %v1847 = vunpack.c.l.b16 %v274
    %v1848 = vunpack.c.h.b16 %v274
    %v1849 = vunpack.c.l.b16 %v275
    %v1850 = vunpack.c.h.b16 %v275
    %v1851 = vunpack.c.l.b16 %v276
    %v1852 = vunpack.c.h.b16 %v276
    %v1853 = vunpack.c.l.b16 %v277
    %v1854 = vunpack.c.h.b16 %v277
    %v1855 = vunpack.c.l.b16 %v278
    %v1856 = vunpack.c.h.b16 %v278
    %v1857 = vunpack.c.l.b16 %v279
    %v1858 = vunpack.c.h.b16 %v279
    %v1859 = vunpack.c.l.b16 %v280
    %v1860 = vunpack.c.h.b16 %v280
    %v1861 = vunpack.c.l.b16 %v281
    %v1862 = vunpack.c.h.b16 %v281
    %v1863 = vunpack.c.l.b16 %v282
    %v1864 = vunpack.c.h.b16 %v282
    %v1865 = vunpack.c.l.b16 %v283
    %v1866 = vunpack.c.h.b16 %v283
    %v1867 = vunpack.c.l.b16 %v284
    %v1868 = vunpack.c.h.b16 %v284
    %v1869 = vunpack.c.l.b16 %v285
    %v1870 = vunpack.c.h.b16 %v285
    %v1871 = vunpack.c.l.b16 %v286
    %v1872 = vunpack.c.h.b16 %v286
    %v1873 = vunpack.c.l.b16 %v287
    %v1874 = vunpack.c.h.b16 %v287
    %v1875 = vunpack.c.l.b16 %v288
    %v1876 = vunpack.c.h.b16 %v288
    %v1877 = vunpack.c.l.b16 %v289
    %v1878 = vunpack.c.h.b16 %v289
    %v1879 = vunpack.c.l.b16 %v290
    %v1880 = vunpack.c.h.b16 %v290
    %v1881 = vunpack.c.l.b16 %v291
    %v1882 = vunpack.c.h.b16 %v291
    %v1883 = vunpack.c.l.b16 %v292
    %v1884 = vunpack.c.h.b16 %v292
    %v1885 = vunpack.c.l.b16 %v293
    %v1886 = vunpack.c.h.b16 %v293
    %v1887 = vunpack.c.l.b16 %v294
    %v1888 = vunpack.c.h.b16 %v294
    %v1889 = vunpack.c.l.b16 %v295
    %v1890 = vunpack.c.h.b16 %v295
    %v1891 = vunpack.c.l.b16 %v296
    %v1892 = vunpack.c.h.b16 %v296
    %v1893 = vunpack.c.l.b16 %v297
    %v1894 = vunpack.c.h.b16 %v297
    %v1895 = vunpack.c.l.b16 %v298
    %v1896 = vunpack.c.h.b16 %v298
    %v1897 = vunpack.c.l.b16 %v299
    %v1898 = vunpack.c.h.b16 %v299
    %v1899 = vunpack.c.l.b16 %v300
    %v1900 = vunpack.c.h.b16 %v300
    %v1901 = vunpack.c.l.b16 %v301
    %v1902 = vunpack.c.h.b16 %v301
    %v1903 = vunpack.c.l.b16 %v302
    %v1904 = vunpack.c.h.b16 %v302
    %v1905 = vunpack.c.l.b16 %v303
    %v1906 = vunpack.c.h.b16 %v303
    %v1907 = vunpack.c.l.b16 %v304
    %v1908 = vunpack.c.h.b16 %v304
    %v1909 = vunpack.c.l.b16 %v305
    %v1910 = vunpack.c.h.b16 %v305
    %v1911 = vunpack.c.l.b16 %v306
    %v1912 = vunpack.c.h.b16 %v306
    %v1913 = vunpack.c.l.b16 %v307
    %v1914 = vunpack.c.h.b16 %v307
    %v1915 = vunpack.c.l.b16 %v308
    %v1916 = vunpack.c.h.b16 %v308
    %v1917 = vunpack.c.l.b16 %v309
    %v1918 = vunpack.c.h.b16 %v309
    %v1919 = vunpack.c.l.b16 %v310
    %v1920 = vunpack.c.h.b16 %v310
    %v1921 = vunpack.c.l.b16 %v311
    %v1922 = vunpack.c.h.b16 %v311
    %v1923 = vunpack.c.l.b16 %v312
    %v1924 = vunpack.c.h.b16 %v312
    %v1925 = vunpack.c.l.b16 %v313
    %v1926 = vunpack.c.h.b16 %v313
    %v1927 = vunpack.c.l.b16 %v314
    %v1928 = vunpack.c.h.b16 %v314
    %v1929 = vunpack.c.l.b16 %v315
    %v1930 = vunpack.c.h.b16 %v315
    %v1931 = vunpack.c.l.b16 %v316
    %v1932 = vunpack.c.h.b16 %v316
    %v1933 = vunpack.c.l.b16 %v317
    %v1934 = vunpack.c.h.b16 %v317
    %v1935 = vunpack.c.l.b16 %v318
    %v1936 = vunpack.c.h.b16 %v318
    %v1937 = vunpack.c.l.b16 %v319
    %v1938 = vunpack.c.h.b16 %v319
    %v1939 = vunpack.c.l.b16 %v320
    %v1940 = vunpack.c.h.b16 %v320
    %v1941 = vunpack.c.l.b16 %v321
    %v1942 = vunpack.c.h.b16 %v321
    %v1943 = vunpack.c.l.b16 %v322
    %v1944 = vunpack.c.h.b16 %v322
    %v1945 = vunpack.c.l.b16 %v323
    %v1946 = vunpack.c.h.b16 %v323
    %v1947 = vunpack.c.l.b16 %v324
    %v1948 = vunpack.c.h.b16 %v324
    %v1949 = vunpack.c.l.b16 %v325
    %v1950 = vunpack.c.h.b16 %v325
    %v1951 = vunpack.c.l.b16 %v326
    %v1952 = vunpack.c.h.b16 %v326
    %v1953 = vunpack.c.l.b16 %v327
    %v1954 = vunpack.c.h.b16 %v327
    %v1955 = vunpack.c.l.b16 %v328
    %v1956 = vunpack.c.h.b16 %v328
    %v1957 = vunpack.c.l.b16 %v329
    %v1958 = vunpack.c.h.b16 %v329
    %v1959 = vunpack.c.l.b16 %v330
    %v1960 = vunpack.c.h.b16 %v330
    %v1961 = vunpack.c.l.b16 %v331
    %v1962 = vunpack.c.h.b16 %v331
    %v1963 = vunpack.c.l.b16 %v332
    %v1964 = vunpack.c.h.b16 %v332
    %v1965 = vunpack.c.l.b16 %v333
    %v1966 = vunpack.c.h.b16 %v333
    %v1967 = vunpack.c.l.b16 %v334
    %v1968 = vunpack.c.h.b16 %v334
    %v1969 = vunpack.c.l.b16 %v335
    %v1970 = vunpack.c.h.b16 %v335
    %v1971 = vunpack.c.l.b16 %v336
    %v1972 = vunpack.c.h.b16 %v336
    %v1973 = vunpack.c.l.b16 %v337
    %v1974 = vunpack.c.h.b16 %v337
    %v1975 = vunpack.c.l.b16 %v338
    %v1976 = vunpack.c.h.b16 %v338
    %v1977 = vunpack.c.l.b16 %v339
    %v1978 = vunpack.c.h.b16 %v339
    %v1979 = vunpack.c.l.b16 %v340
    %v1980 = vunpack.c.h.b16 %v340
    %v1981 = vunpack.c.l.b16 %v341
    %v1982 = vunpack.c.h.b16 %v341
    %v1983 = vunpack.c.l.b16 %v342
    %v1984 = vunpack.c.h.b16 %v342
    %v1985 = vunpack.c.l.b16 %v343
    %v1986 = vunpack.c.h.b16 %v343
    %v1987 = vunpack.c.l.b16 %v344
    %v1988 = vunpack.c.h.b16 %v344
    %v1989 = vunpack.c.l.b16 %v345
    %v1990 = vunpack.c.h.b16 %v345
    %v1991 = vunpack.c.l.b16 %v346
    %v1992 = vunpack.c.h.b16 %v346
    %v1993 = vunpack.c.l.b16 %v347
    %v1994 = vunpack.c.h.b16 %v347
    %v1995 = vunpack.c.l.b16 %v348
    %v1996 = vunpack.c.h.b16 %v348
    %v1997 = vunpack.c.l.b16 %v349
    %v1998 = vunpack.c.h.b16 %v349
    %v1999 = vunpack.c.l.b16 %v350
    %v2000 = vunpack.c.h.b16 %v350
    %v2001 = vunpack.c.l.b16 %v351
    %v2002 = vunpack.c.h.b16 %v351
    %v2003 = vunpack.c.l.b16 %v352
    %v2004 = vunpack.c.h.b16 %v352
    %v2005 = vunpack.c.l.b16 %v353
    %v2006 = vunpack.c.h.b16 %v353
    %v2007 = vunpack.c.l.b16 %v354
    %v2008 = vunpack.c.h.b16 %v354
    %v2009 = vunpack.c.l.b16 %v355
    %v2010 = vunpack.c.h.b16 %v355
    %v2011 = vunpack.c.l.b16 %v356
    %v2012 = vunpack.c.h.b16 %v356
    %v2013 = vunpack.c.l.b16 %v357
    %v2014 = vunpack.c.h.b16 %v357
    %v2015 = vunpack.c.l.b16 %v358
    %v2016 = vunpack.c.h.b16 %v358
    %v2017 = vunpack.c.l.b16 %v359
    %v2018 = vunpack.c.h.b16 %v359
    %v2019 = vunpack.c.l.b16 %v360
    %v2020 = vunpack.c.h.b16 %v360
    %v2021 = vunpack.c.l.b16 %v361
    %v2022 = vunpack.c.h.b16 %v361
    %v2023 = vunpack.c.l.b16 %v362
    %v2024 = vunpack.c.h.b16 %v362
    %v2025 = vunpack.c.l.b16 %v363
    %v2026 = vunpack.c.h.b16 %v363
    %v2027 = vunpack.c.l.b16 %v364
    %v2028 = vunpack.c.h.b16 %v364
    %v2029 = vunpack.c.l.b16 %v365
    %v2030 = vunpack.c.h.b16 %v365
    %v2031 = vunpack.c.l.b16 %v366
    %v2032 = vunpack.c.h.b16 %v366
    %v2033 = vunpack.c.l.b16 %v367
    %v2034 = vunpack.c.h.b16 %v367
    %v2035 = vunpack.c.l.b16 %v368
    %v2036 = vunpack.c.h.b16 %v368
    %v2037 = vunpack.c.l.b16 %v369
    %v2038 = vunpack.c.h.b16 %v369
    %v2039 = vunpack.c.l.b16 %v370
    %v2040 = vunpack.c.h.b16 %v370
    %v2041 = vunpack.c.l.b16 %v371
    %v2042 = vunpack.c.h.b16 %v371
    %v2043 = vunpack.c.l.b16 %v372
    %v2044 = vunpack.c.h.b16 %v372
    %v2045 = vunpack.c.l.b16 %v373
    %v2046 = vunpack.c.h.b16 %v373
    %v2047 = vunpack.c.l.b16 %v374
    %v2048 = vunpack.c.h.b16 %v374
    %v2049 = vunpack.c.l.b16 %v375
    %v2050 = vunpack.c.h.b16 %v375
    %v2051 = vunpack.c.l.b16 %v376
    %v2052 = vunpack.c.h.b16 %v376
    %v2053 = vunpack.c.l.b16 %v377
    %v2054 = vunpack.c.h.b16 %v377
    %v2055 = vunpack.c.l.b16 %v378
    %v2056 = vunpack.c.h.b16 %v378
    %v2057 = vunpack.c.l.b16 %v379
    %v2058 = vunpack.c.h.b16 %v379
    %v2059 = vunpack.c.l.b16 %v380
    %v2060 = vunpack.c.h.b16 %v380
    %v2061 = vunpack.c.l.b16 %v381
    %v2062 = vunpack.c.h.b16 %v381
    %v2063 = vunpack.c.l.b16 %v382
    %v2064 = vunpack.c.h.b16 %v382
    %v2065 = vunpack.c.l.b16 %v383
    %v2066 = vunpack.c.h.b16 %v383
    %v2067 = vunpack.c.l.b16 %v384
    %v2068 = vunpack.c.h.b16 %v384
    %v2069 = vunpack.c.l.b16 %v385
    %v2070 = vunpack.c.h.b16 %v385
    %v2071 = vunpack.c.l.b16 %v386
    %v2072 = vunpack.c.h.b16 %v386
    %v2073 = vunpack.c.l.b16 %v387
    %v2074 = vunpack.c.h.b16 %v387
    %v2075 = vunpack.c.l.b16 %v388
    %v2076 = vunpack.c.h.b16 %v388
    %v2077 = vunpack.c.l.b16 %v389
    %v2078 = vunpack.c.h.b16 %v389
    %v2079 = vunpack.c.l.b16 %v390
    %v2080 = vunpack.c.h.b16 %v390
    %v2081 = vunpack.c.l.b16 %v391
    %v2082 = vunpack.c.h.b16 %v391
    %v2083 = vunpack.c.l.b16 %v392
    %v2084 = vunpack.c.h.b16 %v392
    %v2085 = vunpack.c.l.b16 %v393
    %v2086 = vunpack.c.h.b16 %v393
    %v2087 = vunpack.c.l.b16 %v394
    %v2088 = vunpack.c.h.b16 %v394
    %v2089 = vunpack.c.l.b16 %v395
    %v2090 = vunpack.c.h.b16 %v395
    %v2091 = vunpack.c.l.b16 %v396
    %v2092 = vunpack.c.h.b16 %v396
    %v2093 = vunpack.c.l.b16 %v397
    %v2094 = vunpack.c.h.b16 %v397
    %v2095 = vunpack.c.l.b16 %v398
    %v2096 = vunpack.c.h.b16 %v398
    %v2097 = vunpack.c.l.b16 %v399
    %v2098 = vunpack.c.h.b16 %v399
    %v2099 = vunpack.c.l.b16 %v400
    %v2100 = vunpack.c.h.b16 %v400
    %v2101 = vunpack.c.l.b16 %v401
    %v2102 = vunpack.c.h.b16 %v401
    %v2103 = vunpack.c.l.b16 %v402
    %v2104 = vunpack.c.h.b16 %v402
    %v2105 = vunpack.c.l.b16 %v403
    %v2106 = vunpack.c.h.b16 %v403
    %v2107 = vunpack.c.l.b16 %v404
    %v2108 = vunpack.c.h.b16 %v404
    %v2109 = vunpack.c.l.b16 %v405
    %v2110 = vunpack.c.h.b16 %v405
    %v2111 = vunpack.c.l.b16 %v406
    %v2112 = vunpack.c.h.b16 %v406
    %v2113 = vunpack.c.l.b16 %v407
    %v2114 = vunpack.c.h.b16 %v407
    %v2115 = vunpack.c.l.b16 %v408
    %v2116 = vunpack.c.h.b16 %v408
    %v2117 = vunpack.c.l.b16 %v409
    %v2118 = vunpack.c.h.b16 %v409
    %v2119 = vunpack.c.l.b16 %v410
    %v2120 = vunpack.c.h.b16 %v410
    %v2121 = vunpack.c.l.b16 %v411
    %v2122 = vunpack.c.h.b16 %v411
    %v2123 = vunpack.c.l.b16 %v412
    %v2124 = vunpack.c.h.b16 %v412
    %v2125 = vunpack.c.l.b16 %v413
    %v2126 = vunpack.c.h.b16 %v413
    %v2127 = vunpack.c.l.b16 %v414
    %v2128 = vunpack.c.h.b16 %v414
    %v2129 = vunpack.c.l.b16 %v415
    %v2130 = vunpack.c.h.b16 %v415
    %v2131 = vunpack.c.l.b16 %v416
    %v2132 = vunpack.c.h.b16 %v416
    %v2133 = vunpack.c.l.b16 %v417
    %v2134 = vunpack.c.h.b16 %v417
    %v2135 = vunpack.c.l.b16 %v418
    %v2136 = vunpack.c.h.b16 %v418
    %v2137 = vunpack.c.l.b16 %v419
    %v2138 = vunpack.c.h.b16 %v419
    %v2139 = vunpack.c.l.b16 %v420
    %v2140 = vunpack.c.h.b16 %v420
    %v2141 = vunpack.c.l.b16 %v421
    %v2142 = vunpack.c.h.b16 %v421
    %v2143 = vunpack.c.l.b16 %v422
    %v2144 = vunpack.c.h.b16 %v422
    %v2145 = vunpack.c.l.b16 %v423
    %v2146 = vunpack.c.h.b16 %v423
    %v2147 = vunpack.c.l.b16 %v424
    %v2148 = vunpack.c.h.b16 %v424
    %v2149 = vunpack.c.l.b16 %v425
    %v2150 = vunpack.c.h.b16 %v425
    %v2151 = vunpack.c.l.b16 %v426
    %v2152 = vunpack.c.h.b16 %v426
    %v2153 = vunpack.c.l.b16 %v427
    %v2154 = vunpack.c.h.b16 %v427
    %v2155 = vunpack.c.l.b16 %v428
    %v2156 = vunpack.c.h.b16 %v428
    %v2157 = vunpack.c.l.b16 %v429
    %v2158 = vunpack.c.h.b16 %v429
    %v2159 = vunpack.c.l.b16 %v430
    %v2160 = vunpack.c.h.b16 %v430
    %v2161 = vunpack.c.l.b16 %v431
    %v2162 = vunpack.c.h.b16 %v431
    %v2163 = vunpack.c.l.b16 %v432
    %v2164 = vunpack.c.h.b16 %v432
    %v2165 = vunpack.c.l.b16 %v433
    %v2166 = vunpack.c.h.b16 %v433
    %v2167 = vunpack.c.l.b16 %v434
    %v2168 = vunpack.c.h.b16 %v434
    %v2169 = vunpack.c.l.b16 %v435
    %v2170 = vunpack.c.h.b16 %v435
    %v2171 = vunpack.c.l.b16 %v436
    %v2172 = vunpack.c.h.b16 %v436
    %v2173 = vunpack.c.l.b16 %v437
    %v2174 = vunpack.c.h.b16 %v437
    %v2175 = vunpack.c.l.b16 %v438
    %v2176 = vunpack.c.h.b16 %v438
    %v2177 = vunpack.c.l.b16 %v439
    %v2178 = vunpack.c.h.b16 %v439
    %v2179 = vunpack.c.l.b16 %v440
    %v2180 = vunpack.c.h.b16 %v440
    %v2181 = vunpack.c.l.b16 %v441
    %v2182 = vunpack.c.h.b16 %v441
    %v2183 = vunpack.c.l.b16 %v442
    %v2184 = vunpack.c.h.b16 %v442
    %v2185 = vunpack.c.l.b16 %v443
    %v2186 = vunpack.c.h.b16 %v443
    %v2187 = vunpack.c.l.b16 %v444
    %v2188 = vunpack.c.h.b16 %v444
    %v2189 = vunpack.c.l.b16 %v445
    %v2190 = vunpack.c.h.b16 %v445
    %v2191 = vunpack.c.l.b16 %v446
    %v2192 = vunpack.c.h.b16 %v446
    %v2193 = vunpack.c.l.b16 %v447
    %v2194 = vunpack.c.h.b16 %v447
    %v2195 = vunpack.c.l.b16 %v448
    %v2196 = vunpack.c.h.b16 %v448
    %v2197 = vunpack.c.l.b16 %v449
    %v2198 = vunpack.c.h.b16 %v449
    %v2199 = vunpack.c.l.b16 %v450
    %v2200 = vunpack.c.h.b16 %v450
    %v2201 = vunpack.c.l.b16 %v451
    %v2202 = vunpack.c.h.b16 %v451
    %v2203 = vunpack.c.l.b16 %v452
    %v2204 = vunpack.c.h.b16 %v452
    %v2205 = vunpack.c.l.b16 %v453
    %v2206 = vunpack.c.h.b16 %v453
    %v2207 = vunpack.c.l.b16 %v454
    %v2208 = vunpack.c.h.b16 %v454
    %v2209 = vunpack.c.l.b16 %v455
    %v2210 = vunpack.c.h.b16 %v455
    %v2211 = vunpack.c.l.b16 %v456
    %v2212 = vunpack.c.h.b16 %v456
    %v2213 = vunpack.c.l.b16 %v457
    %v2214 = vunpack.c.h.b16 %v457
    %v2215 = vunpack.c.l.b16 %v458
    %v2216 = vunpack.c.h.b16 %v458
    %v2217 = vunpack.c.l.b16 %v459
    %v2218 = vunpack.c.h.b16 %v459
    %v2219 = vunpack.c.l.b16 %v460
    %v2220 = vunpack.c.h.b16 %v460
    %v2221 = vunpack.c.l.b16 %v461
    %v2222 = vunpack.c.h.b16 %v461
    %v2223 = vunpack.c.l.b16 %v462
    %v2224 = vunpack.c.h.b16 %v462
    %v2225 = vunpack.c.l.b16 %v463
    %v2226 = vunpack.c.h.b16 %v463
    %v2227 = vunpack.c.l.b16 %v464
    %v2228 = vunpack.c.h.b16 %v464
    %v2229 = vunpack.c.l.b16 %v465
    %v2230 = vunpack.c.h.b16 %v465
    %v2231 = vunpack.c.l.b16 %v466
    %v2232 = vunpack.c.h.b16 %v466
    %v2233 = vunpack.c.l.b16 %v467
    %v2234 = vunpack.c.h.b16 %v467
    %v2235 = vunpack.c.l.b16 %v468
    %v2236 = vunpack.c.h.b16 %v468
    %v2237 = vunpack.c.l.b16 %v469
    %v2238 = vunpack.c.h.b16 %v469
    %v2239 = vunpack.c.l.b16 %v470
    %v2240 = vunpack.c.h.b16 %v470
    %v2241 = vunpack.c.l.b16 %v471
    %v2242 = vunpack.c.h.b16 %v471
    %v2243 = vunpack.c.l.b16 %v472
    %v2244 = vunpack.c.h.b16 %v472
    %v2245 = vunpack.c.l.b16 %v473
    %v2246 = vunpack.c.h.b16 %v473
    %v2247 = vunpack.c.l.b16 %v474
    %v2248 = vunpack.c.h.b16 %v474
    %v2249 = vunpack.c.l.b16 %v475
    %v2250 = vunpack.c.h.b16 %v475
    %v2251 = vunpack.c.l.b16 %v476
    %v2252 = vunpack.c.h.b16 %v476
    %v2253 = vunpack.c.l.b16 %v477
    %v2254 = vunpack.c.h.b16 %v477
    %v2255 = vunpack.c.l.b16 %v478
    %v2256 = vunpack.c.h.b16 %v478
    %v2257 = vunpack.c.l.b16 %v479
    %v2258 = vunpack.c.h.b16 %v479
    %v2259 = vunpack.c.l.b16 %v480
    %v2260 = vunpack.c.h.b16 %v480
    %v2261 = vunpack.c.l.b16 %v481
    %v2262 = vunpack.c.h.b16 %v481
    %v2263 = vunpack.c.l.b16 %v482
    %v2264 = vunpack.c.h.b16 %v482
    %v2265 = vunpack.c.l.b16 %v483
    %v2266 = vunpack.c.h.b16 %v483
    %v2267 = vunpack.c.l.b16 %v484
    %v2268 = vunpack.c.h.b16 %v484
    %v2269 = vunpack.c.l.b16 %v485
    %v2270 = vunpack.c.h.b16 %v485
    %v2271 = vunpack.c.l.b16 %v486
    %v2272 = vunpack.c.h.b16 %v486
    %v2273 = vunpack.c.l.b16 %v487
    %v2274 = vunpack.c.h.b16 %v487
    %v2275 = vunpack.c.l.b16 %v488
    %v2276 = vunpack.c.h.b16 %v488
    %v2277 = vunpack.c.l.b16 %v489
    %v2278 = vunpack.c.h.b16 %v489
    %v2279 = vunpack.c.l.b16 %v490
    %v2280 = vunpack.c.h.b16 %v490
    %v2281 = vunpack.c.l.b16 %v491
    %v2282 = vunpack.c.h.b16 %v491
    %v2283 = vunpack.c.l.b16 %v492
    %v2284 = vunpack.c.h.b16 %v492
    %v2285 = vunpack.c.l.b16 %v493
    %v2286 = vunpack.c.h.b16 %v493
    %v2287 = vunpack.c.l.b16 %v494
    %v2288 = vunpack.c.h.b16 %v494
    %v2289 = vunpack.c.l.b16 %v495
    %v2290 = vunpack.c.h.b16 %v495
    %v2291 = vunpack.c.l.b16 %v496
    %v2292 = vunpack.c.h.b16 %v496
    %v2293 = vunpack.c.l.b16 %v497
    %v2294 = vunpack.c.h.b16 %v497
    %v2295 = vunpack.c.l.b16 %v498
    %v2296 = vunpack.c.h.b16 %v498
    %v2297 = vunpack.c.l.b16 %v499
    %v2298 = vunpack.c.h.b16 %v499
    %v2299 = vunpack.c.l.b16 %v500
    %v2300 = vunpack.c.h.b16 %v500
    %v2301 = vunpack.c.l.b16 %v501
    %v2302 = vunpack.c.h.b16 %v501
    %v2303 = vunpack.c.l.b16 %v502
    %v2304 = vunpack.c.h.b16 %v502
    %v2305 = vunpack.c.l.b16 %v503
    %v2306 = vunpack.c.h.b16 %v503
    %v2307 = vunpack.c.l.b16 %v504
    %v2308 = vunpack.c.h.b16 %v504
    %v2309 = vunpack.c.l.b16 %v505
    %v2310 = vunpack.c.h.b16 %v505
    %v2311 = vunpack.c.l.b16 %v506
    %v2312 = vunpack.c.h.b16 %v506
    %v2313 = vunpack.c.l.b16 %v507
    %v2314 = vunpack.c.h.b16 %v507
    %v2315 = vunpack.c.l.b16 %v508
    %v2316 = vunpack.c.h.b16 %v508
    %v2317 = vunpack.c.l.b16 %v509
    %v2318 = vunpack.c.h.b16 %v509
    %v2319 = vunpack.c.l.b16 %v510
    %v2320 = vunpack.c.h.b16 %v510
    %v2321 = vunpack.c.l.b16 %v511
    %v2322 = vunpack.c.h.b16 %v511
    %v2323 = vunpack.c.l.b16 %v512
    %v2324 = vunpack.c.h.b16 %v512
    %v2325 = vunpack.c.l.b16 %v513
    %v2326 = vunpack.c.h.b16 %v513
    %v2327 = vunpack.c.l.b16 %v514
    %v2328 = vunpack.c.h.b16 %v514
    %v2329 = vunpack.c.l.b16 %v515
    %v2330 = vunpack.c.h.b16 %v515
    %v2331 = vunpack.c.l.b16 %v516
    %v2332 = vunpack.c.h.b16 %v516
    %v2333 = vunpack.c.l.b16 %v517
    %v2334 = vunpack.c.h.b16 %v517
    %v2335 = vunpack.c.l.b16 %v518
    %v2336 = vunpack.c.h.b16 %v518
    %v2337 = vunpack.c.l.b16 %v519
    %v2338 = vunpack.c.h.b16 %v519
    %v2339 = vunpack.c.l.b16 %v520
    %v2340 = vunpack.c.h.b16 %v520
    %v2341 = vunpack.c.l.b16 %v521
    %v2342 = vunpack.c.h.b16 %v521
    %v2343 = vunpack.c.l.b16 %v522
    %v2344 = vunpack.c.h.b16 %v522
    %v2345 = vunpack.c.l.b16 %v523
    %v2346 = vunpack.c.h.b16 %v523
    %v2347 = vunpack.c.l.b16 %v524
    %v2348 = vunpack.c.h.b16 %v524
    %v2349 = vunpack.c.l.b16 %v525
    %v2350 = vunpack.c.h.b16 %v525
    %v2351 = vunpack.c.l.b16 %v526
    %v2352 = vunpack.c.h.b16 %v526
    %v2353 = vunpack.c.l.b16 %v527
    %v2354 = vunpack.c.h.b16 %v527
    %v2355 = vunpack.c.l.b16 %v528
    %v2356 = vunpack.c.h.b16 %v528
    %v2357 = vunpack.c.l.b16 %v529
    %v2358 = vunpack.c.h.b16 %v529
    %v2359 = vunpack.c.l.b16 %v530
    %v2360 = vunpack.c.h.b16 %v530
    %v2361 = vunpack.c.l.b16 %v531
    %v2362 = vunpack.c.h.b16 %v531
    %v2363 = vunpack.c.l.b16 %v532
    %v2364 = vunpack.c.h.b16 %v532
    %v2365 = vunpack.c.l.b16 %v533
    %v2366 = vunpack.c.h.b16 %v533
    %v2367 = vunpack.c.l.b16 %v534
    %v2368 = vunpack.c.h.b16 %v534
    %v2369 = vunpack.c.l.b16 %v535
    %v2370 = vunpack.c.h.b16 %v535
    %v2371 = vunpack.c.l.b16 %v536
    %v2372 = vunpack.c.h.b16 %v536
    %v2373 = vunpack.c.l.b16 %v537
    %v2374 = vunpack.c.h.b16 %v537
    %v2375 = vunpack.c.l.b16 %v538
    %v2376 = vunpack.c.h.b16 %v538
    %v2377 = vunpack.c.l.b16 %v539
    %v2378 = vunpack.c.h.b16 %v539
    %v2379 = vunpack.c.l.b16 %v540
    %v2380 = vunpack.c.h.b16 %v540
    %v2381 = vunpack.c.l.b16 %v541
    %v2382 = vunpack.c.h.b16 %v541
    %v2383 = vunpack.c.l.b16 %v542
    %v2384 = vunpack.c.h.b16 %v542
    %v2385 = vunpack.c.l.b16 %v543
    %v2386 = vunpack.c.h.b16 %v543
    %v2387 = vunpack.c.l.b16 %v544
    %v2388 = vunpack.c.h.b16 %v544
    %v2389 = vunpack.c.l.b16 %v545
    %v2390 = vunpack.c.h.b16 %v545
    %v2391 = vunpack.c.l.b16 %v546
    %v2392 = vunpack.c.h.b16 %v546
    %v2393 = vunpack.c.l.b16 %v547
    %v2394 = vunpack.c.h.b16 %v547
    %v2395 = vunpack.c.l.b16 %v548
    %v2396 = vunpack.c.h.b16 %v548
    %v2397 = vunpack.c.l.b16 %v549
    %v2398 = vunpack.c.h.b16 %v549
    %v2399 = vunpack.c.l.b16 %v550
    %v2400 = vunpack.c.h.b16 %v550
    %v2401 = vunpack.c.l.b16 %v551
    %v2402 = vunpack.c.h.b16 %v551
    %v2403 = vunpack.c.l.b16 %v552
    %v2404 = vunpack.c.h.b16 %v552
    %v2405 = vunpack.c.l.b16 %v553
    %v2406 = vunpack.c.h.b16 %v553
    %v2407 = vunpack.c.l.b16 %v554
    %v2408 = vunpack.c.h.b16 %v554
    %v2409 = vunpack.c.l.b16 %v555
    %v2410 = vunpack.c.h.b16 %v555
    %v2411 = vunpack.c.l.b16 %v556
    %v2412 = vunpack.c.h.b16 %v556
    %v2413 = vunpack.c.l.b16 %v557
    %v2414 = vunpack.c.h.b16 %v557
    %v2415 = vunpack.c.l.b16 %v558
    %v2416 = vunpack.c.h.b16 %v558
    %v2417 = vunpack.c.l.b16 %v559
    %v2418 = vunpack.c.h.b16 %v559
    %v2419 = vunpack.c.l.b16 %v560
    %v2420 = vunpack.c.h.b16 %v560
    %v2421 = vunpack.c.l.b16 %v561
    %v2422 = vunpack.c.h.b16 %v561
    %v2423 = vunpack.c.l.b16 %v562
    %v2424 = vunpack.c.h.b16 %v562
    %v2425 = vunpack.c.l.b16 %v563
    %v2426 = vunpack.c.h.b16 %v563
    %v2427 = vunpack.c.l.b16 %v564
    %v2428 = vunpack.c.h.b16 %v564
    %v2429 = vunpack.c.l.b16 %v565
    %v2430 = vunpack.c.h.b16 %v565
    %v2431 = vunpack.c.l.b16 %v566
    %v2432 = vunpack.c.h.b16 %v566
    %v2433 = vunpack.c.l.b16 %v567
    %v2434 = vunpack.c.h.b16 %v567
    %v2435 = vunpack.c.l.b16 %v568
    %v2436 = vunpack.c.h.b16 %v568
    %v2437 = vunpack.c.l.b16 %v569
    %v2438 = vunpack.c.h.b16 %v569
    %v2439 = vunpack.c.l.b16 %v570
    %v2440 = vunpack.c.h.b16 %v570
    %v2441 = vunpack.c.l.b16 %v571
    %v2442 = vunpack.c.h.b16 %v571
    %v2443 = vunpack.c.l.b16 %v572
    %v2444 = vunpack.c.h.b16 %v572
    %v2445 = vunpack.c.l.b16 %v573
    %v2446 = vunpack.c.h.b16 %v573
    %v2447 = vunpack.c.l.b16 %v574
    %v2448 = vunpack.c.h.b16 %v574
    %v2449 = vunpack.c.l.b16 %v575
    %v2450 = vunpack.c.h.b16 %v575
    %v2451 = vunpack.c.l.b16 %v576
    %v2452 = vunpack.c.h.b16 %v576
    %v2453 = vunpack.c.l.b16 %v577
    %v2454 = vunpack.c.h.b16 %v577
    %v2455 = vunpack.c.l.b16 %v578
    %v2456 = vunpack.c.h.b16 %v578
    %v2457 = vunpack.c.l.b16 %v579
    %v2458 = vunpack.c.h.b16 %v579
    %v2459 = vunpack.c.l.b16 %v580
    %v2460 = vunpack.c.h.b16 %v580
    %v2461 = vunpack.c.l.b16 %v581
    %v2462 = vunpack.c.h.b16 %v581
    %v2463 = vunpack.c.l.b16 %v582
    %v2464 = vunpack.c.h.b16 %v582
    %v2465 = vunpack.c.l.b16 %v583
    %v2466 = vunpack.c.h.b16 %v583
    %v2467 = vunpack.c.l.b16 %v584
    %v2468 = vunpack.c.h.b16 %v584
    %v2469 = vunpack.c.l.b16 %v585
    %v2470 = vunpack.c.h.b16 %v585
    %v2471 = vunpack.c.l.b16 %v586
    %v2472 = vunpack.c.h.b16 %v586
    %v2473 = vunpack.c.l.b16 %v587
    %v2474 = vunpack.c.h.b16 %v587
    %v2475 = vunpack.c.l.b16 %v588
    %v2476 = vunpack.c.h.b16 %v588
    %v2477 = vunpack.c.l.b16 %v589
    %v2478 = vunpack.c.h.b16 %v589
    %v2479 = vunpack.c.l.b16 %v590
    %v2480 = vunpack.c.h.b16 %v590
    %v2481 = vunpack.c.l.b16 %v591
    %v2482 = vunpack.c.h.b16 %v591
    %v2483 = vunpack.c.l.b16 %v592
    %v2484 = vunpack.c.h.b16 %v592
    %v2485 = vunpack.c.l.b16 %v593
    %v2486 = vunpack.c.h.b16 %v593
    %v2487 = vunpack.c.l.b16 %v594
    %v2488 = vunpack.c.h.b16 %v594
    %v2489 = vunpack.c.l.b16 %v595
    %v2490 = vunpack.c.h.b16 %v595
    %v2491 = vunpack.c.l.b16 %v596
    %v2492 = vunpack.c.h.b16 %v596
    %v2493 = vunpack.c.l.b16 %v597
    %v2494 = vunpack.c.h.b16 %v597
    %v2495 = vunpack.c.l.b16 %v598
    %v2496 = vunpack.c.h.b16 %v598
    %v2497 = vunpack.c.l.b16 %v599
    %v2498 = vunpack.c.h.b16 %v599
    %v2499 = vunpack.c.l.b16 %v600
    %v2500 = vunpack.c.h.b16 %v600
    %v2501 = vunpack.c.l.b16 %v601
    %v2502 = vunpack.c.h.b16 %v601
    %v2503 = vunpack.c.l.b16 %v602
    %v2504 = vunpack.c.h.b16 %v602
    %v2505 = vunpack.c.l.b16 %v603
    %v2506 = vunpack.c.h.b16 %v603
    %v2507 = vunpack.c.l.b16 %v604
    %v2508 = vunpack.c.h.b16 %v604
    %v2509 = vunpack.c.l.b16 %v605
    %v2510 = vunpack.c.h.b16 %v605
    %v2511 = vunpack.c.l.b16 %v606
    %v2512 = vunpack.c.h.b16 %v606
    %v2513 = vunpack.c.l.b16 %v607
    %v2514 = vunpack.c.h.b16 %v607
    %v2515 = vunpack.c.l.b16 %v608
    %v2516 = vunpack.c.h.b16 %v608
    %v2517 = vunpack.c.l.b16 %v609
    %v2518 = vunpack.c.h.b16 %v609
    %v2519 = vunpack.c.l.b16 %v610
    %v2520 = vunpack.c.h.b16 %v610
    %v2521 = vunpack.c.l.b16 %v611
    %v2522 = vunpack.c.h.b16 %v611
    %v2523 = vunpack.c.l.b16 %v612
    %v2524 = vunpack.c.h.b16 %v612
    %v2525 = vunpack.c.l.b16 %v613
    %v2526 = vunpack.c.h.b16 %v613
    %v2527 = vunpack.c.l.b16 %v614
    %v2528 = vunpack.c.h.b16 %v614
    %v2529 = vunpack.c.l.b16 %v615
    %v2530 = vunpack.c.h.b16 %v615
    %v2531 = vunpack.c.l.b16 %v616
    %v2532 = vunpack.c.h.b16 %v616
    %v2533 = vunpack.c.l.b16 %v617
    %v2534 = vunpack.c.h.b16 %v617
    %v2535 = vunpack.c.l.b16 %v618
    %v2536 = vunpack.c.h.b16 %v618
    %v2537 = vunpack.c.l.b16 %v619
    %v2538 = vunpack.c.h.b16 %v619
    %v2539 = vunpack.c.l.b16 %v620
    %v2540 = vunpack.c.h.b16 %v620
    %v2541 = vunpack.c.l.b16 %v621
    %v2542 = vunpack.c.h.b16 %v621
    %v2543 = vunpack.c.l.b16 %v622
    %v2544 = vunpack.c.h.b16 %v622
    %v2545 = vunpack.c.l.b16 %v623
    %v2546 = vunpack.c.h.b16 %v623
    %v2547 = vunpack.c.l.b16 %v624
    %v2548 = vunpack.c.h.b16 %v624
    %v2549 = vunpack.c.l.b16 %v625
    %v2550 = vunpack.c.h.b16 %v625
    %v2551 = vunpack.c.l.b16 %v626
    %v2552 = vunpack.c.h.b16 %v626
    %v2553 = vunpack.c.l.b16 %v627
    %v2554 = vunpack.c.h.b16 %v627
    %v2555 = vunpack.c.l.b16 %v628
    %v2556 = vunpack.c.h.b16 %v628
    %v2557 = vunpack.c.l.b16 %v629
    %v2558 = vunpack.c.h.b16 %v629
    %v2559 = vunpack.c.l.b16 %v630
    %v2560 = vunpack.c.h.b16 %v630
    %v2561 = vunpack.c.l.b16 %v631
    %v2562 = vunpack.c.h.b16 %v631
    %v2563 = vunpack.c.l.b16 %v632
    %v2564 = vunpack.c.h.b16 %v632
    %v2565 = vunpack.c.l.b16 %v633
    %v2566 = vunpack.c.h.b16 %v633
    %v2567 = vunpack.c.l.b16 %v634
    %v2568 = vunpack.c.h.b16 %v634
    %v2569 = vunpack.c.l.b16 %v635
    %v2570 = vunpack.c.h.b16 %v635
    %v2571 = vunpack.c.l.b16 %v636
    %v2572 = vunpack.c.h.b16 %v636
    %v2573 = vunpack.c.l.b16 %v637
    %v2574 = vunpack.c.h.b16 %v637
    %v2575 = vunpack.c.l.b16 %v638
    %v2576 = vunpack.c.h.b16 %v638
    %v2577 = vunpack.c.l.b16 %v639
    %v2578 = vunpack.c.h.b16 %v639
    %v2579 = vunpack.c.l.b16 %v640
    %v2580 = vunpack.c.h.b16 %v640
    %v2581 = vunpack.c.l.b16 %v641
    %v2582 = vunpack.c.h.b16 %v641
    %v2583 = vunpack.c.l.b16 %v642
    %v2584 = vunpack.c.h.b16 %v642
    %v2585 = vunpack.c.l.b16 %v643
    %v2586 = vunpack.c.h.b16 %v643
    %v2587 = vunpack.c.l.b16 %v644
    %v2588 = vunpack.c.h.b16 %v644
    %v2589 = vunpack.c.l.b16 %v645
    %v2590 = vunpack.c.h.b16 %v645
    %v2591 = vunpack.c.l.b16 %v646
    %v2592 = vunpack.c.h.b16 %v646
    %v2593 = vunpack.c.l.b16 %v647
    %v2594 = vunpack.c.h.b16 %v647
    %v2595 = vunpack.c.l.b16 %v648
    %v2596 = vunpack.c.h.b16 %v648
    %v2597 = vunpack.c.l.b16 %v649
    %v2598 = vunpack.c.h.b16 %v649
    %v2599 = vunpack.c.l.b16 %v650
    %v2600 = vunpack.c.h.b16 %v650
    %v2601 = vunpack.c.l.b16 %v651
    %v2602 = vunpack.c.h.b16 %v651
    %v2603 = vunpack.c.l.b16 %v652
    %v2604 = vunpack.c.h.b16 %v652
    %v2605 = vunpack.c.l.b16 %v653
    %v2606 = vunpack.c.h.b16 %v653
    %v2607 = vunpack.c.l.b16 %v654
    %v2608 = vunpack.c.h.b16 %v654
    %v2609 = vunpack.c.l.b16 %v655
    %v2610 = vunpack.c.h.b16 %v655
    %v2611 = vunpack.c.l.b16 %v656
    %v2612 = vunpack.c.h.b16 %v656
    %v2613 = vunpack.c.l.b16 %v657
    %v2614 = vunpack.c.h.b16 %v657
    %v2615 = vunpack.c.l.b16 %v658
    %v2616 = vunpack.c.h.b16 %v658
    %v2617 = vunpack.c.l.b16 %v659
    %v2618 = vunpack.c.h.b16 %v659
    %v2619 = vunpack.c.l.b16 %v660
    %v2620 = vunpack.c.h.b16 %v660
    %v2621 = vunpack.c.l.b16 %v661
    %v2622 = vunpack.c.h.b16 %v661
    %v2623 = vunpack.c.l.b16 %v662
    %v2624 = vunpack.c.h.b16 %v662
    %v2625 = vunpack.c.l.b16 %v663
    %v2626 = vunpack.c.h.b16 %v663
    %v2627 = vunpack.c.l.b16 %v664
    %v2628 = vunpack.c.h.b16 %v664
    %v2629 = vunpack.c.l.b16 %v665
    %v2630 = vunpack.c.h.b16 %v665
    %v2631 = vunpack.c.l.b16 %v666
    %v2632 = vunpack.c.h.b16 %v666
    %v2633 = vunpack.c.l.b16 %v667
    %v2634 = vunpack.c.h.b16 %v667
    %v2635 = vunpack.c.l.b16 %v668
    %v2636 = vunpack.c.h.b16 %v668
    %v2637 = vunpack.c.l.b16 %v669
    %v2638 = vunpack.c.h.b16 %v669
    %v2639 = vunpack.c.l.b16 %v670
    %v2640 = vunpack.c.h.b16 %v670
    %v2641 = vunpack.c.l.b16 %v671
    %v2642 = vunpack.c.h.b16 %v671
    %v2643 = vunpack.c.l.b16 %v672
    %v2644 = vunpack.c.h.b16 %v672
    %v2645 = vunpack.c.l.b16 %v673
    %v2646 = vunpack.c.h.b16 %v673
    %v2647 = vunpack.c.l.b16 %v674
    %v2648 = vunpack.c.h.b16 %v674
    %v2649 = vunpack.c.l.b16 %v675
    %v2650 = vunpack.c.h.b16 %v675
    %v2651 = vunpack.c.l.b16 %v676
    %v2652 = vunpack.c.h.b16 %v676
    %v2653 = vunpack.c.l.b16 %v677
    %v2654 = vunpack.c.h.b16 %v677
    %v2655 = vunpack.c.l.b16 %v678
    %v2656 = vunpack.c.h.b16 %v678
    %v2657 = vunpack.c.l.b16 %v679
    %v2658 = vunpack.c.h.b16 %v679
    %v2659 = vunpack.c.l.b16 %v680
    %v2660 = vunpack.c.h.b16 %v680
    %v2661 = vunpack.c.l.b16 %v681
    %v2662 = vunpack.c.h.b16 %v681
    %v2663 = vunpack.c.l.b16 %v682
    %v2664 = vunpack.c.h.b16 %v682
    %v2665 = vunpack.c.l.b16 %v683
    %v2666 = vunpack.c.h.b16 %v683
    %v2667 = vunpack.c.l.b16 %v684
    %v2668 = vunpack.c.h.b16 %v684
    %v2669 = vunpack.c.l.b16 %v685
    %v2670 = vunpack.c.h.b16 %v685
    %v2671 = vunpack.c.l.b16 %v686
    %v2672 = vunpack.c.h.b16 %v686
    %v2673 = vunpack.c.l.b16 %v687
    %v2674 = vunpack.c.h.b16 %v687
    %v2675 = vunpack.c.l.b16 %v688
    %v2676 = vunpack.c.h.b16 %v688
    %v2677 = vunpack.c.l.b16 %v689
    %v2678 = vunpack.c.h.b16 %v689
    %v2679 = vunpack.c.l.b16 %v690
    %v2680 = vunpack.c.h.b16 %v690
    %v2681 = vunpack.c.l.b16 %v691
    %v2682 = vunpack.c.h.b16 %v691
    %v2683 = vunpack.c.l.b16 %v692
    %v2684 = vunpack.c.h.b16 %v692
    %v2685 = vunpack.c.l.b16 %v693
    %v2686 = vunpack.c.h.b16 %v693
    %v2687 = vunpack.c.l.b16 %v694
    %v2688 = vunpack.c.h.b16 %v694
    %v2689 = vunpack.c.l.b16 %v695
    %v2690 = vunpack.c.h.b16 %v695
    %v2691 = vunpack.c.l.b16 %v696
    %v2692 = vunpack.c.h.b16 %v696
    %v2693 = vunpack.c.l.b16 %v697
    %v2694 = vunpack.c.h.b16 %v697
    %v2695 = vunpack.c.l.b16 %v698
    %v2696 = vunpack.c.h.b16 %v698
    %v2697 = vunpack.c.l.b16 %v699
    %v2698 = vunpack.c.h.b16 %v699
    %v2699 = vunpack.c.l.b16 %v700
    %v2700 = vunpack.c.h.b16 %v700
    %v2701 = vunpack.c.l.b16 %v701
    %v2702 = vunpack.c.h.b16 %v701
    %v2703 = vunpack.c.l.b16 %v702
    %v2704 = vunpack.c.h.b16 %v702
    %v2705 = vunpack.c.l.b16 %v703
    %v2706 = vunpack.c.h.b16 %v703
    %v2707 = vunpack.c.l.b16 %v704
    %v2708 = vunpack.c.h.b16 %v704
    %v2709 = vunpack.c.l.b16 %v705
    %v2710 = vunpack.c.h.b16 %v705
    %v2711 = vunpack.c.l.b16 %v706
    %v2712 = vunpack.c.h.b16 %v706
    %v2713 = vunpack.c.l.b16 %v707
    %v2714 = vunpack.c.h.b16 %v707
    %v2715 = vunpack.c.l.b16 %v708
    %v2716 = vunpack.c.h.b16 %v708
    %v2717 = vunpack.c.l.b16 %v709
    %v2718 = vunpack.c.h.b16 %v709
    %v2719 = vunpack.c.l.b16 %v710
    %v2720 = vunpack.c.h.b16 %v710
    %v2721 = vunpack.c.l.b16 %v711
    %v2722 = vunpack.c.h.b16 %v711
    %v2723 = vunpack.c.l.b16 %v712
    %v2724 = vunpack.c.h.b16 %v712
    %v2725 = vunpack.c.l.b16 %v713
    %v2726 = vunpack.c.h.b16 %v713
    %v2727 = vunpack.c.l.b16 %v714
    %v2728 = vunpack.c.h.b16 %v714
    %v2729 = vunpack.c.l.b16 %v715
    %v2730 = vunpack.c.h.b16 %v715
    %v2731 = vunpack.c.l.b16 %v716
    %v2732 = vunpack.c.h.b16 %v716
    %v2733 = vunpack.c.l.b16 %v717
    %v2734 = vunpack.c.h.b16 %v717
    %v2735 = vunpack.c.l.b16 %v718
    %v2736 = vunpack.c.h.b16 %v718
    %v2737 = vunpack.c.l.b16 %v719
    %v2738 = vunpack.c.h.b16 %v719
    %v2739 = vunpack.c.l.b16 %v720
    %v2740 = vunpack.c.h.b16 %v720
    %v2741 = vunpack.c.l.b16 %v721
    %v2742 = vunpack.c.h.b16 %v721
    %v2743 = vunpack.c.l.b16 %v722
    %v2744 = vunpack.c.h.b16 %v722
    %v2745 = vunpack.c.l.b16 %v723
    %v2746 = vunpack.c.h.b16 %v723
    %v2747 = vunpack.c.l.b16 %v724
    %v2748 = vunpack.c.h.b16 %v724
    %v2749 = vunpack.c.l.b16 %v725
    %v2750 = vunpack.c.h.b16 %v725
    %v2751 = vunpack.c.l.b16 %v726
    %v2752 = vunpack.c.h.b16 %v726
    %v2753 = vunpack.c.l.b16 %v727
    %v2754 = vunpack.c.h.b16 %v727
    %v2755 = vunpack.c.l.b16 %v728
    %v2756 = vunpack.c.h.b16 %v728
    %v2757 = vunpack.c.l.b16 %v729
    %v2758 = vunpack.c.h.b16 %v729
    %v2759 = vunpack.c.l.b16 %v730
    %v2760 = vunpack.c.h.b16 %v730
    %v2761 = vunpack.c.l.b16 %v731
    %v2762 = vunpack.c.h.b16 %v731
    %v2763 = vunpack.c.l.b16 %v732
    %v2764 = vunpack.c.h.b16 %v732
    %v2765 = vunpack.c.l.b16 %v733
    %v2766 = vunpack.c.h.b16 %v733
    %v2767 = vunpack.c.l.b16 %v734
    %v2768 = vunpack.c.h.b16 %v734
    %v2769 = vunpack.c.l.b16 %v735
    %v2770 = vunpack.c.h.b16 %v735
    %v2771 = vunpack.c.l.b16 %v736
    %v2772 = vunpack.c.h.b16 %v736
    %v2773 = vunpack.c.l.b16 %v737
    %v2774 = vunpack.c.h.b16 %v737
    %v2775 = vunpack.c.l.b16 %v738
    %v2776 = vunpack.c.h.b16 %v738
    %v2777 = vunpack.c.l.b16 %v739
    %v2778 = vunpack.c.h.b16 %v739
    %v2779 = vunpack.c.l.b16 %v740
    %v2780 = vunpack.c.h.b16 %v740
    %v2781 = vunpack.c.l.b16 %v741
    %v2782 = vunpack.c.h.b16 %v741
    %v2783 = vunpack.c.l.b16 %v742
    %v2784 = vunpack.c.h.b16 %v742
    %v2785 = vunpack.c.l.b16 %v743
    %v2786 = vunpack.c.h.b16 %v743
    %v2787 = vunpack.c.l.b16 %v744
    %v2788 = vunpack.c.h.b16 %v744
    %v2789 = vunpack.c.l.b16 %v745
    %v2790 = vunpack.c.h.b16 %v745
    %v2791 = vunpack.c.l.b16 %v746
    %v2792 = vunpack.c.h.b16 %v746
    %v2793 = vunpack.c.l.b16 %v747
    %v2794 = vunpack.c.h.b16 %v747
    %v2795 = vunpack.c.l.b16 %v748
    %v2796 = vunpack.c.h.b16 %v748
    %v2797 = vunpack.c.l.b16 %v749
    %v2798 = vunpack.c.h.b16 %v749
    %v2799 = vunpack.c.l.b16 %v750
    %v2800 = vunpack.c.h.b16 %v750
    %v2801 = vunpack.c.l.b16 %v751
    %v2802 = vunpack.c.h.b16 %v751
    %v2803 = vunpack.c.l.b16 %v752
    %v2804 = vunpack.c.h.b16 %v752
    %v2805 = vunpack.c.l.b16 %v753
    %v2806 = vunpack.c.h.b16 %v753
    %v2807 = vunpack.c.l.b16 %v754
    %v2808 = vunpack.c.h.b16 %v754
    %v2809 = vunpack.c.l.b16 %v755
    %v2810 = vunpack.c.h.b16 %v755
    %v2811 = vunpack.c.l.b16 %v756
    %v2812 = vunpack.c.h.b16 %v756
    %v2813 = vunpack.c.l.b16 %v757
    %v2814 = vunpack.c.h.b16 %v757
    %v2815 = vunpack.c.l.b16 %v758
    %v2816 = vunpack.c.h.b16 %v758
    %v2817 = vunpack.c.l.b16 %v759
    %v2818 = vunpack.c.h.b16 %v759
    %v2819 = vunpack.c.l.b16 %v760
    %v2820 = vunpack.c.h.b16 %v760
    %v2821 = vunpack.c.l.b16 %v761
    %v2822 = vunpack.c.h.b16 %v761
    %v2823 = vunpack.c.l.b16 %v762
    %v2824 = vunpack.c.h.b16 %v762
    %v2825 = vunpack.c.l.b16 %v763
    %v2826 = vunpack.c.h.b16 %v763
    %v2827 = vunpack.c.l.b16 %v764
    %v2828 = vunpack.c.h.b16 %v764
    %v2829 = vunpack.c.l.b16 %v765
    %v2830 = vunpack.c.h.b16 %v765
    %v2831 = vunpack.c.l.b16 %v766
    %v2832 = vunpack.c.h.b16 %v766
    %v2833 = vunpack.c.l.b16 %v767
    %v2834 = vunpack.c.h.b16 %v767
    %v2835 = vunpack.c.l.b16 %v768
    %v2836 = vunpack.c.h.b16 %v768
    %v2837 = vunpack.c.l.b16 %v769
    %v2838 = vunpack.c.h.b16 %v769
    %v2839 = vunpack.c.l.b16 %v770
    %v2840 = vunpack.c.h.b16 %v770
    %v2841 = vunpack.c.l.b16 %v771
    %v2842 = vunpack.c.h.b16 %v771
    %v2843 = vunpack.c.l.b16 %v772
    %v2844 = vunpack.c.h.b16 %v772
    %v2845 = vunpack.c.l.b16 %v773
    %v2846 = vunpack.c.h.b16 %v773
    %v2847 = vunpack.c.l.b16 %v774
    %v2848 = vunpack.c.h.b16 %v774
    %v2849 = vunpack.c.l.b16 %v775
    %v2850 = vunpack.c.h.b16 %v775
    %v2851 = vunpack.c.l.b16 %v776
    %v2852 = vunpack.c.h.b16 %v776
    %v2853 = vunpack.c.l.b16 %v777
    %v2854 = vunpack.c.h.b16 %v777
    %v2855 = vunpack.c.l.b16 %v778
    %v2856 = vunpack.c.h.b16 %v778
    %v2857 = vunpack.c.l.b16 %v779
    %v2858 = vunpack.c.h.b16 %v779
    %v2859 = vunpack.c.l.b16 %v780
    %v2860 = vunpack.c.h.b16 %v780
    %v2861 = vunpack.c.l.b16 %v781
    %v2862 = vunpack.c.h.b16 %v781
    %v2863 = vunpack.c.l.b16 %v782
    %v2864 = vunpack.c.h.b16 %v782
    %v2865 = vunpack.c.l.b16 %v783
    %v2866 = vunpack.c.h.b16 %v783
    %v2867 = vunpack.c.l.b16 %v784
    %v2868 = vunpack.c.h.b16 %v784
    %v2869 = vunpack.c.l.b16 %v785
    %v2870 = vunpack.c.h.b16 %v785
    %v2871 = vunpack.c.l.b16 %v786
    %v2872 = vunpack.c.h.b16 %v786
    %v2873 = vunpack.c.l.b16 %v787
    %v2874 = vunpack.c.h.b16 %v787
    %v2875 = vunpack.c.l.b16 %v788
    %v2876 = vunpack.c.h.b16 %v788
    %v2877 = vunpack.c.l.b16 %v789
    %v2878 = vunpack.c.h.b16 %v789
    %v2879 = vunpack.c.l.b16 %v790
    %v2880 = vunpack.c.h.b16 %v790
    %v2881 = vunpack.c.l.b16 %v791
    %v2882 = vunpack.c.h.b16 %v791
    %v2883 = vunpack.c.l.b16 %v792
    %v2884 = vunpack.c.h.b16 %v792
    %v2885 = vunpack.c.l.b16 %v793
    %v2886 = vunpack.c.h.b16 %v793
    %v2887 = vunpack.c.l.b16 %v794
    %v2888 = vunpack.c.h.b16 %v794
    %v2889 = vunpack.c.l.b16 %v795
    %v2890 = vunpack.c.h.b16 %v795
    %v2891 = vunpack.c.l.b16 %v796
    %v2892 = vunpack.c.h.b16 %v796
    %v2893 = vunpack.c.l.b16 %v797
    %v2894 = vunpack.c.h.b16 %v797
    %v2895 = vunpack.c.l.b16 %v798
    %v2896 = vunpack.c.h.b16 %v798
    %v2897 = vunpack.c.l.b16 %v799
    %v2898 = vunpack.c.h.b16 %v799
    %v2899 = vunpack.c.l.b16 %v800
    %v2900 = vunpack.c.h.b16 %v800
    %v2901 = vunpack.c.l.b16 %v801
    %v2902 = vunpack.c.h.b16 %v801
    %v2903 = vunpack.c.l.b16 %v802
    %v2904 = vunpack.c.h.b16 %v802
    %v2905 = vunpack.c.l.b16 %v803
    %v2906 = vunpack.c.h.b16 %v803
    %v2907 = vunpack.c.l.b16 %v804
    %v2908 = vunpack.c.h.b16 %v804
    %v2909 = vunpack.c.l.b16 %v805
    %v2910 = vunpack.c.h.b16 %v805
    %v2911 = vunpack.c.l.b16 %v806
    %v2912 = vunpack.c.h.b16 %v806
    %v2913 = vunpack.c.l.b16 %v807
    %v2914 = vunpack.c.h.b16 %v807
    %v2915 = vunpack.c.l.b16 %v808
    %v2916 = vunpack.c.h.b16 %v808
    %v2917 = vunpack.c.l.b16 %v809
    %v2918 = vunpack.c.h.b16 %v809
    %v2919 = vunpack.c.l.b16 %v810
    %v2920 = vunpack.c.h.b16 %v810
    %v2921 = vunpack.c.l.b16 %v811
    %v2922 = vunpack.c.h.b16 %v811
    %v2923 = vunpack.c.l.b16 %v812
    %v2924 = vunpack.c.h.b16 %v812
    %v2925 = vunpack.c.l.b16 %v813
    %v2926 = vunpack.c.h.b16 %v813
    %v2927 = vunpack.c.l.b16 %v814
    %v2928 = vunpack.c.h.b16 %v814
    %v2929 = vunpack.c.l.b16 %v815
    %v2930 = vunpack.c.h.b16 %v815
    %v2931 = vunpack.c.l.b16 %v816
    %v2932 = vunpack.c.h.b16 %v816
    %v2933 = vunpack.c.l.b16 %v817
    %v2934 = vunpack.c.h.b16 %v817
    %v2935 = vunpack.c.l.b16 %v818
    %v2936 = vunpack.c.h.b16 %v818
    %v2937 = vunpack.c.l.b16 %v819
    %v2938 = vunpack.c.h.b16 %v819
    %v2939 = vunpack.c.l.b16 %v820
    %v2940 = vunpack.c.h.b16 %v820
    %v2941 = vunpack.c.l.b16 %v821
    %v2942 = vunpack.c.h.b16 %v821
    %v2943 = vunpack.c.l.b16 %v822
    %v2944 = vunpack.c.h.b16 %v822
    %v2945 = vunpack.c.l.b16 %v823
    %v2946 = vunpack.c.h.b16 %v823
    %v2947 = vunpack.c.l.b16 %v824
    %v2948 = vunpack.c.h.b16 %v824
    %v2949 = vunpack.c.l.b16 %v825
    %v2950 = vunpack.c.h.b16 %v825
    %v2951 = vunpack.c.l.b16 %v826
    %v2952 = vunpack.c.h.b16 %v826
    %v2953 = vunpack.c.l.b16 %v827
    %v2954 = vunpack.c.h.b16 %v827
    %v2955 = vunpack.c.l.b16 %v828
    %v2956 = vunpack.c.h.b16 %v828
    %v2957 = vunpack.c.l.b16 %v829
    %v2958 = vunpack.c.h.b16 %v829
    %v2959 = vunpack.c.l.b16 %v830
    %v2960 = vunpack.c.h.b16 %v830
    %v2961 = vunpack.c.l.b16 %v831
    %v2962 = vunpack.c.h.b16 %v831
    %v2963 = vunpack.c.l.b16 %v832
    %v2964 = vunpack.c.h.b16 %v832
    %v2965 = vunpack.c.l.b16 %v833
    %v2966 = vunpack.c.h.b16 %v833
    %v2967 = vunpack.c.l.b16 %v834
    %v2968 = vunpack.c.h.b16 %v834
    %v2969 = vunpack.c.l.b16 %v835
    %v2970 = vunpack.c.h.b16 %v835
    %v2971 = vunpack.c.l.b16 %v836
    %v2972 = vunpack.c.h.b16 %v836
    %v2973 = vunpack.c.l.b16 %v837
    %v2974 = vunpack.c.h.b16 %v837
    %v2975 = vunpack.c.l.b16 %v838
    %v2976 = vunpack.c.h.b16 %v838
    %v2977 = vunpack.c.l.b16 %v839
    %v2978 = vunpack.c.h.b16 %v839
    %v2979 = vunpack.c.l.b16 %v840
    %v2980 = vunpack.c.h.b16 %v840
    %v2981 = vunpack.c.l.b16 %v841
    %v2982 = vunpack.c.h.b16 %v841
    %v2983 = vunpack.c.l.b16 %v842
    %v2984 = vunpack.c.h.b16 %v842
    %v2985 = vunpack.c.l.b16 %v843
    %v2986 = vunpack.c.h.b16 %v843
    %v2987 = vunpack.c.l.b16 %v844
    %v2988 = vunpack.c.h.b16 %v844
    %v2989 = vunpack.c.l.b16 %v845
    %v2990 = vunpack.c.h.b16 %v845
    %v2991 = vunpack.c.l.b16 %v846
    %v2992 = vunpack.c.h.b16 %v846
    %v2993 = vunpack.c.l.b16 %v847
    %v2994 = vunpack.c.h.b16 %v847
    %v2995 = vunpack.c.l.b16 %v848
    %v2996 = vunpack.c.h.b16 %v848
    %v2997 = vunpack.c.l.b16 %v849
    %v2998 = vunpack.c.h.b16 %v849
    %v2999 = vunpack.c.l.b16 %v850
    %v3000 = vunpack.c.h.b16 %v850
    %v3001 = vunpack.c.l.b16 %v851
    %v3002 = vunpack.c.h.b16 %v851
    %v3003 = vunpack.c.l.b16 %v852
    %v3004 = vunpack.c.h.b16 %v852
    %v3005 = vunpack.c.l.b16 %v853
    %v3006 = vunpack.c.h.b16 %v853
    %v3007 = vunpack.c.l.b16 %v854
    %v3008 = vunpack.c.h.b16 %v854
    %v3009 = vunpack.c.l.b16 %v855
    %v3010 = vunpack.c.h.b16 %v855
    %v3011 = vunpack.c.l.b16 %v856
    %v3012 = vunpack.c.h.b16 %v856
    %v3013 = vunpack.c.l.b16 %v857
    %v3014 = vunpack.c.h.b16 %v857
    %v3015 = vunpack.c.l.b16 %v858
    %v3016 = vunpack.c.h.b16 %v858
    %v3017 = vunpack.c.l.b16 %v859
    %v3018 = vunpack.c.h.b16 %v859
    %v3019 = vunpack.c.l.b16 %v860
    %v3020 = vunpack.c.h.b16 %v860
    %v3021 = vunpack.c.l.b16 %v861
    %v3022 = vunpack.c.h.b16 %v861
    %v3023 = vunpack.c.l.b16 %v862
    %v3024 = vunpack.c.h.b16 %v862
    %v3025 = vunpack.c.l.b16 %v863
    %v3026 = vunpack.c.h.b16 %v863
    %v3027 = vunpack.c.l.b16 %v864
    %v3028 = vunpack.c.h.b16 %v864
    %v3029 = vunpack.c.l.b16 %v865
    %v3030 = vunpack.c.h.b16 %v865
    %v3031 = vunpack.c.l.b16 %v866
    %v3032 = vunpack.c.h.b16 %v866
    %v3033 = vunpack.c.l.b16 %v867
    %v3034 = vunpack.c.h.b16 %v867
    %v3035 = vunpack.c.l.b16 %v868
    %v3036 = vunpack.c.h.b16 %v868
    %v3037 = vunpack.c.l.b16 %v869
    %v3038 = vunpack.c.h.b16 %v869
    %v3039 = vunpack.c.l.b16 %v870
    %v3040 = vunpack.c.h.b16 %v870
    %v3041 = vunpack.c.l.b16 %v871
    %v3042 = vunpack.c.h.b16 %v871
    %v3043 = vunpack.c.l.b16 %v872
    %v3044 = vunpack.c.h.b16 %v872
    %v3045 = vunpack.c.l.b16 %v873
    %v3046 = vunpack.c.h.b16 %v873
    %v3047 = vunpack.c.l.b16 %v874
    %v3048 = vunpack.c.h.b16 %v874
    %v3049 = vunpack.c.l.b16 %v875
    %v3050 = vunpack.c.h.b16 %v875
    %v3051 = vunpack.c.l.b16 %v876
    %v3052 = vunpack.c.h.b16 %v876
    %v3053 = vunpack.c.l.b16 %v877
    %v3054 = vunpack.c.h.b16 %v877
    %v3055 = vunpack.c.l.b16 %v878
    %v3056 = vunpack.c.h.b16 %v878
    %v3057 = vunpack.c.l.b16 %v879
    %v3058 = vunpack.c.h.b16 %v879
    %v3059 = vunpack.c.l.b16 %v880
    %v3060 = vunpack.c.h.b16 %v880
    %v3061 = vunpack.c.l.b16 %v881
    %v3062 = vunpack.c.h.b16 %v881
    %v3063 = vunpack.c.l.b16 %v882
    %v3064 = vunpack.c.h.b16 %v882
    %v3065 = vunpack.c.l.b16 %v883
    %v3066 = vunpack.c.h.b16 %v883
    %v3067 = vunpack.c.l.b16 %v884
    %v3068 = vunpack.c.h.b16 %v884
    %v3069 = vunpack.c.l.b16 %v885
    %v3070 = vunpack.c.h.b16 %v885
    %v3071 = vunpack.c.l.b16 %v886
    %v3072 = vunpack.c.h.b16 %v886
    %v3073 = vpack.c.b16 %v1677, %v1673
    %v3074 = vpack.c.b16 %v1678, %v1674
    %v3075 = vpack.c.b16 %v1679, %v1675
    %v3076 = vpack.c.b16 %v1680, %v1676
    %v3077 = vpack.c.b16 %v1685, %v1681
    %v3078 = vpack.c.b16 %v1686, %v1682
    %v3079 = vpack.c.b16 %v1687, %v1683
    %v3080 = vpack.c.b16 %v1688, %v1684
    %v3081 = vpack.c.b16 %v1693, %v1689
    %v3082 = vpack.c.b16 %v1694, %v1690
    %v3083 = vpack.c.b16 %v1695, %v1691
    %v3084 = vpack.c.b16 %v1696, %v1692
    %v3085 = vpack.c.b16 %v1701, %v1697
    %v3086 = vpack.c.b16 %v1702, %v1698
    %v3087 = vpack.c.b16 %v1703, %v1699
    %v3088 = vpack.c.b16 %v1704, %v1700
    %v3089 = vpack.c.b16 %v1709, %v1705
    %v3090 = vpack.c.b16 %v1710, %v1706
    %v3091 = vpack.c.b16 %v1711, %v1707
    %v3092 = vpack.c.b16 %v1712, %v1708
    %v3093 = vpack.c.b16 %v1717, %v1713
    %v3094 = vpack.c.b16 %v1718, %v1714
    %v3095 = vpack.c.b16 %v1719, %v1715
    %v3096 = vpack.c.b16 %v1720, %v1716
    %v3097 = vpack.c.b16 %v1725, %v1721
    %v3098 = vpack.c.b16 %v1726, %v1722
    %v3099 = vpack.c.b16 %v1727, %v1723
    %v3100 = vpack.c.b16 %v1728, %v1724
    %v3101 = vpack.c.b16 %v1733, %v1729
    %v3102 = vpack.c.b16 %v1734, %v1730
    %v3103 = vpack.c.b16 %v1735, %v1731
    %v3104 = vpack.c.b16 %v1736, %v1732
    %v3105 = vpack.c.b16 %v1741, %v1737
    %v3106 = vpack.c.b16 %v1742, %v1738
    %v3107 = vpack.c.b16 %v1743, %v1739
    %v3108 = vpack.c.b16 %v1744, %v1740
    %v3109 = vpack.c.b16 %v1749, %v1745
    %v3110 = vpack.c.b16 %v1750, %v1746
    %v3111 = vpack.c.b16 %v1751, %v1747
    %v3112 = vpack.c.b16 %v1752, %v1748
    %v3113 = vpack.c.b16 %v1757, %v1753
    %v3114 = vpack.c.b16 %v1758, %v1754
    %v3115 = vpack.c.b16 %v1759, %v1755
    %v3116 = vpack.c.b16 %v1760, %v1756
    %v3117 = vpack.c.b16 %v1765, %v1761
    %v3118 = vpack.c.b16 %v1766, %v1762
    %v3119 = vpack.c.b16 %v1767, %v1763
    %v3120 = vpack.c.b16 %v1768, %v1764
    %v3121 = vpack.c.b16 %v1773, %v1769
    %v3122 = vpack.c.b16 %v1774, %v1770
    %v3123 = vpack.c.b16 %v1775, %v1771
    %v3124 = vpack.c.b16 %v1776, %v1772
    %v3125 = vpack.c.b16 %v1781, %v1777
    %v3126 = vpack.c.b16 %v1782, %v1778
    %v3127 = vpack.c.b16 %v1783, %v1779
    %v3128 = vpack.c.b16 %v1784, %v1780
    %v3129 = vpack.c.b16 %v1789, %v1785
    %v3130 = vpack.c.b16 %v1790, %v1786
    %v3131 = vpack.c.b16 %v1791, %v1787
    %v3132 = vpack.c.b16 %v1792, %v1788
    %v3133 = vpack.c.b16 %v1797, %v1793
    %v3134 = vpack.c.b16 %v1798, %v1794
    %v3135 = vpack.c.b16 %v1799, %v1795
    %v3136 = vpack.c.b16 %v1800, %v1796
    %v3137 = vpack.c.b16 %v1805, %v1801
    %v3138 = vpack.c.b16 %v1806, %v1802
    %v3139 = vpack.c.b16 %v1807, %v1803
    %v3140 = vpack.c.b16 %v1808, %v1804
    %v3141 = vpack.c.b16 %v1813, %v1809
    %v3142 = vpack.c.b16 %v1814, %v1810
    %v3143 = vpack.c.b16 %v1815, %v1811
    %v3144 = vpack.c.b16 %v1816, %v1812
    %v3145 = vpack.c.b16 %v1821, %v1817
    %v3146 = vpack.c.b16 %v1822, %v1818
    %v3147 = vpack.c.b16 %v1823, %v1819
    %v3148 = vpack.c.b16 %v1824, %v1820
    %v3149 = vpack.c.b16 %v1829, %v1825
    %v3150 = vpack.c.b16 %v1830, %v1826
    %v3151 = vpack.c.b16 %v1831, %v1827
    %v3152 = vpack.c.b16 %v1832, %v1828
    %v3153 = vpack.c.b16 %v1837, %v1833
    %v3154 = vpack.c.b16 %v1838, %v1834
    %v3155 = vpack.c.b16 %v1839, %v1835
    %v3156 = vpack.c.b16 %v1840, %v1836
    %v3157 = vpack.c.b16 %v1845, %v1841
    %v3158 = vpack.c.b16 %v1846, %v1842
    %v3159 = vpack.c.b16 %v1847, %v1843
    %v3160 = vpack.c.b16 %v1848, %v1844
    %v3161 = vpack.c.b16 %v1853, %v1849
    %v3162 = vpack.c.b16 %v1854, %v1850
    %v3163 = vpack.c.b16 %v1855, %v1851
    %v3164 = vpack.c.b16 %v1856, %v1852
    %v3165 = vpack.c.b16 %v1861, %v1857
    %v3166 = vpack.c.b16 %v1862, %v1858
    %v3167 = vpack.c.b16 %v1863, %v1859
    %v3168 = vpack.c.b16 %v1864, %v1860
    %v3169 = vpack.c.b16 %v1869, %v1865
    %v3170 = vpack.c.b16 %v1870, %v1866
    %v3171 = vpack.c.b16 %v1871, %v1867
    %v3172 = vpack.c.b16 %v1872, %v1868
    %v3173 = vpack.c.b16 %v1877, %v1873
    %v3174 = vpack.c.b16 %v1878, %v1874
    %v3175 = vpack.c.b16 %v1879, %v1875
    %v3176 = vpack.c.b16 %v1880, %v1876
    %v3177 = vpack.c.b16 %v1885, %v1881
    %v3178 = vpack.c.b16 %v1886, %v1882
    %v3179 = vpack.c.b16 %v1887, %v1883
    %v3180 = vpack.c.b16 %v1888, %v1884
    %v3181 = vpack.c.b16 %v1893, %v1889
    %v3182 = vpack.c.b16 %v1894, %v1890
    %v3183 = vpack.c.b16 %v1895, %v1891
    %v3184 = vpack.c.b16 %v1896, %v1892
    %v3185 = vpack.c.b16 %v1901, %v1897
    %v3186 = vpack.c.b16 %v1902, %v1898
    %v3187 = vpack.c.b16 %v1903, %v1899
    %v3188 = vpack.c.b16 %v1904, %v1900
    %v3189 = vpack.c.b16 %v1909, %v1905
    %v3190 = vpack.c.b16 %v1910, %v1906
    %v3191 = vpack.c.b16 %v1911, %v1907
    %v3192 = vpack.c.b16 %v1912, %v1908
    %v3193 = vpack.c.b16 %v1917, %v1913
    %v3194 = vpack.c.b16 %v1918, %v1914
    %v3195 = vpack.c.b16 %v1919, %v1915
    %v3196 = vpack.c.b16 %v1920, %v1916
    %v3197 = vpack.c.b16 %v1925, %v1921
    %v3198 = vpack.c.b16 %v1926, %v1922
    %v3199 = vpack.c.b16 %v1927, %v1923
    %v3200 = vpack.c.b16 %v1928, %v1924
    %v3201 = vpack.c.b16 %v1933, %v1929
    %v3202 = vpack.c.b16 %v1934, %v1930
    %v3203 = vpack.c.b16 %v1935, %v1931
    %v3204 = vpack.c.b16 %v1936, %v1932
    %v3205 = vpack.c.b16 %v1941, %v1937
    %v3206 = vpack.c.b16 %v1942, %v1938
    %v3207 = vpack.c.b16 %v1943, %v1939
    %v3208 = vpack.c.b16 %v1944, %v1940
    %v3209 = vpack.c.b16 %v1949, %v1945
    %v3210 = vpack.c.b16 %v1950, %v1946
    %v3211 = vpack.c.b16 %v1951, %v1947
    %v3212 = vpack.c.b16 %v1952, %v1948
    %v3213 = vpack.c.b16 %v1957, %v1953
    %v3214 = vpack.c.b16 %v1958, %v1954
    %v3215 = vpack.c.b16 %v1959, %v1955
    %v3216 = vpack.c.b16 %v1960, %v1956
    %v3217 = vpack.c.b16 %v1965, %v1961
    %v3218 = vpack.c.b16 %v1966, %v1962
    %v3219 = vpack.c.b16 %v1967, %v1963
    %v3220 = vpack.c.b16 %v1968, %v1964
    %v3221 = vpack.c.b16 %v1973, %v1969
    %v3222 = vpack.c.b16 %v1974, %v1970
    %v3223 = vpack.c.b16 %v1975, %v1971
    %v3224 = vpack.c.b16 %v1976, %v1972
    %v3225 = vpack.c.b16 %v1981, %v1977
    %v3226 = vpack.c.b16 %v1982, %v1978
    %v3227 = vpack.c.b16 %v1983, %v1979
    %v3228 = vpack.c.b16 %v1984, %v1980
    %v3229 = vpack.c.b16 %v1989, %v1985
    %v3230 = vpack.c.b16 %v1990, %v1986
    %v3231 = vpack.c.b16 %v1991, %v1987
    %v3232 = vpack.c.b16 %v1992, %v1988
    %v3233 = vpack.c.b16 %v1997, %v1993
    %v3234 = vpack.c.b16 %v1998, %v1994
    %v3235 = vpack.c.b16 %v1999, %v1995
    %v3236 = vpack.c.b16 %v2000, %v1996
    %v3237 = vpack.c.b16 %v2005, %v2001
    %v3238 = vpack.c.b16 %v2006, %v2002
    %v3239 = vpack.c.b16 %v2007, %v2003
    %v3240 = vpack.c.b16 %v2008, %v2004
    %v3241 = vpack.c.b16 %v2013, %v2009
    %v3242 = vpack.c.b16 %v2014, %v2010
    %v3243 = vpack.c.b16 %v2015, %v2011
    %v3244 = vpack.c.b16 %v2016, %v2012
    %v3245 = vpack.c.b16 %v2021, %v2017
    %v3246 = vpack.c.b16 %v2022, %v2018
    %v3247 = vpack.c.b16 %v2023, %v2019
    %v3248 = vpack.c.b16 %v2024, %v2020
    %v3249 = vpack.c.b16 %v2029, %v2025
    %v3250 = vpack.c.b16 %v2030, %v2026
    %v3251 = vpack.c.b16 %v2031, %v2027
    %v3252 = vpack.c.b16 %v2032, %v2028
    %v3253 = vpack.c.b16 %v2037, %v2033
    %v3254 = vpack.c.b16 %v2038, %v2034
    %v3255 = vpack.c.b16 %v2039, %v2035
    %v3256 = vpack.c.b16 %v2040, %v2036
    %v3257 = vpack.c.b16 %v2045, %v2041
    %v3258 = vpack.c.b16 %v2046, %v2042
    %v3259 = vpack.c.b16 %v2047, %v2043
    %v3260 = vpack.c.b16 %v2048, %v2044
    %v3261 = vpack.c.b16 %v2053, %v2049
    %v3262 = vpack.c.b16 %v2054, %v2050
    %v3263 = vpack.c.b16 %v2055, %v2051
    %v3264 = vpack.c.b16 %v2056, %v2052
    %v3265 = vpack.c.b16 %v2061, %v2057
    %v3266 = vpack.c.b16 %v2062, %v2058
    %v3267 = vpack.c.b16 %v2063, %v2059
    %v3268 = vpack.c.b16 %v2064, %v2060
    %v3269 = vpack.c.b16 %v2069, %v2065
    %v3270 = vpack.c.b16 %v2070, %v2066
    %v3271 = vpack.c.b16 %v2071, %v2067
    %v3272 = vpack.c.b16 %v2072, %v2068
    %v3273 = vpack.c.b16 %v2077, %v2073
    %v3274 = vpack.c.b16 %v2078, %v2074
    %v3275 = vpack.c.b16 %v2079, %v2075
    %v3276 = vpack.c.b16 %v2080, %v2076
    %v3277 = vpack.c.b16 %v2085, %v2081
    %v3278 = vpack.c.b16 %v2086, %v2082
    %v3279 = vpack.c.b16 %v2087, %v2083
    %v3280 = vpack.c.b16 %v2088, %v2084
    %v3281 = vpack.c.b16 %v2093, %v2089
    %v3282 = vpack.c.b16 %v2094, %v2090
    %v3283 = vpack.c.b16 %v2095, %v2091
    %v3284 = vpack.c.b16 %v2096, %v2092
    %v3285 = vpack.c.b16 %v2101, %v2097
    %v3286 = vpack.c.b16 %v2102, %v2098
    %v3287 = vpack.c.b16 %v2103, %v2099
    %v3288 = vpack.c.b16 %v2104, %v2100
    %v3289 = vpack.c.b16 %v2109, %v2105
    %v3290 = vpack.c.b16 %v2110, %v2106
    %v3291 = vpack.c.b16 %v2111, %v2107
    %v3292 = vpack.c.b16 %v2112, %v2108
    %v3293 = vpack.c.b16 %v2117, %v2113
    %v3294 = vpack.c.b16 %v2118, %v2114
    %v3295 = vpack.c.b16 %v2119, %v2115
    %v3296 = vpack.c.b16 %v2120, %v2116
    %v3297 = vpack.c.b16 %v2125, %v2121
    %v3298 = vpack.c.b16 %v2126, %v2122
    %v3299 = vpack.c.b16 %v2127, %v2123
    %v3300 = vpack.c.b16 %v2128, %v2124
    %v3301 = vpack.c.b16 %v2133, %v2129
    %v3302 = vpack.c.b16 %v2134, %v2130
    %v3303 = vpack.c.b16 %v2135, %v2131
    %v3304 = vpack.c.b16 %v2136, %v2132
    %v3305 = vpack.c.b16 %v2141, %v2137
    %v3306 = vpack.c.b16 %v2142, %v2138
    %v3307 = vpack.c.b16 %v2143, %v2139
    %v3308 = vpack.c.b16 %v2144, %v2140
    %v3309 = vpack.c.b16 %v2149, %v2145
    %v3310 = vpack.c.b16 %v2150, %v2146
    %v3311 = vpack.c.b16 %v2151, %v2147
    %v3312 = vpack.c.b16 %v2152, %v2148
    %v3313 = vpack.c.b16 %v2157, %v2153
    %v3314 = vpack.c.b16 %v2158, %v2154
    %v3315 = vpack.c.b16 %v2159, %v2155
    %v3316 = vpack.c.b16 %v2160, %v2156
    %v3317 = vpack.c.b16 %v2165, %v2161
    %v3318 = vpack.c.b16 %v2166, %v2162
    %v3319 = vpack.c.b16 %v2167, %v2163
    %v3320 = vpack.c.b16 %v2168, %v2164
    %v3321 = vpack.c.b16 %v2173, %v2169
    %v3322 = vpack.c.b16 %v2174, %v2170
    %v3323 = vpack.c.b16 %v2175, %v2171
    %v3324 = vpack.c.b16 %v2176, %v2172
    %v3325 = vpack.c.b16 %v2181, %v2177
    %v3326 = vpack.c.b16 %v2182, %v2178
    %v3327 = vpack.c.b16 %v2183, %v2179
    %v3328 = vpack.c.b16 %v2184, %v2180
    %v3329 = vpack.c.b16 %v2189, %v2185
    %v3330 = vpack.c.b16 %v2190, %v2186
    %v3331 = vpack.c.b16 %v2191, %v2187
    %v3332 = vpack.c.b16 %v2192, %v2188
    %v3333 = vpack.c.b16 %v2197, %v2193
    %v3334 = vpack.c.b16 %v2198, %v2194
    %v3335 = vpack.c.b16 %v2199, %v2195
    %v3336 = vpack.c.b16 %v2200, %v2196
    %v3337 = vpack.c.b16 %v2205, %v2201
    %v3338 = vpack.c.b16 %v2206, %v2202
    %v3339 = vpack.c.b16 %v2207, %v2203
    %v3340 = vpack.c.b16 %v2208, %v2204
    %v3341 = vpack.c.b16 %v2213, %v2209
    %v3342 = vpack.c.b16 %v2214, %v2210
    %v3343 = vpack.c.b16 %v2215, %v2211
    %v3344 = vpack.c.b16 %v2216, %v2212
    %v3345 = vpack.c.b16 %v2221, %v2217
    %v3346 = vpack.c.b16 %v2222, %v2218
    %v3347 = vpack.c.b16 %v2223, %v2219
    %v3348 = vpack.c.b16 %v2224, %v2220
    %v3349 = vpack.c.b16 %v2229, %v2225
    %v3350 = vpack.c.b16 %v2230, %v2226
    %v3351 = vpack.c.b16 %v2231, %v2227
    %v3352 = vpack.c.b16 %v2232, %v2228
    %v3353 = vpack.c.b16 %v2237, %v2233
    %v3354 = vpack.c.b16 %v2238, %v2234
    %v3355 = vpack.c.b16 %v2239, %v2235
    %v3356 = vpack.c.b16 %v2240, %v2236
    %v3357 = vpack.c.b16 %v2245, %v2241
    %v3358 = vpack.c.b16 %v2246, %v2242
    %v3359 = vpack.c.b16 %v2247, %v2243
    %v3360 = vpack.c.b16 %v2248, %v2244
    %v3361 = vpack.c.b16 %v2253, %v2249
    %v3362 = vpack.c.b16 %v2254, %v2250
    %v3363 = vpack.c.b16 %v2255, %v2251
    %v3364 = vpack.c.b16 %v2256, %v2252
    %v3365 = vpack.c.b16 %v2261, %v2257
    %v3366 = vpack.c.b16 %v2262, %v2258
    %v3367 = vpack.c.b16 %v2263, %v2259
    %v3368 = vpack.c.b16 %v2264, %v2260
    %v3369 = vpack.c.b16 %v2269, %v2265
    %v3370 = vpack.c.b16 %v2270, %v2266
    %v3371 = vpack.c.b16 %v2271, %v2267
    %v3372 = vpack.c.b16 %v2272, %v2268
    %v3373 = vpack.c.b16 %v2277, %v2273
    %v3374 = vpack.c.b16 %v2278, %v2274
    %v3375 = vpack.c.b16 %v2279, %v2275
    %v3376 = vpack.c.b16 %v2280, %v2276
    %v3377 = vpack.c.b16 %v2285, %v2281
    %v3378 = vpack.c.b16 %v2286, %v2282
    %v3379 = vpack.c.b16 %v2287, %v2283
    %v3380 = vpack.c.b16 %v2288, %v2284
    %v3381 = vpack.c.b16 %v2293, %v2289
    %v3382 = vpack.c.b16 %v2294, %v2290
    %v3383 = vpack.c.b16 %v2295, %v2291
    %v3384 = vpack.c.b16 %v2296, %v2292
    %v3385 = vpack.c.b16 %v2301, %v2297
    %v3386 = vpack.c.b16 %v2302, %v2298
    %v3387 = vpack.c.b16 %v2303, %v2299
    %v3388 = vpack.c.b16 %v2304, %v2300
    %v3389 = vpack.c.b16 %v2309, %v2305
    %v3390 = vpack.c.b16 %v2310, %v2306
    %v3391 = vpack.c.b16 %v2311, %v2307
    %v3392 = vpack.c.b16 %v2312, %v2308
    %v3393 = vpack.c.b16 %v2317, %v2313
    %v3394 = vpack.c.b16 %v2318, %v2314
    %v3395 = vpack.c.b16 %v2319, %v2315
    %v3396 = vpack.c.b16 %v2320, %v2316
    %v3397 = vpack.c.b16 %v2325, %v2321
    %v3398 = vpack.c.b16 %v2326, %v2322
    %v3399 = vpack.c.b16 %v2327, %v2323
    %v3400 = vpack.c.b16 %v2328, %v2324
    %v3401 = vpack.c.b16 %v2333, %v2329
    %v3402 = vpack.c.b16 %v2334, %v2330
    %v3403 = vpack.c.b16 %v2335, %v2331
    %v3404 = vpack.c.b16 %v2336, %v2332
    %v3405 = vpack.c.b16 %v2341, %v2337
    %v3406 = vpack.c.b16 %v2342, %v2338
    %v3407 = vpack.c.b16 %v2343, %v2339
    %v3408 = vpack.c.b16 %v2344, %v2340
    %v3409 = vpack.c.b16 %v2349, %v2345
    %v3410 = vpack.c.b16 %v2350, %v2346
    %v3411 = vpack.c.b16 %v2351, %v2347
    %v3412 = vpack.c.b16 %v2352, %v2348
    %v3413 = vpack.c.b16 %v2357, %v2353
    %v3414 = vpack.c.b16 %v2358, %v2354
    %v3415 = vpack.c.b16 %v2359, %v2355
    %v3416 = vpack.c.b16 %v2360, %v2356
    %v3417 = vpack.c.b16 %v2365, %v2361
    %v3418 = vpack.c.b16 %v2366, %v2362
    %v3419 = vpack.c.b16 %v2367, %v2363
    %v3420 = vpack.c.b16 %v2368, %v2364
    %v3421 = vpack.c.b16 %v2373, %v2369
    %v3422 = vpack.c.b16 %v2374, %v2370
    %v3423 = vpack.c.b16 %v2375, %v2371
    %v3424 = vpack.c.b16 %v2376, %v2372
    %v3425 = vpack.c.b16 %v2381, %v2377
    %v3426 = vpack.c.b16 %v2382, %v2378
    %v3427 = vpack.c.b16 %v2383, %v2379
    %v3428 = vpack.c.b16 %v2384, %v2380
    %v3429 = vpack.c.b16 %v2389, %v2385
    %v3430 = vpack.c.b16 %v2390, %v2386
    %v3431 = vpack.c.b16 %v2391, %v2387
    %v3432 = vpack.c.b16 %v2392, %v2388
    %v3433 = vpack.c.b16 %v2397, %v2393
    %v3434 = vpack.c.b16 %v2398, %v2394
    %v3435 = vpack.c.b16 %v2399, %v2395
    %v3436 = vpack.c.b16 %v2400, %v2396
    %v3437 = vpack.c.b16 %v2405, %v2401
    %v3438 = vpack.c.b16 %v2406, %v2402
    %v3439 = vpack.c.b16 %v2407, %v2403
    %v3440 = vpack.c.b16 %v2408, %v2404
    %v3441 = vpack.c.b16 %v2413, %v2409
    %v3442 = vpack.c.b16 %v2414, %v2410
    %v3443 = vpack.c.b16 %v2415, %v2411
    %v3444 = vpack.c.b16 %v2416, %v2412
    %v3445 = vpack.c.b16 %v2421, %v2417
    %v3446 = vpack.c.b16 %v2422, %v2418
    %v3447 = vpack.c.b16 %v2423, %v2419
    %v3448 = vpack.c.b16 %v2424, %v2420
    %v3449 = vpack.c.b16 %v2429, %v2425
    %v3450 = vpack.c.b16 %v2430, %v2426
    %v3451 = vpack.c.b16 %v2431, %v2427
    %v3452 = vpack.c.b16 %v2432, %v2428
    %v3453 = vpack.c.b16 %v2437, %v2433
    %v3454 = vpack.c.b16 %v2438, %v2434
    %v3455 = vpack.c.b16 %v2439, %v2435
    %v3456 = vpack.c.b16 %v2440, %v2436
    %v3457 = vpack.c.b16 %v2445, %v2441
    %v3458 = vpack.c.b16 %v2446, %v2442
    %v3459 = vpack.c.b16 %v2447, %v2443
    %v3460 = vpack.c.b16 %v2448, %v2444
    %v3461 = vpack.c.b16 %v2453, %v2449
    %v3462 = vpack.c.b16 %v2454, %v2450
    %v3463 = vpack.c.b16 %v2455, %v2451
    %v3464 = vpack.c.b16 %v2456, %v2452
    %v3465 = vpack.c.b16 %v2461, %v2457
    %v3466 = vpack.c.b16 %v2462, %v2458
    %v3467 = vpack.c.b16 %v2463, %v2459
    %v3468 = vpack.c.b16 %v2464, %v2460
    %v3469 = vpack.c.b16 %v2469, %v2465
    %v3470 = vpack.c.b16 %v2470, %v2466
    %v3471 = vpack.c.b16 %v2471, %v2467
    %v3472 = vpack.c.b16 %v2472, %v2468
    %v3473 = vpack.c.b16 %v2477, %v2473
    %v3474 = vpack.c.b16 %v2478, %v2474
    %v3475 = vpack.c.b16 %v2479, %v2475
    %v3476 = vpack.c.b16 %v2480, %v2476
    %v3477 = vpack.c.b16 %v2485, %v2481
    %v3478 = vpack.c.b16 %v2486, %v2482
    %v3479 = vpack.c.b16 %v2487, %v2483
    %v3480 = vpack.c.b16 %v2488, %v2484
    %v3481 = vpack.c.b16 %v2493, %v2489
    %v3482 = vpack.c.b16 %v2494, %v2490
    %v3483 = vpack.c.b16 %v2495, %v2491
    %v3484 = vpack.c.b16 %v2496, %v2492
    %v3485 = vpack.c.b16 %v2501, %v2497
    %v3486 = vpack.c.b16 %v2502, %v2498
    %v3487 = vpack.c.b16 %v2503, %v2499
    %v3488 = vpack.c.b16 %v2504, %v2500
    %v3489 = vpack.c.b16 %v2509, %v2505
    %v3490 = vpack.c.b16 %v2510, %v2506
    %v3491 = vpack.c.b16 %v2511, %v2507
    %v3492 = vpack.c.b16 %v2512, %v2508
    %v3493 = vpack.c.b16 %v2517, %v2513
    %v3494 = vpack.c.b16 %v2518, %v2514
    %v3495 = vpack.c.b16 %v2519, %v2515
    %v3496 = vpack.c.b16 %v2520, %v2516
    %v3497 = vpack.c.b16 %v2525, %v2521
    %v3498 = vpack.c.b16 %v2526, %v2522
    %v3499 = vpack.c.b16 %v2527, %v2523
    %v3500 = vpack.c.b16 %v2528, %v2524
    %v3501 = vpack.c.b16 %v2533, %v2529
    %v3502 = vpack.c.b16 %v2534, %v2530
    %v3503 = vpack.c.b16 %v2535, %v2531
    %v3504 = vpack.c.b16 %v2536, %v2532
    %v3505 = vpack.c.b16 %v2541, %v2537
    %v3506 = vpack.c.b16 %v2542, %v2538
    %v3507 = vpack.c.b16 %v2543, %v2539
    %v3508 = vpack.c.b16 %v2544, %v2540
    %v3509 = vpack.c.b16 %v2549, %v2545
    %v3510 = vpack.c.b16 %v2550, %v2546
    %v3511 = vpack.c.b16 %v2551, %v2547
    %v3512 = vpack.c.b16 %v2552, %v2548
    %v3513 = vpack.c.b16 %v2557, %v2553
    %v3514 = vpack.c.b16 %v2558, %v2554
    %v3515 = vpack.c.b16 %v2559, %v2555
    %v3516 = vpack.c.b16 %v2560, %v2556
    %v3517 = vpack.c.b16 %v2565, %v2561
    %v3518 = vpack.c.b16 %v2566, %v2562
    %v3519 = vpack.c.b16 %v2567, %v2563
    %v3520 = vpack.c.b16 %v2568, %v2564
    %v3521 = vpack.c.b16 %v2573, %v2569
    %v3522 = vpack.c.b16 %v2574, %v2570
    %v3523 = vpack.c.b16 %v2575, %v2571
    %v3524 = vpack.c.b16 %v2576, %v2572
    %v3525 = vpack.c.b16 %v2581, %v2577
    %v3526 = vpack.c.b16 %v2582, %v2578
    %v3527 = vpack.c.b16 %v2583, %v2579
    %v3528 = vpack.c.b16 %v2584, %v2580
    %v3529 = vpack.c.b16 %v2589, %v2585
    %v3530 = vpack.c.b16 %v2590, %v2586
    %v3531 = vpack.c.b16 %v2591, %v2587
    %v3532 = vpack.c.b16 %v2592, %v2588
    %v3533 = vpack.c.b16 %v2597, %v2593
    %v3534 = vpack.c.b16 %v2598, %v2594
    %v3535 = vpack.c.b16 %v2599, %v2595
    %v3536 = vpack.c.b16 %v2600, %v2596
    %v3537 = vpack.c.b16 %v2605, %v2601
    %v3538 = vpack.c.b16 %v2606, %v2602
    %v3539 = vpack.c.b16 %v2607, %v2603
    %v3540 = vpack.c.b16 %v2608, %v2604
    %v3541 = vpack.c.b16 %v2613, %v2609
    %v3542 = vpack.c.b16 %v2614, %v2610
    %v3543 = vpack.c.b16 %v2615, %v2611
    %v3544 = vpack.c.b16 %v2616, %v2612
    %v3545 = vpack.c.b16 %v2621, %v2617
    %v3546 = vpack.c.b16 %v2622, %v2618
    %v3547 = vpack.c.b16 %v2623, %v2619
    %v3548 = vpack.c.b16 %v2624, %v2620
    %v3549 = vpack.c.b16 %v2629, %v2625
    %v3550 = vpack.c.b16 %v2630, %v2626
    %v3551 = vpack.c.b16 %v2631, %v2627
    %v3552 = vpack.c.b16 %v2632, %v2628
    %v3553 = vpack.c.b16 %v2637, %v2633
    %v3554 = vpack.c.b16 %v2638, %v2634
    %v3555 = vpack.c.b16 %v2639, %v2635
    %v3556 = vpack.c.b16 %v2640, %v2636
    %v3557 = vpack.c.b16 %v2645, %v2641
    %v3558 = vpack.c.b16 %v2646, %v2642
    %v3559 = vpack.c.b16 %v2647, %v2643
    %v3560 = vpack.c.b16 %v2648, %v2644
    %v3561 = vpack.c.b16 %v2653, %v2649
    %v3562 = vpack.c.b16 %v2654, %v2650
    %v3563 = vpack.c.b16 %v2655, %v2651
    %v3564 = vpack.c.b16 %v2656, %v2652
    %v3565 = vpack.c.b16 %v2661, %v2657
    %v3566 = vpack.c.b16 %v2662, %v2658
    %v3567 = vpack.c.b16 %v2663, %v2659
    %v3568 = vpack.c.b16 %v2664, %v2660
    %v3569 = vpack.c.b16 %v2669, %v2665
    %v3570 = vpack.c.b16 %v2670, %v2666
    %v3571 = vpack.c.b16 %v2671, %v2667
    %v3572 = vpack.c.b16 %v2672, %v2668
    %v3573 = vpack.c.b16 %v2677, %v2673
    %v3574 = vpack.c.b16 %v2678, %v2674
    %v3575 = vpack.c.b16 %v2679, %v2675
    %v3576 = vpack.c.b16 %v2680, %v2676
    %v3577 = vpack.c.b16 %v2685, %v2681
    %v3578 = vpack.c.b16 %v2686, %v2682
    %v3579 = vpack.c.b16 %v2687, %v2683
    %v3580 = vpack.c.b16 %v2688, %v2684
    %v3581 = vpack.c.b16 %v2693, %v2689
    %v3582 = vpack.c.b16 %v2694, %v2690
    %v3583 = vpack.c.b16 %v2695, %v2691
    %v3584 = vpack.c.b16 %v2696, %v2692
    %v3585 = vpack.c.b16 %v2701, %v2697
    %v3586 = vpack.c.b16 %v2702, %v2698
    %v3587 = vpack.c.b16 %v2703, %v2699
    %v3588 = vpack.c.b16 %v2704, %v2700
    %v3589 = vpack.c.b16 %v2709, %v2705
    %v3590 = vpack.c.b16 %v2710, %v2706
    %v3591 = vpack.c.b16 %v2711, %v2707
    %v3592 = vpack.c.b16 %v2712, %v2708
    %v3593 = vpack.c.b16 %v2717, %v2713
    %v3594 = vpack.c.b16 %v2718, %v2714
    %v3595 = vpack.c.b16 %v2719, %v2715
    %v3596 = vpack.c.b16 %v2720, %v2716
    %v3597 = vpack.c.b16 %v2725, %v2721
    %v3598 = vpack.c.b16 %v2726, %v2722
    %v3599 = vpack.c.b16 %v2727, %v2723
    %v3600 = vpack.c.b16 %v2728, %v2724
    %v3601 = vpack.c.b16 %v2733, %v2729
    %v3602 = vpack.c.b16 %v2734, %v2730
    %v3603 = vpack.c.b16 %v2735, %v2731
    %v3604 = vpack.c.b16 %v2736, %v2732
    %v3605 = vpack.c.b16 %v2741, %v2737
    %v3606 = vpack.c.b16 %v2742, %v2738
    %v3607 = vpack.c.b16 %v2743, %v2739
    %v3608 = vpack.c.b16 %v2744, %v2740
    %v3609 = vpack.c.b16 %v2749, %v2745
    %v3610 = vpack.c.b16 %v2750, %v2746
    %v3611 = vpack.c.b16 %v2751, %v2747
    %v3612 = vpack.c.b16 %v2752, %v2748
    %v3613 = vpack.c.b16 %v2757, %v2753
    %v3614 = vpack.c.b16 %v2758, %v2754
    %v3615 = vpack.c.b16 %v2759, %v2755
    %v3616 = vpack.c.b16 %v2760, %v2756
    %v3617 = vpack.c.b16 %v2765, %v2761
    %v3618 = vpack.c.b16 %v2766, %v2762
    %v3619 = vpack.c.b16 %v2767, %v2763
    %v3620 = vpack.c.b16 %v2768, %v2764
    %v3621 = vpack.c.b16 %v2773, %v2769
    %v3622 = vpack.c.b16 %v2774, %v2770
    %v3623 = vpack.c.b16 %v2775, %v2771
    %v3624 = vpack.c.b16 %v2776, %v2772
    %v3625 = vpack.c.b16 %v2781, %v2777
    %v3626 = vpack.c.b16 %v2782, %v2778
    %v3627 = vpack.c.b16 %v2783, %v2779
    %v3628 = vpack.c.b16 %v2784, %v2780
    %v3629 = vpack.c.b16 %v2789, %v2785
    %v3630 = vpack.c.b16 %v2790, %v2786
    %v3631 = vpack.c.b16 %v2791, %v2787
    %v3632 = vpack.c.b16 %v2792, %v2788
    %v3633 = vpack.c.b16 %v2797, %v2793
    %v3634 = vpack.c.b16 %v2798, %v2794
    %v3635 = vpack.c.b16 %v2799, %v2795
    %v3636 = vpack.c.b16 %v2800, %v2796
    %v3637 = vpack.c.b16 %v2805, %v2801
    %v3638 = vpack.c.b16 %v2806, %v2802
    %v3639 = vpack.c.b16 %v2807, %v2803
    %v3640 = vpack.c.b16 %v2808, %v2804
    %v3641 = vpack.c.b16 %v2813, %v2809
    %v3642 = vpack.c.b16 %v2814, %v2810
    %v3643 = vpack.c.b16 %v2815, %v2811
    %v3644 = vpack.c.b16 %v2816, %v2812
    %v3645 = vpack.c.b16 %v2821, %v2817
    %v3646 = vpack.c.b16 %v2822, %v2818
    %v3647 = vpack.c.b16 %v2823, %v2819
    %v3648 = vpack.c.b16 %v2824, %v2820
    %v3649 = vpack.c.b16 %v2829, %v2825
    %v3650 = vpack.c.b16 %v2830, %v2826
    %v3651 = vpack.c.b16 %v2831, %v2827
    %v3652 = vpack.c.b16 %v2832, %v2828
    %v3653 = vpack.c.b16 %v2837, %v2833
    %v3654 = vpack.c.b16 %v2838, %v2834
    %v3655 = vpack.c.b16 %v2839, %v2835
    %v3656 = vpack.c.b16 %v2840, %v2836
    %v3657 = vpack.c.b16 %v2845, %v2841
    %v3658 = vpack.c.b16 %v2846, %v2842
    %v3659 = vpack.c.b16 %v2847, %v2843
    %v3660 = vpack.c.b16 %v2848, %v2844
    %v3661 = vpack.c.b16 %v2853, %v2849
    %v3662 = vpack.c.b16 %v2854, %v2850
    %v3663 = vpack.c.b16 %v2855, %v2851
    %v3664 = vpack.c.b16 %v2856, %v2852
    %v3665 = vpack.c.b16 %v2861, %v2857
    %v3666 = vpack.c.b16 %v2862, %v2858
    %v3667 = vpack.c.b16 %v2863, %v2859
    %v3668 = vpack.c.b16 %v2864, %v2860
    %v3669 = vpack.c.b16 %v2869, %v2865
    %v3670 = vpack.c.b16 %v2870, %v2866
    %v3671 = vpack.c.b16 %v2871, %v2867
    %v3672 = vpack.c.b16 %v2872, %v2868
    %v3673 = vpack.c.b16 %v2877, %v2873
    %v3674 = vpack.c.b16 %v2878, %v2874
    %v3675 = vpack.c.b16 %v2879, %v2875
    %v3676 = vpack.c.b16 %v2880, %v2876
    %v3677 = vpack.c.b16 %v2885, %v2881
    %v3678 = vpack.c.b16 %v2886, %v2882
    %v3679 = vpack.c.b16 %v2887, %v2883
    %v3680 = vpack.c.b16 %v2888, %v2884
    %v3681 = vpack.c.b16 %v2893, %v2889
    %v3682 = vpack.c.b16 %v2894, %v2890
    %v3683 = vpack.c.b16 %v2895, %v2891
    %v3684 = vpack.c.b16 %v2896, %v2892
    %v3685 = vpack.c.b16 %v2901, %v2897
    %v3686 = vpack.c.b16 %v2902, %v2898
    %v3687 = vpack.c.b16 %v2903, %v2899
    %v3688 = vpack.c.b16 %v2904, %v2900
    %v3689 = vpack.c.b16 %v2909, %v2905
    %v3690 = vpack.c.b16 %v2910, %v2906
    %v3691 = vpack.c.b16 %v2911, %v2907
    %v3692 = vpack.c.b16 %v2912, %v2908
    %v3693 = vpack.c.b16 %v2917, %v2913
    %v3694 = vpack.c.b16 %v2918, %v2914
    %v3695 = vpack.c.b16 %v2919, %v2915
    %v3696 = vpack.c.b16 %v2920, %v2916
    %v3697 = vpack.c.b16 %v2925, %v2921
    %v3698 = vpack.c.b16 %v2926, %v2922
    %v3699 = vpack.c.b16 %v2927, %v2923
    %v3700 = vpack.c.b16 %v2928, %v2924
    %v3701 = vpack.c.b16 %v2933, %v2929
    %v3702 = vpack.c.b16 %v2934, %v2930
    %v3703 = vpack.c.b16 %v2935, %v2931
    %v3704 = vpack.c.b16 %v2936, %v2932
    %v3705 = vpack.c.b16 %v2941, %v2937
    %v3706 = vpack.c.b16 %v2942, %v2938
    %v3707 = vpack.c.b16 %v2943, %v2939
    %v3708 = vpack.c.b16 %v2944, %v2940
    %v3709 = vpack.c.b16 %v2949, %v2945
    %v3710 = vpack.c.b16 %v2950, %v2946
    %v3711 = vpack.c.b16 %v2951, %v2947
    %v3712 = vpack.c.b16 %v2952, %v2948
    %v3713 = vpack.c.b16 %v2957, %v2953
    %v3714 = vpack.c.b16 %v2958, %v2954
    %v3715 = vpack.c.b16 %v2959, %v2955
    %v3716 = vpack.c.b16 %v2960, %v2956
    %v3717 = vpack.c.b16 %v2965, %v2961
    %v3718 = vpack.c.b16 %v2966, %v2962
    %v3719 = vpack.c.b16 %v2967, %v2963
    %v3720 = vpack.c.b16 %v2968, %v2964
    %v3721 = vpack.c.b16 %v2973, %v2969
    %v3722 = vpack.c.b16 %v2974, %v2970
    %v3723 = vpack.c.b16 %v2975, %v2971
    %v3724 = vpack.c.b16 %v2976, %v2972
    %v3725 = vpack.c.b16 %v2981, %v2977
    %v3726 = vpack.c.b16 %v2982, %v2978
    %v3727 = vpack.c.b16 %v2983, %v2979
    %v3728 = vpack.c.b16 %v2984, %v2980
    %v3729 = vpack.c.b16 %v2989, %v2985
    %v3730 = vpack.c.b16 %v2990, %v2986
    %v3731 = vpack.c.b16 %v2991, %v2987
    %v3732 = vpack.c.b16 %v2992, %v2988
    %v3733 = vpack.c.b16 %v2997, %v2993
    %v3734 = vpack.c.b16 %v2998, %v2994
    %v3735 = vpack.c.b16 %v2999, %v2995
    %v3736 = vpack.c.b16 %v3000, %v2996
    %v3737 = vpack.c.b16 %v3005, %v3001
    %v3738 = vpack.c.b16 %v3006, %v3002
    %v3739 = vpack.c.b16 %v3007, %v3003
    %v3740 = vpack.c.b16 %v3008, %v3004
    %v3741 = vpack.c.b16 %v3013, %v3009
    %v3742 = vpack.c.b16 %v3014, %v3010
    %v3743 = vpack.c.b16 %v3015, %v3011
    %v3744 = vpack.c.b16 %v3016, %v3012
    %v3745 = vpack.c.b16 %v3021, %v3017
    %v3746 = vpack.c.b16 %v3022, %v3018
    %v3747 = vpack.c.b16 %v3023, %v3019
    %v3748 = vpack.c.b16 %v3024, %v3020
    %v3749 = vpack.c.b16 %v3029, %v3025
    %v3750 = vpack.c.b16 %v3030, %v3026
    %v3751 = vpack.c.b16 %v3031, %v3027
    %v3752 = vpack.c.b16 %v3032, %v3028
    %v3753 = vpack.c.b16 %v3037, %v3033
    %v3754 = vpack.c.b16 %v3038, %v3034
    %v3755 = vpack.c.b16 %v3039, %v3035
    %v3756 = vpack.c.b16 %v3040, %v3036
    %v3757 = vpack.c.b16 %v3045, %v3041
    %v3758 = vpack.c.b16 %v3046, %v3042
    %v3759 = vpack.c.b16 %v3047, %v3043
    %v3760 = vpack.c.b16 %v3048, %v3044
    %v3761 = vpack.c.b16 %v3053, %v3049
    %v3762 = vpack.c.b16 %v3054, %v3050
    %v3763 = vpack.c.b16 %v3055, %v3051
    %v3764 = vpack.c.b16 %v3056, %v3052
    %v3765 = vpack.c.b16 %v3061, %v3057
    %v3766 = vpack.c.b16 %v3062, %v3058
    %v3767 = vpack.c.b16 %v3063, %v3059
    %v3768 = vpack.c.b16 %v3064, %v3060
    %v3769 = vpack.c.b16 %v3069, %v3065
    %v3770 = vpack.c.b16 %v3070, %v3066
    %v3771 = vpack.c.b16 %v3071, %v3067
    %v3772 = vpack.c.b16 %v3072, %v3068
    %vm4473 = vcmask 916480
    %v4475 = vsel %vm4473, %v951, 0
    %4477 = vmatpush.bf16.msra.mxu0 %v3101
    %4478 = vmatpush.bf16.msra.mxu0 %v3097
    %4479 = vmatpush.bf16.msra.mxu0 %v3093
    %4480 = vmatpush.bf16.msra.mxu0 %v3089
    %4481 = vmatpush.bf16.msra.mxu0 %v3085
    %4482 = vmatpush.bf16.msra.mxu0 %v3081
    %4483 = vmatpush.bf16.msra.mxu0 %v3077
    %4484 = vmatpush.bf16.msra.mxu0 %v3073
    %4485 = vmatmul.bf16.gmra.mxu0 %v930
    %v4486 = vpop.f32.mrf.mxu0
    %v4487 = vadd.f32 %v889, %v4486
    %v4488 = vpop.f32.mrf.mxu0
    %4489 = vdwg.mxu0
    %4490 = vmatpush.bf16.msra.mxu0 %v3133
    %4491 = vmatpush.bf16.msra.mxu0 %v3129
    %4492 = vmatpush.bf16.msra.mxu0 %v3125
    %4493 = vmatpush.bf16.msra.mxu0 %v3121
    %4494 = vmatpush.bf16.msra.mxu0 %v3117
    %4495 = vmatpush.bf16.msra.mxu0 %v3113
    %4496 = vmatpush.bf16.msra.mxu0 %v3109
    %4497 = vmatpush.bf16.msra.mxu0 %v3105
    %4498 = vmatmul.bf16.gmra.mxu0 %v931
    %v4499 = vpop.f32.mrf.mxu0
    %v4500 = vadd.f32 %v4487, %v4499
    %v4501 = vpop.f32.mrf.mxu0
    %4502 = vdwg.mxu0
    %4503 = vmatpush.bf16.msra.mxu0 %v3165
    %4504 = vmatpush.bf16.msra.mxu0 %v3161
    %4505 = vmatpush.bf16.msra.mxu0 %v3157
    %4506 = vmatpush.bf16.msra.mxu0 %v3153
    %4507 = vmatpush.bf16.msra.mxu0 %v3149
    %4508 = vmatpush.bf16.msra.mxu0 %v3145
    %4509 = vmatpush.bf16.msra.mxu0 %v3141
    %4510 = vmatpush.bf16.msra.mxu0 %v3137
    %4511 = vmatmul.bf16.gmra.mxu0 %v932
    %v4512 = vpop.f32.mrf.mxu0
    %v4513 = vadd.f32 %v4500, %v4512
    %v4514 = vpop.f32.mrf.mxu0
    %4515 = vdwg.mxu0
    %4516 = vmatpush.bf16.msra.mxu0 %v3197
    %4517 = vmatpush.bf16.msra.mxu0 %v3193
    %4518 = vmatpush.bf16.msra.mxu0 %v3189
    %4519 = vmatpush.bf16.msra.mxu0 %v3185
    %4520 = vmatpush.bf16.msra.mxu0 %v3181
    %4521 = vmatpush.bf16.msra.mxu0 %v3177
    %4522 = vmatpush.bf16.msra.mxu0 %v3173
    %4523 = vmatpush.bf16.msra.mxu0 %v3169
    %4524 = vmatmul.bf16.gmra.mxu0 %v933
    %v4525 = vpop.f32.mrf.mxu0
    %v4526 = vadd.f32 %v4513, %v4525
    %v4527 = vpop.f32.mrf.mxu0
    %4528 = vdwg.mxu0
    %4529 = vmatpush.bf16.msra.mxu0 %v3229
    %4530 = vmatpush.bf16.msra.mxu0 %v3225
    %4531 = vmatpush.bf16.msra.mxu0 %v3221
    %4532 = vmatpush.bf16.msra.mxu0 %v3217
    %4533 = vmatpush.bf16.msra.mxu0 %v3213
    %4534 = vmatpush.bf16.msra.mxu0 %v3209
    %4535 = vmatpush.bf16.msra.mxu0 %v3205
    %4536 = vmatpush.bf16.msra.mxu0 %v3201
    %4537 = vmatmul.bf16.gmra.mxu0 %v934
    %v4538 = vpop.f32.mrf.mxu0
    %v4539 = vadd.f32 %v4526, %v4538
    %v4540 = vpop.f32.mrf.mxu0
    %4541 = vdwg.mxu0
    %4542 = vmatpush.bf16.msra.mxu0 %v3261
    %4543 = vmatpush.bf16.msra.mxu0 %v3257
    %4544 = vmatpush.bf16.msra.mxu0 %v3253
    %4545 = vmatpush.bf16.msra.mxu0 %v3249
    %4546 = vmatpush.bf16.msra.mxu0 %v3245
    %4547 = vmatpush.bf16.msra.mxu0 %v3241
    %4548 = vmatpush.bf16.msra.mxu0 %v3237
    %4549 = vmatpush.bf16.msra.mxu0 %v3233
    %4550 = vmatmul.bf16.gmra.mxu0 %v935
    %v4551 = vpop.f32.mrf.mxu0
    %v4552 = vadd.f32 %v4539, %v4551
    %v4553 = vpop.f32.mrf.mxu0
    %4554 = vdwg.mxu0
    %4555 = vmatpush.bf16.msra.mxu0 %v3293
    %4556 = vmatpush.bf16.msra.mxu0 %v3289
    %4557 = vmatpush.bf16.msra.mxu0 %v3285
    %4558 = vmatpush.bf16.msra.mxu0 %v3281
    %4559 = vmatpush.bf16.msra.mxu0 %v3277
    %4560 = vmatpush.bf16.msra.mxu0 %v3273
    %4561 = vmatpush.bf16.msra.mxu0 %v3269
    %4562 = vmatpush.bf16.msra.mxu0 %v3265
    %4563 = vmatmul.bf16.gmra.mxu0 %v936
    %v4564 = vpop.f32.mrf.mxu0
    %v4565 = vadd.f32 %v4552, %v4564
    %v4566 = vpop.f32.mrf.mxu0
    %4567 = vdwg.mxu0
    %4568 = vmatpush.bf16.msra.mxu0 %v3325
    %4569 = vmatpush.bf16.msra.mxu0 %v3321
    %4570 = vmatpush.bf16.msra.mxu0 %v3317
    %4571 = vmatpush.bf16.msra.mxu0 %v3313
    %4572 = vmatpush.bf16.msra.mxu0 %v3309
    %4573 = vmatpush.bf16.msra.mxu0 %v3305
    %4574 = vmatpush.bf16.msra.mxu0 %v3301
    %4575 = vmatpush.bf16.msra.mxu0 %v3297
    %4576 = vmatmul.bf16.gmra.mxu0 %v937
    %v4577 = vpop.f32.mrf.mxu0
    %v4578 = vadd.f32 %v4565, %v4577
    %v4579 = vpop.f32.mrf.mxu0
    %4580 = vdwg.mxu0
    %4581 = vmatpush.bf16.msra.mxu0 %v3357
    %4582 = vmatpush.bf16.msra.mxu0 %v3353
    %4583 = vmatpush.bf16.msra.mxu0 %v3349
    %4584 = vmatpush.bf16.msra.mxu0 %v3345
    %4585 = vmatpush.bf16.msra.mxu0 %v3341
    %4586 = vmatpush.bf16.msra.mxu0 %v3337
    %4587 = vmatpush.bf16.msra.mxu0 %v3333
    %4588 = vmatpush.bf16.msra.mxu0 %v3329
    %4589 = vmatmul.bf16.gmra.mxu0 %v938
    %v4590 = vpop.f32.mrf.mxu0
    %v4591 = vadd.f32 %v4578, %v4590
    %v4592 = vpop.f32.mrf.mxu0
    %4593 = vdwg.mxu0
    %4594 = vmatpush.bf16.msra.mxu0 %v3389
    %4595 = vmatpush.bf16.msra.mxu0 %v3385
    %4596 = vmatpush.bf16.msra.mxu0 %v3381
    %4597 = vmatpush.bf16.msra.mxu0 %v3377
    %4598 = vmatpush.bf16.msra.mxu0 %v3373
    %4599 = vmatpush.bf16.msra.mxu0 %v3369
    %4600 = vmatpush.bf16.msra.mxu0 %v3365
    %4601 = vmatpush.bf16.msra.mxu0 %v3361
    %4602 = vmatmul.bf16.gmra.mxu0 %v939
    %v4603 = vpop.f32.mrf.mxu0
    %v4604 = vadd.f32 %v4591, %v4603
    %v4605 = vpop.f32.mrf.mxu0
    %4606 = vdwg.mxu0
    %4607 = vmatpush.bf16.msra.mxu0 %v3421
    %4608 = vmatpush.bf16.msra.mxu0 %v3417
    %4609 = vmatpush.bf16.msra.mxu0 %v3413
    %4610 = vmatpush.bf16.msra.mxu0 %v3409
    %4611 = vmatpush.bf16.msra.mxu0 %v3405
    %4612 = vmatpush.bf16.msra.mxu0 %v3401
    %4613 = vmatpush.bf16.msra.mxu0 %v3397
    %4614 = vmatpush.bf16.msra.mxu0 %v3393
    %4615 = vmatmul.bf16.gmra.mxu0 %v940
    %v4616 = vpop.f32.mrf.mxu0
    %v4617 = vadd.f32 %v4604, %v4616
    %v4618 = vpop.f32.mrf.mxu0
    %4619 = vdwg.mxu0
    %4620 = vmatpush.bf16.msra.mxu0 %v3453
    %4621 = vmatpush.bf16.msra.mxu0 %v3449
    %4622 = vmatpush.bf16.msra.mxu0 %v3445
    %4623 = vmatpush.bf16.msra.mxu0 %v3441
    %4624 = vmatpush.bf16.msra.mxu0 %v3437
    %4625 = vmatpush.bf16.msra.mxu0 %v3433
    %4626 = vmatpush.bf16.msra.mxu0 %v3429
    %4627 = vmatpush.bf16.msra.mxu0 %v3425
    %4628 = vmatmul.bf16.gmra.mxu0 %v941
    %v4629 = vpop.f32.mrf.mxu0
    %v4630 = vadd.f32 %v4617, %v4629
    %v4631 = vpop.f32.mrf.mxu0
    %4632 = vdwg.mxu0
    %4633 = vmatpush.bf16.msra.mxu0 %v3485
    %4634 = vmatpush.bf16.msra.mxu0 %v3481
    %4635 = vmatpush.bf16.msra.mxu0 %v3477
    %4636 = vmatpush.bf16.msra.mxu0 %v3473
    %4637 = vmatpush.bf16.msra.mxu0 %v3469
    %4638 = vmatpush.bf16.msra.mxu0 %v3465
    %4639 = vmatpush.bf16.msra.mxu0 %v3461
    %4640 = vmatpush.bf16.msra.mxu0 %v3457
    %4641 = vmatmul.bf16.gmra.mxu0 %v942
    %v4642 = vpop.f32.mrf.mxu0
    %v4643 = vadd.f32 %v4630, %v4642
    %v4644 = vpop.f32.mrf.mxu0
    %4645 = vdwg.mxu0
    %4646 = vmatpush.bf16.msra.mxu0 %v3517
    %4647 = vmatpush.bf16.msra.mxu0 %v3513
    %4648 = vmatpush.bf16.msra.mxu0 %v3509
    %4649 = vmatpush.bf16.msra.mxu0 %v3505
    %4650 = vmatpush.bf16.msra.mxu0 %v3501
    %4651 = vmatpush.bf16.msra.mxu0 %v3497
    %4652 = vmatpush.bf16.msra.mxu0 %v3493
    %4653 = vmatpush.bf16.msra.mxu0 %v3489
    %4654 = vmatmul.bf16.gmra.mxu0 %v943
    %v4655 = vpop.f32.mrf.mxu0
    %v4656 = vadd.f32 %v4643, %v4655
    %v4657 = vpop.f32.mrf.mxu0
    %4658 = vdwg.mxu0
    %4659 = vmatpush.bf16.msra.mxu0 %v3549
    %4660 = vmatpush.bf16.msra.mxu0 %v3545
    %4661 = vmatpush.bf16.msra.mxu0 %v3541
    %4662 = vmatpush.bf16.msra.mxu0 %v3537
    %4663 = vmatpush.bf16.msra.mxu0 %v3533
    %4664 = vmatpush.bf16.msra.mxu0 %v3529
    %4665 = vmatpush.bf16.msra.mxu0 %v3525
    %4666 = vmatpush.bf16.msra.mxu0 %v3521
    %4667 = vmatmul.bf16.gmra.mxu0 %v944
    %v4668 = vpop.f32.mrf.mxu0
    %v4669 = vadd.f32 %v4656, %v4668
    %v4670 = vpop.f32.mrf.mxu0
    %4671 = vdwg.mxu0
    %4672 = vmatpush.bf16.msra.mxu0 %v3581
    %4673 = vmatpush.bf16.msra.mxu0 %v3577
    %4674 = vmatpush.bf16.msra.mxu0 %v3573
    %4675 = vmatpush.bf16.msra.mxu0 %v3569
    %4676 = vmatpush.bf16.msra.mxu0 %v3565
    %4677 = vmatpush.bf16.msra.mxu0 %v3561
    %4678 = vmatpush.bf16.msra.mxu0 %v3557
    %4679 = vmatpush.bf16.msra.mxu0 %v3553
    %4680 = vmatmul.bf16.gmra.mxu0 %v945
    %v4681 = vpop.f32.mrf.mxu0
    %v4682 = vadd.f32 %v4669, %v4681
    %v4683 = vpop.f32.mrf.mxu0
    %4684 = vdwg.mxu0
    %4685 = vmatpush.bf16.msra.mxu0 %v3613
    %4686 = vmatpush.bf16.msra.mxu0 %v3609
    %4687 = vmatpush.bf16.msra.mxu0 %v3605
    %4688 = vmatpush.bf16.msra.mxu0 %v3601
    %4689 = vmatpush.bf16.msra.mxu0 %v3597
    %4690 = vmatpush.bf16.msra.mxu0 %v3593
    %4691 = vmatpush.bf16.msra.mxu0 %v3589
    %4692 = vmatpush.bf16.msra.mxu0 %v3585
    %4693 = vmatmul.bf16.gmra.mxu0 %v946
    %v4694 = vpop.f32.mrf.mxu0
    %v4695 = vadd.f32 %v4682, %v4694
    %v4696 = vpop.f32.mrf.mxu0
    %4697 = vdwg.mxu0
    %4698 = vmatpush.bf16.msra.mxu0 %v3645
    %4699 = vmatpush.bf16.msra.mxu0 %v3641
    %4700 = vmatpush.bf16.msra.mxu0 %v3637
    %4701 = vmatpush.bf16.msra.mxu0 %v3633
    %4702 = vmatpush.bf16.msra.mxu0 %v3629
    %4703 = vmatpush.bf16.msra.mxu0 %v3625
    %4704 = vmatpush.bf16.msra.mxu0 %v3621
    %4705 = vmatpush.bf16.msra.mxu0 %v3617
    %4706 = vmatmul.bf16.gmra.mxu0 %v947
    %v4707 = vpop.f32.mrf.mxu0
    %v4708 = vadd.f32 %v4695, %v4707
    %v4709 = vpop.f32.mrf.mxu0
    %4710 = vdwg.mxu0
    %4711 = vmatpush.bf16.msra.mxu0 %v3677
    %4712 = vmatpush.bf16.msra.mxu0 %v3673
    %4713 = vmatpush.bf16.msra.mxu0 %v3669
    %4714 = vmatpush.bf16.msra.mxu0 %v3665
    %4715 = vmatpush.bf16.msra.mxu0 %v3661
    %4716 = vmatpush.bf16.msra.mxu0 %v3657
    %4717 = vmatpush.bf16.msra.mxu0 %v3653
    %4718 = vmatpush.bf16.msra.mxu0 %v3649
    %4719 = vmatmul.bf16.gmra.mxu0 %v948
    %v4720 = vpop.f32.mrf.mxu0
    %v4721 = vadd.f32 %v4708, %v4720
    %v4722 = vpop.f32.mrf.mxu0
    %4723 = vdwg.mxu0
    %4724 = vmatpush.bf16.msra.mxu0 %v3709
    %4725 = vmatpush.bf16.msra.mxu0 %v3705
    %4726 = vmatpush.bf16.msra.mxu0 %v3701
    %4727 = vmatpush.bf16.msra.mxu0 %v3697
    %4728 = vmatpush.bf16.msra.mxu0 %v3693
    %4729 = vmatpush.bf16.msra.mxu0 %v3689
    %4730 = vmatpush.bf16.msra.mxu0 %v3685
    %4731 = vmatpush.bf16.msra.mxu0 %v3681
    %4732 = vmatmul.bf16.gmra.mxu0 %v949
    %v4733 = vpop.f32.mrf.mxu0
    %v4734 = vadd.f32 %v4721, %v4733
    %v4735 = vpop.f32.mrf.mxu0
    %4736 = vdwg.mxu0
    %4737 = vmatpush.bf16.msra.mxu0 %v3741
    %4738 = vmatpush.bf16.msra.mxu0 %v3737
    %4739 = vmatpush.bf16.msra.mxu0 %v3733
    %4740 = vmatpush.bf16.msra.mxu0 %v3729
    %4741 = vmatpush.bf16.msra.mxu0 %v3725
    %4742 = vmatpush.bf16.msra.mxu0 %v3721
    %4743 = vmatpush.bf16.msra.mxu0 %v3717
    %4744 = vmatpush.bf16.msra.mxu0 %v3713
    %4745 = vmatmul.bf16.gmra.mxu0 %v950
    %v4746 = vpop.f32.mrf.mxu0
    %v4747 = vadd.f32 %v4734, %v4746
    %v4748 = vpop.f32.mrf.mxu0
    %4749 = vdwg.mxu0
    %4750 = vmatpush.bf16.msra.mxu0 0
    %4751 = vmatpush.bf16.msra.mxu0 %v3769
    %4752 = vmatpush.bf16.msra.mxu0 %v3765
    %4753 = vmatpush.bf16.msra.mxu0 %v3761
    %4754 = vmatpush.bf16.msra.mxu0 %v3757
    %4755 = vmatpush.bf16.msra.mxu0 %v3753
    %4756 = vmatpush.bf16.msra.mxu0 %v3749
    %4757 = vmatpush.bf16.msra.mxu0 %v3745
    %4758 = vmatmul.bf16.gmra.mxu0 %v4475
    %v4759 = vpop.f32.mrf.mxu0
    %v4760 = vadd.f32 %v4747, %v4759
    %v4761 = vpop.f32.mrf.mxu0
    %4762 = vdwg.mxu0
    %4763 = vmatpush.bf16.msra.mxu0 %v3102
    %4764 = vmatpush.bf16.msra.mxu0 %v3098
    %4765 = vmatpush.bf16.msra.mxu0 %v3094
    %4766 = vmatpush.bf16.msra.mxu0 %v3090
    %4767 = vmatpush.bf16.msra.mxu0 %v3086
    %4768 = vmatpush.bf16.msra.mxu0 %v3082
    %4769 = vmatpush.bf16.msra.mxu0 %v3078
    %4770 = vmatpush.bf16.msra.mxu0 %v3074
    %4771 = vmatmul.bf16.gmra.mxu0 %v930
    %v4772 = vpop.f32.mrf.mxu0
    %v4773 = vadd.f32 %v890, %v4772
    %v4774 = vpop.f32.mrf.mxu0
    %4775 = vdwg.mxu0
    %4776 = vmatpush.bf16.msra.mxu0 %v3134
    %4777 = vmatpush.bf16.msra.mxu0 %v3130
    %4778 = vmatpush.bf16.msra.mxu0 %v3126
    %4779 = vmatpush.bf16.msra.mxu0 %v3122
    %4780 = vmatpush.bf16.msra.mxu0 %v3118
    %4781 = vmatpush.bf16.msra.mxu0 %v3114
    %4782 = vmatpush.bf16.msra.mxu0 %v3110
    %4783 = vmatpush.bf16.msra.mxu0 %v3106
    %4784 = vmatmul.bf16.gmra.mxu0 %v931
    %v4785 = vpop.f32.mrf.mxu0
    %v4786 = vadd.f32 %v4773, %v4785
    %v4787 = vpop.f32.mrf.mxu0
    %4788 = vdwg.mxu0
    %4789 = vmatpush.bf16.msra.mxu0 %v3166
    %4790 = vmatpush.bf16.msra.mxu0 %v3162
    %4791 = vmatpush.bf16.msra.mxu0 %v3158
    %4792 = vmatpush.bf16.msra.mxu0 %v3154
    %4793 = vmatpush.bf16.msra.mxu0 %v3150
    %4794 = vmatpush.bf16.msra.mxu0 %v3146
    %4795 = vmatpush.bf16.msra.mxu0 %v3142
    %4796 = vmatpush.bf16.msra.mxu0 %v3138
    %4797 = vmatmul.bf16.gmra.mxu0 %v932
    %v4798 = vpop.f32.mrf.mxu0
    %v4799 = vadd.f32 %v4786, %v4798
    %v4800 = vpop.f32.mrf.mxu0
    %4801 = vdwg.mxu0
    %4802 = vmatpush.bf16.msra.mxu0 %v3198
    %4803 = vmatpush.bf16.msra.mxu0 %v3194
    %4804 = vmatpush.bf16.msra.mxu0 %v3190
    %4805 = vmatpush.bf16.msra.mxu0 %v3186
    %4806 = vmatpush.bf16.msra.mxu0 %v3182
    %4807 = vmatpush.bf16.msra.mxu0 %v3178
    %4808 = vmatpush.bf16.msra.mxu0 %v3174
    %4809 = vmatpush.bf16.msra.mxu0 %v3170
    %4810 = vmatmul.bf16.gmra.mxu0 %v933
    %v4811 = vpop.f32.mrf.mxu0
    %v4812 = vadd.f32 %v4799, %v4811
    %v4813 = vpop.f32.mrf.mxu0
    %4814 = vdwg.mxu0
    %4815 = vmatpush.bf16.msra.mxu0 %v3230
    %4816 = vmatpush.bf16.msra.mxu0 %v3226
    %4817 = vmatpush.bf16.msra.mxu0 %v3222
    %4818 = vmatpush.bf16.msra.mxu0 %v3218
    %4819 = vmatpush.bf16.msra.mxu0 %v3214
    %4820 = vmatpush.bf16.msra.mxu0 %v3210
    %4821 = vmatpush.bf16.msra.mxu0 %v3206
    %4822 = vmatpush.bf16.msra.mxu0 %v3202
    %4823 = vmatmul.bf16.gmra.mxu0 %v934
    %v4824 = vpop.f32.mrf.mxu0
    %v4825 = vadd.f32 %v4812, %v4824
    %v4826 = vpop.f32.mrf.mxu0
    %4827 = vdwg.mxu0
    %4828 = vmatpush.bf16.msra.mxu0 %v3262
    %4829 = vmatpush.bf16.msra.mxu0 %v3258
    %4830 = vmatpush.bf16.msra.mxu0 %v3254
    %4831 = vmatpush.bf16.msra.mxu0 %v3250
    %4832 = vmatpush.bf16.msra.mxu0 %v3246
    %4833 = vmatpush.bf16.msra.mxu0 %v3242
    %4834 = vmatpush.bf16.msra.mxu0 %v3238
    %4835 = vmatpush.bf16.msra.mxu0 %v3234
    %4836 = vmatmul.bf16.gmra.mxu0 %v935
    %v4837 = vpop.f32.mrf.mxu0
    %v4838 = vadd.f32 %v4825, %v4837
    %v4839 = vpop.f32.mrf.mxu0
    %4840 = vdwg.mxu0
    %4841 = vmatpush.bf16.msra.mxu0 %v3294
    %4842 = vmatpush.bf16.msra.mxu0 %v3290
    %4843 = vmatpush.bf16.msra.mxu0 %v3286
    %4844 = vmatpush.bf16.msra.mxu0 %v3282
    %4845 = vmatpush.bf16.msra.mxu0 %v3278
    %4846 = vmatpush.bf16.msra.mxu0 %v3274
    %4847 = vmatpush.bf16.msra.mxu0 %v3270
    %4848 = vmatpush.bf16.msra.mxu0 %v3266
    %4849 = vmatmul.bf16.gmra.mxu0 %v936
    %v4850 = vpop.f32.mrf.mxu0
    %v4851 = vadd.f32 %v4838, %v4850
    %v4852 = vpop.f32.mrf.mxu0
    %4853 = vdwg.mxu0
    %4854 = vmatpush.bf16.msra.mxu0 %v3326
    %4855 = vmatpush.bf16.msra.mxu0 %v3322
    %4856 = vmatpush.bf16.msra.mxu0 %v3318
    %4857 = vmatpush.bf16.msra.mxu0 %v3314
    %4858 = vmatpush.bf16.msra.mxu0 %v3310
    %4859 = vmatpush.bf16.msra.mxu0 %v3306
    %4860 = vmatpush.bf16.msra.mxu0 %v3302
    %4861 = vmatpush.bf16.msra.mxu0 %v3298
    %4862 = vmatmul.bf16.gmra.mxu0 %v937
    %v4863 = vpop.f32.mrf.mxu0
    %v4864 = vadd.f32 %v4851, %v4863
    %v4865 = vpop.f32.mrf.mxu0
    %4866 = vdwg.mxu0
    %4867 = vmatpush.bf16.msra.mxu0 %v3358
    %4868 = vmatpush.bf16.msra.mxu0 %v3354
    %4869 = vmatpush.bf16.msra.mxu0 %v3350
    %4870 = vmatpush.bf16.msra.mxu0 %v3346
    %4871 = vmatpush.bf16.msra.mxu0 %v3342
    %4872 = vmatpush.bf16.msra.mxu0 %v3338
    %4873 = vmatpush.bf16.msra.mxu0 %v3334
    %4874 = vmatpush.bf16.msra.mxu0 %v3330
    %4875 = vmatmul.bf16.gmra.mxu0 %v938
    %v4876 = vpop.f32.mrf.mxu0
    %v4877 = vadd.f32 %v4864, %v4876
    %v4878 = vpop.f32.mrf.mxu0
    %4879 = vdwg.mxu0
    %4880 = vmatpush.bf16.msra.mxu0 %v3390
    %4881 = vmatpush.bf16.msra.mxu0 %v3386
    %4882 = vmatpush.bf16.msra.mxu0 %v3382
    %4883 = vmatpush.bf16.msra.mxu0 %v3378
    %4884 = vmatpush.bf16.msra.mxu0 %v3374
    %4885 = vmatpush.bf16.msra.mxu0 %v3370
    %4886 = vmatpush.bf16.msra.mxu0 %v3366
    %4887 = vmatpush.bf16.msra.mxu0 %v3362
    %4888 = vmatmul.bf16.gmra.mxu0 %v939
    %v4889 = vpop.f32.mrf.mxu0
    %v4890 = vadd.f32 %v4877, %v4889
    %v4891 = vpop.f32.mrf.mxu0
    %4892 = vdwg.mxu0
    %4893 = vmatpush.bf16.msra.mxu0 %v3422
    %4894 = vmatpush.bf16.msra.mxu0 %v3418
    %4895 = vmatpush.bf16.msra.mxu0 %v3414
    %4896 = vmatpush.bf16.msra.mxu0 %v3410
    %4897 = vmatpush.bf16.msra.mxu0 %v3406
    %4898 = vmatpush.bf16.msra.mxu0 %v3402
    %4899 = vmatpush.bf16.msra.mxu0 %v3398
    %4900 = vmatpush.bf16.msra.mxu0 %v3394
    %4901 = vmatmul.bf16.gmra.mxu0 %v940
    %v4902 = vpop.f32.mrf.mxu0
    %v4903 = vadd.f32 %v4890, %v4902
    %v4904 = vpop.f32.mrf.mxu0
    %4905 = vdwg.mxu0
    %4906 = vmatpush.bf16.msra.mxu0 %v3454
    %4907 = vmatpush.bf16.msra.mxu0 %v3450
    %4908 = vmatpush.bf16.msra.mxu0 %v3446
    %4909 = vmatpush.bf16.msra.mxu0 %v3442
    %4910 = vmatpush.bf16.msra.mxu0 %v3438
    %4911 = vmatpush.bf16.msra.mxu0 %v3434
    %4912 = vmatpush.bf16.msra.mxu0 %v3430
    %4913 = vmatpush.bf16.msra.mxu0 %v3426
    %4914 = vmatmul.bf16.gmra.mxu0 %v941
    %v4915 = vpop.f32.mrf.mxu0
    %v4916 = vadd.f32 %v4903, %v4915
    %v4917 = vpop.f32.mrf.mxu0
    %4918 = vdwg.mxu0
    %4919 = vmatpush.bf16.msra.mxu0 %v3486
    %4920 = vmatpush.bf16.msra.mxu0 %v3482
    %4921 = vmatpush.bf16.msra.mxu0 %v3478
    %4922 = vmatpush.bf16.msra.mxu0 %v3474
    %4923 = vmatpush.bf16.msra.mxu0 %v3470
    %4924 = vmatpush.bf16.msra.mxu0 %v3466
    %4925 = vmatpush.bf16.msra.mxu0 %v3462
    %4926 = vmatpush.bf16.msra.mxu0 %v3458
    %4927 = vmatmul.bf16.gmra.mxu0 %v942
    %v4928 = vpop.f32.mrf.mxu0
    %v4929 = vadd.f32 %v4916, %v4928
    %v4930 = vpop.f32.mrf.mxu0
    %4931 = vdwg.mxu0
    %4932 = vmatpush.bf16.msra.mxu0 %v3518
    %4933 = vmatpush.bf16.msra.mxu0 %v3514
    %4934 = vmatpush.bf16.msra.mxu0 %v3510
    %4935 = vmatpush.bf16.msra.mxu0 %v3506
    %4936 = vmatpush.bf16.msra.mxu0 %v3502
    %4937 = vmatpush.bf16.msra.mxu0 %v3498
    %4938 = vmatpush.bf16.msra.mxu0 %v3494
    %4939 = vmatpush.bf16.msra.mxu0 %v3490
    %4940 = vmatmul.bf16.gmra.mxu0 %v943
    %v4941 = vpop.f32.mrf.mxu0
    %v4942 = vadd.f32 %v4929, %v4941
    %v4943 = vpop.f32.mrf.mxu0
    %4944 = vdwg.mxu0
    %4945 = vmatpush.bf16.msra.mxu0 %v3550
    %4946 = vmatpush.bf16.msra.mxu0 %v3546
    %4947 = vmatpush.bf16.msra.mxu0 %v3542
    %4948 = vmatpush.bf16.msra.mxu0 %v3538
    %4949 = vmatpush.bf16.msra.mxu0 %v3534
    %4950 = vmatpush.bf16.msra.mxu0 %v3530
    %4951 = vmatpush.bf16.msra.mxu0 %v3526
    %4952 = vmatpush.bf16.msra.mxu0 %v3522
    %4953 = vmatmul.bf16.gmra.mxu0 %v944
    %v4954 = vpop.f32.mrf.mxu0
    %v4955 = vadd.f32 %v4942, %v4954
    %v4956 = vpop.f32.mrf.mxu0
    %4957 = vdwg.mxu0
    %4958 = vmatpush.bf16.msra.mxu0 %v3582
    %4959 = vmatpush.bf16.msra.mxu0 %v3578
    %4960 = vmatpush.bf16.msra.mxu0 %v3574
    %4961 = vmatpush.bf16.msra.mxu0 %v3570
    %4962 = vmatpush.bf16.msra.mxu0 %v3566
    %4963 = vmatpush.bf16.msra.mxu0 %v3562
    %4964 = vmatpush.bf16.msra.mxu0 %v3558
    %4965 = vmatpush.bf16.msra.mxu0 %v3554
    %4966 = vmatmul.bf16.gmra.mxu0 %v945
    %v4967 = vpop.f32.mrf.mxu0
    %v4968 = vadd.f32 %v4955, %v4967
    %v4969 = vpop.f32.mrf.mxu0
    %4970 = vdwg.mxu0
    %4971 = vmatpush.bf16.msra.mxu0 %v3614
    %4972 = vmatpush.bf16.msra.mxu0 %v3610
    %4973 = vmatpush.bf16.msra.mxu0 %v3606
    %4974 = vmatpush.bf16.msra.mxu0 %v3602
    %4975 = vmatpush.bf16.msra.mxu0 %v3598
    %4976 = vmatpush.bf16.msra.mxu0 %v3594
    %4977 = vmatpush.bf16.msra.mxu0 %v3590
    %4978 = vmatpush.bf16.msra.mxu0 %v3586
    %4979 = vmatmul.bf16.gmra.mxu0 %v946
    %v4980 = vpop.f32.mrf.mxu0
    %v4981 = vadd.f32 %v4968, %v4980
    %v4982 = vpop.f32.mrf.mxu0
    %4983 = vdwg.mxu0
    %4984 = vmatpush.bf16.msra.mxu0 %v3646
    %4985 = vmatpush.bf16.msra.mxu0 %v3642
    %4986 = vmatpush.bf16.msra.mxu0 %v3638
    %4987 = vmatpush.bf16.msra.mxu0 %v3634
    %4988 = vmatpush.bf16.msra.mxu0 %v3630
    %4989 = vmatpush.bf16.msra.mxu0 %v3626
    %4990 = vmatpush.bf16.msra.mxu0 %v3622
    %4991 = vmatpush.bf16.msra.mxu0 %v3618
    %4992 = vmatmul.bf16.gmra.mxu0 %v947
    %v4993 = vpop.f32.mrf.mxu0
    %v4994 = vadd.f32 %v4981, %v4993
    %v4995 = vpop.f32.mrf.mxu0
    %4996 = vdwg.mxu0
    %4997 = vmatpush.bf16.msra.mxu0 %v3678
    %4998 = vmatpush.bf16.msra.mxu0 %v3674
    %4999 = vmatpush.bf16.msra.mxu0 %v3670
    %5000 = vmatpush.bf16.msra.mxu0 %v3666
    %5001 = vmatpush.bf16.msra.mxu0 %v3662
    %5002 = vmatpush.bf16.msra.mxu0 %v3658
    %5003 = vmatpush.bf16.msra.mxu0 %v3654
    %5004 = vmatpush.bf16.msra.mxu0 %v3650
    %5005 = vmatmul.bf16.gmra.mxu0 %v948
    %v5006 = vpop.f32.mrf.mxu0
    %v5007 = vadd.f32 %v4994, %v5006
    %v5008 = vpop.f32.mrf.mxu0
    %5009 = vdwg.mxu0
    %5010 = vmatpush.bf16.msra.mxu0 %v3710
    %5011 = vmatpush.bf16.msra.mxu0 %v3706
    %5012 = vmatpush.bf16.msra.mxu0 %v3702
    %5013 = vmatpush.bf16.msra.mxu0 %v3698
    %5014 = vmatpush.bf16.msra.mxu0 %v3694
    %5015 = vmatpush.bf16.msra.mxu0 %v3690
    %5016 = vmatpush.bf16.msra.mxu0 %v3686
    %5017 = vmatpush.bf16.msra.mxu0 %v3682
    %5018 = vmatmul.bf16.gmra.mxu0 %v949
    %v5019 = vpop.f32.mrf.mxu0
    %v5020 = vadd.f32 %v5007, %v5019
    %v5021 = vpop.f32.mrf.mxu0
    %5022 = vdwg.mxu0
    %5023 = vmatpush.bf16.msra.mxu0 %v3742
    %5024 = vmatpush.bf16.msra.mxu0 %v3738
    %5025 = vmatpush.bf16.msra.mxu0 %v3734
    %5026 = vmatpush.bf16.msra.mxu0 %v3730
    %5027 = vmatpush.bf16.msra.mxu0 %v3726
    %5028 = vmatpush.bf16.msra.mxu0 %v3722
    %5029 = vmatpush.bf16.msra.mxu0 %v3718
    %5030 = vmatpush.bf16.msra.mxu0 %v3714
    %5031 = vmatmul.bf16.gmra.mxu0 %v950
    %v5032 = vpop.f32.mrf.mxu0
    %v5033 = vadd.f32 %v5020, %v5032
    %v5034 = vpop.f32.mrf.mxu0
    %5035 = vdwg.mxu0
    %5036 = vmatpush.bf16.msra.mxu0 0
    %5037 = vmatpush.bf16.msra.mxu0 %v3770
    %5038 = vmatpush.bf16.msra.mxu0 %v3766
    %5039 = vmatpush.bf16.msra.mxu0 %v3762
    %5040 = vmatpush.bf16.msra.mxu0 %v3758
    %5041 = vmatpush.bf16.msra.mxu0 %v3754
    %5042 = vmatpush.bf16.msra.mxu0 %v3750
    %5043 = vmatpush.bf16.msra.mxu0 %v3746
    %5044 = vmatmul.bf16.gmra.mxu0 %v4475
    %v5045 = vpop.f32.mrf.mxu0
    %v5046 = vadd.f32 %v5033, %v5045
    %v5047 = vpop.f32.mrf.mxu0
    %5048 = vdwg.mxu0
    %5049 = vmatpush.bf16.msra.mxu0 %v3103
    %5050 = vmatpush.bf16.msra.mxu0 %v3099
    %5051 = vmatpush.bf16.msra.mxu0 %v3095
    %5052 = vmatpush.bf16.msra.mxu0 %v3091
    %5053 = vmatpush.bf16.msra.mxu0 %v3087
    %5054 = vmatpush.bf16.msra.mxu0 %v3083
    %5055 = vmatpush.bf16.msra.mxu0 %v3079
    %5056 = vmatpush.bf16.msra.mxu0 %v3075
    %5057 = vmatmul.bf16.gmra.mxu0 %v930
    %v5058 = vpop.f32.mrf.mxu0
    %v5059 = vadd.f32 %v891, %v5058
    %v5060 = vpop.f32.mrf.mxu0
    %5061 = vdwg.mxu0
    %5062 = vmatpush.bf16.msra.mxu0 %v3135
    %5063 = vmatpush.bf16.msra.mxu0 %v3131
    %5064 = vmatpush.bf16.msra.mxu0 %v3127
    %5065 = vmatpush.bf16.msra.mxu0 %v3123
    %5066 = vmatpush.bf16.msra.mxu0 %v3119
    %5067 = vmatpush.bf16.msra.mxu0 %v3115
    %5068 = vmatpush.bf16.msra.mxu0 %v3111
    %5069 = vmatpush.bf16.msra.mxu0 %v3107
    %5070 = vmatmul.bf16.gmra.mxu0 %v931
    %v5071 = vpop.f32.mrf.mxu0
    %v5072 = vadd.f32 %v5059, %v5071
    %v5073 = vpop.f32.mrf.mxu0
    %5074 = vdwg.mxu0
    %5075 = vmatpush.bf16.msra.mxu0 %v3167
    %5076 = vmatpush.bf16.msra.mxu0 %v3163
    %5077 = vmatpush.bf16.msra.mxu0 %v3159
    %5078 = vmatpush.bf16.msra.mxu0 %v3155
    %5079 = vmatpush.bf16.msra.mxu0 %v3151
    %5080 = vmatpush.bf16.msra.mxu0 %v3147
    %5081 = vmatpush.bf16.msra.mxu0 %v3143
    %5082 = vmatpush.bf16.msra.mxu0 %v3139
    %5083 = vmatmul.bf16.gmra.mxu0 %v932
    %v5084 = vpop.f32.mrf.mxu0
    %v5085 = vadd.f32 %v5072, %v5084
    %v5086 = vpop.f32.mrf.mxu0
    %5087 = vdwg.mxu0
    %5088 = vmatpush.bf16.msra.mxu0 %v3199
    %5089 = vmatpush.bf16.msra.mxu0 %v3195
    %5090 = vmatpush.bf16.msra.mxu0 %v3191
    %5091 = vmatpush.bf16.msra.mxu0 %v3187
    %5092 = vmatpush.bf16.msra.mxu0 %v3183
    %5093 = vmatpush.bf16.msra.mxu0 %v3179
    %5094 = vmatpush.bf16.msra.mxu0 %v3175
    %5095 = vmatpush.bf16.msra.mxu0 %v3171
    %5096 = vmatmul.bf16.gmra.mxu0 %v933
    %v5097 = vpop.f32.mrf.mxu0
    %v5098 = vadd.f32 %v5085, %v5097
    %v5099 = vpop.f32.mrf.mxu0
    %5100 = vdwg.mxu0
    %5101 = vmatpush.bf16.msra.mxu0 %v3231
    %5102 = vmatpush.bf16.msra.mxu0 %v3227
    %5103 = vmatpush.bf16.msra.mxu0 %v3223
    %5104 = vmatpush.bf16.msra.mxu0 %v3219
    %5105 = vmatpush.bf16.msra.mxu0 %v3215
    %5106 = vmatpush.bf16.msra.mxu0 %v3211
    %5107 = vmatpush.bf16.msra.mxu0 %v3207
    %5108 = vmatpush.bf16.msra.mxu0 %v3203
    %5109 = vmatmul.bf16.gmra.mxu0 %v934
    %v5110 = vpop.f32.mrf.mxu0
    %v5111 = vadd.f32 %v5098, %v5110
    %v5112 = vpop.f32.mrf.mxu0
    %5113 = vdwg.mxu0
    %5114 = vmatpush.bf16.msra.mxu0 %v3263
    %5115 = vmatpush.bf16.msra.mxu0 %v3259
    %5116 = vmatpush.bf16.msra.mxu0 %v3255
    %5117 = vmatpush.bf16.msra.mxu0 %v3251
    %5118 = vmatpush.bf16.msra.mxu0 %v3247
    %5119 = vmatpush.bf16.msra.mxu0 %v3243
    %5120 = vmatpush.bf16.msra.mxu0 %v3239
    %5121 = vmatpush.bf16.msra.mxu0 %v3235
    %5122 = vmatmul.bf16.gmra.mxu0 %v935
    %v5123 = vpop.f32.mrf.mxu0
    %v5124 = vadd.f32 %v5111, %v5123
    %v5125 = vpop.f32.mrf.mxu0
    %5126 = vdwg.mxu0
    %5127 = vmatpush.bf16.msra.mxu0 %v3295
    %5128 = vmatpush.bf16.msra.mxu0 %v3291
    %5129 = vmatpush.bf16.msra.mxu0 %v3287
    %5130 = vmatpush.bf16.msra.mxu0 %v3283
    %5131 = vmatpush.bf16.msra.mxu0 %v3279
    %5132 = vmatpush.bf16.msra.mxu0 %v3275
    %5133 = vmatpush.bf16.msra.mxu0 %v3271
    %5134 = vmatpush.bf16.msra.mxu0 %v3267
    %5135 = vmatmul.bf16.gmra.mxu0 %v936
    %v5136 = vpop.f32.mrf.mxu0
    %v5137 = vadd.f32 %v5124, %v5136
    %v5138 = vpop.f32.mrf.mxu0
    %5139 = vdwg.mxu0
    %5140 = vmatpush.bf16.msra.mxu0 %v3327
    %5141 = vmatpush.bf16.msra.mxu0 %v3323
    %5142 = vmatpush.bf16.msra.mxu0 %v3319
    %5143 = vmatpush.bf16.msra.mxu0 %v3315
    %5144 = vmatpush.bf16.msra.mxu0 %v3311
    %5145 = vmatpush.bf16.msra.mxu0 %v3307
    %5146 = vmatpush.bf16.msra.mxu0 %v3303
    %5147 = vmatpush.bf16.msra.mxu0 %v3299
    %5148 = vmatmul.bf16.gmra.mxu0 %v937
    %v5149 = vpop.f32.mrf.mxu0
    %v5150 = vadd.f32 %v5137, %v5149
    %v5151 = vpop.f32.mrf.mxu0
    %5152 = vdwg.mxu0
    %5153 = vmatpush.bf16.msra.mxu0 %v3359
    %5154 = vmatpush.bf16.msra.mxu0 %v3355
    %5155 = vmatpush.bf16.msra.mxu0 %v3351
    %5156 = vmatpush.bf16.msra.mxu0 %v3347
    %5157 = vmatpush.bf16.msra.mxu0 %v3343
    %5158 = vmatpush.bf16.msra.mxu0 %v3339
    %5159 = vmatpush.bf16.msra.mxu0 %v3335
    %5160 = vmatpush.bf16.msra.mxu0 %v3331
    %5161 = vmatmul.bf16.gmra.mxu0 %v938
    %v5162 = vpop.f32.mrf.mxu0
    %v5163 = vadd.f32 %v5150, %v5162
    %v5164 = vpop.f32.mrf.mxu0
    %5165 = vdwg.mxu0
    %5166 = vmatpush.bf16.msra.mxu0 %v3391
    %5167 = vmatpush.bf16.msra.mxu0 %v3387
    %5168 = vmatpush.bf16.msra.mxu0 %v3383
    %5169 = vmatpush.bf16.msra.mxu0 %v3379
    %5170 = vmatpush.bf16.msra.mxu0 %v3375
    %5171 = vmatpush.bf16.msra.mxu0 %v3371
    %5172 = vmatpush.bf16.msra.mxu0 %v3367
    %5173 = vmatpush.bf16.msra.mxu0 %v3363
    %5174 = vmatmul.bf16.gmra.mxu0 %v939
    %v5175 = vpop.f32.mrf.mxu0
    %v5176 = vadd.f32 %v5163, %v5175
    %v5177 = vpop.f32.mrf.mxu0
    %5178 = vdwg.mxu0
    %5179 = vmatpush.bf16.msra.mxu0 %v3423
    %5180 = vmatpush.bf16.msra.mxu0 %v3419
    %5181 = vmatpush.bf16.msra.mxu0 %v3415
    %5182 = vmatpush.bf16.msra.mxu0 %v3411
    %5183 = vmatpush.bf16.msra.mxu0 %v3407
    %5184 = vmatpush.bf16.msra.mxu0 %v3403
    %5185 = vmatpush.bf16.msra.mxu0 %v3399
    %5186 = vmatpush.bf16.msra.mxu0 %v3395
    %5187 = vmatmul.bf16.gmra.mxu0 %v940
    %v5188 = vpop.f32.mrf.mxu0
    %v5189 = vadd.f32 %v5176, %v5188
    %v5190 = vpop.f32.mrf.mxu0
    %5191 = vdwg.mxu0
    %5192 = vmatpush.bf16.msra.mxu0 %v3455
    %5193 = vmatpush.bf16.msra.mxu0 %v3451
    %5194 = vmatpush.bf16.msra.mxu0 %v3447
    %5195 = vmatpush.bf16.msra.mxu0 %v3443
    %5196 = vmatpush.bf16.msra.mxu0 %v3439
    %5197 = vmatpush.bf16.msra.mxu0 %v3435
    %5198 = vmatpush.bf16.msra.mxu0 %v3431
    %5199 = vmatpush.bf16.msra.mxu0 %v3427
    %5200 = vmatmul.bf16.gmra.mxu0 %v941
    %v5201 = vpop.f32.mrf.mxu0
    %v5202 = vadd.f32 %v5189, %v5201
    %v5203 = vpop.f32.mrf.mxu0
    %5204 = vdwg.mxu0
    %5205 = vmatpush.bf16.msra.mxu0 %v3487
    %5206 = vmatpush.bf16.msra.mxu0 %v3483
    %5207 = vmatpush.bf16.msra.mxu0 %v3479
    %5208 = vmatpush.bf16.msra.mxu0 %v3475
    %5209 = vmatpush.bf16.msra.mxu0 %v3471
    %5210 = vmatpush.bf16.msra.mxu0 %v3467
    %5211 = vmatpush.bf16.msra.mxu0 %v3463
    %5212 = vmatpush.bf16.msra.mxu0 %v3459
    %5213 = vmatmul.bf16.gmra.mxu0 %v942
    %v5214 = vpop.f32.mrf.mxu0
    %v5215 = vadd.f32 %v5202, %v5214
    %v5216 = vpop.f32.mrf.mxu0
    %5217 = vdwg.mxu0
    %5218 = vmatpush.bf16.msra.mxu0 %v3519
    %5219 = vmatpush.bf16.msra.mxu0 %v3515
    %5220 = vmatpush.bf16.msra.mxu0 %v3511
    %5221 = vmatpush.bf16.msra.mxu0 %v3507
    %5222 = vmatpush.bf16.msra.mxu0 %v3503
    %5223 = vmatpush.bf16.msra.mxu0 %v3499
    %5224 = vmatpush.bf16.msra.mxu0 %v3495
    %5225 = vmatpush.bf16.msra.mxu0 %v3491
    %5226 = vmatmul.bf16.gmra.mxu0 %v943
    %v5227 = vpop.f32.mrf.mxu0
    %v5228 = vadd.f32 %v5215, %v5227
    %v5229 = vpop.f32.mrf.mxu0
    %5230 = vdwg.mxu0
    %5231 = vmatpush.bf16.msra.mxu0 %v3551
    %5232 = vmatpush.bf16.msra.mxu0 %v3547
    %5233 = vmatpush.bf16.msra.mxu0 %v3543
    %5234 = vmatpush.bf16.msra.mxu0 %v3539
    %5235 = vmatpush.bf16.msra.mxu0 %v3535
    %5236 = vmatpush.bf16.msra.mxu0 %v3531
    %5237 = vmatpush.bf16.msra.mxu0 %v3527
    %5238 = vmatpush.bf16.msra.mxu0 %v3523
    %5239 = vmatmul.bf16.gmra.mxu0 %v944
    %v5240 = vpop.f32.mrf.mxu0
    %v5241 = vadd.f32 %v5228, %v5240
    %v5242 = vpop.f32.mrf.mxu0
    %5243 = vdwg.mxu0
    %5244 = vmatpush.bf16.msra.mxu0 %v3583
    %5245 = vmatpush.bf16.msra.mxu0 %v3579
    %5246 = vmatpush.bf16.msra.mxu0 %v3575
    %5247 = vmatpush.bf16.msra.mxu0 %v3571
    %5248 = vmatpush.bf16.msra.mxu0 %v3567
    %5249 = vmatpush.bf16.msra.mxu0 %v3563
    %5250 = vmatpush.bf16.msra.mxu0 %v3559
    %5251 = vmatpush.bf16.msra.mxu0 %v3555
    %5252 = vmatmul.bf16.gmra.mxu0 %v945
    %v5253 = vpop.f32.mrf.mxu0
    %v5254 = vadd.f32 %v5241, %v5253
    %v5255 = vpop.f32.mrf.mxu0
    %5256 = vdwg.mxu0
    %5257 = vmatpush.bf16.msra.mxu0 %v3615
    %5258 = vmatpush.bf16.msra.mxu0 %v3611
    %5259 = vmatpush.bf16.msra.mxu0 %v3607
    %5260 = vmatpush.bf16.msra.mxu0 %v3603
    %5261 = vmatpush.bf16.msra.mxu0 %v3599
    %5262 = vmatpush.bf16.msra.mxu0 %v3595
    %5263 = vmatpush.bf16.msra.mxu0 %v3591
    %5264 = vmatpush.bf16.msra.mxu0 %v3587
    %5265 = vmatmul.bf16.gmra.mxu0 %v946
    %v5266 = vpop.f32.mrf.mxu0
    %v5267 = vadd.f32 %v5254, %v5266
    %v5268 = vpop.f32.mrf.mxu0
    %5269 = vdwg.mxu0
    %5270 = vmatpush.bf16.msra.mxu0 %v3647
    %5271 = vmatpush.bf16.msra.mxu0 %v3643
    %5272 = vmatpush.bf16.msra.mxu0 %v3639
    %5273 = vmatpush.bf16.msra.mxu0 %v3635
    %5274 = vmatpush.bf16.msra.mxu0 %v3631
    %5275 = vmatpush.bf16.msra.mxu0 %v3627
    %5276 = vmatpush.bf16.msra.mxu0 %v3623
    %5277 = vmatpush.bf16.msra.mxu0 %v3619
    %5278 = vmatmul.bf16.gmra.mxu0 %v947
    %v5279 = vpop.f32.mrf.mxu0
    %v5280 = vadd.f32 %v5267, %v5279
    %v5281 = vpop.f32.mrf.mxu0
    %5282 = vdwg.mxu0
    %5283 = vmatpush.bf16.msra.mxu0 %v3679
    %5284 = vmatpush.bf16.msra.mxu0 %v3675
    %5285 = vmatpush.bf16.msra.mxu0 %v3671
    %5286 = vmatpush.bf16.msra.mxu0 %v3667
    %5287 = vmatpush.bf16.msra.mxu0 %v3663
    %5288 = vmatpush.bf16.msra.mxu0 %v3659
    %5289 = vmatpush.bf16.msra.mxu0 %v3655
    %5290 = vmatpush.bf16.msra.mxu0 %v3651
    %5291 = vmatmul.bf16.gmra.mxu0 %v948
    %v5292 = vpop.f32.mrf.mxu0
    %v5293 = vadd.f32 %v5280, %v5292
    %v5294 = vpop.f32.mrf.mxu0
    %5295 = vdwg.mxu0
    %5296 = vmatpush.bf16.msra.mxu0 %v3711
    %5297 = vmatpush.bf16.msra.mxu0 %v3707
    %5298 = vmatpush.bf16.msra.mxu0 %v3703
    %5299 = vmatpush.bf16.msra.mxu0 %v3699
    %5300 = vmatpush.bf16.msra.mxu0 %v3695
    %5301 = vmatpush.bf16.msra.mxu0 %v3691
    %5302 = vmatpush.bf16.msra.mxu0 %v3687
    %5303 = vmatpush.bf16.msra.mxu0 %v3683
    %5304 = vmatmul.bf16.gmra.mxu0 %v949
    %v5305 = vpop.f32.mrf.mxu0
    %v5306 = vadd.f32 %v5293, %v5305
    %v5307 = vpop.f32.mrf.mxu0
    %5308 = vdwg.mxu0
    %5309 = vmatpush.bf16.msra.mxu0 %v3743
    %5310 = vmatpush.bf16.msra.mxu0 %v3739
    %5311 = vmatpush.bf16.msra.mxu0 %v3735
    %5312 = vmatpush.bf16.msra.mxu0 %v3731
    %5313 = vmatpush.bf16.msra.mxu0 %v3727
    %5314 = vmatpush.bf16.msra.mxu0 %v3723
    %5315 = vmatpush.bf16.msra.mxu0 %v3719
    %5316 = vmatpush.bf16.msra.mxu0 %v3715
    %5317 = vmatmul.bf16.gmra.mxu0 %v950
    %v5318 = vpop.f32.mrf.mxu0
    %v5319 = vadd.f32 %v5306, %v5318
    %v5320 = vpop.f32.mrf.mxu0
    %5321 = vdwg.mxu0
    %5322 = vmatpush.bf16.msra.mxu0 0
    %5323 = vmatpush.bf16.msra.mxu0 %v3771
    %5324 = vmatpush.bf16.msra.mxu0 %v3767
    %5325 = vmatpush.bf16.msra.mxu0 %v3763
    %5326 = vmatpush.bf16.msra.mxu0 %v3759
    %5327 = vmatpush.bf16.msra.mxu0 %v3755
    %5328 = vmatpush.bf16.msra.mxu0 %v3751
    %5329 = vmatpush.bf16.msra.mxu0 %v3747
    %5330 = vmatmul.bf16.gmra.mxu0 %v4475
    %v5331 = vpop.f32.mrf.mxu0
    %v5332 = vadd.f32 %v5319, %v5331
    %v5333 = vpop.f32.mrf.mxu0
    %5334 = vdwg.mxu0
    %5335 = vmatpush.bf16.msra.mxu0 %v3104
    %5336 = vmatpush.bf16.msra.mxu0 %v3100
    %5337 = vmatpush.bf16.msra.mxu0 %v3096
    %5338 = vmatpush.bf16.msra.mxu0 %v3092
    %5339 = vmatpush.bf16.msra.mxu0 %v3088
    %5340 = vmatpush.bf16.msra.mxu0 %v3084
    %5341 = vmatpush.bf16.msra.mxu0 %v3080
    %5342 = vmatpush.bf16.msra.mxu0 %v3076
    %5343 = vmatmul.bf16.gmra.mxu0 %v930
    %v5344 = vpop.f32.mrf.mxu0
    %v5345 = vadd.f32 %v892, %v5344
    %v5346 = vpop.f32.mrf.mxu0
    %5347 = vdwg.mxu0
    %5348 = vmatpush.bf16.msra.mxu0 %v3136
    %5349 = vmatpush.bf16.msra.mxu0 %v3132
    %5350 = vmatpush.bf16.msra.mxu0 %v3128
    %5351 = vmatpush.bf16.msra.mxu0 %v3124
    %5352 = vmatpush.bf16.msra.mxu0 %v3120
    %5353 = vmatpush.bf16.msra.mxu0 %v3116
    %5354 = vmatpush.bf16.msra.mxu0 %v3112
    %5355 = vmatpush.bf16.msra.mxu0 %v3108
    %5356 = vmatmul.bf16.gmra.mxu0 %v931
    %v5357 = vpop.f32.mrf.mxu0
    %v5358 = vadd.f32 %v5345, %v5357
    %v5359 = vpop.f32.mrf.mxu0
    %5360 = vdwg.mxu0
    %5361 = vmatpush.bf16.msra.mxu0 %v3168
    %5362 = vmatpush.bf16.msra.mxu0 %v3164
    %5363 = vmatpush.bf16.msra.mxu0 %v3160
    %5364 = vmatpush.bf16.msra.mxu0 %v3156
    %5365 = vmatpush.bf16.msra.mxu0 %v3152
    %5366 = vmatpush.bf16.msra.mxu0 %v3148
    %5367 = vmatpush.bf16.msra.mxu0 %v3144
    %5368 = vmatpush.bf16.msra.mxu0 %v3140
    %5369 = vmatmul.bf16.gmra.mxu0 %v932
    %v5370 = vpop.f32.mrf.mxu0
    %v5371 = vadd.f32 %v5358, %v5370
    %v5372 = vpop.f32.mrf.mxu0
    %5373 = vdwg.mxu0
    %5374 = vmatpush.bf16.msra.mxu0 %v3200
    %5375 = vmatpush.bf16.msra.mxu0 %v3196
    %5376 = vmatpush.bf16.msra.mxu0 %v3192
    %5377 = vmatpush.bf16.msra.mxu0 %v3188
    %5378 = vmatpush.bf16.msra.mxu0 %v3184
    %5379 = vmatpush.bf16.msra.mxu0 %v3180
    %5380 = vmatpush.bf16.msra.mxu0 %v3176
    %5381 = vmatpush.bf16.msra.mxu0 %v3172
    %5382 = vmatmul.bf16.gmra.mxu0 %v933
    %v5383 = vpop.f32.mrf.mxu0
    %v5384 = vadd.f32 %v5371, %v5383
    %v5385 = vpop.f32.mrf.mxu0
    %5386 = vdwg.mxu0
    %5387 = vmatpush.bf16.msra.mxu0 %v3232
    %5388 = vmatpush.bf16.msra.mxu0 %v3228
    %5389 = vmatpush.bf16.msra.mxu0 %v3224
    %5390 = vmatpush.bf16.msra.mxu0 %v3220
    %5391 = vmatpush.bf16.msra.mxu0 %v3216
    %5392 = vmatpush.bf16.msra.mxu0 %v3212
    %5393 = vmatpush.bf16.msra.mxu0 %v3208
    %5394 = vmatpush.bf16.msra.mxu0 %v3204
    %5395 = vmatmul.bf16.gmra.mxu0 %v934
    %v5396 = vpop.f32.mrf.mxu0
    %v5397 = vadd.f32 %v5384, %v5396
    %v5398 = vpop.f32.mrf.mxu0
    %5399 = vdwg.mxu0
    %5400 = vmatpush.bf16.msra.mxu0 %v3264
    %5401 = vmatpush.bf16.msra.mxu0 %v3260
    %5402 = vmatpush.bf16.msra.mxu0 %v3256
    %5403 = vmatpush.bf16.msra.mxu0 %v3252
    %5404 = vmatpush.bf16.msra.mxu0 %v3248
    %5405 = vmatpush.bf16.msra.mxu0 %v3244
    %5406 = vmatpush.bf16.msra.mxu0 %v3240
    %5407 = vmatpush.bf16.msra.mxu0 %v3236
    %5408 = vmatmul.bf16.gmra.mxu0 %v935
    %v5409 = vpop.f32.mrf.mxu0
    %v5410 = vadd.f32 %v5397, %v5409
    %v5411 = vpop.f32.mrf.mxu0
    %5412 = vdwg.mxu0
    %5413 = vmatpush.bf16.msra.mxu0 %v3296
    %5414 = vmatpush.bf16.msra.mxu0 %v3292
    %5415 = vmatpush.bf16.msra.mxu0 %v3288
    %5416 = vmatpush.bf16.msra.mxu0 %v3284
    %5417 = vmatpush.bf16.msra.mxu0 %v3280
    %5418 = vmatpush.bf16.msra.mxu0 %v3276
    %5419 = vmatpush.bf16.msra.mxu0 %v3272
    %5420 = vmatpush.bf16.msra.mxu0 %v3268
    %5421 = vmatmul.bf16.gmra.mxu0 %v936
    %v5422 = vpop.f32.mrf.mxu0
    %v5423 = vadd.f32 %v5410, %v5422
    %v5424 = vpop.f32.mrf.mxu0
    %5425 = vdwg.mxu0
    %5426 = vmatpush.bf16.msra.mxu0 %v3328
    %5427 = vmatpush.bf16.msra.mxu0 %v3324
    %5428 = vmatpush.bf16.msra.mxu0 %v3320
    %5429 = vmatpush.bf16.msra.mxu0 %v3316
    %5430 = vmatpush.bf16.msra.mxu0 %v3312
    %5431 = vmatpush.bf16.msra.mxu0 %v3308
    %5432 = vmatpush.bf16.msra.mxu0 %v3304
    %5433 = vmatpush.bf16.msra.mxu0 %v3300
    %5434 = vmatmul.bf16.gmra.mxu0 %v937
    %v5435 = vpop.f32.mrf.mxu0
    %v5436 = vadd.f32 %v5423, %v5435
    %v5437 = vpop.f32.mrf.mxu0
    %5438 = vdwg.mxu0
    %5439 = vmatpush.bf16.msra.mxu0 %v3360
    %5440 = vmatpush.bf16.msra.mxu0 %v3356
    %5441 = vmatpush.bf16.msra.mxu0 %v3352
    %5442 = vmatpush.bf16.msra.mxu0 %v3348
    %5443 = vmatpush.bf16.msra.mxu0 %v3344
    %5444 = vmatpush.bf16.msra.mxu0 %v3340
    %5445 = vmatpush.bf16.msra.mxu0 %v3336
    %5446 = vmatpush.bf16.msra.mxu0 %v3332
    %5447 = vmatmul.bf16.gmra.mxu0 %v938
    %v5448 = vpop.f32.mrf.mxu0
    %v5449 = vadd.f32 %v5436, %v5448
    %v5450 = vpop.f32.mrf.mxu0
    %5451 = vdwg.mxu0
    %5452 = vmatpush.bf16.msra.mxu0 %v3392
    %5453 = vmatpush.bf16.msra.mxu0 %v3388
    %5454 = vmatpush.bf16.msra.mxu0 %v3384
    %5455 = vmatpush.bf16.msra.mxu0 %v3380
    %5456 = vmatpush.bf16.msra.mxu0 %v3376
    %5457 = vmatpush.bf16.msra.mxu0 %v3372
    %5458 = vmatpush.bf16.msra.mxu0 %v3368
    %5459 = vmatpush.bf16.msra.mxu0 %v3364
    %5460 = vmatmul.bf16.gmra.mxu0 %v939
    %v5461 = vpop.f32.mrf.mxu0
    %v5462 = vadd.f32 %v5449, %v5461
    %v5463 = vpop.f32.mrf.mxu0
    %5464 = vdwg.mxu0
    %5465 = vmatpush.bf16.msra.mxu0 %v3424
    %5466 = vmatpush.bf16.msra.mxu0 %v3420
    %5467 = vmatpush.bf16.msra.mxu0 %v3416
    %5468 = vmatpush.bf16.msra.mxu0 %v3412
    %5469 = vmatpush.bf16.msra.mxu0 %v3408
    %5470 = vmatpush.bf16.msra.mxu0 %v3404
    %5471 = vmatpush.bf16.msra.mxu0 %v3400
    %5472 = vmatpush.bf16.msra.mxu0 %v3396
    %5473 = vmatmul.bf16.gmra.mxu0 %v940
    %v5474 = vpop.f32.mrf.mxu0
    %v5475 = vadd.f32 %v5462, %v5474
    %v5476 = vpop.f32.mrf.mxu0
    %5477 = vdwg.mxu0
    %5478 = vmatpush.bf16.msra.mxu0 %v3456
    %5479 = vmatpush.bf16.msra.mxu0 %v3452
    %5480 = vmatpush.bf16.msra.mxu0 %v3448
    %5481 = vmatpush.bf16.msra.mxu0 %v3444
    %5482 = vmatpush.bf16.msra.mxu0 %v3440
    %5483 = vmatpush.bf16.msra.mxu0 %v3436
    %5484 = vmatpush.bf16.msra.mxu0 %v3432
    %5485 = vmatpush.bf16.msra.mxu0 %v3428
    %5486 = vmatmul.bf16.gmra.mxu0 %v941
    %v5487 = vpop.f32.mrf.mxu0
    %v5488 = vadd.f32 %v5475, %v5487
    %v5489 = vpop.f32.mrf.mxu0
    %5490 = vdwg.mxu0
    %5491 = vmatpush.bf16.msra.mxu0 %v3488
    %5492 = vmatpush.bf16.msra.mxu0 %v3484
    %5493 = vmatpush.bf16.msra.mxu0 %v3480
    %5494 = vmatpush.bf16.msra.mxu0 %v3476
    %5495 = vmatpush.bf16.msra.mxu0 %v3472
    %5496 = vmatpush.bf16.msra.mxu0 %v3468
    %5497 = vmatpush.bf16.msra.mxu0 %v3464
    %5498 = vmatpush.bf16.msra.mxu0 %v3460
    %5499 = vmatmul.bf16.gmra.mxu0 %v942
    %v5500 = vpop.f32.mrf.mxu0
    %v5501 = vadd.f32 %v5488, %v5500
    %v5502 = vpop.f32.mrf.mxu0
    %5503 = vdwg.mxu0
    %5504 = vmatpush.bf16.msra.mxu0 %v3520
    %5505 = vmatpush.bf16.msra.mxu0 %v3516
    %5506 = vmatpush.bf16.msra.mxu0 %v3512
    %5507 = vmatpush.bf16.msra.mxu0 %v3508
    %5508 = vmatpush.bf16.msra.mxu0 %v3504
    %5509 = vmatpush.bf16.msra.mxu0 %v3500
    %5510 = vmatpush.bf16.msra.mxu0 %v3496
    %5511 = vmatpush.bf16.msra.mxu0 %v3492
    %5512 = vmatmul.bf16.gmra.mxu0 %v943
    %v5513 = vpop.f32.mrf.mxu0
    %v5514 = vadd.f32 %v5501, %v5513
    %v5515 = vpop.f32.mrf.mxu0
    %5516 = vdwg.mxu0
    %5517 = vmatpush.bf16.msra.mxu0 %v3552
    %5518 = vmatpush.bf16.msra.mxu0 %v3548
    %5519 = vmatpush.bf16.msra.mxu0 %v3544
    %5520 = vmatpush.bf16.msra.mxu0 %v3540
    %5521 = vmatpush.bf16.msra.mxu0 %v3536
    %5522 = vmatpush.bf16.msra.mxu0 %v3532
    %5523 = vmatpush.bf16.msra.mxu0 %v3528
    %5524 = vmatpush.bf16.msra.mxu0 %v3524
    %5525 = vmatmul.bf16.gmra.mxu0 %v944
    %v5526 = vpop.f32.mrf.mxu0
    %v5527 = vadd.f32 %v5514, %v5526
    %v5528 = vpop.f32.mrf.mxu0
    %5529 = vdwg.mxu0
    %5530 = vmatpush.bf16.msra.mxu0 %v3584
    %5531 = vmatpush.bf16.msra.mxu0 %v3580
    %5532 = vmatpush.bf16.msra.mxu0 %v3576
    %5533 = vmatpush.bf16.msra.mxu0 %v3572
    %5534 = vmatpush.bf16.msra.mxu0 %v3568
    %5535 = vmatpush.bf16.msra.mxu0 %v3564
    %5536 = vmatpush.bf16.msra.mxu0 %v3560
    %5537 = vmatpush.bf16.msra.mxu0 %v3556
    %5538 = vmatmul.bf16.gmra.mxu0 %v945
    %v5539 = vpop.f32.mrf.mxu0
    %v5540 = vadd.f32 %v5527, %v5539
    %v5541 = vpop.f32.mrf.mxu0
    %5542 = vdwg.mxu0
    %5543 = vmatpush.bf16.msra.mxu0 %v3616
    %5544 = vmatpush.bf16.msra.mxu0 %v3612
    %5545 = vmatpush.bf16.msra.mxu0 %v3608
    %5546 = vmatpush.bf16.msra.mxu0 %v3604
    %5547 = vmatpush.bf16.msra.mxu0 %v3600
    %5548 = vmatpush.bf16.msra.mxu0 %v3596
    %5549 = vmatpush.bf16.msra.mxu0 %v3592
    %5550 = vmatpush.bf16.msra.mxu0 %v3588
    %5551 = vmatmul.bf16.gmra.mxu0 %v946
    %v5552 = vpop.f32.mrf.mxu0
    %v5553 = vadd.f32 %v5540, %v5552
    %v5554 = vpop.f32.mrf.mxu0
    %5555 = vdwg.mxu0
    %5556 = vmatpush.bf16.msra.mxu0 %v3648
    %5557 = vmatpush.bf16.msra.mxu0 %v3644
    %5558 = vmatpush.bf16.msra.mxu0 %v3640
    %5559 = vmatpush.bf16.msra.mxu0 %v3636
    %5560 = vmatpush.bf16.msra.mxu0 %v3632
    %5561 = vmatpush.bf16.msra.mxu0 %v3628
    %5562 = vmatpush.bf16.msra.mxu0 %v3624
    %5563 = vmatpush.bf16.msra.mxu0 %v3620
    %5564 = vmatmul.bf16.gmra.mxu0 %v947
    %v5565 = vpop.f32.mrf.mxu0
    %v5566 = vadd.f32 %v5553, %v5565
    %v5567 = vpop.f32.mrf.mxu0
    %5568 = vdwg.mxu0
    %5569 = vmatpush.bf16.msra.mxu0 %v3680
    %5570 = vmatpush.bf16.msra.mxu0 %v3676
    %5571 = vmatpush.bf16.msra.mxu0 %v3672
    %5572 = vmatpush.bf16.msra.mxu0 %v3668
    %5573 = vmatpush.bf16.msra.mxu0 %v3664
    %5574 = vmatpush.bf16.msra.mxu0 %v3660
    %5575 = vmatpush.bf16.msra.mxu0 %v3656
    %5576 = vmatpush.bf16.msra.mxu0 %v3652
    %5577 = vmatmul.bf16.gmra.mxu0 %v948
    %v5578 = vpop.f32.mrf.mxu0
    %v5579 = vadd.f32 %v5566, %v5578
    %v5580 = vpop.f32.mrf.mxu0
    %5581 = vdwg.mxu0
    %5582 = vmatpush.bf16.msra.mxu0 %v3712
    %5583 = vmatpush.bf16.msra.mxu0 %v3708
    %5584 = vmatpush.bf16.msra.mxu0 %v3704
    %5585 = vmatpush.bf16.msra.mxu0 %v3700
    %5586 = vmatpush.bf16.msra.mxu0 %v3696
    %5587 = vmatpush.bf16.msra.mxu0 %v3692
    %5588 = vmatpush.bf16.msra.mxu0 %v3688
    %5589 = vmatpush.bf16.msra.mxu0 %v3684
    %5590 = vmatmul.bf16.gmra.mxu0 %v949
    %v5591 = vpop.f32.mrf.mxu0
    %v5592 = vadd.f32 %v5579, %v5591
    %v5593 = vpop.f32.mrf.mxu0
    %5594 = vdwg.mxu0
    %5595 = vmatpush.bf16.msra.mxu0 %v3744
    %5596 = vmatpush.bf16.msra.mxu0 %v3740
    %5597 = vmatpush.bf16.msra.mxu0 %v3736
    %5598 = vmatpush.bf16.msra.mxu0 %v3732
    %5599 = vmatpush.bf16.msra.mxu0 %v3728
    %5600 = vmatpush.bf16.msra.mxu0 %v3724
    %5601 = vmatpush.bf16.msra.mxu0 %v3720
    %5602 = vmatpush.bf16.msra.mxu0 %v3716
    %5603 = vmatmul.bf16.gmra.mxu0 %v950
    %v5604 = vpop.f32.mrf.mxu0
    %v5605 = vadd.f32 %v5592, %v5604
    %v5606 = vpop.f32.mrf.mxu0
    %5607 = vdwg.mxu0
    %5608 = vmatpush.bf16.msra.mxu0 0
    %5609 = vmatpush.bf16.msra.mxu0 %v3772
    %5610 = vmatpush.bf16.msra.mxu0 %v3768
    %5611 = vmatpush.bf16.msra.mxu0 %v3764
    %5612 = vmatpush.bf16.msra.mxu0 %v3760
    %5613 = vmatpush.bf16.msra.mxu0 %v3756
    %5614 = vmatpush.bf16.msra.mxu0 %v3752
    %5615 = vmatpush.bf16.msra.mxu0 %v3748
    %5616 = vmatmul.bf16.gmra.mxu0 %v4475
    %v5617 = vpop.f32.mrf.mxu0
    %v5618 = vadd.f32 %v5605, %v5617
    %v5619 = vpop.f32.mrf.mxu0
    %5620 = vdwg.mxu0
    %s5621 = sld [smem:[#allocation2]]
    %vm5622 = vcmp.ge.f32.partialorder %v4760, 0.0
    %vm5623 = vcmp.ge.f32.partialorder %v5046, 0.0
    %vm5624 = vcmp.ge.f32.partialorder %v5332, 0.0
    %vm5625 = vcmp.ge.f32.partialorder %v5618, 0.0
    %v5626 = vstv %s5621
    %v5627 = vmul.f32 %v5626, %v4760
    %v5628 = vmul.f32 %v5626, %v5046
    %v5629 = vmul.f32 %v5626, %v5332
    %v5630 = vmul.f32 %v5626, %v5618
    %v5631 = vsel %vm5622, %v4760, %v5627
    %v5632 = vsel %vm5623, %v5046, %v5628
    %v5633 = vsel %vm5624, %v5332, %v5629
    %v5634 = vsel %vm5625, %v5618, %v5630
    %v5635 = vpack.c.bf16 %v5631, %v5631
    %v5636 = vpack.c.bf16 %v5632, %v5632
    %v5637 = vpack.c.bf16 %v5633, %v5633
    %v5638 = vpack.c.bf16 %v5634, %v5634
    %v5639 = vld [vmem:[#allocation11] sm:$0xff]
    %v5640 = vld [vmem:[#allocation11 + $0x8] sm:$0xff]
    %v5641 = vld [vmem:[#allocation11 + $0x10] sm:$0xff]
    %v5642 = vld [vmem:[#allocation11 + $0x18] sm:$0xff]
    %v5643 = vld [vmem:[#allocation11 + $0x20] sm:$0xff]
    %v5644 = vld [vmem:[#allocation11 + $0x28] sm:$0xff]
    %v5645 = vld [vmem:[#allocation11 + $0x30] sm:$0xff]
    %v5646 = vld [vmem:[#allocation11 + $0x38] sm:$0xff]
    %v5647 = vld [vmem:[#allocation11 + $0x40] sm:$0xff]
    %v5648 = vld [vmem:[#allocation11 + $0x48] sm:$0xff]
    %v5649 = vld [vmem:[#allocation11 + $0x50] sm:$0xff]
    %v5650 = vld [vmem:[#allocation11 + $0x58] sm:$0xff]
    %v5651 = vld [vmem:[#allocation11 + $0x60] sm:$0xff]
    %v5652 = vld [vmem:[#allocation11 + $0x68] sm:$0xff]
    %v5653 = vld [vmem:[#allocation11 + $0x70] sm:$0xff]
    %v5654 = vld [vmem:[#allocation11 + $0x78] sm:$0xff]
    %v5655 = vld [vmem:[#allocation11 + $0x80] sm:$0xff]
    %v5656 = vld [vmem:[#allocation11 + $0x88] sm:$0xff]
    %v5657 = vld [vmem:[#allocation11 + $0x90] sm:$0xff]
    %v5658 = vld [vmem:[#allocation11 + $0x98] sm:$0xff]
    %v5659 = vld [vmem:[#allocation11 + $0xa0] sm:$0xff]
    %v5660 = vld [vmem:[#allocation11 + $0xa8] sm:$0xff]
    %v5661 = vld [vmem:[#allocation11 + $0xb0] sm:$0xff]
    %v5662 = vld [vmem:[#allocation11 + $0xb8] sm:$0xff]
    %v5663 = vld [vmem:[#allocation11 + $0xc0] sm:$0xff]
    %v5664 = vld [vmem:[#allocation11 + $0xc8] sm:$0xff]
    %v5665 = vld [vmem:[#allocation11 + $0xd0] sm:$0xff]
    %v5666 = vld [vmem:[#allocation11 + $0xd8] sm:$0xff]
    %v5667 = vld [vmem:[#allocation11 + $0xe0] sm:$0xff]
    %v5668 = vld [vmem:[#allocation11 + $0xe8] sm:$0xff]
    %v5669 = vld [vmem:[#allocation11 + $0xf0] sm:$0xff]
    %v5670 = vld [vmem:[#allocation11 + $0xf8] sm:$0xff]
    %v5671 = vld [vmem:[#allocation11 + $0x100] sm:$0xff]
    %v5672 = vld [vmem:[#allocation11 + $0x108] sm:$0xff]
    %v5673 = vld [vmem:[#allocation11 + $0x110] sm:$0xff]
    %v5674 = vld [vmem:[#allocation11 + $0x118] sm:$0xff]
    %v5675 = vld [vmem:[#allocation11 + $0x120] sm:$0xff]
    %v5676 = vld [vmem:[#allocation11 + $0x128] sm:$0xff]
    %v5677 = vld [vmem:[#allocation11 + $0x130] sm:$0xff]
    %v5678 = vld [vmem:[#allocation11 + $0x138] sm:$0xff]
    %v5679 = vld [vmem:[#allocation11 + $0x140] sm:$0xff]
    %v5680 = vld [vmem:[#allocation11 + $0x148] sm:$0xff]
    %v5681 = vld [vmem:[#allocation11 + $0x150] sm:$0xff]
    %v5682 = vld [vmem:[#allocation11 + $0x158] sm:$0xff]
    %v5683 = vld [vmem:[#allocation11 + $0x160] sm:$0xff]
    %v5684 = vld [vmem:[#allocation11 + $0x168] sm:$0xff]
    %v5685 = vld [vmem:[#allocation11 + $0x170] sm:$0xff]
    %v5686 = vld [vmem:[#allocation11 + $0x178] sm:$0xff]
    %v5687 = vld [vmem:[#allocation11 + $0x180] sm:$0xff]
    %v5688 = vld [vmem:[#allocation11 + $0x188] sm:$0xff]
    %v5689 = vld [vmem:[#allocation11 + $0x190] sm:$0xff]
    %v5690 = vld [vmem:[#allocation11 + $0x198] sm:$0xff]
    %v5691 = vld [vmem:[#allocation11 + $0x1a0] sm:$0xff]
    %v5692 = vld [vmem:[#allocation11 + $0x1a8] sm:$0xff]
    %v5693 = vld [vmem:[#allocation11 + $0x1b0] sm:$0xff]
    %v5694 = vld [vmem:[#allocation11 + $0x1b8] sm:$0xff]
    %v5695 = vld [vmem:[#allocation11 + $0x1c0] sm:$0xff]
    %v5696 = vld [vmem:[#allocation11 + $0x1c8] sm:$0xff]
    %v5697 = vld [vmem:[#allocation11 + $0x1d0] sm:$0xff]
    %v5698 = vld [vmem:[#allocation11 + $0x1d8] sm:$0xff]
    %v5699 = vld [vmem:[#allocation11 + $0x1e0] sm:$0xff]
    %v5700 = vld [vmem:[#allocation11 + $0x1e8] sm:$0xff]
    %v5701 = vld [vmem:[#allocation11 + $0x1f0] sm:$0xff]
    %v5702 = vld [vmem:[#allocation11 + $0x1f8] sm:$0xff]
    %v5703 = vld [vmem:[#allocation13] sm:$0x3]
    %v5705 = vperm.slane %v5703, 0
    %v5706 = vperm.slane %v5703, 1
    %v5773 = vunpack.c.l.b16 %v5639
    %v5774 = vunpack.c.h.b16 %v5639
    %v5775 = vunpack.c.l.b16 %v5640
    %v5776 = vunpack.c.h.b16 %v5640
    %v5777 = vunpack.c.l.b16 %v5641
    %v5778 = vunpack.c.h.b16 %v5641
    %v5779 = vunpack.c.l.b16 %v5642
    %v5780 = vunpack.c.h.b16 %v5642
    %v5781 = vunpack.c.l.b16 %v5643
    %v5782 = vunpack.c.h.b16 %v5643
    %v5783 = vunpack.c.l.b16 %v5644
    %v5784 = vunpack.c.h.b16 %v5644
    %v5785 = vunpack.c.l.b16 %v5645
    %v5786 = vunpack.c.h.b16 %v5645
    %v5787 = vunpack.c.l.b16 %v5646
    %v5788 = vunpack.c.h.b16 %v5646
    %v5789 = vunpack.c.l.b16 %v5647
    %v5790 = vunpack.c.h.b16 %v5647
    %v5791 = vunpack.c.l.b16 %v5648
    %v5792 = vunpack.c.h.b16 %v5648
    %v5793 = vunpack.c.l.b16 %v5649
    %v5794 = vunpack.c.h.b16 %v5649
    %v5795 = vunpack.c.l.b16 %v5650
    %v5796 = vunpack.c.h.b16 %v5650
    %v5797 = vunpack.c.l.b16 %v5651
    %v5798 = vunpack.c.h.b16 %v5651
    %v5799 = vunpack.c.l.b16 %v5652
    %v5800 = vunpack.c.h.b16 %v5652
    %v5801 = vunpack.c.l.b16 %v5653
    %v5802 = vunpack.c.h.b16 %v5653
    %v5803 = vunpack.c.l.b16 %v5654
    %v5804 = vunpack.c.h.b16 %v5654
    %v5805 = vunpack.c.l.b16 %v5655
    %v5806 = vunpack.c.h.b16 %v5655
    %v5807 = vunpack.c.l.b16 %v5656
    %v5808 = vunpack.c.h.b16 %v5656
    %v5809 = vunpack.c.l.b16 %v5657
    %v5810 = vunpack.c.h.b16 %v5657
    %v5811 = vunpack.c.l.b16 %v5658
    %v5812 = vunpack.c.h.b16 %v5658
    %v5813 = vunpack.c.l.b16 %v5659
    %v5814 = vunpack.c.h.b16 %v5659
    %v5815 = vunpack.c.l.b16 %v5660
    %v5816 = vunpack.c.h.b16 %v5660
    %v5817 = vunpack.c.l.b16 %v5661
    %v5818 = vunpack.c.h.b16 %v5661
    %v5819 = vunpack.c.l.b16 %v5662
    %v5820 = vunpack.c.h.b16 %v5662
    %v5821 = vunpack.c.l.b16 %v5663
    %v5822 = vunpack.c.h.b16 %v5663
    %v5823 = vunpack.c.l.b16 %v5664
    %v5824 = vunpack.c.h.b16 %v5664
    %v5825 = vunpack.c.l.b16 %v5665
    %v5826 = vunpack.c.h.b16 %v5665
    %v5827 = vunpack.c.l.b16 %v5666
    %v5828 = vunpack.c.h.b16 %v5666
    %v5829 = vunpack.c.l.b16 %v5667
    %v5830 = vunpack.c.h.b16 %v5667
    %v5831 = vunpack.c.l.b16 %v5668
    %v5832 = vunpack.c.h.b16 %v5668
    %v5833 = vunpack.c.l.b16 %v5669
    %v5834 = vunpack.c.h.b16 %v5669
    %v5835 = vunpack.c.l.b16 %v5670
    %v5836 = vunpack.c.h.b16 %v5670
    %v5837 = vunpack.c.l.b16 %v5671
    %v5838 = vunpack.c.h.b16 %v5671
    %v5839 = vunpack.c.l.b16 %v5672
    %v5840 = vunpack.c.h.b16 %v5672
    %v5841 = vunpack.c.l.b16 %v5673
    %v5842 = vunpack.c.h.b16 %v5673
    %v5843 = vunpack.c.l.b16 %v5674
    %v5844 = vunpack.c.h.b16 %v5674
    %v5845 = vunpack.c.l.b16 %v5675
    %v5846 = vunpack.c.h.b16 %v5675
    %v5847 = vunpack.c.l.b16 %v5676
    %v5848 = vunpack.c.h.b16 %v5676
    %v5849 = vunpack.c.l.b16 %v5677
    %v5850 = vunpack.c.h.b16 %v5677
    %v5851 = vunpack.c.l.b16 %v5678
    %v5852 = vunpack.c.h.b16 %v5678
    %v5853 = vunpack.c.l.b16 %v5679
    %v5854 = vunpack.c.h.b16 %v5679
    %v5855 = vunpack.c.l.b16 %v5680
    %v5856 = vunpack.c.h.b16 %v5680
    %v5857 = vunpack.c.l.b16 %v5681
    %v5858 = vunpack.c.h.b16 %v5681
    %v5859 = vunpack.c.l.b16 %v5682
    %v5860 = vunpack.c.h.b16 %v5682
    %v5861 = vunpack.c.l.b16 %v5683
    %v5862 = vunpack.c.h.b16 %v5683
    %v5863 = vunpack.c.l.b16 %v5684
    %v5864 = vunpack.c.h.b16 %v5684
    %v5865 = vunpack.c.l.b16 %v5685
    %v5866 = vunpack.c.h.b16 %v5685
    %v5867 = vunpack.c.l.b16 %v5686
    %v5868 = vunpack.c.h.b16 %v5686
    %v5869 = vunpack.c.l.b16 %v5687
    %v5870 = vunpack.c.h.b16 %v5687
    %v5871 = vunpack.c.l.b16 %v5688
    %v5872 = vunpack.c.h.b16 %v5688
    %v5873 = vunpack.c.l.b16 %v5689
    %v5874 = vunpack.c.h.b16 %v5689
    %v5875 = vunpack.c.l.b16 %v5690
    %v5876 = vunpack.c.h.b16 %v5690
    %v5877 = vunpack.c.l.b16 %v5691
    %v5878 = vunpack.c.h.b16 %v5691
    %v5879 = vunpack.c.l.b16 %v5692
    %v5880 = vunpack.c.h.b16 %v5692
    %v5881 = vunpack.c.l.b16 %v5693
    %v5882 = vunpack.c.h.b16 %v5693
    %v5883 = vunpack.c.l.b16 %v5694
    %v5884 = vunpack.c.h.b16 %v5694
    %v5885 = vunpack.c.l.b16 %v5695
    %v5886 = vunpack.c.h.b16 %v5695
    %v5887 = vunpack.c.l.b16 %v5696
    %v5888 = vunpack.c.h.b16 %v5696
    %v5889 = vunpack.c.l.b16 %v5697
    %v5890 = vunpack.c.h.b16 %v5697
    %v5891 = vunpack.c.l.b16 %v5698
    %v5892 = vunpack.c.h.b16 %v5698
    %v5893 = vunpack.c.l.b16 %v5699
    %v5894 = vunpack.c.h.b16 %v5699
    %v5895 = vunpack.c.l.b16 %v5700
    %v5896 = vunpack.c.h.b16 %v5700
    %v5897 = vunpack.c.l.b16 %v5701
    %v5898 = vunpack.c.h.b16 %v5701
    %v5899 = vunpack.c.l.b16 %v5702
    %v5900 = vunpack.c.h.b16 %v5702
    %v5901 = vpack.c.b16 %v5775, %v5773
    %v5902 = vpack.c.b16 %v5776, %v5774
    %v5903 = vpack.c.b16 %v5779, %v5777
    %v5904 = vpack.c.b16 %v5780, %v5778
    %v5905 = vpack.c.b16 %v5783, %v5781
    %v5906 = vpack.c.b16 %v5784, %v5782
    %v5907 = vpack.c.b16 %v5787, %v5785
    %v5908 = vpack.c.b16 %v5788, %v5786
    %v5909 = vpack.c.b16 %v5791, %v5789
    %v5910 = vpack.c.b16 %v5792, %v5790
    %v5911 = vpack.c.b16 %v5795, %v5793
    %v5912 = vpack.c.b16 %v5796, %v5794
    %v5913 = vpack.c.b16 %v5799, %v5797
    %v5914 = vpack.c.b16 %v5800, %v5798
    %v5915 = vpack.c.b16 %v5803, %v5801
    %v5916 = vpack.c.b16 %v5804, %v5802
    %v5917 = vpack.c.b16 %v5807, %v5805
    %v5918 = vpack.c.b16 %v5808, %v5806
    %v5919 = vpack.c.b16 %v5811, %v5809
    %v5920 = vpack.c.b16 %v5812, %v5810
    %v5921 = vpack.c.b16 %v5815, %v5813
    %v5922 = vpack.c.b16 %v5816, %v5814
    %v5923 = vpack.c.b16 %v5819, %v5817
    %v5924 = vpack.c.b16 %v5820, %v5818
    %v5925 = vpack.c.b16 %v5823, %v5821
    %v5926 = vpack.c.b16 %v5824, %v5822
    %v5927 = vpack.c.b16 %v5827, %v5825
    %v5928 = vpack.c.b16 %v5828, %v5826
    %v5929 = vpack.c.b16 %v5831, %v5829
    %v5930 = vpack.c.b16 %v5832, %v5830
    %v5931 = vpack.c.b16 %v5835, %v5833
    %v5932 = vpack.c.b16 %v5836, %v5834
    %v5933 = vpack.c.b16 %v5839, %v5837
    %v5934 = vpack.c.b16 %v5840, %v5838
    %v5935 = vpack.c.b16 %v5843, %v5841
    %v5936 = vpack.c.b16 %v5844, %v5842
    %v5937 = vpack.c.b16 %v5847, %v5845
    %v5938 = vpack.c.b16 %v5848, %v5846
    %v5939 = vpack.c.b16 %v5851, %v5849
    %v5940 = vpack.c.b16 %v5852, %v5850
    %v5941 = vpack.c.b16 %v5855, %v5853
    %v5942 = vpack.c.b16 %v5856, %v5854
    %v5943 = vpack.c.b16 %v5859, %v5857
    %v5944 = vpack.c.b16 %v5860, %v5858
    %v5945 = vpack.c.b16 %v5863, %v5861
    %v5946 = vpack.c.b16 %v5864, %v5862
    %v5947 = vpack.c.b16 %v5867, %v5865
    %v5948 = vpack.c.b16 %v5868, %v5866
    %v5949 = vpack.c.b16 %v5871, %v5869
    %v5950 = vpack.c.b16 %v5872, %v5870
    %v5951 = vpack.c.b16 %v5875, %v5873
    %v5952 = vpack.c.b16 %v5876, %v5874
    %v5953 = vpack.c.b16 %v5879, %v5877
    %v5954 = vpack.c.b16 %v5880, %v5878
    %v5955 = vpack.c.b16 %v5883, %v5881
    %v5956 = vpack.c.b16 %v5884, %v5882
    %v5957 = vpack.c.b16 %v5887, %v5885
    %v5958 = vpack.c.b16 %v5888, %v5886
    %v5959 = vpack.c.b16 %v5891, %v5889
    %v5960 = vpack.c.b16 %v5892, %v5890
    %v5961 = vpack.c.b16 %v5895, %v5893
    %v5962 = vpack.c.b16 %v5896, %v5894
    %v5963 = vpack.c.b16 %v5899, %v5897
    %v5964 = vpack.c.b16 %v5900, %v5898
    %6029 = vmatpush.bf16.msra.mxu0 %v5915
    %6030 = vmatpush.bf16.msra.mxu0 %v5913
    %6031 = vmatpush.bf16.msra.mxu0 %v5911
    %6032 = vmatpush.bf16.msra.mxu0 %v5909
    %6033 = vmatpush.bf16.msra.mxu0 %v5907
    %6034 = vmatpush.bf16.msra.mxu0 %v5905
    %6035 = vmatpush.bf16.msra.mxu0 %v5903
    %6036 = vmatpush.bf16.msra.mxu0 %v5901
    %6037 = vmatmul.bf16.gmra.mxu0 %v5635
    %v6038 = vpop.f32.mrf.mxu0
    %v6039 = vadd.f32 %v5705, %v6038
    %v6040 = vpop.f32.mrf.mxu0
    %6041 = vdwg.mxu0
    %6042 = vmatpush.bf16.msra.mxu0 %v5931
    %6043 = vmatpush.bf16.msra.mxu0 %v5929
    %6044 = vmatpush.bf16.msra.mxu0 %v5927
    %6045 = vmatpush.bf16.msra.mxu0 %v5925
    %6046 = vmatpush.bf16.msra.mxu0 %v5923
    %6047 = vmatpush.bf16.msra.mxu0 %v5921
    %6048 = vmatpush.bf16.msra.mxu0 %v5919
    %6049 = vmatpush.bf16.msra.mxu0 %v5917
    %6050 = vmatmul.bf16.gmra.mxu0 %v5636
    %v6051 = vpop.f32.mrf.mxu0
    %v6052 = vadd.f32 %v6039, %v6051
    %v6053 = vpop.f32.mrf.mxu0
    %6054 = vdwg.mxu0
    %6055 = vmatpush.bf16.msra.mxu0 %v5947
    %6056 = vmatpush.bf16.msra.mxu0 %v5945
    %6057 = vmatpush.bf16.msra.mxu0 %v5943
    %6058 = vmatpush.bf16.msra.mxu0 %v5941
    %6059 = vmatpush.bf16.msra.mxu0 %v5939
    %6060 = vmatpush.bf16.msra.mxu0 %v5937
    %6061 = vmatpush.bf16.msra.mxu0 %v5935
    %6062 = vmatpush.bf16.msra.mxu0 %v5933
    %6063 = vmatmul.bf16.gmra.mxu0 %v5637
    %v6064 = vpop.f32.mrf.mxu0
    %v6065 = vadd.f32 %v6052, %v6064
    %v6066 = vpop.f32.mrf.mxu0
    %6067 = vdwg.mxu0
    %6068 = vmatpush.bf16.msra.mxu0 %v5963
    %6069 = vmatpush.bf16.msra.mxu0 %v5961
    %6070 = vmatpush.bf16.msra.mxu0 %v5959
    %6071 = vmatpush.bf16.msra.mxu0 %v5957
    %6072 = vmatpush.bf16.msra.mxu0 %v5955
    %6073 = vmatpush.bf16.msra.mxu0 %v5953
    %6074 = vmatpush.bf16.msra.mxu0 %v5951
    %6075 = vmatpush.bf16.msra.mxu0 %v5949
    %6076 = vmatmul.bf16.gmra.mxu0 %v5638
    %v6077 = vpop.f32.mrf.mxu0
    %v6078 = vadd.f32 %v6065, %v6077
    %v6079 = vpop.f32.mrf.mxu0
    %6080 = vdwg.mxu0
    %6081 = vmatpush.bf16.msra.mxu0 %v5916
    %6082 = vmatpush.bf16.msra.mxu0 %v5914
    %6083 = vmatpush.bf16.msra.mxu0 %v5912
    %6084 = vmatpush.bf16.msra.mxu0 %v5910
    %6085 = vmatpush.bf16.msra.mxu0 %v5908
    %6086 = vmatpush.bf16.msra.mxu0 %v5906
    %6087 = vmatpush.bf16.msra.mxu0 %v5904
    %6088 = vmatpush.bf16.msra.mxu0 %v5902
    %6089 = vmatmul.bf16.gmra.mxu0 %v5635
    %v6090 = vpop.f32.mrf.mxu0
    %v6091 = vadd.f32 %v5706, %v6090
    %v6092 = vpop.f32.mrf.mxu0
    %6093 = vdwg.mxu0
    %6094 = vmatpush.bf16.msra.mxu0 %v5932
    %6095 = vmatpush.bf16.msra.mxu0 %v5930
    %6096 = vmatpush.bf16.msra.mxu0 %v5928
    %6097 = vmatpush.bf16.msra.mxu0 %v5926
    %6098 = vmatpush.bf16.msra.mxu0 %v5924
    %6099 = vmatpush.bf16.msra.mxu0 %v5922
    %6100 = vmatpush.bf16.msra.mxu0 %v5920
    %6101 = vmatpush.bf16.msra.mxu0 %v5918
    %6102 = vmatmul.bf16.gmra.mxu0 %v5636
    %v6103 = vpop.f32.mrf.mxu0
    %v6104 = vadd.f32 %v6091, %v6103
    %v6105 = vpop.f32.mrf.mxu0
    %6106 = vdwg.mxu0
    %6107 = vmatpush.bf16.msra.mxu0 %v5948
    %6108 = vmatpush.bf16.msra.mxu0 %v5946
    %6109 = vmatpush.bf16.msra.mxu0 %v5944
    %6110 = vmatpush.bf16.msra.mxu0 %v5942
    %6111 = vmatpush.bf16.msra.mxu0 %v5940
    %6112 = vmatpush.bf16.msra.mxu0 %v5938
    %6113 = vmatpush.bf16.msra.mxu0 %v5936
    %6114 = vmatpush.bf16.msra.mxu0 %v5934
    %6115 = vmatmul.bf16.gmra.mxu0 %v5637
    %v6116 = vpop.f32.mrf.mxu0
    %v6117 = vadd.f32 %v6104, %v6116
    %v6118 = vpop.f32.mrf.mxu0
    %6119 = vdwg.mxu0
    %6120 = vmatpush.bf16.msra.mxu0 %v5964
    %6121 = vmatpush.bf16.msra.mxu0 %v5962
    %6122 = vmatpush.bf16.msra.mxu0 %v5960
    %6123 = vmatpush.bf16.msra.mxu0 %v5958
    %6124 = vmatpush.bf16.msra.mxu0 %v5956
    %6125 = vmatpush.bf16.msra.mxu0 %v5954
    %6126 = vmatpush.bf16.msra.mxu0 %v5952
    %6127 = vmatpush.bf16.msra.mxu0 %v5950
    %6128 = vmatmul.bf16.gmra.mxu0 %v5638
    %v6129 = vpop.f32.mrf.mxu0
    %v6130 = vadd.f32 %v6117, %v6129
    %v6131 = vpop.f32.mrf.mxu0
    %6132 = vdwg.mxu0
    %s6133 = sld [smem:[#allocation3]]
    %vm6134 = vcmp.ge.f32.partialorder %v6078, 0.0
    %vm6135 = vcmp.ge.f32.partialorder %v6130, 0.0
    %v6136 = vstv %s6133
    %v6137 = vmul.f32 %v6136, %v6078
    %v6138 = vmul.f32 %v6136, %v6130
    %v6139 = vsel %vm6134, %v6078, %v6137
    %v6140 = vsel %vm6135, %v6130, %v6138
    %v6141 = vpack.c.bf16 %v6139, %v6139
    %v6142 = vpack.c.bf16 %v6140, %v6140
    %v6143 = vld [vmem:[#allocation14] sm:$0xf]
    %v6144 = vld [vmem:[#allocation14 + $0x4] sm:$0xf]
    %v6145 = vld [vmem:[#allocation14 + $0x8] sm:$0xf]
    %v6146 = vld [vmem:[#allocation14 + $0xc] sm:$0xf]
    %v6147 = vld [vmem:[#allocation14 + $0x10] sm:$0xf]
    %v6148 = vld [vmem:[#allocation14 + $0x14] sm:$0xf]
    %v6149 = vld [vmem:[#allocation14 + $0x18] sm:$0xf]
    %v6150 = vld [vmem:[#allocation14 + $0x1c] sm:$0xf]
    %v6151 = vld [vmem:[#allocation14 + $0x20] sm:$0xf]
    %v6152 = vld [vmem:[#allocation14 + $0x24] sm:$0xf]
    %v6153 = vld [vmem:[#allocation14 + $0x28] sm:$0xf]
    %v6154 = vld [vmem:[#allocation14 + $0x2c] sm:$0xf]
    %v6155 = vld [vmem:[#allocation14 + $0x30] sm:$0xf]
    %v6156 = vld [vmem:[#allocation14 + $0x34] sm:$0xf]
    %v6157 = vld [vmem:[#allocation14 + $0x38] sm:$0xf]
    %v6158 = vld [vmem:[#allocation14 + $0x3c] sm:$0xf]
    %v6159 = vld [vmem:[#allocation14 + $0x40] sm:$0xf]
    %v6160 = vld [vmem:[#allocation14 + $0x44] sm:$0xf]
    %v6161 = vld [vmem:[#allocation14 + $0x48] sm:$0xf]
    %v6162 = vld [vmem:[#allocation14 + $0x4c] sm:$0xf]
    %v6163 = vld [vmem:[#allocation14 + $0x50] sm:$0xf]
    %v6164 = vld [vmem:[#allocation14 + $0x54] sm:$0xf]
    %v6165 = vld [vmem:[#allocation14 + $0x58] sm:$0xf]
    %v6166 = vld [vmem:[#allocation14 + $0x5c] sm:$0xf]
    %v6167 = vld [vmem:[#allocation14 + $0x60] sm:$0xf]
    %v6168 = vld [vmem:[#allocation14 + $0x64] sm:$0xf]
    %v6169 = vld [vmem:[#allocation14 + $0x68] sm:$0xf]
    %v6170 = vld [vmem:[#allocation14 + $0x6c] sm:$0xf]
    %v6171 = vld [vmem:[#allocation14 + $0x70] sm:$0xf]
    %v6172 = vld [vmem:[#allocation14 + $0x74] sm:$0xf]
    %v6173 = vld [vmem:[#allocation14 + $0x78] sm:$0xf]
    %v6174 = vld [vmem:[#allocation14 + $0x7c] sm:$0xf]
    %v6175 = vld [vmem:[#allocation16] sm:$0x1]
    %v6177 = vperm.slane %v6175, 0
    %v6211 = vunpack.c.l.b16 %v6143
    %v6212 = vunpack.c.l.b16 %v6144
    %v6213 = vunpack.c.l.b16 %v6145
    %v6214 = vunpack.c.l.b16 %v6146
    %v6215 = vunpack.c.l.b16 %v6147
    %v6216 = vunpack.c.l.b16 %v6148
    %v6217 = vunpack.c.l.b16 %v6149
    %v6218 = vunpack.c.l.b16 %v6150
    %v6219 = vunpack.c.l.b16 %v6151
    %v6220 = vunpack.c.l.b16 %v6152
    %v6221 = vunpack.c.l.b16 %v6153
    %v6222 = vunpack.c.l.b16 %v6154
    %v6223 = vunpack.c.l.b16 %v6155
    %v6224 = vunpack.c.l.b16 %v6156
    %v6225 = vunpack.c.l.b16 %v6157
    %v6226 = vunpack.c.l.b16 %v6158
    %v6227 = vunpack.c.l.b16 %v6159
    %v6228 = vunpack.c.l.b16 %v6160
    %v6229 = vunpack.c.l.b16 %v6161
    %v6230 = vunpack.c.l.b16 %v6162
    %v6231 = vunpack.c.l.b16 %v6163
    %v6232 = vunpack.c.l.b16 %v6164
    %v6233 = vunpack.c.l.b16 %v6165
    %v6234 = vunpack.c.l.b16 %v6166
    %v6235 = vunpack.c.l.b16 %v6167
    %v6236 = vunpack.c.l.b16 %v6168
    %v6237 = vunpack.c.l.b16 %v6169
    %v6238 = vunpack.c.l.b16 %v6170
    %v6239 = vunpack.c.l.b16 %v6171
    %v6240 = vunpack.c.l.b16 %v6172
    %v6241 = vunpack.c.l.b16 %v6173
    %v6242 = vunpack.c.l.b16 %v6174
    %v6243 = vpack.c.b16 %v6212, %v6211
    %v6244 = vpack.c.b16 %v6214, %v6213
    %v6245 = vpack.c.b16 %v6216, %v6215
    %v6246 = vpack.c.b16 %v6218, %v6217
    %v6247 = vpack.c.b16 %v6220, %v6219
    %v6248 = vpack.c.b16 %v6222, %v6221
    %v6249 = vpack.c.b16 %v6224, %v6223
    %v6250 = vpack.c.b16 %v6226, %v6225
    %v6251 = vpack.c.b16 %v6228, %v6227
    %v6252 = vpack.c.b16 %v6230, %v6229
    %v6253 = vpack.c.b16 %v6232, %v6231
    %v6254 = vpack.c.b16 %v6234, %v6233
    %v6255 = vpack.c.b16 %v6236, %v6235
    %v6256 = vpack.c.b16 %v6238, %v6237
    %v6257 = vpack.c.b16 %v6240, %v6239
    %v6258 = vpack.c.b16 %v6242, %v6241
    %6275 = vmatpush.bf16.msra.mxu0 %v6250
    %6276 = vmatpush.bf16.msra.mxu0 %v6249
    %6277 = vmatpush.bf16.msra.mxu0 %v6248
    %6278 = vmatpush.bf16.msra.mxu0 %v6247
    %6279 = vmatpush.bf16.msra.mxu0 %v6246
    %6280 = vmatpush.bf16.msra.mxu0 %v6245
    %6281 = vmatpush.bf16.msra.mxu0 %v6244
    %6282 = vmatpush.bf16.msra.mxu0 %v6243
    %6283 = vmatmul.bf16.gmra.mxu0 %v6141
    %v6284 = vpop.f32.mrf.mxu0
    %v6285 = vadd.f32 %v6177, %v6284
    %v6286 = vpop.f32.mrf.mxu0
    %6287 = vdwg.mxu0
    %6288 = vmatpush.bf16.msra.mxu0 %v6258
    %6289 = vmatpush.bf16.msra.mxu0 %v6257
    %6290 = vmatpush.bf16.msra.mxu0 %v6256
    %6291 = vmatpush.bf16.msra.mxu0 %v6255
    %6292 = vmatpush.bf16.msra.mxu0 %v6254
    %6293 = vmatpush.bf16.msra.mxu0 %v6253
    %6294 = vmatpush.bf16.msra.mxu0 %v6252
    %6295 = vmatpush.bf16.msra.mxu0 %v6251
    %6296 = vmatmul.bf16.gmra.mxu0 %v6142
    %v6297 = vpop.f32.mrf.mxu0
    %v6298 = vadd.f32 %v6285, %v6297
    %v6299 = vpop.f32.mrf.mxu0
    %6300 = vdwg.mxu0
    %s6301 = sld [smem:[#allocation4]]
    %vm6302 = vcmp.ge.f32.partialorder %v6298, 0.0
    %v6303 = vstv %s6301
    %v6304 = vmul.f32 %v6303, %v6298
    %v6305 = vsel %vm6302, %v6298, %v6304
    %v6306 = vpack.c.bf16 %v6305, %v6305
    %v6307 = vld [vmem:[#allocation17] sm:$0xf]
    %v6308 = vld [vmem:[#allocation17 + $0x4] sm:$0xf]
    %v6309 = vld [vmem:[#allocation17 + $0x8] sm:$0xf]
    %v6310 = vld [vmem:[#allocation17 + $0xc] sm:$0xf]
    %v6311 = vld [vmem:[#allocation17 + $0x10] sm:$0xf]
    %v6312 = vld [vmem:[#allocation17 + $0x14] sm:$0xf]
    %v6313 = vld [vmem:[#allocation17 + $0x18] sm:$0xf]
    %v6314 = vld [vmem:[#allocation17 + $0x1c] sm:$0xf]
    %v6315 = vld [vmem:[#allocation17 + $0x20] sm:$0xf]
    %v6316 = vld [vmem:[#allocation17 + $0x24] sm:$0xf]
    %v6317 = vld [vmem:[#allocation17 + $0x28] sm:$0xf]
    %v6318 = vld [vmem:[#allocation17 + $0x2c] sm:$0xf]
    %v6319 = vld [vmem:[#allocation17 + $0x30] sm:$0xf]
    %v6320 = vld [vmem:[#allocation17 + $0x34] sm:$0xf]
    %v6321 = vld [vmem:[#allocation17 + $0x38] sm:$0xf]
    %v6322 = vld [vmem:[#allocation17 + $0x3c] sm:$0xf]
    %v6323 = vld [vmem:[#allocation19] sm:$0x1]
    %v6325 = vperm.slane %v6323, 0
    %v6343 = vunpack.c.l.b16 %v6307
    %v6344 = vunpack.c.l.b16 %v6308
    %v6345 = vunpack.c.l.b16 %v6309
    %v6346 = vunpack.c.l.b16 %v6310
    %v6347 = vunpack.c.l.b16 %v6311
    %v6348 = vunpack.c.l.b16 %v6312
    %v6349 = vunpack.c.l.b16 %v6313
    %v6350 = vunpack.c.l.b16 %v6314
    %v6351 = vunpack.c.l.b16 %v6315
    %v6352 = vunpack.c.l.b16 %v6316
    %v6353 = vunpack.c.l.b16 %v6317
    %v6354 = vunpack.c.l.b16 %v6318
    %v6355 = vunpack.c.l.b16 %v6319
    %v6356 = vunpack.c.l.b16 %v6320
    %v6357 = vunpack.c.l.b16 %v6321
    %v6358 = vunpack.c.l.b16 %v6322
    %v6359 = vpack.c.b16 %v6344, %v6343
    %v6360 = vpack.c.b16 %v6346, %v6345
    %v6361 = vpack.c.b16 %v6348, %v6347
    %v6362 = vpack.c.b16 %v6350, %v6349
    %v6363 = vpack.c.b16 %v6352, %v6351
    %v6364 = vpack.c.b16 %v6354, %v6353
    %v6365 = vpack.c.b16 %v6356, %v6355
    %v6366 = vpack.c.b16 %v6358, %v6357
    %6375 = vmatpush.bf16.msra.mxu0 %v6366
    %6376 = vmatpush.bf16.msra.mxu0 %v6365
    %6377 = vmatpush.bf16.msra.mxu0 %v6364
    %6378 = vmatpush.bf16.msra.mxu0 %v6363
    %6379 = vmatpush.bf16.msra.mxu0 %v6362
    %6380 = vmatpush.bf16.msra.mxu0 %v6361
    %6381 = vmatpush.bf16.msra.mxu0 %v6360
    %6382 = vmatpush.bf16.msra.mxu0 %v6359
    %6383 = vmatmul.bf16.gmra.mxu0 %v6306
    %v6384 = vpop.f32.mrf.mxu0
    %v6385 = vadd.f32 %v6325, %v6384
    %v6386 = vpop.f32.mrf.mxu0
    %6387 = vdwg.mxu0
    %6388 = vst [vmem:[#allocation20] sm:$0xff] %v6385
    // Predicated region
    $region86: #{tpu_custom_call.1} parent=1 // pred_check
      _
    $region87: #{tpu_custom_call.1} parent=1 // pred_check_branch
      %6390 = sbr.rel (0) target = $region89
    $region88: #{tpu_custom_call.1} parent=1 // pred_region
      %6392 = vsyncadd [#allocation7], 0
      %s6394 = sshll.u32 [#allocation20], 4
      %s6395 = int_to_ptr.vmem [resolvable:$true] %s6394
      %s6396 = sshll.u32 %s12, 4
      %s6397 = int_to_ptr.hbm [resolvable:$true] %s6396
      %6399 = dma.vmem_to_hbm [thread:$0]  %s6395, 128, %s6397, [#allocation7]
    $region89: #{tpu_custom_call.1} parent=1 // pred_fallthru
      _
    // Predicated region
    $region90: #{tpu_custom_call.1} parent=1 // pred_check
      _
    $region91: #{tpu_custom_call.1} parent=1 // pred_check_branch
      %6401 = sbr.rel (0) target = $region93
    $region92: #{tpu_custom_call.1} parent=1 // pred_region
      %6403 = dma.done [#allocation7], 128
    $region93: #{tpu_custom_call.1} parent=1 // pred_fallthru
      _
    %6404 = vsyncpa [#allocation6], 1
    %6405 = vsyncpa [#allocation9], 1
    %6406 = vsyncpa [#allocation12], 1
    %6407 = vsyncpa [#allocation15], 1
    %6408 = vsyncpa [#allocation18], 1
    %6409 = vsyncpa [#allocation7], 1

// kernel: tpu_custom_call.1
$region0: #{tpu_custom_call.1}
  #allocation0 [shape = 'u32[]', space=smem, size = 0x4, offset = 0x4, fixed_abs, tag = 'smem constant byte address 0x4 - core index']
  #allocation1 [shape = 'u32[72,128]{1,0:T(1,128)}', space=vmem, size = 0x9000, scoped, tag = 'internal scratch']
  #allocation2 [shape = 'f32[1]{0:T(128)S(6)}', space=smem, size = 0x200, scoped, tag = 'scoped memory for tpu_custom_call.1']
  #allocation3 [shape = 'f32[1]{0:T(128)S(6)}', space=smem, size = 0x200, scoped, tag = 'scoped memory for tpu_custom_call.1']
  #allocation4 [shape = 'f32[1]{0:T(128)S(6)}', space=smem, size = 0x200, scoped, tag = 'scoped memory for tpu_custom_call.1']
  %s0 = inlined_call_operand.hbm [shape: bf16[8,2800], index: 0, kind: input, shape index: {}]
  %s1 = inlined_call_operand.hbm [shape: bf16[2800,512], index: 1, kind: input, shape index: {}]
  %s2 = inlined_call_operand.hbm [shape: f32[1,512], index: 2, kind: input, shape index: {}]
  %s3 = inlined_call_operand.<no memory space> [shape: f32[1], index: 3, kind: input, shape index: {}]
  %s4 = inlined_call_operand.hbm [shape: bf16[512,256], index: 4, kind: input, shape index: {}]
  %s5 = inlined_call_operand.hbm [shape: f32[1,256], index: 5, kind: input, shape index: {}]
  %s6 = inlined_call_operand.<no memory space> [shape: f32[1], index: 6, kind: input, shape index: {}]
  %s7 = inlined_call_operand.hbm [shape: bf16[256,128], index: 7, kind: input, shape index: {}]
  %s8 = inlined_call_operand.hbm [shape: f32[1,128], index: 8, kind: input, shape index: {}]
  %s9 = inlined_call_operand.<no memory space> [shape: f32[1], index: 9, kind: input, shape index: {}]
  %s10 = inlined_call_operand.hbm [shape: bf16[128,128], index: 10, kind: input, shape index: {}]
  %s11 = inlined_call_operand.hbm [shape: f32[1,128], index: 11, kind: input, shape index: {}]
  %s12 = inlined_call_operand.hbm [shape: f32[8,128], index: 12, kind: output, shape index: {}]
  %s13 = sld [smem:[#allocation0]]
  $region94: #{tpu_custom_call.1} parent=0
    _
  %s15 = ssub.s32 1, %s13
  %s16 = scalar_select 0, %s15, %s13
  %17 = sst [smem:[#allocation2]] %s3
  %18 = sst [smem:[#allocation3]] %s6
  %19 = sst [smem:[#allocation4]] %s9
  $region1: #{tpu_custom_call.1} parent=0
    #allocation5 [shape = 'u8[45056]{0}', space=vmem, size = 0xb000, scoped, tag = 'input window, operand 0, single buffered']
    #allocation6 [shape = 's32[1]{0}', space=sflag, size = 0x4, scoped, tag = 'scoped memory for tpu_custom_call.1']
    #allocation7 [shape = 's32[1]{0}', space=sflag, size = 0x4, scoped, tag = 'scoped memory for tpu_custom_call.1']
    #allocation8 [shape = 'u8[2867200]{0}', space=vmem, size = 0x2bc000, scoped, tag = 'input window, operand 1, single buffered']
    #allocation9 [shape = 's32[1]{0}', space=sflag, size = 0x4, scoped, tag = 'scoped memory for tpu_custom_call.1']
    #allocation10 [shape = 'u8[2048]{0}', space=vmem, size = 0x800, scoped, tag = 'input window, operand 2, single buffered']
    #allocation11 [shape = 'u8[262144]{0}', space=vmem, size = 0x40000, scoped, tag = 'input window, operand 4, single buffered']
    #allocation12 [shape = 's32[1]{0}', space=sflag, size = 0x4, scoped, tag = 'scoped memory for tpu_custom_call.1']
    #allocation13 [shape = 'u8[1024]{0}', space=vmem, size = 0x400, scoped, tag = 'input window, operand 5, single buffered']
    #allocation14 [shape = 'u8[65536]{0}', space=vmem, size = 0x10000, scoped, tag = 'input window, operand 7, single buffered']
    #allocation15 [shape = 's32[1]{0}', space=sflag, size = 0x4, scoped, tag = 'scoped memory for tpu_custom_call.1']
    #allocation16 [shape = 'u8[512]{0}', space=vmem, size = 0x400, scoped, tag = 'input window, operand 8, single buffered']
    #allocation17 [shape = 'u8[32768]{0}', space=vmem, size = 0x8000, scoped, tag = 'input window, operand 10, single buffered']
    #allocation18 [shape = 's32[1]{0}', space=sflag, size = 0x4, scoped, tag = 'scoped memory for tpu_custom_call.1']
    #allocation19 [shape = 'u8[512]{0}', space=vmem, size = 0x400, scoped, tag = 'input window, operand 11, single buffered']
    #allocation20 [shape = 'u8[4096]{0}', space=vmem, size = 0x1000, scoped, tag = 'output window, operand 0, single buffered']
    %20 = vsyncpa [#allocation6], 0
    %21 = vsyncpa [#allocation9], 0
    %22 = vsyncpa [#allocation12], 0
    %23 = vsyncpa [#allocation15], 0
    %24 = vsyncpa [#allocation18], 0
    %25 = vsyncpa [#allocation7], 0
    // Predicated region
    $region2: #{tpu_custom_call.1} parent=1 // pred_check
      _
    $region3: #{tpu_custom_call.1} parent=1 // pred_check_branch
      %27 = sbr.rel (0) target = $region5
    $region4: #{tpu_custom_call.1} parent=1 // pred_region
      %29 = vsyncadd [#allocation6], 0
      %s31 = sshll.u32 %s0, 4
      %s32 = int_to_ptr.hbm [resolvable:$true] %s31
      %s33 = sshll.u32 [#allocation5], 4
      %s34 = int_to_ptr.vmem [resolvable:$true] %s33
      %36 = dma.hbm_to_vmem [thread:$0]  %s32, 1408, %s34, [#allocation6]
    $region5: #{tpu_custom_call.1} parent=1 // pred_fallthru
      _
    // Predicated region
    $region6: #{tpu_custom_call.1} parent=1 // pred_check
      _
    $region7: #{tpu_custom_call.1} parent=1 // pred_check_branch
      %38 = sbr.rel (0) target = $region9
    $region8: #{tpu_custom_call.1} parent=1 // pred_region
      %40 = vsyncadd [#allocation9], 0
      %s41 = sshll.u32 %s1, 4
      %s42 = int_to_ptr.hbm [resolvable:$true] %s41
      %s43 = sshll.u32 [#allocation8], 4
      %s44 = int_to_ptr.vmem [resolvable:$true] %s43
      %49 = dma.hbm_to_vmem [thread:$0]  %s42, 89600, %s44, [#allocation9], 256, 256, 16
    $region9: #{tpu_custom_call.1} parent=1 // pred_fallthru
      _
    // Predicated region
    $region10: #{tpu_custom_call.1} parent=1 // pred_check
      _
    $region11: #{tpu_custom_call.1} parent=1 // pred_check_branch
      %51 = sbr.rel (0) target = $region13
    $region12: #{tpu_custom_call.1} parent=1 // pred_region
      %53 = vsyncadd [#allocation9], 0
      %s55 = sshll.u32 %s2, 4
      %s56 = int_to_ptr.hbm [resolvable:$true] %s55
      %s57 = sshll.u32 [#allocation10], 4
      %s58 = int_to_ptr.vmem [resolvable:$true] %s57
      %60 = dma.hbm_to_vmem [thread:$0]  %s56, 64, %s58, [#allocation9]
    $region13: #{tpu_custom_call.1} parent=1 // pred_fallthru
      _
    // Predicated region
    $region14: #{tpu_custom_call.1} parent=1 // pred_check
      _
    $region15: #{tpu_custom_call.1} parent=1 // pred_check_branch
      %62 = sbr.rel (0) target = $region17
    $region16: #{tpu_custom_call.1} parent=1 // pred_region
      _
    $region17: #{tpu_custom_call.1} parent=1 // pred_fallthru
      _
    // Predicated region
    $region18: #{tpu_custom_call.1} parent=1 // pred_check
      _
    $region19: #{tpu_custom_call.1} parent=1 // pred_check_branch
      %64 = sbr.rel (0) target = $region21
    $region20: #{tpu_custom_call.1} parent=1 // pred_region
      %66 = vsyncadd [#allocation12], 0
      %s67 = sshll.u32 %s4, 4
      %s68 = int_to_ptr.hbm [resolvable:$true] %s67
      %s69 = sshll.u32 [#allocation11], 4
      %s70 = int_to_ptr.vmem [resolvable:$true] %s69
      %75 = dma.hbm_to_vmem [thread:$0]  %s68, 8192, %s70, [#allocation12], 128, 128, 8
    $region21: #{tpu_custom_call.1} parent=1 // pred_fallthru
      _
    // Predicated region
    $region22: #{tpu_custom_call.1} parent=1 // pred_check
      _
    $region23: #{tpu_custom_call.1} parent=1 // pred_check_branch
      %77 = sbr.rel (0) target = $region25
    $region24: #{tpu_custom_call.1} parent=1 // pred_region
      %79 = vsyncadd [#allocation12], 0
      %s81 = sshll.u32 %s5, 4
      %s82 = int_to_ptr.hbm [resolvable:$true] %s81
      %s83 = sshll.u32 [#allocation13], 4
      %s84 = int_to_ptr.vmem [resolvable:$true] %s83
      %86 = dma.hbm_to_vmem [thread:$0]  %s82, 32, %s84, [#allocation12]
    $region25: #{tpu_custom_call.1} parent=1 // pred_fallthru
      _
    // Predicated region
    $region26: #{tpu_custom_call.1} parent=1 // pred_check
      _
    $region27: #{tpu_custom_call.1} parent=1 // pred_check_branch
      %88 = sbr.rel (0) target = $region29
    $region28: #{tpu_custom_call.1} parent=1 // pred_region
      _
    $region29: #{tpu_custom_call.1} parent=1 // pred_fallthru
      _
    // Predicated region
    $region30: #{tpu_custom_call.1} parent=1 // pred_check
      _
    $region31: #{tpu_custom_call.1} parent=1 // pred_check_branch
      %90 = sbr.rel (0) target = $region33
    $region32: #{tpu_custom_call.1} parent=1 // pred_region
      %92 = vsyncadd [#allocation15], 0
      %s93 = sshll.u32 %s7, 4
      %s94 = int_to_ptr.hbm [resolvable:$true] %s93
      %s95 = sshll.u32 [#allocation14], 4
      %s96 = int_to_ptr.vmem [resolvable:$true] %s95
      %101 = dma.hbm_to_vmem [thread:$0]  %s94, 2048, %s96, [#allocation15], 64, 64, 4
    $region33: #{tpu_custom_call.1} parent=1 // pred_fallthru
      _
    // Predicated region
    $region34: #{tpu_custom_call.1} parent=1 // pred_check
      _
    $region35: #{tpu_custom_call.1} parent=1 // pred_check_branch
      %103 = sbr.rel (0) target = $region37
    $region36: #{tpu_custom_call.1} parent=1 // pred_region
      %105 = vsyncadd [#allocation15], 0
      %s107 = sshll.u32 %s8, 4
      %s108 = int_to_ptr.hbm [resolvable:$true] %s107
      %s109 = sshll.u32 [#allocation16], 4
      %s110 = int_to_ptr.vmem [resolvable:$true] %s109
      %112 = dma.hbm_to_vmem [thread:$0]  %s108, 16, %s110, [#allocation15]
    $region37: #{tpu_custom_call.1} parent=1 // pred_fallthru
      _
    // Predicated region
    $region38: #{tpu_custom_call.1} parent=1 // pred_check
      _
    $region39: #{tpu_custom_call.1} parent=1 // pred_check_branch
      %114 = sbr.rel (0) target = $region41
    $region40: #{tpu_custom_call.1} parent=1 // pred_region
      _
    $region41: #{tpu_custom_call.1} parent=1 // pred_fallthru
      _
    // Predicated region
    $region42: #{tpu_custom_call.1} parent=1 // pred_check
      _
    $region43: #{tpu_custom_call.1} parent=1 // pred_check_branch
      %116 = sbr.rel (0) target = $region45
    $region44: #{tpu_custom_call.1} parent=1 // pred_region
      %118 = vsyncadd [#allocation18], 0
      %s119 = sshll.u32 %s10, 4
      %s120 = int_to_ptr.hbm [resolvable:$true] %s119
      %s121 = sshll.u32 [#allocation17], 4
      %s122 = int_to_ptr.vmem [resolvable:$true] %s121
      %127 = dma.hbm_to_vmem [thread:$0]  %s120, 1024, %s122, [#allocation18], 64, 64, 4
    $region45: #{tpu_custom_call.1} parent=1 // pred_fallthru
      _
    // Predicated region
    $region46: #{tpu_custom_call.1} parent=1 // pred_check
      _
    $region47: #{tpu_custom_call.1} parent=1 // pred_check_branch
      %129 = sbr.rel (0) target = $region49
    $region48: #{tpu_custom_call.1} parent=1 // pred_region
      %131 = vsyncadd [#allocation18], 0
      %s133 = sshll.u32 %s11, 4
      %s134 = int_to_ptr.hbm [resolvable:$true] %s133
      %s135 = sshll.u32 [#allocation19], 4
      %s136 = int_to_ptr.vmem [resolvable:$true] %s135
      %138 = dma.hbm_to_vmem [thread:$0]  %s134, 16, %s136, [#allocation18]
    $region49: #{tpu_custom_call.1} parent=1 // pred_fallthru
      _
    // Predicated region
    $region50: #{tpu_custom_call.1} parent=1 // pred_check
      _
    $region51: #{tpu_custom_call.1} parent=1 // pred_check_branch
      %140 = sbr.rel (0) target = $region53
    $region52: #{tpu_custom_call.1} parent=1 // pred_region
      %142 = dma.done [#allocation6], 1408
    $region53: #{tpu_custom_call.1} parent=1 // pred_fallthru
      _
    // Predicated region
    $region54: #{tpu_custom_call.1} parent=1 // pred_check
      _
    $region55: #{tpu_custom_call.1} parent=1 // pred_check_branch
      %144 = sbr.rel (0) target = $region57
    $region56: #{tpu_custom_call.1} parent=1 // pred_region
      %146 = dma.done [#allocation9], 89600
    $region57: #{tpu_custom_call.1} parent=1 // pred_fallthru
      _
    // Predicated region
    $region58: #{tpu_custom_call.1} parent=1 // pred_check
      _
    $region59: #{tpu_custom_call.1} parent=1 // pred_check_branch
      %148 = sbr.rel (0) target = $region61
    $region60: #{tpu_custom_call.1} parent=1 // pred_region
      %150 = dma.done [#allocation9], 64
    $region61: #{tpu_custom_call.1} parent=1 // pred_fallthru
      _
    // Predicated region
    $region62: #{tpu_custom_call.1} parent=1 // pred_check
      _
    $region63: #{tpu_custom_call.1} parent=1 // pred_check_branch
      %152 = sbr.rel (0) target = $region65
    $region64: #{tpu_custom_call.1} parent=1 // pred_region
      %154 = dma.done [#allocation12], 8192
    $region65: #{tpu_custom_call.1} parent=1 // pred_fallthru
      _
    // Predicated region
    $region66: #{tpu_custom_call.1} parent=1 // pred_check
      _
    $region67: #{tpu_custom_call.1} parent=1 // pred_check_branch
      %156 = sbr.rel (0) target = $region69
    $region68: #{tpu_custom_call.1} parent=1 // pred_region
      %158 = dma.done [#allocation12], 32
    $region69: #{tpu_custom_call.1} parent=1 // pred_fallthru
      _
    // Predicated region
    $region70: #{tpu_custom_call.1} parent=1 // pred_check
      _
    $region71: #{tpu_custom_call.1} parent=1 // pred_check_branch
      %160 = sbr.rel (0) target = $region73
    $region72: #{tpu_custom_call.1} parent=1 // pred_region
      %162 = dma.done [#allocation15], 2048
    $region73: #{tpu_custom_call.1} parent=1 // pred_fallthru
      _
    // Predicated region
    $region74: #{tpu_custom_call.1} parent=1 // pred_check
      _
    $region75: #{tpu_custom_call.1} parent=1 // pred_check_branch
      %164 = sbr.rel (0) target = $region77
    $region76: #{tpu_custom_call.1} parent=1 // pred_region
      %166 = dma.done [#allocation15], 16
    $region77: #{tpu_custom_call.1} parent=1 // pred_fallthru
      _
    // Predicated region
    $region78: #{tpu_custom_call.1} parent=1 // pred_check
      _
    $region79: #{tpu_custom_call.1} parent=1 // pred_check_branch
      %168 = sbr.rel (0) target = $region81
    $region80: #{tpu_custom_call.1} parent=1 // pred_region
      %170 = dma.done [#allocation18], 1024
    $region81: #{tpu_custom_call.1} parent=1 // pred_fallthru
      _
    // Predicated region
    $region82: #{tpu_custom_call.1} parent=1 // pred_check
      _
    $region83: #{tpu_custom_call.1} parent=1 // pred_check_branch
      %172 = sbr.rel (0) target = $region85
    $region84: #{tpu_custom_call.1} parent=1 // pred_region
      %174 = dma.done [#allocation18], 16
    $region85: #{tpu_custom_call.1} parent=1 // pred_fallthru
      _
    %v176 = vld [vmem:[#allocation5] sm:$0xff]
    %v177 = vld [vmem:[#allocation5 + $0x8] sm:$0xff]
    %v178 = vld [vmem:[#allocation5 + $0x10] sm:$0xff]
    %v179 = vld [vmem:[#allocation5 + $0x18] sm:$0xff]
    %v180 = vld [vmem:[#allocation5 + $0x20] sm:$0xff]
    %v181 = vld [vmem:[#allocation5 + $0x28] sm:$0xff]
    %v182 = vld [vmem:[#allocation5 + $0x30] sm:$0xff]
    %v183 = vld [vmem:[#allocation5 + $0x38] sm:$0xff]
    %v184 = vld [vmem:[#allocation5 + $0x40] sm:$0xff]
    %v185 = vld [vmem:[#allocation5 + $0x48] sm:$0xff]
    %v186 = vld [vmem:[#allocation5 + $0x50] sm:$0xff]
    %v187 = vld [vmem:[#allocation8] sm:$0xff]
    %v188 = vld [vmem:[#allocation8 + $0x8] sm:$0xff]
    %v189 = vld [vmem:[#allocation8 + $0x10] sm:$0xff]
    %v190 = vld [vmem:[#allocation8 + $0x18] sm:$0xff]
    %v191 = vld [vmem:[#allocation8 + $0x20] sm:$0xff]
    %v192 = vld [vmem:[#allocation8 + $0x28] sm:$0xff]
    %v193 = vld [vmem:[#allocation8 + $0x30] sm:$0xff]
    %v194 = vld [vmem:[#allocation8 + $0x38] sm:$0xff]
    %v195 = vld [vmem:[#allocation8 + $0x40] sm:$0xff]
    %v196 = vld [vmem:[#allocation8 + $0x48] sm:$0xff]
    %v197 = vld [vmem:[#allocation8 + $0x50] sm:$0xff]
    %v198 = vld [vmem:[#allocation8 + $0x58] sm:$0xff]
    %v199 = vld [vmem:[#allocation8 + $0x60] sm:$0xff]
    %v200 = vld [vmem:[#allocation8 + $0x68] sm:$0xff]
    %v201 = vld [vmem:[#allocation8 + $0x70] sm:$0xff]
    %v202 = vld [vmem:[#allocation8 + $0x78] sm:$0xff]
    %v203 = vld [vmem:[#allocation8 + $0x80] sm:$0xff]
    %v204 = vld [vmem:[#allocation8 + $0x88] sm:$0xff]
    %v205 = vld [vmem:[#allocation8 + $0x90] sm:$0xff]
    %v206 = vld [vmem:[#allocation8 + $0x98] sm:$0xff]
    %v207 = vld [vmem:[#allocation8 + $0xa0] sm:$0xff]
    %v208 = vld [vmem:[#allocation8 + $0xa8] sm:$0xff]
    %v209 = vld [vmem:[#allocation8 + $0xb0] sm:$0xff]
    %v210 = vld [vmem:[#allocation8 + $0xb8] sm:$0xff]
    %v211 = vld [vmem:[#allocation8 + $0xc0] sm:$0xff]
    %v212 = vld [vmem:[#allocation8 + $0xc8] sm:$0xff]
    %v213 = vld [vmem:[#allocation8 + $0xd0] sm:$0xff]
    %v214 = vld [vmem:[#allocation8 + $0xd8] sm:$0xff]
    %v215 = vld [vmem:[#allocation8 + $0xe0] sm:$0xff]
    %v216 = vld [vmem:[#allocation8 + $0xe8] sm:$0xff]
    %v217 = vld [vmem:[#allocation8 + $0xf0] sm:$0xff]
    %v218 = vld [vmem:[#allocation8 + $0xf8] sm:$0xff]
    %v219 = vld [vmem:[#allocation8 + $0x100] sm:$0xff]
    %v220 = vld [vmem:[#allocation8 + $0x108] sm:$0xff]
    %v221 = vld [vmem:[#allocation8 + $0x110] sm:$0xff]
    %v222 = vld [vmem:[#allocation8 + $0x118] sm:$0xff]
    %v223 = vld [vmem:[#allocation8 + $0x120] sm:$0xff]
    %v224 = vld [vmem:[#allocation8 + $0x128] sm:$0xff]
    %v225 = vld [vmem:[#allocation8 + $0x130] sm:$0xff]
    %v226 = vld [vmem:[#allocation8 + $0x138] sm:$0xff]
    %v227 = vld [vmem:[#allocation8 + $0x140] sm:$0xff]
    %v228 = vld [vmem:[#allocation8 + $0x148] sm:$0xff]
    %v229 = vld [vmem:[#allocation8 + $0x150] sm:$0xff]
    %v230 = vld [vmem:[#allocation8 + $0x158] sm:$0xff]
    %v231 = vld [vmem:[#allocation8 + $0x160] sm:$0xff]
    %v232 = vld [vmem:[#allocation8 + $0x168] sm:$0xff]
    %v233 = vld [vmem:[#allocation8 + $0x170] sm:$0xff]
    %v234 = vld [vmem:[#allocation8 + $0x178] sm:$0xff]
    %v235 = vld [vmem:[#allocation8 + $0x180] sm:$0xff]
    %v236 = vld [vmem:[#allocation8 + $0x188] sm:$0xff]
    %v237 = vld [vmem:[#allocation8 + $0x190] sm:$0xff]
    %v238 = vld [vmem:[#allocation8 + $0x198] sm:$0xff]
    %v239 = vld [vmem:[#allocation8 + $0x1a0] sm:$0xff]
    %v240 = vld [vmem:[#allocation8 + $0x1a8] sm:$0xff]
    %v241 = vld [vmem:[#allocation8 + $0x1b0] sm:$0xff]
    %v242 = vld [vmem:[#allocation8 + $0x1b8] sm:$0xff]
    %v243 = vld [vmem:[#allocation8 + $0x1c0] sm:$0xff]
    %v244 = vld [vmem:[#allocation8 + $0x1c8] sm:$0xff]
    %v245 = vld [vmem:[#allocation8 + $0x1d0] sm:$0xff]
    %v246 = vld [vmem:[#allocation8 + $0x1d8] sm:$0xff]
    %v247 = vld [vmem:[#allocation8 + $0x1e0] sm:$0xff]
    %v248 = vld [vmem:[#allocation8 + $0x1e8] sm:$0xff]
    %v249 = vld [vmem:[#allocation8 + $0x1f0] sm:$0xff]
    %v250 = vld [vmem:[#allocation8 + $0x1f8] sm:$0xff]
    %v251 = vld [vmem:[#allocation8 + $0x200] sm:$0xff]
    %v252 = vld [vmem:[#allocation8 + $0x208] sm:$0xff]
    %v253 = vld [vmem:[#allocation8 + $0x210] sm:$0xff]
    %v254 = vld [vmem:[#allocation8 + $0x218] sm:$0xff]
    %v255 = vld [vmem:[#allocation8 + $0x220] sm:$0xff]
    %v256 = vld [vmem:[#allocation8 + $0x228] sm:$0xff]
    %v257 = vld [vmem:[#allocation8 + $0x230] sm:$0xff]
    %v258 = vld [vmem:[#allocation8 + $0x238] sm:$0xff]
    %v259 = vld [vmem:[#allocation8 + $0x240] sm:$0xff]
    %v260 = vld [vmem:[#allocation8 + $0x248] sm:$0xff]
    %v261 = vld [vmem:[#allocation8 + $0x250] sm:$0xff]
    %v262 = vld [vmem:[#allocation8 + $0x258] sm:$0xff]
    %v263 = vld [vmem:[#allocation8 + $0x260] sm:$0xff]
    %v264 = vld [vmem:[#allocation8 + $0x268] sm:$0xff]
    %v265 = vld [vmem:[#allocation8 + $0x270] sm:$0xff]
    %v266 = vld [vmem:[#allocation8 + $0x278] sm:$0xff]
    %v267 = vld [vmem:[#allocation8 + $0x280] sm:$0xff]
    %v268 = vld [vmem:[#allocation8 + $0x288] sm:$0xff]
    %v269 = vld [vmem:[#allocation8 + $0x290] sm:$0xff]
    %v270 = vld [vmem:[#allocation8 + $0x298] sm:$0xff]
    %v271 = vld [vmem:[#allocation8 + $0x2a0] sm:$0xff]
    %v272 = vld [vmem:[#allocation8 + $0x2a8] sm:$0xff]
    %v273 = vld [vmem:[#allocation8 + $0x2b0] sm:$0xff]
    %v274 = vld [vmem:[#allocation8 + $0x2b8] sm:$0xff]
    %v275 = vld [vmem:[#allocation8 + $0x2c0] sm:$0xff]
    %v276 = vld [vmem:[#allocation8 + $0x2c8] sm:$0xff]
    %v277 = vld [vmem:[#allocation8 + $0x2d0] sm:$0xff]
    %v278 = vld [vmem:[#allocation8 + $0x2d8] sm:$0xff]
    %v279 = vld [vmem:[#allocation8 + $0x2e0] sm:$0xff]
    %v280 = vld [vmem:[#allocation8 + $0x2e8] sm:$0xff]
    %v281 = vld [vmem:[#allocation8 + $0x2f0] sm:$0xff]
    %v282 = vld [vmem:[#allocation8 + $0x2f8] sm:$0xff]
    %v283 = vld [vmem:[#allocation8 + $0x300] sm:$0xff]
    %v284 = vld [vmem:[#allocation8 + $0x308] sm:$0xff]
    %v285 = vld [vmem:[#allocation8 + $0x310] sm:$0xff]
    %v286 = vld [vmem:[#allocation8 + $0x318] sm:$0xff]
    %v287 = vld [vmem:[#allocation8 + $0x320] sm:$0xff]
    %v288 = vld [vmem:[#allocation8 + $0x328] sm:$0xff]
    %v289 = vld [vmem:[#allocation8 + $0x330] sm:$0xff]
    %v290 = vld [vmem:[#allocation8 + $0x338] sm:$0xff]
    %v291 = vld [vmem:[#allocation8 + $0x340] sm:$0xff]
    %v292 = vld [vmem:[#allocation8 + $0x348] sm:$0xff]
    %v293 = vld [vmem:[#allocation8 + $0x350] sm:$0xff]
    %v294 = vld [vmem:[#allocation8 + $0x358] sm:$0xff]
    %v295 = vld [vmem:[#allocation8 + $0x360] sm:$0xff]
    %v296 = vld [vmem:[#allocation8 + $0x368] sm:$0xff]
    %v297 = vld [vmem:[#allocation8 + $0x370] sm:$0xff]
    %v298 = vld [vmem:[#allocation8 + $0x378] sm:$0xff]
    %v299 = vld [vmem:[#allocation8 + $0x380] sm:$0xff]
    %v300 = vld [vmem:[#allocation8 + $0x388] sm:$0xff]
    %v301 = vld [vmem:[#allocation8 + $0x390] sm:$0xff]
    %v302 = vld [vmem:[#allocation8 + $0x398] sm:$0xff]
    %v303 = vld [vmem:[#allocation8 + $0x3a0] sm:$0xff]
    %v304 = vld [vmem:[#allocation8 + $0x3a8] sm:$0xff]
    %v305 = vld [vmem:[#allocation8 + $0x3b0] sm:$0xff]
    %v306 = vld [vmem:[#allocation8 + $0x3b8] sm:$0xff]
    %v307 = vld [vmem:[#allocation8 + $0x3c0] sm:$0xff]
    %v308 = vld [vmem:[#allocation8 + $0x3c8] sm:$0xff]
    %v309 = vld [vmem:[#allocation8 + $0x3d0] sm:$0xff]
    %v310 = vld [vmem:[#allocation8 + $0x3d8] sm:$0xff]
    %v311 = vld [vmem:[#allocation8 + $0x3e0] sm:$0xff]
    %v312 = vld [vmem:[#allocation8 + $0x3e8] sm:$0xff]
    %v313 = vld [vmem:[#allocation8 + $0x3f0] sm:$0xff]
    %v314 = vld [vmem:[#allocation8 + $0x3f8] sm:$0xff]
    %v315 = vld [vmem:[#allocation8 + $0x400] sm:$0xff]
    %v316 = vld [vmem:[#allocation8 + $0x408] sm:$0xff]
    %v317 = vld [vmem:[#allocation8 + $0x410] sm:$0xff]
    %v318 = vld [vmem:[#allocation8 + $0x418] sm:$0xff]
    %v319 = vld [vmem:[#allocation8 + $0x420] sm:$0xff]
    %v320 = vld [vmem:[#allocation8 + $0x428] sm:$0xff]
    %v321 = vld [vmem:[#allocation8 + $0x430] sm:$0xff]
    %v322 = vld [vmem:[#allocation8 + $0x438] sm:$0xff]
    %v323 = vld [vmem:[#allocation8 + $0x440] sm:$0xff]
    %v324 = vld [vmem:[#allocation8 + $0x448] sm:$0xff]
    %v325 = vld [vmem:[#allocation8 + $0x450] sm:$0xff]
    %v326 = vld [vmem:[#allocation8 + $0x458] sm:$0xff]
    %v327 = vld [vmem:[#allocation8 + $0x460] sm:$0xff]
    %v328 = vld [vmem:[#allocation8 + $0x468] sm:$0xff]
    %v329 = vld [vmem:[#allocation8 + $0x470] sm:$0xff]
    %v330 = vld [vmem:[#allocation8 + $0x478] sm:$0xff]
    %v331 = vld [vmem:[#allocation8 + $0x480] sm:$0xff]
    %v332 = vld [vmem:[#allocation8 + $0x488] sm:$0xff]
    %v333 = vld [vmem:[#allocation8 + $0x490] sm:$0xff]
    %v334 = vld [vmem:[#allocation8 + $0x498] sm:$0xff]
    %v335 = vld [vmem:[#allocation8 + $0x4a0] sm:$0xff]
    %v336 = vld [vmem:[#allocation8 + $0x4a8] sm:$0xff]
    %v337 = vld [vmem:[#allocation8 + $0x4b0] sm:$0xff]
    %v338 = vld [vmem:[#allocation8 + $0x4b8] sm:$0xff]
    %v339 = vld [vmem:[#allocation8 + $0x4c0] sm:$0xff]
    %v340 = vld [vmem:[#allocation8 + $0x4c8] sm:$0xff]
    %v341 = vld [vmem:[#allocation8 + $0x4d0] sm:$0xff]
    %v342 = vld [vmem:[#allocation8 + $0x4d8] sm:$0xff]
    %v343 = vld [vmem:[#allocation8 + $0x4e0] sm:$0xff]
    %v344 = vld [vmem:[#allocation8 + $0x4e8] sm:$0xff]
    %v345 = vld [vmem:[#allocation8 + $0x4f0] sm:$0xff]
    %v346 = vld [vmem:[#allocation8 + $0x4f8] sm:$0xff]
    %v347 = vld [vmem:[#allocation8 + $0x500] sm:$0xff]
    %v348 = vld [vmem:[#allocation8 + $0x508] sm:$0xff]
    %v349 = vld [vmem:[#allocation8 + $0x510] sm:$0xff]
    %v350 = vld [vmem:[#allocation8 + $0x518] sm:$0xff]
    %v351 = vld [vmem:[#allocation8 + $0x520] sm:$0xff]
    %v352 = vld [vmem:[#allocation8 + $0x528] sm:$0xff]
    %v353 = vld [vmem:[#allocation8 + $0x530] sm:$0xff]
    %v354 = vld [vmem:[#allocation8 + $0x538] sm:$0xff]
    %v355 = vld [vmem:[#allocation8 + $0x540] sm:$0xff]
    %v356 = vld [vmem:[#allocation8 + $0x548] sm:$0xff]
    %v357 = vld [vmem:[#allocation8 + $0x550] sm:$0xff]
    %v358 = vld [vmem:[#allocation8 + $0x558] sm:$0xff]
    %v359 = vld [vmem:[#allocation8 + $0x560] sm:$0xff]
    %v360 = vld [vmem:[#allocation8 + $0x568] sm:$0xff]
    %v361 = vld [vmem:[#allocation8 + $0x570] sm:$0xff]
    %v362 = vld [vmem:[#allocation8 + $0x578] sm:$0xff]
    %v363 = vld [vmem:[#allocation8 + $0x580] sm:$0xff]
    %v364 = vld [vmem:[#allocation8 + $0x588] sm:$0xff]
    %v365 = vld [vmem:[#allocation8 + $0x590] sm:$0xff]
    %v366 = vld [vmem:[#allocation8 + $0x598] sm:$0xff]
    %v367 = vld [vmem:[#allocation8 + $0x5a0] sm:$0xff]
    %v368 = vld [vmem:[#allocation8 + $0x5a8] sm:$0xff]
    %v369 = vld [vmem:[#allocation8 + $0x5b0] sm:$0xff]
    %v370 = vld [vmem:[#allocation8 + $0x5b8] sm:$0xff]
    %v371 = vld [vmem:[#allocation8 + $0x5c0] sm:$0xff]
    %v372 = vld [vmem:[#allocation8 + $0x5c8] sm:$0xff]
    %v373 = vld [vmem:[#allocation8 + $0x5d0] sm:$0xff]
    %v374 = vld [vmem:[#allocation8 + $0x5d8] sm:$0xff]
    %v375 = vld [vmem:[#allocation8 + $0x5e0] sm:$0xff]
    %v376 = vld [vmem:[#allocation8 + $0x5e8] sm:$0xff]
    %v377 = vld [vmem:[#allocation8 + $0x5f0] sm:$0xff]
    %v378 = vld [vmem:[#allocation8 + $0x5f8] sm:$0xff]
    %v379 = vld [vmem:[#allocation8 + $0x600] sm:$0xff]
    %v380 = vld [vmem:[#allocation8 + $0x608] sm:$0xff]
    %v381 = vld [vmem:[#allocation8 + $0x610] sm:$0xff]
    %v382 = vld [vmem:[#allocation8 + $0x618] sm:$0xff]
    %v383 = vld [vmem:[#allocation8 + $0x620] sm:$0xff]
    %v384 = vld [vmem:[#allocation8 + $0x628] sm:$0xff]
    %v385 = vld [vmem:[#allocation8 + $0x630] sm:$0xff]
    %v386 = vld [vmem:[#allocation8 + $0x638] sm:$0xff]
    %v387 = vld [vmem:[#allocation8 + $0x640] sm:$0xff]
    %v388 = vld [vmem:[#allocation8 + $0x648] sm:$0xff]
    %v389 = vld [vmem:[#allocation8 + $0x650] sm:$0xff]
    %v390 = vld [vmem:[#allocation8 + $0x658] sm:$0xff]
    %v391 = vld [vmem:[#allocation8 + $0x660] sm:$0xff]
    %v392 = vld [vmem:[#allocation8 + $0x668] sm:$0xff]
    %v393 = vld [vmem:[#allocation8 + $0x670] sm:$0xff]
    %v394 = vld [vmem:[#allocation8 + $0x678] sm:$0xff]
    %v395 = vld [vmem:[#allocation8 + $0x680] sm:$0xff]
    %v396 = vld [vmem:[#allocation8 + $0x688] sm:$0xff]
    %v397 = vld [vmem:[#allocation8 + $0x690] sm:$0xff]
    %v398 = vld [vmem:[#allocation8 + $0x698] sm:$0xff]
    %v399 = vld [vmem:[#allocation8 + $0x6a0] sm:$0xff]
    %v400 = vld [vmem:[#allocation8 + $0x6a8] sm:$0xff]
    %v401 = vld [vmem:[#allocation8 + $0x6b0] sm:$0xff]
    %v402 = vld [vmem:[#allocation8 + $0x6b8] sm:$0xff]
    %v403 = vld [vmem:[#allocation8 + $0x6c0] sm:$0xff]
    %v404 = vld [vmem:[#allocation8 + $0x6c8] sm:$0xff]
    %v405 = vld [vmem:[#allocation8 + $0x6d0] sm:$0xff]
    %v406 = vld [vmem:[#allocation8 + $0x6d8] sm:$0xff]
    %v407 = vld [vmem:[#allocation8 + $0x6e0] sm:$0xff]
    %v408 = vld [vmem:[#allocation8 + $0x6e8] sm:$0xff]
    %v409 = vld [vmem:[#allocation8 + $0x6f0] sm:$0xff]
    %v410 = vld [vmem:[#allocation8 + $0x6f8] sm:$0xff]
    %v411 = vld [vmem:[#allocation8 + $0x700] sm:$0xff]
    %v412 = vld [vmem:[#allocation8 + $0x708] sm:$0xff]
    %v413 = vld [vmem:[#allocation8 + $0x710] sm:$0xff]
    %v414 = vld [vmem:[#allocation8 + $0x718] sm:$0xff]
    %v415 = vld [vmem:[#allocation8 + $0x720] sm:$0xff]
    %v416 = vld [vmem:[#allocation8 + $0x728] sm:$0xff]
    %v417 = vld [vmem:[#allocation8 + $0x730] sm:$0xff]
    %v418 = vld [vmem:[#allocation8 + $0x738] sm:$0xff]
    %v419 = vld [vmem:[#allocation8 + $0x740] sm:$0xff]
    %v420 = vld [vmem:[#allocation8 + $0x748] sm:$0xff]
    %v421 = vld [vmem:[#allocation8 + $0x750] sm:$0xff]
    %v422 = vld [vmem:[#allocation8 + $0x758] sm:$0xff]
    %v423 = vld [vmem:[#allocation8 + $0x760] sm:$0xff]
    %v424 = vld [vmem:[#allocation8 + $0x768] sm:$0xff]
    %v425 = vld [vmem:[#allocation8 + $0x770] sm:$0xff]
    %v426 = vld [vmem:[#allocation8 + $0x778] sm:$0xff]
    %v427 = vld [vmem:[#allocation8 + $0x780] sm:$0xff]
    %v428 = vld [vmem:[#allocation8 + $0x788] sm:$0xff]
    %v429 = vld [vmem:[#allocation8 + $0x790] sm:$0xff]
    %v430 = vld [vmem:[#allocation8 + $0x798] sm:$0xff]
    %v431 = vld [vmem:[#allocation8 + $0x7a0] sm:$0xff]
    %v432 = vld [vmem:[#allocation8 + $0x7a8] sm:$0xff]
    %v433 = vld [vmem:[#allocation8 + $0x7b0] sm:$0xff]
    %v434 = vld [vmem:[#allocation8 + $0x7b8] sm:$0xff]
    %v435 = vld [vmem:[#allocation8 + $0x7c0] sm:$0xff]
    %v436 = vld [vmem:[#allocation8 + $0x7c8] sm:$0xff]
    %v437 = vld [vmem:[#allocation8 + $0x7d0] sm:$0xff]
    %v438 = vld [vmem:[#allocation8 + $0x7d8] sm:$0xff]
    %v439 = vld [vmem:[#allocation8 + $0x7e0] sm:$0xff]
    %v440 = vld [vmem:[#allocation8 + $0x7e8] sm:$0xff]
    %v441 = vld [vmem:[#allocation8 + $0x7f0] sm:$0xff]
    %v442 = vld [vmem:[#allocation8 + $0x7f8] sm:$0xff]
    %v443 = vld [vmem:[#allocation8 + $0x800] sm:$0xff]
    %v444 = vld [vmem:[#allocation8 + $0x808] sm:$0xff]
    %v445 = vld [vmem:[#allocation8 + $0x810] sm:$0xff]
    %v446 = vld [vmem:[#allocation8 + $0x818] sm:$0xff]
    %v447 = vld [vmem:[#allocation8 + $0x820] sm:$0xff]
    %v448 = vld [vmem:[#allocation8 + $0x828] sm:$0xff]
    %v449 = vld [vmem:[#allocation8 + $0x830] sm:$0xff]
    %v450 = vld [vmem:[#allocation8 + $0x838] sm:$0xff]
    %v451 = vld [vmem:[#allocation8 + $0x840] sm:$0xff]
    %v452 = vld [vmem:[#allocation8 + $0x848] sm:$0xff]
    %v453 = vld [vmem:[#allocation8 + $0x850] sm:$0xff]
    %v454 = vld [vmem:[#allocation8 + $0x858] sm:$0xff]
    %v455 = vld [vmem:[#allocation8 + $0x860] sm:$0xff]
    %v456 = vld [vmem:[#allocation8 + $0x868] sm:$0xff]
    %v457 = vld [vmem:[#allocation8 + $0x870] sm:$0xff]
    %v458 = vld [vmem:[#allocation8 + $0x878] sm:$0xff]
    %v459 = vld [vmem:[#allocation8 + $0x880] sm:$0xff]
    %v460 = vld [vmem:[#allocation8 + $0x888] sm:$0xff]
    %v461 = vld [vmem:[#allocation8 + $0x890] sm:$0xff]
    %v462 = vld [vmem:[#allocation8 + $0x898] sm:$0xff]
    %v463 = vld [vmem:[#allocation8 + $0x8a0] sm:$0xff]
    %v464 = vld [vmem:[#allocation8 + $0x8a8] sm:$0xff]
    %v465 = vld [vmem:[#allocation8 + $0x8b0] sm:$0xff]
    %v466 = vld [vmem:[#allocation8 + $0x8b8] sm:$0xff]
    %v467 = vld [vmem:[#allocation8 + $0x8c0] sm:$0xff]
    %v468 = vld [vmem:[#allocation8 + $0x8c8] sm:$0xff]
    %v469 = vld [vmem:[#allocation8 + $0x8d0] sm:$0xff]
    %v470 = vld [vmem:[#allocation8 + $0x8d8] sm:$0xff]
    %v471 = vld [vmem:[#allocation8 + $0x8e0] sm:$0xff]
    %v472 = vld [vmem:[#allocation8 + $0x8e8] sm:$0xff]
    %v473 = vld [vmem:[#allocation8 + $0x8f0] sm:$0xff]
    %v474 = vld [vmem:[#allocation8 + $0x8f8] sm:$0xff]
    %v475 = vld [vmem:[#allocation8 + $0x900] sm:$0xff]
    %v476 = vld [vmem:[#allocation8 + $0x908] sm:$0xff]
    %v477 = vld [vmem:[#allocation8 + $0x910] sm:$0xff]
    %v478 = vld [vmem:[#allocation8 + $0x918] sm:$0xff]
    %v479 = vld [vmem:[#allocation8 + $0x920] sm:$0xff]
    %v480 = vld [vmem:[#allocation8 + $0x928] sm:$0xff]
    %v481 = vld [vmem:[#allocation8 + $0x930] sm:$0xff]
    %v482 = vld [vmem:[#allocation8 + $0x938] sm:$0xff]
    %v483 = vld [vmem:[#allocation8 + $0x940] sm:$0xff]
    %v484 = vld [vmem:[#allocation8 + $0x948] sm:$0xff]
    %v485 = vld [vmem:[#allocation8 + $0x950] sm:$0xff]
    %v486 = vld [vmem:[#allocation8 + $0x958] sm:$0xff]
    %v487 = vld [vmem:[#allocation8 + $0x960] sm:$0xff]
    %v488 = vld [vmem:[#allocation8 + $0x968] sm:$0xff]
    %v489 = vld [vmem:[#allocation8 + $0x970] sm:$0xff]
    %v490 = vld [vmem:[#allocation8 + $0x978] sm:$0xff]
    %v491 = vld [vmem:[#allocation8 + $0x980] sm:$0xff]
    %v492 = vld [vmem:[#allocation8 + $0x988] sm:$0xff]
    %v493 = vld [vmem:[#allocation8 + $0x990] sm:$0xff]
    %v494 = vld [vmem:[#allocation8 + $0x998] sm:$0xff]
    %v495 = vld [vmem:[#allocation8 + $0x9a0] sm:$0xff]
    %v496 = vld [vmem:[#allocation8 + $0x9a8] sm:$0xff]
    %v497 = vld [vmem:[#allocation8 + $0x9b0] sm:$0xff]
    %v498 = vld [vmem:[#allocation8 + $0x9b8] sm:$0xff]
    %v499 = vld [vmem:[#allocation8 + $0x9c0] sm:$0xff]
    %v500 = vld [vmem:[#allocation8 + $0x9c8] sm:$0xff]
    %v501 = vld [vmem:[#allocation8 + $0x9d0] sm:$0xff]
    %v502 = vld [vmem:[#allocation8 + $0x9d8] sm:$0xff]
    %v503 = vld [vmem:[#allocation8 + $0x9e0] sm:$0xff]
    %v504 = vld [vmem:[#allocation8 + $0x9e8] sm:$0xff]
    %v505 = vld [vmem:[#allocation8 + $0x9f0] sm:$0xff]
    %v506 = vld [vmem:[#allocation8 + $0x9f8] sm:$0xff]
    %v507 = vld [vmem:[#allocation8 + $0xa00] sm:$0xff]
    %v508 = vld [vmem:[#allocation8 + $0xa08] sm:$0xff]
    %v509 = vld [vmem:[#allocation8 + $0xa10] sm:$0xff]
    %v510 = vld [vmem:[#allocation8 + $0xa18] sm:$0xff]
    %v511 = vld [vmem:[#allocation8 + $0xa20] sm:$0xff]
    %v512 = vld [vmem:[#allocation8 + $0xa28] sm:$0xff]
    %v513 = vld [vmem:[#allocation8 + $0xa30] sm:$0xff]
    %v514 = vld [vmem:[#allocation8 + $0xa38] sm:$0xff]
    %v515 = vld [vmem:[#allocation8 + $0xa40] sm:$0xff]
    %v516 = vld [vmem:[#allocation8 + $0xa48] sm:$0xff]
    %v517 = vld [vmem:[#allocation8 + $0xa50] sm:$0xff]
    %v518 = vld [vmem:[#allocation8 + $0xa58] sm:$0xff]
    %v519 = vld [vmem:[#allocation8 + $0xa60] sm:$0xff]
    %v520 = vld [vmem:[#allocation8 + $0xa68] sm:$0xff]
    %v521 = vld [vmem:[#allocation8 + $0xa70] sm:$0xff]
    %v522 = vld [vmem:[#allocation8 + $0xa78] sm:$0xff]
    %v523 = vld [vmem:[#allocation8 + $0xa80] sm:$0xff]
    %v524 = vld [vmem:[#allocation8 + $0xa88] sm:$0xff]
    %v525 = vld [vmem:[#allocation8 + $0xa90] sm:$0xff]
    %v526 = vld [vmem:[#allocation8 + $0xa98] sm:$0xff]
    %v527 = vld [vmem:[#allocation8 + $0xaa0] sm:$0xff]
    %v528 = vld [vmem:[#allocation8 + $0xaa8] sm:$0xff]
    %v529 = vld [vmem:[#allocation8 + $0xab0] sm:$0xff]
    %v530 = vld [vmem:[#allocation8 + $0xab8] sm:$0xff]
    %v531 = vld [vmem:[#allocation8 + $0xac0] sm:$0xff]
    %v532 = vld [vmem:[#allocation8 + $0xac8] sm:$0xff]
    %v533 = vld [vmem:[#allocation8 + $0xad0] sm:$0xff]
    %v534 = vld [vmem:[#allocation8 + $0xad8] sm:$0xff]
    %v535 = vld [vmem:[#allocation8 + $0xae0] sm:$0xff]
    %v536 = vld [vmem:[#allocation8 + $0xae8] sm:$0xff]
    %v537 = vld [vmem:[#allocation8 + $0xaf0] sm:$0xff]
    %v538 = vld [vmem:[#allocation8 + $0xaf8] sm:$0xff]
    %v539 = vld [vmem:[#allocation8 + $0xb00] sm:$0xff]
    %v540 = vld [vmem:[#allocation8 + $0xb08] sm:$0xff]
    %v541 = vld [vmem:[#allocation8 + $0xb10] sm:$0xff]
    %v542 = vld [vmem:[#allocation8 + $0xb18] sm:$0xff]
    %v543 = vld [vmem:[#allocation8 + $0xb20] sm:$0xff]
    %v544 = vld [vmem:[#allocation8 + $0xb28] sm:$0xff]
    %v545 = vld [vmem:[#allocation8 + $0xb30] sm:$0xff]
    %v546 = vld [vmem:[#allocation8 + $0xb38] sm:$0xff]
    %v547 = vld [vmem:[#allocation8 + $0xb40] sm:$0xff]
    %v548 = vld [vmem:[#allocation8 + $0xb48] sm:$0xff]
    %v549 = vld [vmem:[#allocation8 + $0xb50] sm:$0xff]
    %v550 = vld [vmem:[#allocation8 + $0xb58] sm:$0xff]
    %v551 = vld [vmem:[#allocation8 + $0xb60] sm:$0xff]
    %v552 = vld [vmem:[#allocation8 + $0xb68] sm:$0xff]
    %v553 = vld [vmem:[#allocation8 + $0xb70] sm:$0xff]
    %v554 = vld [vmem:[#allocation8 + $0xb78] sm:$0xff]
    %v555 = vld [vmem:[#allocation8 + $0xb80] sm:$0xff]
    %v556 = vld [vmem:[#allocation8 + $0xb88] sm:$0xff]
    %v557 = vld [vmem:[#allocation8 + $0xb90] sm:$0xff]
    %v558 = vld [vmem:[#allocation8 + $0xb98] sm:$0xff]
    %v559 = vld [vmem:[#allocation8 + $0xba0] sm:$0xff]
    %v560 = vld [vmem:[#allocation8 + $0xba8] sm:$0xff]
    %v561 = vld [vmem:[#allocation8 + $0xbb0] sm:$0xff]
    %v562 = vld [vmem:[#allocation8 + $0xbb8] sm:$0xff]
    %v563 = vld [vmem:[#allocation8 + $0xbc0] sm:$0xff]
    %v564 = vld [vmem:[#allocation8 + $0xbc8] sm:$0xff]
    %v565 = vld [vmem:[#allocation8 + $0xbd0] sm:$0xff]
    %v566 = vld [vmem:[#allocation8 + $0xbd8] sm:$0xff]
    %v567 = vld [vmem:[#allocation8 + $0xbe0] sm:$0xff]
    %v568 = vld [vmem:[#allocation8 + $0xbe8] sm:$0xff]
    %v569 = vld [vmem:[#allocation8 + $0xbf0] sm:$0xff]
    %v570 = vld [vmem:[#allocation8 + $0xbf8] sm:$0xff]
    %v571 = vld [vmem:[#allocation8 + $0xc00] sm:$0xff]
    %v572 = vld [vmem:[#allocation8 + $0xc08] sm:$0xff]
    %v573 = vld [vmem:[#allocation8 + $0xc10] sm:$0xff]
    %v574 = vld [vmem:[#allocation8 + $0xc18] sm:$0xff]
    %v575 = vld [vmem:[#allocation8 + $0xc20] sm:$0xff]
    %v576 = vld [vmem:[#allocation8 + $0xc28] sm:$0xff]
    %v577 = vld [vmem:[#allocation8 + $0xc30] sm:$0xff]
    %v578 = vld [vmem:[#allocation8 + $0xc38] sm:$0xff]
    %v579 = vld [vmem:[#allocation8 + $0xc40] sm:$0xff]
    %v580 = vld [vmem:[#allocation8 + $0xc48] sm:$0xff]
    %v581 = vld [vmem:[#allocation8 + $0xc50] sm:$0xff]
    %v582 = vld [vmem:[#allocation8 + $0xc58] sm:$0xff]
    %v583 = vld [vmem:[#allocation8 + $0xc60] sm:$0xff]
    %v584 = vld [vmem:[#allocation8 + $0xc68] sm:$0xff]
    %v585 = vld [vmem:[#allocation8 + $0xc70] sm:$0xff]
    %v586 = vld [vmem:[#allocation8 + $0xc78] sm:$0xff]
    %v587 = vld [vmem:[#allocation8 + $0xc80] sm:$0xff]
    %v588 = vld [vmem:[#allocation8 + $0xc88] sm:$0xff]
    %v589 = vld [vmem:[#allocation8 + $0xc90] sm:$0xff]
    %v590 = vld [vmem:[#allocation8 + $0xc98] sm:$0xff]
    %v591 = vld [vmem:[#allocation8 + $0xca0] sm:$0xff]
    %v592 = vld [vmem:[#allocation8 + $0xca8] sm:$0xff]
    %v593 = vld [vmem:[#allocation8 + $0xcb0] sm:$0xff]
    %v594 = vld [vmem:[#allocation8 + $0xcb8] sm:$0xff]
    %v595 = vld [vmem:[#allocation8 + $0xcc0] sm:$0xff]
    %v596 = vld [vmem:[#allocation8 + $0xcc8] sm:$0xff]
    %v597 = vld [vmem:[#allocation8 + $0xcd0] sm:$0xff]
    %v598 = vld [vmem:[#allocation8 + $0xcd8] sm:$0xff]
    %v599 = vld [vmem:[#allocation8 + $0xce0] sm:$0xff]
    %v600 = vld [vmem:[#allocation8 + $0xce8] sm:$0xff]
    %v601 = vld [vmem:[#allocation8 + $0xcf0] sm:$0xff]
    %v602 = vld [vmem:[#allocation8 + $0xcf8] sm:$0xff]
    %v603 = vld [vmem:[#allocation8 + $0xd00] sm:$0xff]
    %v604 = vld [vmem:[#allocation8 + $0xd08] sm:$0xff]
    %v605 = vld [vmem:[#allocation8 + $0xd10] sm:$0xff]
    %v606 = vld [vmem:[#allocation8 + $0xd18] sm:$0xff]
    %v607 = vld [vmem:[#allocation8 + $0xd20] sm:$0xff]
    %v608 = vld [vmem:[#allocation8 + $0xd28] sm:$0xff]
    %v609 = vld [vmem:[#allocation8 + $0xd30] sm:$0xff]
    %v610 = vld [vmem:[#allocation8 + $0xd38] sm:$0xff]
    %v611 = vld [vmem:[#allocation8 + $0xd40] sm:$0xff]
    %v612 = vld [vmem:[#allocation8 + $0xd48] sm:$0xff]
    %v613 = vld [vmem:[#allocation8 + $0xd50] sm:$0xff]
    %v614 = vld [vmem:[#allocation8 + $0xd58] sm:$0xff]
    %v615 = vld [vmem:[#allocation8 + $0xd60] sm:$0xff]
    %v616 = vld [vmem:[#allocation8 + $0xd68] sm:$0xff]
    %v617 = vld [vmem:[#allocation8 + $0xd70] sm:$0xff]
    %v618 = vld [vmem:[#allocation8 + $0xd78] sm:$0xff]
    %v619 = vld [vmem:[#allocation8 + $0xd80] sm:$0xff]
    %v620 = vld [vmem:[#allocation8 + $0xd88] sm:$0xff]
    %v621 = vld [vmem:[#allocation8 + $0xd90] sm:$0xff]
    %v622 = vld [vmem:[#allocation8 + $0xd98] sm:$0xff]
    %v623 = vld [vmem:[#allocation8 + $0xda0] sm:$0xff]
    %v624 = vld [vmem:[#allocation8 + $0xda8] sm:$0xff]
    %v625 = vld [vmem:[#allocation8 + $0xdb0] sm:$0xff]
    %v626 = vld [vmem:[#allocation8 + $0xdb8] sm:$0xff]
    %v627 = vld [vmem:[#allocation8 + $0xdc0] sm:$0xff]
    %v628 = vld [vmem:[#allocation8 + $0xdc8] sm:$0xff]
    %v629 = vld [vmem:[#allocation8 + $0xdd0] sm:$0xff]
    %v630 = vld [vmem:[#allocation8 + $0xdd8] sm:$0xff]
    %v631 = vld [vmem:[#allocation8 + $0xde0] sm:$0xff]
    %v632 = vld [vmem:[#allocation8 + $0xde8] sm:$0xff]
    %v633 = vld [vmem:[#allocation8 + $0xdf0] sm:$0xff]
    %v634 = vld [vmem:[#allocation8 + $0xdf8] sm:$0xff]
    %v635 = vld [vmem:[#allocation8 + $0xe00] sm:$0xff]
    %v636 = vld [vmem:[#allocation8 + $0xe08] sm:$0xff]
    %v637 = vld [vmem:[#allocation8 + $0xe10] sm:$0xff]
    %v638 = vld [vmem:[#allocation8 + $0xe18] sm:$0xff]
    %v639 = vld [vmem:[#allocation8 + $0xe20] sm:$0xff]
    %v640 = vld [vmem:[#allocation8 + $0xe28] sm:$0xff]
    %v641 = vld [vmem:[#allocation8 + $0xe30] sm:$0xff]
    %v642 = vld [vmem:[#allocation8 + $0xe38] sm:$0xff]
    %v643 = vld [vmem:[#allocation8 + $0xe40] sm:$0xff]
    %v644 = vld [vmem:[#allocation8 + $0xe48] sm:$0xff]
    %v645 = vld [vmem:[#allocation8 + $0xe50] sm:$0xff]
    %v646 = vld [vmem:[#allocation8 + $0xe58] sm:$0xff]
    %v647 = vld [vmem:[#allocation8 + $0xe60] sm:$0xff]
    %v648 = vld [vmem:[#allocation8 + $0xe68] sm:$0xff]
    %v649 = vld [vmem:[#allocation8 + $0xe70] sm:$0xff]
    %v650 = vld [vmem:[#allocation8 + $0xe78] sm:$0xff]
    %v651 = vld [vmem:[#allocation8 + $0xe80] sm:$0xff]
    %v652 = vld [vmem:[#allocation8 + $0xe88] sm:$0xff]
    %v653 = vld [vmem:[#allocation8 + $0xe90] sm:$0xff]
    %v654 = vld [vmem:[#allocation8 + $0xe98] sm:$0xff]
    %v655 = vld [vmem:[#allocation8 + $0xea0] sm:$0xff]
    %v656 = vld [vmem:[#allocation8 + $0xea8] sm:$0xff]
    %v657 = vld [vmem:[#allocation8 + $0xeb0] sm:$0xff]
    %v658 = vld [vmem:[#allocation8 + $0xeb8] sm:$0xff]
    %v659 = vld [vmem:[#allocation8 + $0xec0] sm:$0xff]
    %v660 = vld [vmem:[#allocation8 + $0xec8] sm:$0xff]
    %v661 = vld [vmem:[#allocation8 + $0xed0] sm:$0xff]
    %v662 = vld [vmem:[#allocation8 + $0xed8] sm:$0xff]
    %v663 = vld [vmem:[#allocation8 + $0xee0] sm:$0xff]
    %v664 = vld [vmem:[#allocation8 + $0xee8] sm:$0xff]
    %v665 = vld [vmem:[#allocation8 + $0xef0] sm:$0xff]
    %v666 = vld [vmem:[#allocation8 + $0xef8] sm:$0xff]
    %v667 = vld [vmem:[#allocation8 + $0xf00] sm:$0xff]
    %v668 = vld [vmem:[#allocation8 + $0xf08] sm:$0xff]
    %v669 = vld [vmem:[#allocation8 + $0xf10] sm:$0xff]
    %v670 = vld [vmem:[#allocation8 + $0xf18] sm:$0xff]
    %v671 = vld [vmem:[#allocation8 + $0xf20] sm:$0xff]
    %v672 = vld [vmem:[#allocation8 + $0xf28] sm:$0xff]
    %v673 = vld [vmem:[#allocation8 + $0xf30] sm:$0xff]
    %v674 = vld [vmem:[#allocation8 + $0xf38] sm:$0xff]
    %v675 = vld [vmem:[#allocation8 + $0xf40] sm:$0xff]
    %v676 = vld [vmem:[#allocation8 + $0xf48] sm:$0xff]
    %v677 = vld [vmem:[#allocation8 + $0xf50] sm:$0xff]
    %v678 = vld [vmem:[#allocation8 + $0xf58] sm:$0xff]
    %v679 = vld [vmem:[#allocation8 + $0xf60] sm:$0xff]
    %v680 = vld [vmem:[#allocation8 + $0xf68] sm:$0xff]
    %v681 = vld [vmem:[#allocation8 + $0xf70] sm:$0xff]
    %v682 = vld [vmem:[#allocation8 + $0xf78] sm:$0xff]
    %v683 = vld [vmem:[#allocation8 + $0xf80] sm:$0xff]
    %v684 = vld [vmem:[#allocation8 + $0xf88] sm:$0xff]
    %v685 = vld [vmem:[#allocation8 + $0xf90] sm:$0xff]
    %v686 = vld [vmem:[#allocation8 + $0xf98] sm:$0xff]
    %v687 = vld [vmem:[#allocation8 + $0xfa0] sm:$0xff]
    %v688 = vld [vmem:[#allocation8 + $0xfa8] sm:$0xff]
    %v689 = vld [vmem:[#allocation8 + $0xfb0] sm:$0xff]
    %v690 = vld [vmem:[#allocation8 + $0xfb8] sm:$0xff]
    %v691 = vld [vmem:[#allocation8 + $0xfc0] sm:$0xff]
    %v692 = vld [vmem:[#allocation8 + $0xfc8] sm:$0xff]
    %v693 = vld [vmem:[#allocation8 + $0xfd0] sm:$0xff]
    %v694 = vld [vmem:[#allocation8 + $0xfd8] sm:$0xff]
    %v695 = vld [vmem:[#allocation8 + $0xfe0] sm:$0xff]
    %v696 = vld [vmem:[#allocation8 + $0xfe8] sm:$0xff]
    %v697 = vld [vmem:[#allocation8 + $0xff0] sm:$0xff]
    %v698 = vld [vmem:[#allocation8 + $0xff8] sm:$0xff]
    %v699 = vld [vmem:[#allocation8 + $0x1000] sm:$0xff]
    %v700 = vld [vmem:[#allocation8 + $0x1008] sm:$0xff]
    %v701 = vld [vmem:[#allocation8 + $0x1010] sm:$0xff]
    %v702 = vld [vmem:[#allocation8 + $0x1018] sm:$0xff]
    %v703 = vld [vmem:[#allocation8 + $0x1020] sm:$0xff]
    %v704 = vld [vmem:[#allocation8 + $0x1028] sm:$0xff]
    %v705 = vld [vmem:[#allocation8 + $0x1030] sm:$0xff]
    %v706 = vld [vmem:[#allocation8 + $0x1038] sm:$0xff]
    %v707 = vld [vmem:[#allocation8 + $0x1040] sm:$0xff]
    %v708 = vld [vmem:[#allocation8 + $0x1048] sm:$0xff]
    %v709 = vld [vmem:[#allocation8 + $0x1050] sm:$0xff]
    %v710 = vld [vmem:[#allocation8 + $0x1058] sm:$0xff]
    %v711 = vld [vmem:[#allocation8 + $0x1060] sm:$0xff]
    %v712 = vld [vmem:[#allocation8 + $0x1068] sm:$0xff]
    %v713 = vld [vmem:[#allocation8 + $0x1070] sm:$0xff]
    %v714 = vld [vmem:[#allocation8 + $0x1078] sm:$0xff]
    %v715 = vld [vmem:[#allocation8 + $0x1080] sm:$0xff]
    %v716 = vld [vmem:[#allocation8 + $0x1088] sm:$0xff]
    %v717 = vld [vmem:[#allocation8 + $0x1090] sm:$0xff]
    %v718 = vld [vmem:[#allocation8 + $0x1098] sm:$0xff]
    %v719 = vld [vmem:[#allocation8 + $0x10a0] sm:$0xff]
    %v720 = vld [vmem:[#allocation8 + $0x10a8] sm:$0xff]
    %v721 = vld [vmem:[#allocation8 + $0x10b0] sm:$0xff]
    %v722 = vld [vmem:[#allocation8 + $0x10b8] sm:$0xff]
    %v723 = vld [vmem:[#allocation8 + $0x10c0] sm:$0xff]
    %v724 = vld [vmem:[#allocation8 + $0x10c8] sm:$0xff]
    %v725 = vld [vmem:[#allocation8 + $0x10d0] sm:$0xff]
    %v726 = vld [vmem:[#allocation8 + $0x10d8] sm:$0xff]
    %v727 = vld [vmem:[#allocation8 + $0x10e0] sm:$0xff]
    %v728 = vld [vmem:[#allocation8 + $0x10e8] sm:$0xff]
    %v729 = vld [vmem:[#allocation8 + $0x10f0] sm:$0xff]
    %v730 = vld [vmem:[#allocation8 + $0x10f8] sm:$0xff]
    %v731 = vld [vmem:[#allocation8 + $0x1100] sm:$0xff]
    %v732 = vld [vmem:[#allocation8 + $0x1108] sm:$0xff]
    %v733 = vld [vmem:[#allocation8 + $0x1110] sm:$0xff]
    %v734 = vld [vmem:[#allocation8 + $0x1118] sm:$0xff]
    %v735 = vld [vmem:[#allocation8 + $0x1120] sm:$0xff]
    %v736 = vld [vmem:[#allocation8 + $0x1128] sm:$0xff]
    %v737 = vld [vmem:[#allocation8 + $0x1130] sm:$0xff]
    %v738 = vld [vmem:[#allocation8 + $0x1138] sm:$0xff]
    %v739 = vld [vmem:[#allocation8 + $0x1140] sm:$0xff]
    %v740 = vld [vmem:[#allocation8 + $0x1148] sm:$0xff]
    %v741 = vld [vmem:[#allocation8 + $0x1150] sm:$0xff]
    %v742 = vld [vmem:[#allocation8 + $0x1158] sm:$0xff]
    %v743 = vld [vmem:[#allocation8 + $0x1160] sm:$0xff]
    %v744 = vld [vmem:[#allocation8 + $0x1168] sm:$0xff]
    %v745 = vld [vmem:[#allocation8 + $0x1170] sm:$0xff]
    %v746 = vld [vmem:[#allocation8 + $0x1178] sm:$0xff]
    %v747 = vld [vmem:[#allocation8 + $0x1180] sm:$0xff]
    %v748 = vld [vmem:[#allocation8 + $0x1188] sm:$0xff]
    %v749 = vld [vmem:[#allocation8 + $0x1190] sm:$0xff]
    %v750 = vld [vmem:[#allocation8 + $0x1198] sm:$0xff]
    %v751 = vld [vmem:[#allocation8 + $0x11a0] sm:$0xff]
    %v752 = vld [vmem:[#allocation8 + $0x11a8] sm:$0xff]
    %v753 = vld [vmem:[#allocation8 + $0x11b0] sm:$0xff]
    %v754 = vld [vmem:[#allocation8 + $0x11b8] sm:$0xff]
    %v755 = vld [vmem:[#allocation8 + $0x11c0] sm:$0xff]
    %v756 = vld [vmem:[#allocation8 + $0x11c8] sm:$0xff]
    %v757 = vld [vmem:[#allocation8 + $0x11d0] sm:$0xff]
    %v758 = vld [vmem:[#allocation8 + $0x11d8] sm:$0xff]
    %v759 = vld [vmem:[#allocation8 + $0x11e0] sm:$0xff]
    %v760 = vld [vmem:[#allocation8 + $0x11e8] sm:$0xff]
    %v761 = vld [vmem:[#allocation8 + $0x11f0] sm:$0xff]
    %v762 = vld [vmem:[#allocation8 + $0x11f8] sm:$0xff]
    %v763 = vld [vmem:[#allocation8 + $0x1200] sm:$0xff]
    %v764 = vld [vmem:[#allocation8 + $0x1208] sm:$0xff]
    %v765 = vld [vmem:[#allocation8 + $0x1210] sm:$0xff]
    %v766 = vld [vmem:[#allocation8 + $0x1218] sm:$0xff]
    %v767 = vld [vmem:[#allocation8 + $0x1220] sm:$0xff]
    %v768 = vld [vmem:[#allocation8 + $0x1228] sm:$0xff]
    %v769 = vld [vmem:[#allocation8 + $0x1230] sm:$0xff]
    %v770 = vld [vmem:[#allocation8 + $0x1238] sm:$0xff]
    %v771 = vld [vmem:[#allocation8 + $0x1240] sm:$0xff]
    %v772 = vld [vmem:[#allocation8 + $0x1248] sm:$0xff]
    %v773 = vld [vmem:[#allocation8 + $0x1250] sm:$0xff]
    %v774 = vld [vmem:[#allocation8 + $0x1258] sm:$0xff]
    %v775 = vld [vmem:[#allocation8 + $0x1260] sm:$0xff]
    %v776 = vld [vmem:[#allocation8 + $0x1268] sm:$0xff]
    %v777 = vld [vmem:[#allocation8 + $0x1270] sm:$0xff]
    %v778 = vld [vmem:[#allocation8 + $0x1278] sm:$0xff]
    %v779 = vld [vmem:[#allocation8 + $0x1280] sm:$0xff]
    %v780 = vld [vmem:[#allocation8 + $0x1288] sm:$0xff]
    %v781 = vld [vmem:[#allocation8 + $0x1290] sm:$0xff]
    %v782 = vld [vmem:[#allocation8 + $0x1298] sm:$0xff]
    %v783 = vld [vmem:[#allocation8 + $0x12a0] sm:$0xff]
    %v784 = vld [vmem:[#allocation8 + $0x12a8] sm:$0xff]
    %v785 = vld [vmem:[#allocation8 + $0x12b0] sm:$0xff]
    %v786 = vld [vmem:[#allocation8 + $0x12b8] sm:$0xff]
    %v787 = vld [vmem:[#allocation8 + $0x12c0] sm:$0xff]
    %v788 = vld [vmem:[#allocation8 + $0x12c8] sm:$0xff]
    %v789 = vld [vmem:[#allocation8 + $0x12d0] sm:$0xff]
    %v790 = vld [vmem:[#allocation8 + $0x12d8] sm:$0xff]
    %v791 = vld [vmem:[#allocation8 + $0x12e0] sm:$0xff]
    %v792 = vld [vmem:[#allocation8 + $0x12e8] sm:$0xff]
    %v793 = vld [vmem:[#allocation8 + $0x12f0] sm:$0xff]
    %v794 = vld [vmem:[#allocation8 + $0x12f8] sm:$0xff]
    %v795 = vld [vmem:[#allocation8 + $0x1300] sm:$0xff]
    %v796 = vld [vmem:[#allocation8 + $0x1308] sm:$0xff]
    %v797 = vld [vmem:[#allocation8 + $0x1310] sm:$0xff]
    %v798 = vld [vmem:[#allocation8 + $0x1318] sm:$0xff]
    %v799 = vld [vmem:[#allocation8 + $0x1320] sm:$0xff]
    %v800 = vld [vmem:[#allocation8 + $0x1328] sm:$0xff]
    %v801 = vld [vmem:[#allocation8 + $0x1330] sm:$0xff]
    %v802 = vld [vmem:[#allocation8 + $0x1338] sm:$0xff]
    %v803 = vld [vmem:[#allocation8 + $0x1340] sm:$0xff]
    %v804 = vld [vmem:[#allocation8 + $0x1348] sm:$0xff]
    %v805 = vld [vmem:[#allocation8 + $0x1350] sm:$0xff]
    %v806 = vld [vmem:[#allocation8 + $0x1358] sm:$0xff]
    %v807 = vld [vmem:[#allocation8 + $0x1360] sm:$0xff]
    %v808 = vld [vmem:[#allocation8 + $0x1368] sm:$0xff]
    %v809 = vld [vmem:[#allocation8 + $0x1370] sm:$0xff]
    %v810 = vld [vmem:[#allocation8 + $0x1378] sm:$0xff]
    %v811 = vld [vmem:[#allocation8 + $0x1380] sm:$0xff]
    %v812 = vld [vmem:[#allocation8 + $0x1388] sm:$0xff]
    %v813 = vld [vmem:[#allocation8 + $0x1390] sm:$0xff]
    %v814 = vld [vmem:[#allocation8 + $0x1398] sm:$0xff]
    %v815 = vld [vmem:[#allocation8 + $0x13a0] sm:$0xff]
    %v816 = vld [vmem:[#allocation8 + $0x13a8] sm:$0xff]
    %v817 = vld [vmem:[#allocation8 + $0x13b0] sm:$0xff]
    %v818 = vld [vmem:[#allocation8 + $0x13b8] sm:$0xff]
    %v819 = vld [vmem:[#allocation8 + $0x13c0] sm:$0xff]
    %v820 = vld [vmem:[#allocation8 + $0x13c8] sm:$0xff]
    %v821 = vld [vmem:[#allocation8 + $0x13d0] sm:$0xff]
    %v822 = vld [vmem:[#allocation8 + $0x13d8] sm:$0xff]
    %v823 = vld [vmem:[#allocation8 + $0x13e0] sm:$0xff]
    %v824 = vld [vmem:[#allocation8 + $0x13e8] sm:$0xff]
    %v825 = vld [vmem:[#allocation8 + $0x13f0] sm:$0xff]
    %v826 = vld [vmem:[#allocation8 + $0x13f8] sm:$0xff]
    %v827 = vld [vmem:[#allocation8 + $0x1400] sm:$0xff]
    %v828 = vld [vmem:[#allocation8 + $0x1408] sm:$0xff]
    %v829 = vld [vmem:[#allocation8 + $0x1410] sm:$0xff]
    %v830 = vld [vmem:[#allocation8 + $0x1418] sm:$0xff]
    %v831 = vld [vmem:[#allocation8 + $0x1420] sm:$0xff]
    %v832 = vld [vmem:[#allocation8 + $0x1428] sm:$0xff]
    %v833 = vld [vmem:[#allocation8 + $0x1430] sm:$0xff]
    %v834 = vld [vmem:[#allocation8 + $0x1438] sm:$0xff]
    %v835 = vld [vmem:[#allocation8 + $0x1440] sm:$0xff]
    %v836 = vld [vmem:[#allocation8 + $0x1448] sm:$0xff]
    %v837 = vld [vmem:[#allocation8 + $0x1450] sm:$0xff]
    %v838 = vld [vmem:[#allocation8 + $0x1458] sm:$0xff]
    %v839 = vld [vmem:[#allocation8 + $0x1460] sm:$0xff]
    %v840 = vld [vmem:[#allocation8 + $0x1468] sm:$0xff]
    %v841 = vld [vmem:[#allocation8 + $0x1470] sm:$0xff]
    %v842 = vld [vmem:[#allocation8 + $0x1478] sm:$0xff]
    %v843 = vld [vmem:[#allocation8 + $0x1480] sm:$0xff]
    %v844 = vld [vmem:[#allocation8 + $0x1488] sm:$0xff]
    %v845 = vld [vmem:[#allocation8 + $0x1490] sm:$0xff]
    %v846 = vld [vmem:[#allocation8 + $0x1498] sm:$0xff]
    %v847 = vld [vmem:[#allocation8 + $0x14a0] sm:$0xff]
    %v848 = vld [vmem:[#allocation8 + $0x14a8] sm:$0xff]
    %v849 = vld [vmem:[#allocation8 + $0x14b0] sm:$0xff]
    %v850 = vld [vmem:[#allocation8 + $0x14b8] sm:$0xff]
    %v851 = vld [vmem:[#allocation8 + $0x14c0] sm:$0xff]
    %v852 = vld [vmem:[#allocation8 + $0x14c8] sm:$0xff]
    %v853 = vld [vmem:[#allocation8 + $0x14d0] sm:$0xff]
    %v854 = vld [vmem:[#allocation8 + $0x14d8] sm:$0xff]
    %v855 = vld [vmem:[#allocation8 + $0x14e0] sm:$0xff]
    %v856 = vld [vmem:[#allocation8 + $0x14e8] sm:$0xff]
    %v857 = vld [vmem:[#allocation8 + $0x14f0] sm:$0xff]
    %v858 = vld [vmem:[#allocation8 + $0x14f8] sm:$0xff]
    %v859 = vld [vmem:[#allocation8 + $0x1500] sm:$0xff]
    %v860 = vld [vmem:[#allocation8 + $0x1508] sm:$0xff]
    %v861 = vld [vmem:[#allocation8 + $0x1510] sm:$0xff]
    %v862 = vld [vmem:[#allocation8 + $0x1518] sm:$0xff]
    %v863 = vld [vmem:[#allocation8 + $0x1520] sm:$0xff]
    %v864 = vld [vmem:[#allocation8 + $0x1528] sm:$0xff]
    %v865 = vld [vmem:[#allocation8 + $0x1530] sm:$0xff]
    %v866 = vld [vmem:[#allocation8 + $0x1538] sm:$0xff]
    %v867 = vld [vmem:[#allocation8 + $0x1540] sm:$0xff]
    %v868 = vld [vmem:[#allocation8 + $0x1548] sm:$0xff]
    %v869 = vld [vmem:[#allocation8 + $0x1550] sm:$0xff]
    %v870 = vld [vmem:[#allocation8 + $0x1558] sm:$0xff]
    %v871 = vld [vmem:[#allocation8 + $0x1560] sm:$0xff]
    %v872 = vld [vmem:[#allocation8 + $0x1568] sm:$0xff]
    %v873 = vld [vmem:[#allocation8 + $0x1570] sm:$0xff]
    %v874 = vld [vmem:[#allocation8 + $0x1578] sm:$0xff]
    %v875 = vld [vmem:[#allocation8 + $0x1580] sm:$0xff]
    %v876 = vld [vmem:[#allocation8 + $0x1588] sm:$0xff]
    %v877 = vld [vmem:[#allocation8 + $0x1590] sm:$0xff]
    %v878 = vld [vmem:[#allocation8 + $0x1598] sm:$0xff]
    %v879 = vld [vmem:[#allocation8 + $0x15a0] sm:$0xff]
    %v880 = vld [vmem:[#allocation8 + $0x15a8] sm:$0xff]
    %v881 = vld [vmem:[#allocation8 + $0x15b0] sm:$0xff]
    %v882 = vld [vmem:[#allocation8 + $0x15b8] sm:$0xff]
    %v883 = vld [vmem:[#allocation8 + $0x15c0] sm:$0xff]
    %v884 = vld [vmem:[#allocation8 + $0x15c8] sm:$0xff]
    %v885 = vld [vmem:[#allocation8 + $0x15d0] sm:$0xff]
    %v886 = vld [vmem:[#allocation8 + $0x15d8] sm:$0xff]
    %v887 = vld [vmem:[#allocation10] sm:$0xf]
    %v889 = vperm.slane %v887, 0
    %v890 = vperm.slane %v887, 1
    %v891 = vperm.slane %v887, 2
    %v892 = vperm.slane %v887, 3
    %v908 = vunpack.c.l.b16 %v176
    %v909 = vunpack.c.h.b16 %v176
    %v910 = vunpack.c.l.b16 %v177
    %v911 = vunpack.c.h.b16 %v177
    %v912 = vunpack.c.l.b16 %v178
    %v913 = vunpack.c.h.b16 %v178
    %v914 = vunpack.c.l.b16 %v179
    %v915 = vunpack.c.h.b16 %v179
    %v916 = vunpack.c.l.b16 %v180
    %v917 = vunpack.c.h.b16 %v180
    %v918 = vunpack.c.l.b16 %v181
    %v919 = vunpack.c.h.b16 %v181
    %v920 = vunpack.c.l.b16 %v182
    %v921 = vunpack.c.h.b16 %v182
    %v922 = vunpack.c.l.b16 %v183
    %v923 = vunpack.c.h.b16 %v183
    %v924 = vunpack.c.l.b16 %v184
    %v925 = vunpack.c.h.b16 %v184
    %v926 = vunpack.c.l.b16 %v185
    %v927 = vunpack.c.h.b16 %v185
    %v928 = vunpack.c.l.b16 %v186
    %v929 = vunpack.c.h.b16 %v186
    %v930 = vpack.c.b16 %v908, %v908
    %v931 = vpack.c.b16 %v909, %v909
    %v932 = vpack.c.b16 %v910, %v910
    %v933 = vpack.c.b16 %v911, %v911
    %v934 = vpack.c.b16 %v912, %v912
    %v935 = vpack.c.b16 %v913, %v913
    %v936 = vpack.c.b16 %v914, %v914
    %v937 = vpack.c.b16 %v915, %v915
    %v938 = vpack.c.b16 %v916, %v916
    %v939 = vpack.c.b16 %v917, %v917
    %v940 = vpack.c.b16 %v918, %v918
    %v941 = vpack.c.b16 %v919, %v919
    %v942 = vpack.c.b16 %v920, %v920
    %v943 = vpack.c.b16 %v921, %v921
    %v944 = vpack.c.b16 %v922, %v922
    %v945 = vpack.c.b16 %v923, %v923
    %v946 = vpack.c.b16 %v924, %v924
    %v947 = vpack.c.b16 %v925, %v925
    %v948 = vpack.c.b16 %v926, %v926
    %v949 = vpack.c.b16 %v927, %v927
    %v950 = vpack.c.b16 %v928, %v928
    %v951 = vpack.c.b16 %v929, %v929
    %v1673 = vunpack.c.l.b16 %v187
    %v1674 = vunpack.c.h.b16 %v187
    %v1675 = vunpack.c.l.b16 %v188
    %v1676 = vunpack.c.h.b16 %v188
    %v1677 = vunpack.c.l.b16 %v189
    %v1678 = vunpack.c.h.b16 %v189
    %v1679 = vunpack.c.l.b16 %v190
    %v1680 = vunpack.c.h.b16 %v190
    %v1681 = vunpack.c.l.b16 %v191
    %v1682 = vunpack.c.h.b16 %v191
    %v1683 = vunpack.c.l.b16 %v192
    %v1684 = vunpack.c.h.b16 %v192
    %v1685 = vunpack.c.l.b16 %v193
    %v1686 = vunpack.c.h.b16 %v193
    %v1687 = vunpack.c.l.b16 %v194
    %v1688 = vunpack.c.h.b16 %v194
    %v1689 = vunpack.c.l.b16 %v195
    %v1690 = vunpack.c.h.b16 %v195
    %v1691 = vunpack.c.l.b16 %v196
    %v1692 = vunpack.c.h.b16 %v196
    %v1693 = vunpack.c.l.b16 %v197
    %v1694 = vunpack.c.h.b16 %v197
    %v1695 = vunpack.c.l.b16 %v198
    %v1696 = vunpack.c.h.b16 %v198
    %v1697 = vunpack.c.l.b16 %v199
    %v1698 = vunpack.c.h.b16 %v199
    %v1699 = vunpack.c.l.b16 %v200
    %v1700 = vunpack.c.h.b16 %v200
    %v1701 = vunpack.c.l.b16 %v201
    %v1702 = vunpack.c.h.b16 %v201
    %v1703 = vunpack.c.l.b16 %v202
    %v1704 = vunpack.c.h.b16 %v202
    %v1705 = vunpack.c.l.b16 %v203
    %v1706 = vunpack.c.h.b16 %v203
    %v1707 = vunpack.c.l.b16 %v204
    %v1708 = vunpack.c.h.b16 %v204
    %v1709 = vunpack.c.l.b16 %v205
    %v1710 = vunpack.c.h.b16 %v205
    %v1711 = vunpack.c.l.b16 %v206
    %v1712 = vunpack.c.h.b16 %v206
    %v1713 = vunpack.c.l.b16 %v207
    %v1714 = vunpack.c.h.b16 %v207
    %v1715 = vunpack.c.l.b16 %v208
    %v1716 = vunpack.c.h.b16 %v208
    %v1717 = vunpack.c.l.b16 %v209
    %v1718 = vunpack.c.h.b16 %v209
    %v1719 = vunpack.c.l.b16 %v210
    %v1720 = vunpack.c.h.b16 %v210
    %v1721 = vunpack.c.l.b16 %v211
    %v1722 = vunpack.c.h.b16 %v211
    %v1723 = vunpack.c.l.b16 %v212
    %v1724 = vunpack.c.h.b16 %v212
    %v1725 = vunpack.c.l.b16 %v213
    %v1726 = vunpack.c.h.b16 %v213
    %v1727 = vunpack.c.l.b16 %v214
    %v1728 = vunpack.c.h.b16 %v214
    %v1729 = vunpack.c.l.b16 %v215
    %v1730 = vunpack.c.h.b16 %v215
    %v1731 = vunpack.c.l.b16 %v216
    %v1732 = vunpack.c.h.b16 %v216
    %v1733 = vunpack.c.l.b16 %v217
    %v1734 = vunpack.c.h.b16 %v217
    %v1735 = vunpack.c.l.b16 %v218
    %v1736 = vunpack.c.h.b16 %v218
    %v1737 = vunpack.c.l.b16 %v219
    %v1738 = vunpack.c.h.b16 %v219
    %v1739 = vunpack.c.l.b16 %v220
    %v1740 = vunpack.c.h.b16 %v220
    %v1741 = vunpack.c.l.b16 %v221
    %v1742 = vunpack.c.h.b16 %v221
    %v1743 = vunpack.c.l.b16 %v222
    %v1744 = vunpack.c.h.b16 %v222
    %v1745 = vunpack.c.l.b16 %v223
    %v1746 = vunpack.c.h.b16 %v223
    %v1747 = vunpack.c.l.b16 %v224
    %v1748 = vunpack.c.h.b16 %v224
    %v1749 = vunpack.c.l.b16 %v225
    %v1750 = vunpack.c.h.b16 %v225
    %v1751 = vunpack.c.l.b16 %v226
    %v1752 = vunpack.c.h.b16 %v226
    %v1753 = vunpack.c.l.b16 %v227
    %v1754 = vunpack.c.h.b16 %v227
    %v1755 = vunpack.c.l.b16 %v228
    %v1756 = vunpack.c.h.b16 %v228
    %v1757 = vunpack.c.l.b16 %v229
    %v1758 = vunpack.c.h.b16 %v229
    %v1759 = vunpack.c.l.b16 %v230
    %v1760 = vunpack.c.h.b16 %v230
    %v1761 = vunpack.c.l.b16 %v231
    %v1762 = vunpack.c.h.b16 %v231
    %v1763 = vunpack.c.l.b16 %v232
    %v1764 = vunpack.c.h.b16 %v232
    %v1765 = vunpack.c.l.b16 %v233
    %v1766 = vunpack.c.h.b16 %v233
    %v1767 = vunpack.c.l.b16 %v234
    %v1768 = vunpack.c.h.b16 %v234
    %v1769 = vunpack.c.l.b16 %v235
    %v1770 = vunpack.c.h.b16 %v235
    %v1771 = vunpack.c.l.b16 %v236
    %v1772 = vunpack.c.h.b16 %v236
    %v1773 = vunpack.c.l.b16 %v237
    %v1774 = vunpack.c.h.b16 %v237
    %v1775 = vunpack.c.l.b16 %v238
    %v1776 = vunpack.c.h.b16 %v238
    %v1777 = vunpack.c.l.b16 %v239
    %v1778 = vunpack.c.h.b16 %v239
    %v1779 = vunpack.c.l.b16 %v240
    %v1780 = vunpack.c.h.b16 %v240
    %v1781 = vunpack.c.l.b16 %v241
    %v1782 = vunpack.c.h.b16 %v241
    %v1783 = vunpack.c.l.b16 %v242
    %v1784 = vunpack.c.h.b16 %v242
    %v1785 = vunpack.c.l.b16 %v243
    %v1786 = vunpack.c.h.b16 %v243
    %v1787 = vunpack.c.l.b16 %v244
    %v1788 = vunpack.c.h.b16 %v244
    %v1789 = vunpack.c.l.b16 %v245
    %v1790 = vunpack.c.h.b16 %v245
    %v1791 = vunpack.c.l.b16 %v246
    %v1792 = vunpack.c.h.b16 %v246
    %v1793 = vunpack.c.l.b16 %v247
    %v1794 = vunpack.c.h.b16 %v247
    %v1795 = vunpack.c.l.b16 %v248
    %v1796 = vunpack.c.h.b16 %v248
    %v1797 = vunpack.c.l.b16 %v249
    %v1798 = vunpack.c.h.b16 %v249
    %v1799 = vunpack.c.l.b16 %v250
    %v1800 = vunpack.c.h.b16 %v250
    %v1801 = vunpack.c.l.b16 %v251
    %v1802 = vunpack.c.h.b16 %v251
    %v1803 = vunpack.c.l.b16 %v252
    %v1804 = vunpack.c.h.b16 %v252
    %v1805 = vunpack.c.l.b16 %v253
    %v1806 = vunpack.c.h.b16 %v253
    %v1807 = vunpack.c.l.b16 %v254
    %v1808 = vunpack.c.h.b16 %v254
    %v1809 = vunpack.c.l.b16 %v255
    %v1810 = vunpack.c.h.b16 %v255
    %v1811 = vunpack.c.l.b16 %v256
    %v1812 = vunpack.c.h.b16 %v256
    %v1813 = vunpack.c.l.b16 %v257
    %v1814 = vunpack.c.h.b16 %v257
    %v1815 = vunpack.c.l.b16 %v258
    %v1816 = vunpack.c.h.b16 %v258
    %v1817 = vunpack.c.l.b16 %v259
    %v1818 = vunpack.c.h.b16 %v259
    %v1819 = vunpack.c.l.b16 %v260
    %v1820 = vunpack.c.h.b16 %v260
    %v1821 = vunpack.c.l.b16 %v261
    %v1822 = vunpack.c.h.b16 %v261
    %v1823 = vunpack.c.l.b16 %v262
    %v1824 = vunpack.c.h.b16 %v262
    %v1825 = vunpack.c.l.b16 %v263
    %v1826 = vunpack.c.h.b16 %v263
    %v1827 = vunpack.c.l.b16 %v264
    %v1828 = vunpack.c.h.b16 %v264
    %v1829 = vunpack.c.l.b16 %v265
    %v1830 = vunpack.c.h.b16 %v265
    %v1831 = vunpack.c.l.b16 %v266
    %v1832 = vunpack.c.h.b16 %v266
    %v1833 = vunpack.c.l.b16 %v267
    %v1834 = vunpack.c.h.b16 %v267
    %v1835 = vunpack.c.l.b16 %v268
    %v1836 = vunpack.c.h.b16 %v268
    %v1837 = vunpack.c.l.b16 %v269
    %v1838 = vunpack.c.h.b16 %v269
    %v1839 = vunpack.c.l.b16 %v270
    %v1840 = vunpack.c.h.b16 %v270
    %v1841 = vunpack.c.l.b16 %v271
    %v1842 = vunpack.c.h.b16 %v271
    %v1843 = vunpack.c.l.b16 %v272
    %v1844 = vunpack.c.h.b16 %v272
    %v1845 = vunpack.c.l.b16 %v273
    %v1846 = vunpack.c.h.b16 %v273
    %v1847 = vunpack.c.l.b16 %v274
    %v1848 = vunpack.c.h.b16 %v274
    %v1849 = vunpack.c.l.b16 %v275
    %v1850 = vunpack.c.h.b16 %v275
    %v1851 = vunpack.c.l.b16 %v276
    %v1852 = vunpack.c.h.b16 %v276
    %v1853 = vunpack.c.l.b16 %v277
    %v1854 = vunpack.c.h.b16 %v277
    %v1855 = vunpack.c.l.b16 %v278
    %v1856 = vunpack.c.h.b16 %v278
    %v1857 = vunpack.c.l.b16 %v279
    %v1858 = vunpack.c.h.b16 %v279
    %v1859 = vunpack.c.l.b16 %v280
    %v1860 = vunpack.c.h.b16 %v280
    %v1861 = vunpack.c.l.b16 %v281
    %v1862 = vunpack.c.h.b16 %v281
    %v1863 = vunpack.c.l.b16 %v282
    %v1864 = vunpack.c.h.b16 %v282
    %v1865 = vunpack.c.l.b16 %v283
    %v1866 = vunpack.c.h.b16 %v283
    %v1867 = vunpack.c.l.b16 %v284
    %v1868 = vunpack.c.h.b16 %v284
    %v1869 = vunpack.c.l.b16 %v285
    %v1870 = vunpack.c.h.b16 %v285
    %v1871 = vunpack.c.l.b16 %v286
    %v1872 = vunpack.c.h.b16 %v286
    %v1873 = vunpack.c.l.b16 %v287
    %v1874 = vunpack.c.h.b16 %v287
    %v1875 = vunpack.c.l.b16 %v288
    %v1876 = vunpack.c.h.b16 %v288
    %v1877 = vunpack.c.l.b16 %v289
    %v1878 = vunpack.c.h.b16 %v289
    %v1879 = vunpack.c.l.b16 %v290
    %v1880 = vunpack.c.h.b16 %v290
    %v1881 = vunpack.c.l.b16 %v291
    %v1882 = vunpack.c.h.b16 %v291
    %v1883 = vunpack.c.l.b16 %v292
    %v1884 = vunpack.c.h.b16 %v292
    %v1885 = vunpack.c.l.b16 %v293
    %v1886 = vunpack.c.h.b16 %v293
    %v1887 = vunpack.c.l.b16 %v294
    %v1888 = vunpack.c.h.b16 %v294
    %v1889 = vunpack.c.l.b16 %v295
    %v1890 = vunpack.c.h.b16 %v295
    %v1891 = vunpack.c.l.b16 %v296
    %v1892 = vunpack.c.h.b16 %v296
    %v1893 = vunpack.c.l.b16 %v297
    %v1894 = vunpack.c.h.b16 %v297
    %v1895 = vunpack.c.l.b16 %v298
    %v1896 = vunpack.c.h.b16 %v298
    %v1897 = vunpack.c.l.b16 %v299
    %v1898 = vunpack.c.h.b16 %v299
    %v1899 = vunpack.c.l.b16 %v300
    %v1900 = vunpack.c.h.b16 %v300
    %v1901 = vunpack.c.l.b16 %v301
    %v1902 = vunpack.c.h.b16 %v301
    %v1903 = vunpack.c.l.b16 %v302
    %v1904 = vunpack.c.h.b16 %v302
    %v1905 = vunpack.c.l.b16 %v303
    %v1906 = vunpack.c.h.b16 %v303
    %v1907 = vunpack.c.l.b16 %v304
    %v1908 = vunpack.c.h.b16 %v304
    %v1909 = vunpack.c.l.b16 %v305
    %v1910 = vunpack.c.h.b16 %v305
    %v1911 = vunpack.c.l.b16 %v306
    %v1912 = vunpack.c.h.b16 %v306
    %v1913 = vunpack.c.l.b16 %v307
    %v1914 = vunpack.c.h.b16 %v307
    %v1915 = vunpack.c.l.b16 %v308
    %v1916 = vunpack.c.h.b16 %v308
    %v1917 = vunpack.c.l.b16 %v309
    %v1918 = vunpack.c.h.b16 %v309
    %v1919 = vunpack.c.l.b16 %v310
    %v1920 = vunpack.c.h.b16 %v310
    %v1921 = vunpack.c.l.b16 %v311
    %v1922 = vunpack.c.h.b16 %v311
    %v1923 = vunpack.c.l.b16 %v312
    %v1924 = vunpack.c.h.b16 %v312
    %v1925 = vunpack.c.l.b16 %v313
    %v1926 = vunpack.c.h.b16 %v313
    %v1927 = vunpack.c.l.b16 %v314
    %v1928 = vunpack.c.h.b16 %v314
    %v1929 = vunpack.c.l.b16 %v315
    %v1930 = vunpack.c.h.b16 %v315
    %v1931 = vunpack.c.l.b16 %v316
    %v1932 = vunpack.c.h.b16 %v316
    %v1933 = vunpack.c.l.b16 %v317
    %v1934 = vunpack.c.h.b16 %v317
    %v1935 = vunpack.c.l.b16 %v318
    %v1936 = vunpack.c.h.b16 %v318
    %v1937 = vunpack.c.l.b16 %v319
    %v1938 = vunpack.c.h.b16 %v319
    %v1939 = vunpack.c.l.b16 %v320
    %v1940 = vunpack.c.h.b16 %v320
    %v1941 = vunpack.c.l.b16 %v321
    %v1942 = vunpack.c.h.b16 %v321
    %v1943 = vunpack.c.l.b16 %v322
    %v1944 = vunpack.c.h.b16 %v322
    %v1945 = vunpack.c.l.b16 %v323
    %v1946 = vunpack.c.h.b16 %v323
    %v1947 = vunpack.c.l.b16 %v324
    %v1948 = vunpack.c.h.b16 %v324
    %v1949 = vunpack.c.l.b16 %v325
    %v1950 = vunpack.c.h.b16 %v325
    %v1951 = vunpack.c.l.b16 %v326
    %v1952 = vunpack.c.h.b16 %v326
    %v1953 = vunpack.c.l.b16 %v327
    %v1954 = vunpack.c.h.b16 %v327
    %v1955 = vunpack.c.l.b16 %v328
    %v1956 = vunpack.c.h.b16 %v328
    %v1957 = vunpack.c.l.b16 %v329
    %v1958 = vunpack.c.h.b16 %v329
    %v1959 = vunpack.c.l.b16 %v330
    %v1960 = vunpack.c.h.b16 %v330
    %v1961 = vunpack.c.l.b16 %v331
    %v1962 = vunpack.c.h.b16 %v331
    %v1963 = vunpack.c.l.b16 %v332
    %v1964 = vunpack.c.h.b16 %v332
    %v1965 = vunpack.c.l.b16 %v333
    %v1966 = vunpack.c.h.b16 %v333
    %v1967 = vunpack.c.l.b16 %v334
    %v1968 = vunpack.c.h.b16 %v334
    %v1969 = vunpack.c.l.b16 %v335
    %v1970 = vunpack.c.h.b16 %v335
    %v1971 = vunpack.c.l.b16 %v336
    %v1972 = vunpack.c.h.b16 %v336
    %v1973 = vunpack.c.l.b16 %v337
    %v1974 = vunpack.c.h.b16 %v337
    %v1975 = vunpack.c.l.b16 %v338
    %v1976 = vunpack.c.h.b16 %v338
    %v1977 = vunpack.c.l.b16 %v339
    %v1978 = vunpack.c.h.b16 %v339
    %v1979 = vunpack.c.l.b16 %v340
    %v1980 = vunpack.c.h.b16 %v340
    %v1981 = vunpack.c.l.b16 %v341
    %v1982 = vunpack.c.h.b16 %v341
    %v1983 = vunpack.c.l.b16 %v342
    %v1984 = vunpack.c.h.b16 %v342
    %v1985 = vunpack.c.l.b16 %v343
    %v1986 = vunpack.c.h.b16 %v343
    %v1987 = vunpack.c.l.b16 %v344
    %v1988 = vunpack.c.h.b16 %v344
    %v1989 = vunpack.c.l.b16 %v345
    %v1990 = vunpack.c.h.b16 %v345
    %v1991 = vunpack.c.l.b16 %v346
    %v1992 = vunpack.c.h.b16 %v346
    %v1993 = vunpack.c.l.b16 %v347
    %v1994 = vunpack.c.h.b16 %v347
    %v1995 = vunpack.c.l.b16 %v348
    %v1996 = vunpack.c.h.b16 %v348
    %v1997 = vunpack.c.l.b16 %v349
    %v1998 = vunpack.c.h.b16 %v349
    %v1999 = vunpack.c.l.b16 %v350
    %v2000 = vunpack.c.h.b16 %v350
    %v2001 = vunpack.c.l.b16 %v351
    %v2002 = vunpack.c.h.b16 %v351
    %v2003 = vunpack.c.l.b16 %v352
    %v2004 = vunpack.c.h.b16 %v352
    %v2005 = vunpack.c.l.b16 %v353
    %v2006 = vunpack.c.h.b16 %v353
    %v2007 = vunpack.c.l.b16 %v354
    %v2008 = vunpack.c.h.b16 %v354
    %v2009 = vunpack.c.l.b16 %v355
    %v2010 = vunpack.c.h.b16 %v355
    %v2011 = vunpack.c.l.b16 %v356
    %v2012 = vunpack.c.h.b16 %v356
    %v2013 = vunpack.c.l.b16 %v357
    %v2014 = vunpack.c.h.b16 %v357
    %v2015 = vunpack.c.l.b16 %v358
    %v2016 = vunpack.c.h.b16 %v358
    %v2017 = vunpack.c.l.b16 %v359
    %v2018 = vunpack.c.h.b16 %v359
    %v2019 = vunpack.c.l.b16 %v360
    %v2020 = vunpack.c.h.b16 %v360
    %v2021 = vunpack.c.l.b16 %v361
    %v2022 = vunpack.c.h.b16 %v361
    %v2023 = vunpack.c.l.b16 %v362
    %v2024 = vunpack.c.h.b16 %v362
    %v2025 = vunpack.c.l.b16 %v363
    %v2026 = vunpack.c.h.b16 %v363
    %v2027 = vunpack.c.l.b16 %v364
    %v2028 = vunpack.c.h.b16 %v364
    %v2029 = vunpack.c.l.b16 %v365
    %v2030 = vunpack.c.h.b16 %v365
    %v2031 = vunpack.c.l.b16 %v366
    %v2032 = vunpack.c.h.b16 %v366
    %v2033 = vunpack.c.l.b16 %v367
    %v2034 = vunpack.c.h.b16 %v367
    %v2035 = vunpack.c.l.b16 %v368
    %v2036 = vunpack.c.h.b16 %v368
    %v2037 = vunpack.c.l.b16 %v369
    %v2038 = vunpack.c.h.b16 %v369
    %v2039 = vunpack.c.l.b16 %v370
    %v2040 = vunpack.c.h.b16 %v370
    %v2041 = vunpack.c.l.b16 %v371
    %v2042 = vunpack.c.h.b16 %v371
    %v2043 = vunpack.c.l.b16 %v372
    %v2044 = vunpack.c.h.b16 %v372
    %v2045 = vunpack.c.l.b16 %v373
    %v2046 = vunpack.c.h.b16 %v373
    %v2047 = vunpack.c.l.b16 %v374
    %v2048 = vunpack.c.h.b16 %v374
    %v2049 = vunpack.c.l.b16 %v375
    %v2050 = vunpack.c.h.b16 %v375
    %v2051 = vunpack.c.l.b16 %v376
    %v2052 = vunpack.c.h.b16 %v376
    %v2053 = vunpack.c.l.b16 %v377
    %v2054 = vunpack.c.h.b16 %v377
    %v2055 = vunpack.c.l.b16 %v378
    %v2056 = vunpack.c.h.b16 %v378
    %v2057 = vunpack.c.l.b16 %v379
    %v2058 = vunpack.c.h.b16 %v379
    %v2059 = vunpack.c.l.b16 %v380
    %v2060 = vunpack.c.h.b16 %v380
    %v2061 = vunpack.c.l.b16 %v381
    %v2062 = vunpack.c.h.b16 %v381
    %v2063 = vunpack.c.l.b16 %v382
    %v2064 = vunpack.c.h.b16 %v382
    %v2065 = vunpack.c.l.b16 %v383
    %v2066 = vunpack.c.h.b16 %v383
    %v2067 = vunpack.c.l.b16 %v384
    %v2068 = vunpack.c.h.b16 %v384
    %v2069 = vunpack.c.l.b16 %v385
    %v2070 = vunpack.c.h.b16 %v385
    %v2071 = vunpack.c.l.b16 %v386
    %v2072 = vunpack.c.h.b16 %v386
    %v2073 = vunpack.c.l.b16 %v387
    %v2074 = vunpack.c.h.b16 %v387
    %v2075 = vunpack.c.l.b16 %v388
    %v2076 = vunpack.c.h.b16 %v388
    %v2077 = vunpack.c.l.b16 %v389
    %v2078 = vunpack.c.h.b16 %v389
    %v2079 = vunpack.c.l.b16 %v390
    %v2080 = vunpack.c.h.b16 %v390
    %v2081 = vunpack.c.l.b16 %v391
    %v2082 = vunpack.c.h.b16 %v391
    %v2083 = vunpack.c.l.b16 %v392
    %v2084 = vunpack.c.h.b16 %v392
    %v2085 = vunpack.c.l.b16 %v393
    %v2086 = vunpack.c.h.b16 %v393
    %v2087 = vunpack.c.l.b16 %v394
    %v2088 = vunpack.c.h.b16 %v394
    %v2089 = vunpack.c.l.b16 %v395
    %v2090 = vunpack.c.h.b16 %v395
    %v2091 = vunpack.c.l.b16 %v396
    %v2092 = vunpack.c.h.b16 %v396
    %v2093 = vunpack.c.l.b16 %v397
    %v2094 = vunpack.c.h.b16 %v397
    %v2095 = vunpack.c.l.b16 %v398
    %v2096 = vunpack.c.h.b16 %v398
    %v2097 = vunpack.c.l.b16 %v399
    %v2098 = vunpack.c.h.b16 %v399
    %v2099 = vunpack.c.l.b16 %v400
    %v2100 = vunpack.c.h.b16 %v400
    %v2101 = vunpack.c.l.b16 %v401
    %v2102 = vunpack.c.h.b16 %v401
    %v2103 = vunpack.c.l.b16 %v402
    %v2104 = vunpack.c.h.b16 %v402
    %v2105 = vunpack.c.l.b16 %v403
    %v2106 = vunpack.c.h.b16 %v403
    %v2107 = vunpack.c.l.b16 %v404
    %v2108 = vunpack.c.h.b16 %v404
    %v2109 = vunpack.c.l.b16 %v405
    %v2110 = vunpack.c.h.b16 %v405
    %v2111 = vunpack.c.l.b16 %v406
    %v2112 = vunpack.c.h.b16 %v406
    %v2113 = vunpack.c.l.b16 %v407
    %v2114 = vunpack.c.h.b16 %v407
    %v2115 = vunpack.c.l.b16 %v408
    %v2116 = vunpack.c.h.b16 %v408
    %v2117 = vunpack.c.l.b16 %v409
    %v2118 = vunpack.c.h.b16 %v409
    %v2119 = vunpack.c.l.b16 %v410
    %v2120 = vunpack.c.h.b16 %v410
    %v2121 = vunpack.c.l.b16 %v411
    %v2122 = vunpack.c.h.b16 %v411
    %v2123 = vunpack.c.l.b16 %v412
    %v2124 = vunpack.c.h.b16 %v412
    %v2125 = vunpack.c.l.b16 %v413
    %v2126 = vunpack.c.h.b16 %v413
    %v2127 = vunpack.c.l.b16 %v414
    %v2128 = vunpack.c.h.b16 %v414
    %v2129 = vunpack.c.l.b16 %v415
    %v2130 = vunpack.c.h.b16 %v415
    %v2131 = vunpack.c.l.b16 %v416
    %v2132 = vunpack.c.h.b16 %v416
    %v2133 = vunpack.c.l.b16 %v417
    %v2134 = vunpack.c.h.b16 %v417
    %v2135 = vunpack.c.l.b16 %v418
    %v2136 = vunpack.c.h.b16 %v418
    %v2137 = vunpack.c.l.b16 %v419
    %v2138 = vunpack.c.h.b16 %v419
    %v2139 = vunpack.c.l.b16 %v420
    %v2140 = vunpack.c.h.b16 %v420
    %v2141 = vunpack.c.l.b16 %v421
    %v2142 = vunpack.c.h.b16 %v421
    %v2143 = vunpack.c.l.b16 %v422
    %v2144 = vunpack.c.h.b16 %v422
    %v2145 = vunpack.c.l.b16 %v423
    %v2146 = vunpack.c.h.b16 %v423
    %v2147 = vunpack.c.l.b16 %v424
    %v2148 = vunpack.c.h.b16 %v424
    %v2149 = vunpack.c.l.b16 %v425
    %v2150 = vunpack.c.h.b16 %v425
    %v2151 = vunpack.c.l.b16 %v426
    %v2152 = vunpack.c.h.b16 %v426
    %v2153 = vunpack.c.l.b16 %v427
    %v2154 = vunpack.c.h.b16 %v427
    %v2155 = vunpack.c.l.b16 %v428
    %v2156 = vunpack.c.h.b16 %v428
    %v2157 = vunpack.c.l.b16 %v429
    %v2158 = vunpack.c.h.b16 %v429
    %v2159 = vunpack.c.l.b16 %v430
    %v2160 = vunpack.c.h.b16 %v430
    %v2161 = vunpack.c.l.b16 %v431
    %v2162 = vunpack.c.h.b16 %v431
    %v2163 = vunpack.c.l.b16 %v432
    %v2164 = vunpack.c.h.b16 %v432
    %v2165 = vunpack.c.l.b16 %v433
    %v2166 = vunpack.c.h.b16 %v433
    %v2167 = vunpack.c.l.b16 %v434
    %v2168 = vunpack.c.h.b16 %v434
    %v2169 = vunpack.c.l.b16 %v435
    %v2170 = vunpack.c.h.b16 %v435
    %v2171 = vunpack.c.l.b16 %v436
    %v2172 = vunpack.c.h.b16 %v436
    %v2173 = vunpack.c.l.b16 %v437
    %v2174 = vunpack.c.h.b16 %v437
    %v2175 = vunpack.c.l.b16 %v438
    %v2176 = vunpack.c.h.b16 %v438
    %v2177 = vunpack.c.l.b16 %v439
    %v2178 = vunpack.c.h.b16 %v439
    %v2179 = vunpack.c.l.b16 %v440
    %v2180 = vunpack.c.h.b16 %v440
    %v2181 = vunpack.c.l.b16 %v441
    %v2182 = vunpack.c.h.b16 %v441
    %v2183 = vunpack.c.l.b16 %v442
    %v2184 = vunpack.c.h.b16 %v442
    %v2185 = vunpack.c.l.b16 %v443
    %v2186 = vunpack.c.h.b16 %v443
    %v2187 = vunpack.c.l.b16 %v444
    %v2188 = vunpack.c.h.b16 %v444
    %v2189 = vunpack.c.l.b16 %v445
    %v2190 = vunpack.c.h.b16 %v445
    %v2191 = vunpack.c.l.b16 %v446
    %v2192 = vunpack.c.h.b16 %v446
    %v2193 = vunpack.c.l.b16 %v447
    %v2194 = vunpack.c.h.b16 %v447
    %v2195 = vunpack.c.l.b16 %v448
    %v2196 = vunpack.c.h.b16 %v448
    %v2197 = vunpack.c.l.b16 %v449
    %v2198 = vunpack.c.h.b16 %v449
    %v2199 = vunpack.c.l.b16 %v450
    %v2200 = vunpack.c.h.b16 %v450
    %v2201 = vunpack.c.l.b16 %v451
    %v2202 = vunpack.c.h.b16 %v451
    %v2203 = vunpack.c.l.b16 %v452
    %v2204 = vunpack.c.h.b16 %v452
    %v2205 = vunpack.c.l.b16 %v453
    %v2206 = vunpack.c.h.b16 %v453
    %v2207 = vunpack.c.l.b16 %v454
    %v2208 = vunpack.c.h.b16 %v454
    %v2209 = vunpack.c.l.b16 %v455
    %v2210 = vunpack.c.h.b16 %v455
    %v2211 = vunpack.c.l.b16 %v456
    %v2212 = vunpack.c.h.b16 %v456
    %v2213 = vunpack.c.l.b16 %v457
    %v2214 = vunpack.c.h.b16 %v457
    %v2215 = vunpack.c.l.b16 %v458
    %v2216 = vunpack.c.h.b16 %v458
    %v2217 = vunpack.c.l.b16 %v459
    %v2218 = vunpack.c.h.b16 %v459
    %v2219 = vunpack.c.l.b16 %v460
    %v2220 = vunpack.c.h.b16 %v460
    %v2221 = vunpack.c.l.b16 %v461
    %v2222 = vunpack.c.h.b16 %v461
    %v2223 = vunpack.c.l.b16 %v462
    %v2224 = vunpack.c.h.b16 %v462
    %v2225 = vunpack.c.l.b16 %v463
    %v2226 = vunpack.c.h.b16 %v463
    %v2227 = vunpack.c.l.b16 %v464
    %v2228 = vunpack.c.h.b16 %v464
    %v2229 = vunpack.c.l.b16 %v465
    %v2230 = vunpack.c.h.b16 %v465
    %v2231 = vunpack.c.l.b16 %v466
    %v2232 = vunpack.c.h.b16 %v466
    %v2233 = vunpack.c.l.b16 %v467
    %v2234 = vunpack.c.h.b16 %v467
    %v2235 = vunpack.c.l.b16 %v468
    %v2236 = vunpack.c.h.b16 %v468
    %v2237 = vunpack.c.l.b16 %v469
    %v2238 = vunpack.c.h.b16 %v469
    %v2239 = vunpack.c.l.b16 %v470
    %v2240 = vunpack.c.h.b16 %v470
    %v2241 = vunpack.c.l.b16 %v471
    %v2242 = vunpack.c.h.b16 %v471
    %v2243 = vunpack.c.l.b16 %v472
    %v2244 = vunpack.c.h.b16 %v472
    %v2245 = vunpack.c.l.b16 %v473
    %v2246 = vunpack.c.h.b16 %v473
    %v2247 = vunpack.c.l.b16 %v474
    %v2248 = vunpack.c.h.b16 %v474
    %v2249 = vunpack.c.l.b16 %v475
    %v2250 = vunpack.c.h.b16 %v475
    %v2251 = vunpack.c.l.b16 %v476
    %v2252 = vunpack.c.h.b16 %v476
    %v2253 = vunpack.c.l.b16 %v477
    %v2254 = vunpack.c.h.b16 %v477
    %v2255 = vunpack.c.l.b16 %v478
    %v2256 = vunpack.c.h.b16 %v478
    %v2257 = vunpack.c.l.b16 %v479
    %v2258 = vunpack.c.h.b16 %v479
    %v2259 = vunpack.c.l.b16 %v480
    %v2260 = vunpack.c.h.b16 %v480
    %v2261 = vunpack.c.l.b16 %v481
    %v2262 = vunpack.c.h.b16 %v481
    %v2263 = vunpack.c.l.b16 %v482
    %v2264 = vunpack.c.h.b16 %v482
    %v2265 = vunpack.c.l.b16 %v483
    %v2266 = vunpack.c.h.b16 %v483
    %v2267 = vunpack.c.l.b16 %v484
    %v2268 = vunpack.c.h.b16 %v484
    %v2269 = vunpack.c.l.b16 %v485
    %v2270 = vunpack.c.h.b16 %v485
    %v2271 = vunpack.c.l.b16 %v486
    %v2272 = vunpack.c.h.b16 %v486
    %v2273 = vunpack.c.l.b16 %v487
    %v2274 = vunpack.c.h.b16 %v487
    %v2275 = vunpack.c.l.b16 %v488
    %v2276 = vunpack.c.h.b16 %v488
    %v2277 = vunpack.c.l.b16 %v489
    %v2278 = vunpack.c.h.b16 %v489
    %v2279 = vunpack.c.l.b16 %v490
    %v2280 = vunpack.c.h.b16 %v490
    %v2281 = vunpack.c.l.b16 %v491
    %v2282 = vunpack.c.h.b16 %v491
    %v2283 = vunpack.c.l.b16 %v492
    %v2284 = vunpack.c.h.b16 %v492
    %v2285 = vunpack.c.l.b16 %v493
    %v2286 = vunpack.c.h.b16 %v493
    %v2287 = vunpack.c.l.b16 %v494
    %v2288 = vunpack.c.h.b16 %v494
    %v2289 = vunpack.c.l.b16 %v495
    %v2290 = vunpack.c.h.b16 %v495
    %v2291 = vunpack.c.l.b16 %v496
    %v2292 = vunpack.c.h.b16 %v496
    %v2293 = vunpack.c.l.b16 %v497
    %v2294 = vunpack.c.h.b16 %v497
    %v2295 = vunpack.c.l.b16 %v498
    %v2296 = vunpack.c.h.b16 %v498
    %v2297 = vunpack.c.l.b16 %v499
    %v2298 = vunpack.c.h.b16 %v499
    %v2299 = vunpack.c.l.b16 %v500
    %v2300 = vunpack.c.h.b16 %v500
    %v2301 = vunpack.c.l.b16 %v501
    %v2302 = vunpack.c.h.b16 %v501
    %v2303 = vunpack.c.l.b16 %v502
    %v2304 = vunpack.c.h.b16 %v502
    %v2305 = vunpack.c.l.b16 %v503
    %v2306 = vunpack.c.h.b16 %v503
    %v2307 = vunpack.c.l.b16 %v504
    %v2308 = vunpack.c.h.b16 %v504
    %v2309 = vunpack.c.l.b16 %v505
    %v2310 = vunpack.c.h.b16 %v505
    %v2311 = vunpack.c.l.b16 %v506
    %v2312 = vunpack.c.h.b16 %v506
    %v2313 = vunpack.c.l.b16 %v507
    %v2314 = vunpack.c.h.b16 %v507
    %v2315 = vunpack.c.l.b16 %v508
    %v2316 = vunpack.c.h.b16 %v508
    %v2317 = vunpack.c.l.b16 %v509
    %v2318 = vunpack.c.h.b16 %v509
    %v2319 = vunpack.c.l.b16 %v510
    %v2320 = vunpack.c.h.b16 %v510
    %v2321 = vunpack.c.l.b16 %v511
    %v2322 = vunpack.c.h.b16 %v511
    %v2323 = vunpack.c.l.b16 %v512
    %v2324 = vunpack.c.h.b16 %v512
    %v2325 = vunpack.c.l.b16 %v513
    %v2326 = vunpack.c.h.b16 %v513
    %v2327 = vunpack.c.l.b16 %v514
    %v2328 = vunpack.c.h.b16 %v514
    %v2329 = vunpack.c.l.b16 %v515
    %v2330 = vunpack.c.h.b16 %v515
    %v2331 = vunpack.c.l.b16 %v516
    %v2332 = vunpack.c.h.b16 %v516
    %v2333 = vunpack.c.l.b16 %v517
    %v2334 = vunpack.c.h.b16 %v517
    %v2335 = vunpack.c.l.b16 %v518
    %v2336 = vunpack.c.h.b16 %v518
    %v2337 = vunpack.c.l.b16 %v519
    %v2338 = vunpack.c.h.b16 %v519
    %v2339 = vunpack.c.l.b16 %v520
    %v2340 = vunpack.c.h.b16 %v520
    %v2341 = vunpack.c.l.b16 %v521
    %v2342 = vunpack.c.h.b16 %v521
    %v2343 = vunpack.c.l.b16 %v522
    %v2344 = vunpack.c.h.b16 %v522
    %v2345 = vunpack.c.l.b16 %v523
    %v2346 = vunpack.c.h.b16 %v523
    %v2347 = vunpack.c.l.b16 %v524
    %v2348 = vunpack.c.h.b16 %v524
    %v2349 = vunpack.c.l.b16 %v525
    %v2350 = vunpack.c.h.b16 %v525
    %v2351 = vunpack.c.l.b16 %v526
    %v2352 = vunpack.c.h.b16 %v526
    %v2353 = vunpack.c.l.b16 %v527
    %v2354 = vunpack.c.h.b16 %v527
    %v2355 = vunpack.c.l.b16 %v528
    %v2356 = vunpack.c.h.b16 %v528
    %v2357 = vunpack.c.l.b16 %v529
    %v2358 = vunpack.c.h.b16 %v529
    %v2359 = vunpack.c.l.b16 %v530
    %v2360 = vunpack.c.h.b16 %v530
    %v2361 = vunpack.c.l.b16 %v531
    %v2362 = vunpack.c.h.b16 %v531
    %v2363 = vunpack.c.l.b16 %v532
    %v2364 = vunpack.c.h.b16 %v532
    %v2365 = vunpack.c.l.b16 %v533
    %v2366 = vunpack.c.h.b16 %v533
    %v2367 = vunpack.c.l.b16 %v534
    %v2368 = vunpack.c.h.b16 %v534
    %v2369 = vunpack.c.l.b16 %v535
    %v2370 = vunpack.c.h.b16 %v535
    %v2371 = vunpack.c.l.b16 %v536
    %v2372 = vunpack.c.h.b16 %v536
    %v2373 = vunpack.c.l.b16 %v537
    %v2374 = vunpack.c.h.b16 %v537
    %v2375 = vunpack.c.l.b16 %v538
    %v2376 = vunpack.c.h.b16 %v538
    %v2377 = vunpack.c.l.b16 %v539
    %v2378 = vunpack.c.h.b16 %v539
    %v2379 = vunpack.c.l.b16 %v540
    %v2380 = vunpack.c.h.b16 %v540
    %v2381 = vunpack.c.l.b16 %v541
    %v2382 = vunpack.c.h.b16 %v541
    %v2383 = vunpack.c.l.b16 %v542
    %v2384 = vunpack.c.h.b16 %v542
    %v2385 = vunpack.c.l.b16 %v543
    %v2386 = vunpack.c.h.b16 %v543
    %v2387 = vunpack.c.l.b16 %v544
    %v2388 = vunpack.c.h.b16 %v544
    %v2389 = vunpack.c.l.b16 %v545
    %v2390 = vunpack.c.h.b16 %v545
    %v2391 = vunpack.c.l.b16 %v546
    %v2392 = vunpack.c.h.b16 %v546
    %v2393 = vunpack.c.l.b16 %v547
    %v2394 = vunpack.c.h.b16 %v547
    %v2395 = vunpack.c.l.b16 %v548
    %v2396 = vunpack.c.h.b16 %v548
    %v2397 = vunpack.c.l.b16 %v549
    %v2398 = vunpack.c.h.b16 %v549
    %v2399 = vunpack.c.l.b16 %v550
    %v2400 = vunpack.c.h.b16 %v550
    %v2401 = vunpack.c.l.b16 %v551
    %v2402 = vunpack.c.h.b16 %v551
    %v2403 = vunpack.c.l.b16 %v552
    %v2404 = vunpack.c.h.b16 %v552
    %v2405 = vunpack.c.l.b16 %v553
    %v2406 = vunpack.c.h.b16 %v553
    %v2407 = vunpack.c.l.b16 %v554
    %v2408 = vunpack.c.h.b16 %v554
    %v2409 = vunpack.c.l.b16 %v555
    %v2410 = vunpack.c.h.b16 %v555
    %v2411 = vunpack.c.l.b16 %v556
    %v2412 = vunpack.c.h.b16 %v556
    %v2413 = vunpack.c.l.b16 %v557
    %v2414 = vunpack.c.h.b16 %v557
    %v2415 = vunpack.c.l.b16 %v558
    %v2416 = vunpack.c.h.b16 %v558
    %v2417 = vunpack.c.l.b16 %v559
    %v2418 = vunpack.c.h.b16 %v559
    %v2419 = vunpack.c.l.b16 %v560
    %v2420 = vunpack.c.h.b16 %v560
    %v2421 = vunpack.c.l.b16 %v561
    %v2422 = vunpack.c.h.b16 %v561
    %v2423 = vunpack.c.l.b16 %v562
    %v2424 = vunpack.c.h.b16 %v562
    %v2425 = vunpack.c.l.b16 %v563
    %v2426 = vunpack.c.h.b16 %v563
    %v2427 = vunpack.c.l.b16 %v564
    %v2428 = vunpack.c.h.b16 %v564
    %v2429 = vunpack.c.l.b16 %v565
    %v2430 = vunpack.c.h.b16 %v565
    %v2431 = vunpack.c.l.b16 %v566
    %v2432 = vunpack.c.h.b16 %v566
    %v2433 = vunpack.c.l.b16 %v567
    %v2434 = vunpack.c.h.b16 %v567
    %v2435 = vunpack.c.l.b16 %v568
    %v2436 = vunpack.c.h.b16 %v568
    %v2437 = vunpack.c.l.b16 %v569
    %v2438 = vunpack.c.h.b16 %v569
    %v2439 = vunpack.c.l.b16 %v570
    %v2440 = vunpack.c.h.b16 %v570
    %v2441 = vunpack.c.l.b16 %v571
    %v2442 = vunpack.c.h.b16 %v571
    %v2443 = vunpack.c.l.b16 %v572
    %v2444 = vunpack.c.h.b16 %v572
    %v2445 = vunpack.c.l.b16 %v573
    %v2446 = vunpack.c.h.b16 %v573
    %v2447 = vunpack.c.l.b16 %v574
    %v2448 = vunpack.c.h.b16 %v574
    %v2449 = vunpack.c.l.b16 %v575
    %v2450 = vunpack.c.h.b16 %v575
    %v2451 = vunpack.c.l.b16 %v576
    %v2452 = vunpack.c.h.b16 %v576
    %v2453 = vunpack.c.l.b16 %v577
    %v2454 = vunpack.c.h.b16 %v577
    %v2455 = vunpack.c.l.b16 %v578
    %v2456 = vunpack.c.h.b16 %v578
    %v2457 = vunpack.c.l.b16 %v579
    %v2458 = vunpack.c.h.b16 %v579
    %v2459 = vunpack.c.l.b16 %v580
    %v2460 = vunpack.c.h.b16 %v580
    %v2461 = vunpack.c.l.b16 %v581
    %v2462 = vunpack.c.h.b16 %v581
    %v2463 = vunpack.c.l.b16 %v582
    %v2464 = vunpack.c.h.b16 %v582
    %v2465 = vunpack.c.l.b16 %v583
    %v2466 = vunpack.c.h.b16 %v583
    %v2467 = vunpack.c.l.b16 %v584
    %v2468 = vunpack.c.h.b16 %v584
    %v2469 = vunpack.c.l.b16 %v585
    %v2470 = vunpack.c.h.b16 %v585
    %v2471 = vunpack.c.l.b16 %v586
    %v2472 = vunpack.c.h.b16 %v586
    %v2473 = vunpack.c.l.b16 %v587
    %v2474 = vunpack.c.h.b16 %v587
    %v2475 = vunpack.c.l.b16 %v588
    %v2476 = vunpack.c.h.b16 %v588
    %v2477 = vunpack.c.l.b16 %v589
    %v2478 = vunpack.c.h.b16 %v589
    %v2479 = vunpack.c.l.b16 %v590
    %v2480 = vunpack.c.h.b16 %v590
    %v2481 = vunpack.c.l.b16 %v591
    %v2482 = vunpack.c.h.b16 %v591
    %v2483 = vunpack.c.l.b16 %v592
    %v2484 = vunpack.c.h.b16 %v592
    %v2485 = vunpack.c.l.b16 %v593
    %v2486 = vunpack.c.h.b16 %v593
    %v2487 = vunpack.c.l.b16 %v594
    %v2488 = vunpack.c.h.b16 %v594
    %v2489 = vunpack.c.l.b16 %v595
    %v2490 = vunpack.c.h.b16 %v595
    %v2491 = vunpack.c.l.b16 %v596
    %v2492 = vunpack.c.h.b16 %v596
    %v2493 = vunpack.c.l.b16 %v597
    %v2494 = vunpack.c.h.b16 %v597
    %v2495 = vunpack.c.l.b16 %v598
    %v2496 = vunpack.c.h.b16 %v598
    %v2497 = vunpack.c.l.b16 %v599
    %v2498 = vunpack.c.h.b16 %v599
    %v2499 = vunpack.c.l.b16 %v600
    %v2500 = vunpack.c.h.b16 %v600
    %v2501 = vunpack.c.l.b16 %v601
    %v2502 = vunpack.c.h.b16 %v601
    %v2503 = vunpack.c.l.b16 %v602
    %v2504 = vunpack.c.h.b16 %v602
    %v2505 = vunpack.c.l.b16 %v603
    %v2506 = vunpack.c.h.b16 %v603
    %v2507 = vunpack.c.l.b16 %v604
    %v2508 = vunpack.c.h.b16 %v604
    %v2509 = vunpack.c.l.b16 %v605
    %v2510 = vunpack.c.h.b16 %v605
    %v2511 = vunpack.c.l.b16 %v606
    %v2512 = vunpack.c.h.b16 %v606
    %v2513 = vunpack.c.l.b16 %v607
    %v2514 = vunpack.c.h.b16 %v607
    %v2515 = vunpack.c.l.b16 %v608
    %v2516 = vunpack.c.h.b16 %v608
    %v2517 = vunpack.c.l.b16 %v609
    %v2518 = vunpack.c.h.b16 %v609
    %v2519 = vunpack.c.l.b16 %v610
    %v2520 = vunpack.c.h.b16 %v610
    %v2521 = vunpack.c.l.b16 %v611
    %v2522 = vunpack.c.h.b16 %v611
    %v2523 = vunpack.c.l.b16 %v612
    %v2524 = vunpack.c.h.b16 %v612
    %v2525 = vunpack.c.l.b16 %v613
    %v2526 = vunpack.c.h.b16 %v613
    %v2527 = vunpack.c.l.b16 %v614
    %v2528 = vunpack.c.h.b16 %v614
    %v2529 = vunpack.c.l.b16 %v615
    %v2530 = vunpack.c.h.b16 %v615
    %v2531 = vunpack.c.l.b16 %v616
    %v2532 = vunpack.c.h.b16 %v616
    %v2533 = vunpack.c.l.b16 %v617
    %v2534 = vunpack.c.h.b16 %v617
    %v2535 = vunpack.c.l.b16 %v618
    %v2536 = vunpack.c.h.b16 %v618
    %v2537 = vunpack.c.l.b16 %v619
    %v2538 = vunpack.c.h.b16 %v619
    %v2539 = vunpack.c.l.b16 %v620
    %v2540 = vunpack.c.h.b16 %v620
    %v2541 = vunpack.c.l.b16 %v621
    %v2542 = vunpack.c.h.b16 %v621
    %v2543 = vunpack.c.l.b16 %v622
    %v2544 = vunpack.c.h.b16 %v622
    %v2545 = vunpack.c.l.b16 %v623
    %v2546 = vunpack.c.h.b16 %v623
    %v2547 = vunpack.c.l.b16 %v624
    %v2548 = vunpack.c.h.b16 %v624
    %v2549 = vunpack.c.l.b16 %v625
    %v2550 = vunpack.c.h.b16 %v625
    %v2551 = vunpack.c.l.b16 %v626
    %v2552 = vunpack.c.h.b16 %v626
    %v2553 = vunpack.c.l.b16 %v627
    %v2554 = vunpack.c.h.b16 %v627
    %v2555 = vunpack.c.l.b16 %v628
    %v2556 = vunpack.c.h.b16 %v628
    %v2557 = vunpack.c.l.b16 %v629
    %v2558 = vunpack.c.h.b16 %v629
    %v2559 = vunpack.c.l.b16 %v630
    %v2560 = vunpack.c.h.b16 %v630
    %v2561 = vunpack.c.l.b16 %v631
    %v2562 = vunpack.c.h.b16 %v631
    %v2563 = vunpack.c.l.b16 %v632
    %v2564 = vunpack.c.h.b16 %v632
    %v2565 = vunpack.c.l.b16 %v633
    %v2566 = vunpack.c.h.b16 %v633
    %v2567 = vunpack.c.l.b16 %v634
    %v2568 = vunpack.c.h.b16 %v634
    %v2569 = vunpack.c.l.b16 %v635
    %v2570 = vunpack.c.h.b16 %v635
    %v2571 = vunpack.c.l.b16 %v636
    %v2572 = vunpack.c.h.b16 %v636
    %v2573 = vunpack.c.l.b16 %v637
    %v2574 = vunpack.c.h.b16 %v637
    %v2575 = vunpack.c.l.b16 %v638
    %v2576 = vunpack.c.h.b16 %v638
    %v2577 = vunpack.c.l.b16 %v639
    %v2578 = vunpack.c.h.b16 %v639
    %v2579 = vunpack.c.l.b16 %v640
    %v2580 = vunpack.c.h.b16 %v640
    %v2581 = vunpack.c.l.b16 %v641
    %v2582 = vunpack.c.h.b16 %v641
    %v2583 = vunpack.c.l.b16 %v642
    %v2584 = vunpack.c.h.b16 %v642
    %v2585 = vunpack.c.l.b16 %v643
    %v2586 = vunpack.c.h.b16 %v643
    %v2587 = vunpack.c.l.b16 %v644
    %v2588 = vunpack.c.h.b16 %v644
    %v2589 = vunpack.c.l.b16 %v645
    %v2590 = vunpack.c.h.b16 %v645
    %v2591 = vunpack.c.l.b16 %v646
    %v2592 = vunpack.c.h.b16 %v646
    %v2593 = vunpack.c.l.b16 %v647
    %v2594 = vunpack.c.h.b16 %v647
    %v2595 = vunpack.c.l.b16 %v648
    %v2596 = vunpack.c.h.b16 %v648
    %v2597 = vunpack.c.l.b16 %v649
    %v2598 = vunpack.c.h.b16 %v649
    %v2599 = vunpack.c.l.b16 %v650
    %v2600 = vunpack.c.h.b16 %v650
    %v2601 = vunpack.c.l.b16 %v651
    %v2602 = vunpack.c.h.b16 %v651
    %v2603 = vunpack.c.l.b16 %v652
    %v2604 = vunpack.c.h.b16 %v652
    %v2605 = vunpack.c.l.b16 %v653
    %v2606 = vunpack.c.h.b16 %v653
    %v2607 = vunpack.c.l.b16 %v654
    %v2608 = vunpack.c.h.b16 %v654
    %v2609 = vunpack.c.l.b16 %v655
    %v2610 = vunpack.c.h.b16 %v655
    %v2611 = vunpack.c.l.b16 %v656
    %v2612 = vunpack.c.h.b16 %v656
    %v2613 = vunpack.c.l.b16 %v657
    %v2614 = vunpack.c.h.b16 %v657
    %v2615 = vunpack.c.l.b16 %v658
    %v2616 = vunpack.c.h.b16 %v658
    %v2617 = vunpack.c.l.b16 %v659
    %v2618 = vunpack.c.h.b16 %v659
    %v2619 = vunpack.c.l.b16 %v660
    %v2620 = vunpack.c.h.b16 %v660
    %v2621 = vunpack.c.l.b16 %v661
    %v2622 = vunpack.c.h.b16 %v661
    %v2623 = vunpack.c.l.b16 %v662
    %v2624 = vunpack.c.h.b16 %v662
    %v2625 = vunpack.c.l.b16 %v663
    %v2626 = vunpack.c.h.b16 %v663
    %v2627 = vunpack.c.l.b16 %v664
    %v2628 = vunpack.c.h.b16 %v664
    %v2629 = vunpack.c.l.b16 %v665
    %v2630 = vunpack.c.h.b16 %v665
    %v2631 = vunpack.c.l.b16 %v666
    %v2632 = vunpack.c.h.b16 %v666
    %v2633 = vunpack.c.l.b16 %v667
    %v2634 = vunpack.c.h.b16 %v667
    %v2635 = vunpack.c.l.b16 %v668
    %v2636 = vunpack.c.h.b16 %v668
    %v2637 = vunpack.c.l.b16 %v669
    %v2638 = vunpack.c.h.b16 %v669
    %v2639 = vunpack.c.l.b16 %v670
    %v2640 = vunpack.c.h.b16 %v670
    %v2641 = vunpack.c.l.b16 %v671
    %v2642 = vunpack.c.h.b16 %v671
    %v2643 = vunpack.c.l.b16 %v672
    %v2644 = vunpack.c.h.b16 %v672
    %v2645 = vunpack.c.l.b16 %v673
    %v2646 = vunpack.c.h.b16 %v673
    %v2647 = vunpack.c.l.b16 %v674
    %v2648 = vunpack.c.h.b16 %v674
    %v2649 = vunpack.c.l.b16 %v675
    %v2650 = vunpack.c.h.b16 %v675
    %v2651 = vunpack.c.l.b16 %v676
    %v2652 = vunpack.c.h.b16 %v676
    %v2653 = vunpack.c.l.b16 %v677
    %v2654 = vunpack.c.h.b16 %v677
    %v2655 = vunpack.c.l.b16 %v678
    %v2656 = vunpack.c.h.b16 %v678
    %v2657 = vunpack.c.l.b16 %v679
    %v2658 = vunpack.c.h.b16 %v679
    %v2659 = vunpack.c.l.b16 %v680
    %v2660 = vunpack.c.h.b16 %v680
    %v2661 = vunpack.c.l.b16 %v681
    %v2662 = vunpack.c.h.b16 %v681
    %v2663 = vunpack.c.l.b16 %v682
    %v2664 = vunpack.c.h.b16 %v682
    %v2665 = vunpack.c.l.b16 %v683
    %v2666 = vunpack.c.h.b16 %v683
    %v2667 = vunpack.c.l.b16 %v684
    %v2668 = vunpack.c.h.b16 %v684
    %v2669 = vunpack.c.l.b16 %v685
    %v2670 = vunpack.c.h.b16 %v685
    %v2671 = vunpack.c.l.b16 %v686
    %v2672 = vunpack.c.h.b16 %v686
    %v2673 = vunpack.c.l.b16 %v687
    %v2674 = vunpack.c.h.b16 %v687
    %v2675 = vunpack.c.l.b16 %v688
    %v2676 = vunpack.c.h.b16 %v688
    %v2677 = vunpack.c.l.b16 %v689
    %v2678 = vunpack.c.h.b16 %v689
    %v2679 = vunpack.c.l.b16 %v690
    %v2680 = vunpack.c.h.b16 %v690
    %v2681 = vunpack.c.l.b16 %v691
    %v2682 = vunpack.c.h.b16 %v691
    %v2683 = vunpack.c.l.b16 %v692
    %v2684 = vunpack.c.h.b16 %v692
    %v2685 = vunpack.c.l.b16 %v693
    %v2686 = vunpack.c.h.b16 %v693
    %v2687 = vunpack.c.l.b16 %v694
    %v2688 = vunpack.c.h.b16 %v694
    %v2689 = vunpack.c.l.b16 %v695
    %v2690 = vunpack.c.h.b16 %v695
    %v2691 = vunpack.c.l.b16 %v696
    %v2692 = vunpack.c.h.b16 %v696
    %v2693 = vunpack.c.l.b16 %v697
    %v2694 = vunpack.c.h.b16 %v697
    %v2695 = vunpack.c.l.b16 %v698
    %v2696 = vunpack.c.h.b16 %v698
    %v2697 = vunpack.c.l.b16 %v699
    %v2698 = vunpack.c.h.b16 %v699
    %v2699 = vunpack.c.l.b16 %v700
    %v2700 = vunpack.c.h.b16 %v700
    %v2701 = vunpack.c.l.b16 %v701
    %v2702 = vunpack.c.h.b16 %v701
    %v2703 = vunpack.c.l.b16 %v702
    %v2704 = vunpack.c.h.b16 %v702
    %v2705 = vunpack.c.l.b16 %v703
    %v2706 = vunpack.c.h.b16 %v703
    %v2707 = vunpack.c.l.b16 %v704
    %v2708 = vunpack.c.h.b16 %v704
    %v2709 = vunpack.c.l.b16 %v705
    %v2710 = vunpack.c.h.b16 %v705
    %v2711 = vunpack.c.l.b16 %v706
    %v2712 = vunpack.c.h.b16 %v706
    %v2713 = vunpack.c.l.b16 %v707
    %v2714 = vunpack.c.h.b16 %v707
    %v2715 = vunpack.c.l.b16 %v708
    %v2716 = vunpack.c.h.b16 %v708
    %v2717 = vunpack.c.l.b16 %v709
    %v2718 = vunpack.c.h.b16 %v709
    %v2719 = vunpack.c.l.b16 %v710
    %v2720 = vunpack.c.h.b16 %v710
    %v2721 = vunpack.c.l.b16 %v711
    %v2722 = vunpack.c.h.b16 %v711
    %v2723 = vunpack.c.l.b16 %v712
    %v2724 = vunpack.c.h.b16 %v712
    %v2725 = vunpack.c.l.b16 %v713
    %v2726 = vunpack.c.h.b16 %v713
    %v2727 = vunpack.c.l.b16 %v714
    %v2728 = vunpack.c.h.b16 %v714
    %v2729 = vunpack.c.l.b16 %v715
    %v2730 = vunpack.c.h.b16 %v715
    %v2731 = vunpack.c.l.b16 %v716
    %v2732 = vunpack.c.h.b16 %v716
    %v2733 = vunpack.c.l.b16 %v717
    %v2734 = vunpack.c.h.b16 %v717
    %v2735 = vunpack.c.l.b16 %v718
    %v2736 = vunpack.c.h.b16 %v718
    %v2737 = vunpack.c.l.b16 %v719
    %v2738 = vunpack.c.h.b16 %v719
    %v2739 = vunpack.c.l.b16 %v720
    %v2740 = vunpack.c.h.b16 %v720
    %v2741 = vunpack.c.l.b16 %v721
    %v2742 = vunpack.c.h.b16 %v721
    %v2743 = vunpack.c.l.b16 %v722
    %v2744 = vunpack.c.h.b16 %v722
    %v2745 = vunpack.c.l.b16 %v723
    %v2746 = vunpack.c.h.b16 %v723
    %v2747 = vunpack.c.l.b16 %v724
    %v2748 = vunpack.c.h.b16 %v724
    %v2749 = vunpack.c.l.b16 %v725
    %v2750 = vunpack.c.h.b16 %v725
    %v2751 = vunpack.c.l.b16 %v726
    %v2752 = vunpack.c.h.b16 %v726
    %v2753 = vunpack.c.l.b16 %v727
    %v2754 = vunpack.c.h.b16 %v727
    %v2755 = vunpack.c.l.b16 %v728
    %v2756 = vunpack.c.h.b16 %v728
    %v2757 = vunpack.c.l.b16 %v729
    %v2758 = vunpack.c.h.b16 %v729
    %v2759 = vunpack.c.l.b16 %v730
    %v2760 = vunpack.c.h.b16 %v730
    %v2761 = vunpack.c.l.b16 %v731
    %v2762 = vunpack.c.h.b16 %v731
    %v2763 = vunpack.c.l.b16 %v732
    %v2764 = vunpack.c.h.b16 %v732
    %v2765 = vunpack.c.l.b16 %v733
    %v2766 = vunpack.c.h.b16 %v733
    %v2767 = vunpack.c.l.b16 %v734
    %v2768 = vunpack.c.h.b16 %v734
    %v2769 = vunpack.c.l.b16 %v735
    %v2770 = vunpack.c.h.b16 %v735
    %v2771 = vunpack.c.l.b16 %v736
    %v2772 = vunpack.c.h.b16 %v736
    %v2773 = vunpack.c.l.b16 %v737
    %v2774 = vunpack.c.h.b16 %v737
    %v2775 = vunpack.c.l.b16 %v738
    %v2776 = vunpack.c.h.b16 %v738
    %v2777 = vunpack.c.l.b16 %v739
    %v2778 = vunpack.c.h.b16 %v739
    %v2779 = vunpack.c.l.b16 %v740
    %v2780 = vunpack.c.h.b16 %v740
    %v2781 = vunpack.c.l.b16 %v741
    %v2782 = vunpack.c.h.b16 %v741
    %v2783 = vunpack.c.l.b16 %v742
    %v2784 = vunpack.c.h.b16 %v742
    %v2785 = vunpack.c.l.b16 %v743
    %v2786 = vunpack.c.h.b16 %v743
    %v2787 = vunpack.c.l.b16 %v744
    %v2788 = vunpack.c.h.b16 %v744
    %v2789 = vunpack.c.l.b16 %v745
    %v2790 = vunpack.c.h.b16 %v745
    %v2791 = vunpack.c.l.b16 %v746
    %v2792 = vunpack.c.h.b16 %v746
    %v2793 = vunpack.c.l.b16 %v747
    %v2794 = vunpack.c.h.b16 %v747
    %v2795 = vunpack.c.l.b16 %v748
    %v2796 = vunpack.c.h.b16 %v748
    %v2797 = vunpack.c.l.b16 %v749
    %v2798 = vunpack.c.h.b16 %v749
    %v2799 = vunpack.c.l.b16 %v750
    %v2800 = vunpack.c.h.b16 %v750
    %v2801 = vunpack.c.l.b16 %v751
    %v2802 = vunpack.c.h.b16 %v751
    %v2803 = vunpack.c.l.b16 %v752
    %v2804 = vunpack.c.h.b16 %v752
    %v2805 = vunpack.c.l.b16 %v753
    %v2806 = vunpack.c.h.b16 %v753
    %v2807 = vunpack.c.l.b16 %v754
    %v2808 = vunpack.c.h.b16 %v754
    %v2809 = vunpack.c.l.b16 %v755
    %v2810 = vunpack.c.h.b16 %v755
    %v2811 = vunpack.c.l.b16 %v756
    %v2812 = vunpack.c.h.b16 %v756
    %v2813 = vunpack.c.l.b16 %v757
    %v2814 = vunpack.c.h.b16 %v757
    %v2815 = vunpack.c.l.b16 %v758
    %v2816 = vunpack.c.h.b16 %v758
    %v2817 = vunpack.c.l.b16 %v759
    %v2818 = vunpack.c.h.b16 %v759
    %v2819 = vunpack.c.l.b16 %v760
    %v2820 = vunpack.c.h.b16 %v760
    %v2821 = vunpack.c.l.b16 %v761
    %v2822 = vunpack.c.h.b16 %v761
    %v2823 = vunpack.c.l.b16 %v762
    %v2824 = vunpack.c.h.b16 %v762
    %v2825 = vunpack.c.l.b16 %v763
    %v2826 = vunpack.c.h.b16 %v763
    %v2827 = vunpack.c.l.b16 %v764
    %v2828 = vunpack.c.h.b16 %v764
    %v2829 = vunpack.c.l.b16 %v765
    %v2830 = vunpack.c.h.b16 %v765
    %v2831 = vunpack.c.l.b16 %v766
    %v2832 = vunpack.c.h.b16 %v766
    %v2833 = vunpack.c.l.b16 %v767
    %v2834 = vunpack.c.h.b16 %v767
    %v2835 = vunpack.c.l.b16 %v768
    %v2836 = vunpack.c.h.b16 %v768
    %v2837 = vunpack.c.l.b16 %v769
    %v2838 = vunpack.c.h.b16 %v769
    %v2839 = vunpack.c.l.b16 %v770
    %v2840 = vunpack.c.h.b16 %v770
    %v2841 = vunpack.c.l.b16 %v771
    %v2842 = vunpack.c.h.b16 %v771
    %v2843 = vunpack.c.l.b16 %v772
    %v2844 = vunpack.c.h.b16 %v772
    %v2845 = vunpack.c.l.b16 %v773
    %v2846 = vunpack.c.h.b16 %v773
    %v2847 = vunpack.c.l.b16 %v774
    %v2848 = vunpack.c.h.b16 %v774
    %v2849 = vunpack.c.l.b16 %v775
    %v2850 = vunpack.c.h.b16 %v775
    %v2851 = vunpack.c.l.b16 %v776
    %v2852 = vunpack.c.h.b16 %v776
    %v2853 = vunpack.c.l.b16 %v777
    %v2854 = vunpack.c.h.b16 %v777
    %v2855 = vunpack.c.l.b16 %v778
    %v2856 = vunpack.c.h.b16 %v778
    %v2857 = vunpack.c.l.b16 %v779
    %v2858 = vunpack.c.h.b16 %v779
    %v2859 = vunpack.c.l.b16 %v780
    %v2860 = vunpack.c.h.b16 %v780
    %v2861 = vunpack.c.l.b16 %v781
    %v2862 = vunpack.c.h.b16 %v781
    %v2863 = vunpack.c.l.b16 %v782
    %v2864 = vunpack.c.h.b16 %v782
    %v2865 = vunpack.c.l.b16 %v783
    %v2866 = vunpack.c.h.b16 %v783
    %v2867 = vunpack.c.l.b16 %v784
    %v2868 = vunpack.c.h.b16 %v784
    %v2869 = vunpack.c.l.b16 %v785
    %v2870 = vunpack.c.h.b16 %v785
    %v2871 = vunpack.c.l.b16 %v786
    %v2872 = vunpack.c.h.b16 %v786
    %v2873 = vunpack.c.l.b16 %v787
    %v2874 = vunpack.c.h.b16 %v787
    %v2875 = vunpack.c.l.b16 %v788
    %v2876 = vunpack.c.h.b16 %v788
    %v2877 = vunpack.c.l.b16 %v789
    %v2878 = vunpack.c.h.b16 %v789
    %v2879 = vunpack.c.l.b16 %v790
    %v2880 = vunpack.c.h.b16 %v790
    %v2881 = vunpack.c.l.b16 %v791
    %v2882 = vunpack.c.h.b16 %v791
    %v2883 = vunpack.c.l.b16 %v792
    %v2884 = vunpack.c.h.b16 %v792
    %v2885 = vunpack.c.l.b16 %v793
    %v2886 = vunpack.c.h.b16 %v793
    %v2887 = vunpack.c.l.b16 %v794
    %v2888 = vunpack.c.h.b16 %v794
    %v2889 = vunpack.c.l.b16 %v795
    %v2890 = vunpack.c.h.b16 %v795
    %v2891 = vunpack.c.l.b16 %v796
    %v2892 = vunpack.c.h.b16 %v796
    %v2893 = vunpack.c.l.b16 %v797
    %v2894 = vunpack.c.h.b16 %v797
    %v2895 = vunpack.c.l.b16 %v798
    %v2896 = vunpack.c.h.b16 %v798
    %v2897 = vunpack.c.l.b16 %v799
    %v2898 = vunpack.c.h.b16 %v799
    %v2899 = vunpack.c.l.b16 %v800
    %v2900 = vunpack.c.h.b16 %v800
    %v2901 = vunpack.c.l.b16 %v801
    %v2902 = vunpack.c.h.b16 %v801
    %v2903 = vunpack.c.l.b16 %v802
    %v2904 = vunpack.c.h.b16 %v802
    %v2905 = vunpack.c.l.b16 %v803
    %v2906 = vunpack.c.h.b16 %v803
    %v2907 = vunpack.c.l.b16 %v804
    %v2908 = vunpack.c.h.b16 %v804
    %v2909 = vunpack.c.l.b16 %v805
    %v2910 = vunpack.c.h.b16 %v805
    %v2911 = vunpack.c.l.b16 %v806
    %v2912 = vunpack.c.h.b16 %v806
    %v2913 = vunpack.c.l.b16 %v807
    %v2914 = vunpack.c.h.b16 %v807
    %v2915 = vunpack.c.l.b16 %v808
    %v2916 = vunpack.c.h.b16 %v808
    %v2917 = vunpack.c.l.b16 %v809
    %v2918 = vunpack.c.h.b16 %v809
    %v2919 = vunpack.c.l.b16 %v810
    %v2920 = vunpack.c.h.b16 %v810
    %v2921 = vunpack.c.l.b16 %v811
    %v2922 = vunpack.c.h.b16 %v811
    %v2923 = vunpack.c.l.b16 %v812
    %v2924 = vunpack.c.h.b16 %v812
    %v2925 = vunpack.c.l.b16 %v813
    %v2926 = vunpack.c.h.b16 %v813
    %v2927 = vunpack.c.l.b16 %v814
    %v2928 = vunpack.c.h.b16 %v814
    %v2929 = vunpack.c.l.b16 %v815
    %v2930 = vunpack.c.h.b16 %v815
    %v2931 = vunpack.c.l.b16 %v816
    %v2932 = vunpack.c.h.b16 %v816
    %v2933 = vunpack.c.l.b16 %v817
    %v2934 = vunpack.c.h.b16 %v817
    %v2935 = vunpack.c.l.b16 %v818
    %v2936 = vunpack.c.h.b16 %v818
    %v2937 = vunpack.c.l.b16 %v819
    %v2938 = vunpack.c.h.b16 %v819
    %v2939 = vunpack.c.l.b16 %v820
    %v2940 = vunpack.c.h.b16 %v820
    %v2941 = vunpack.c.l.b16 %v821
    %v2942 = vunpack.c.h.b16 %v821
    %v2943 = vunpack.c.l.b16 %v822
    %v2944 = vunpack.c.h.b16 %v822
    %v2945 = vunpack.c.l.b16 %v823
    %v2946 = vunpack.c.h.b16 %v823
    %v2947 = vunpack.c.l.b16 %v824
    %v2948 = vunpack.c.h.b16 %v824
    %v2949 = vunpack.c.l.b16 %v825
    %v2950 = vunpack.c.h.b16 %v825
    %v2951 = vunpack.c.l.b16 %v826
    %v2952 = vunpack.c.h.b16 %v826
    %v2953 = vunpack.c.l.b16 %v827
    %v2954 = vunpack.c.h.b16 %v827
    %v2955 = vunpack.c.l.b16 %v828
    %v2956 = vunpack.c.h.b16 %v828
    %v2957 = vunpack.c.l.b16 %v829
    %v2958 = vunpack.c.h.b16 %v829
    %v2959 = vunpack.c.l.b16 %v830
    %v2960 = vunpack.c.h.b16 %v830
    %v2961 = vunpack.c.l.b16 %v831
    %v2962 = vunpack.c.h.b16 %v831
    %v2963 = vunpack.c.l.b16 %v832
    %v2964 = vunpack.c.h.b16 %v832
    %v2965 = vunpack.c.l.b16 %v833
    %v2966 = vunpack.c.h.b16 %v833
    %v2967 = vunpack.c.l.b16 %v834
    %v2968 = vunpack.c.h.b16 %v834
    %v2969 = vunpack.c.l.b16 %v835
    %v2970 = vunpack.c.h.b16 %v835
    %v2971 = vunpack.c.l.b16 %v836
    %v2972 = vunpack.c.h.b16 %v836
    %v2973 = vunpack.c.l.b16 %v837
    %v2974 = vunpack.c.h.b16 %v837
    %v2975 = vunpack.c.l.b16 %v838
    %v2976 = vunpack.c.h.b16 %v838
    %v2977 = vunpack.c.l.b16 %v839
    %v2978 = vunpack.c.h.b16 %v839
    %v2979 = vunpack.c.l.b16 %v840
    %v2980 = vunpack.c.h.b16 %v840
    %v2981 = vunpack.c.l.b16 %v841
    %v2982 = vunpack.c.h.b16 %v841
    %v2983 = vunpack.c.l.b16 %v842
    %v2984 = vunpack.c.h.b16 %v842
    %v2985 = vunpack.c.l.b16 %v843
    %v2986 = vunpack.c.h.b16 %v843
    %v2987 = vunpack.c.l.b16 %v844
    %v2988 = vunpack.c.h.b16 %v844
    %v2989 = vunpack.c.l.b16 %v845
    %v2990 = vunpack.c.h.b16 %v845
    %v2991 = vunpack.c.l.b16 %v846
    %v2992 = vunpack.c.h.b16 %v846
    %v2993 = vunpack.c.l.b16 %v847
    %v2994 = vunpack.c.h.b16 %v847
    %v2995 = vunpack.c.l.b16 %v848
    %v2996 = vunpack.c.h.b16 %v848
    %v2997 = vunpack.c.l.b16 %v849
    %v2998 = vunpack.c.h.b16 %v849
    %v2999 = vunpack.c.l.b16 %v850
    %v3000 = vunpack.c.h.b16 %v850
    %v3001 = vunpack.c.l.b16 %v851
    %v3002 = vunpack.c.h.b16 %v851
    %v3003 = vunpack.c.l.b16 %v852
    %v3004 = vunpack.c.h.b16 %v852
    %v3005 = vunpack.c.l.b16 %v853
    %v3006 = vunpack.c.h.b16 %v853
    %v3007 = vunpack.c.l.b16 %v854
    %v3008 = vunpack.c.h.b16 %v854
    %v3009 = vunpack.c.l.b16 %v855
    %v3010 = vunpack.c.h.b16 %v855
    %v3011 = vunpack.c.l.b16 %v856
    %v3012 = vunpack.c.h.b16 %v856
    %v3013 = vunpack.c.l.b16 %v857
    %v3014 = vunpack.c.h.b16 %v857
    %v3015 = vunpack.c.l.b16 %v858
    %v3016 = vunpack.c.h.b16 %v858
    %v3017 = vunpack.c.l.b16 %v859
    %v3018 = vunpack.c.h.b16 %v859
    %v3019 = vunpack.c.l.b16 %v860
    %v3020 = vunpack.c.h.b16 %v860
    %v3021 = vunpack.c.l.b16 %v861
    %v3022 = vunpack.c.h.b16 %v861
    %v3023 = vunpack.c.l.b16 %v862
    %v3024 = vunpack.c.h.b16 %v862
    %v3025 = vunpack.c.l.b16 %v863
    %v3026 = vunpack.c.h.b16 %v863
    %v3027 = vunpack.c.l.b16 %v864
    %v3028 = vunpack.c.h.b16 %v864
    %v3029 = vunpack.c.l.b16 %v865
    %v3030 = vunpack.c.h.b16 %v865
    %v3031 = vunpack.c.l.b16 %v866
    %v3032 = vunpack.c.h.b16 %v866
    %v3033 = vunpack.c.l.b16 %v867
    %v3034 = vunpack.c.h.b16 %v867
    %v3035 = vunpack.c.l.b16 %v868
    %v3036 = vunpack.c.h.b16 %v868
    %v3037 = vunpack.c.l.b16 %v869
    %v3038 = vunpack.c.h.b16 %v869
    %v3039 = vunpack.c.l.b16 %v870
    %v3040 = vunpack.c.h.b16 %v870
    %v3041 = vunpack.c.l.b16 %v871
    %v3042 = vunpack.c.h.b16 %v871
    %v3043 = vunpack.c.l.b16 %v872
    %v3044 = vunpack.c.h.b16 %v872
    %v3045 = vunpack.c.l.b16 %v873
    %v3046 = vunpack.c.h.b16 %v873
    %v3047 = vunpack.c.l.b16 %v874
    %v3048 = vunpack.c.h.b16 %v874
    %v3049 = vunpack.c.l.b16 %v875
    %v3050 = vunpack.c.h.b16 %v875
    %v3051 = vunpack.c.l.b16 %v876
    %v3052 = vunpack.c.h.b16 %v876
    %v3053 = vunpack.c.l.b16 %v877
    %v3054 = vunpack.c.h.b16 %v877
    %v3055 = vunpack.c.l.b16 %v878
    %v3056 = vunpack.c.h.b16 %v878
    %v3057 = vunpack.c.l.b16 %v879
    %v3058 = vunpack.c.h.b16 %v879
    %v3059 = vunpack.c.l.b16 %v880
    %v3060 = vunpack.c.h.b16 %v880
    %v3061 = vunpack.c.l.b16 %v881
    %v3062 = vunpack.c.h.b16 %v881
    %v3063 = vunpack.c.l.b16 %v882
    %v3064 = vunpack.c.h.b16 %v882
    %v3065 = vunpack.c.l.b16 %v883
    %v3066 = vunpack.c.h.b16 %v883
    %v3067 = vunpack.c.l.b16 %v884
    %v3068 = vunpack.c.h.b16 %v884
    %v3069 = vunpack.c.l.b16 %v885
    %v3070 = vunpack.c.h.b16 %v885
    %v3071 = vunpack.c.l.b16 %v886
    %v3072 = vunpack.c.h.b16 %v886
    %v3073 = vpack.c.b16 %v1677, %v1673
    %v3074 = vpack.c.b16 %v1678, %v1674
    %v3075 = vpack.c.b16 %v1679, %v1675
    %v3076 = vpack.c.b16 %v1680, %v1676
    %v3077 = vpack.c.b16 %v1685, %v1681
    %v3078 = vpack.c.b16 %v1686, %v1682
    %v3079 = vpack.c.b16 %v1687, %v1683
    %v3080 = vpack.c.b16 %v1688, %v1684
    %v3081 = vpack.c.b16 %v1693, %v1689
    %v3082 = vpack.c.b16 %v1694, %v1690
    %v3083 = vpack.c.b16 %v1695, %v1691
    %v3084 = vpack.c.b16 %v1696, %v1692
    %v3085 = vpack.c.b16 %v1701, %v1697
    %v3086 = vpack.c.b16 %v1702, %v1698
    %v3087 = vpack.c.b16 %v1703, %v1699
    %v3088 = vpack.c.b16 %v1704, %v1700
    %v3089 = vpack.c.b16 %v1709, %v1705
    %v3090 = vpack.c.b16 %v1710, %v1706
    %v3091 = vpack.c.b16 %v1711, %v1707
    %v3092 = vpack.c.b16 %v1712, %v1708
    %v3093 = vpack.c.b16 %v1717, %v1713
    %v3094 = vpack.c.b16 %v1718, %v1714
    %v3095 = vpack.c.b16 %v1719, %v1715
    %v3096 = vpack.c.b16 %v1720, %v1716
    %v3097 = vpack.c.b16 %v1725, %v1721
    %v3098 = vpack.c.b16 %v1726, %v1722
    %v3099 = vpack.c.b16 %v1727, %v1723
    %v3100 = vpack.c.b16 %v1728, %v1724
    %v3101 = vpack.c.b16 %v1733, %v1729
    %v3102 = vpack.c.b16 %v1734, %v1730
    %v3103 = vpack.c.b16 %v1735, %v1731
    %v3104 = vpack.c.b16 %v1736, %v1732
    %v3105 = vpack.c.b16 %v1741, %v1737
    %v3106 = vpack.c.b16 %v1742, %v1738
    %v3107 = vpack.c.b16 %v1743, %v1739
    %v3108 = vpack.c.b16 %v1744, %v1740
    %v3109 = vpack.c.b16 %v1749, %v1745
    %v3110 = vpack.c.b16 %v1750, %v1746
    %v3111 = vpack.c.b16 %v1751, %v1747
    %v3112 = vpack.c.b16 %v1752, %v1748
    %v3113 = vpack.c.b16 %v1757, %v1753
    %v3114 = vpack.c.b16 %v1758, %v1754
    %v3115 = vpack.c.b16 %v1759, %v1755
    %v3116 = vpack.c.b16 %v1760, %v1756
    %v3117 = vpack.c.b16 %v1765, %v1761
    %v3118 = vpack.c.b16 %v1766, %v1762
    %v3119 = vpack.c.b16 %v1767, %v1763
    %v3120 = vpack.c.b16 %v1768, %v1764
    %v3121 = vpack.c.b16 %v1773, %v1769
    %v3122 = vpack.c.b16 %v1774, %v1770
    %v3123 = vpack.c.b16 %v1775, %v1771
    %v3124 = vpack.c.b16 %v1776, %v1772
    %v3125 = vpack.c.b16 %v1781, %v1777
    %v3126 = vpack.c.b16 %v1782, %v1778
    %v3127 = vpack.c.b16 %v1783, %v1779
    %v3128 = vpack.c.b16 %v1784, %v1780
    %v3129 = vpack.c.b16 %v1789, %v1785
    %v3130 = vpack.c.b16 %v1790, %v1786
    %v3131 = vpack.c.b16 %v1791, %v1787
    %v3132 = vpack.c.b16 %v1792, %v1788
    %v3133 = vpack.c.b16 %v1797, %v1793
    %v3134 = vpack.c.b16 %v1798, %v1794
    %v3135 = vpack.c.b16 %v1799, %v1795
    %v3136 = vpack.c.b16 %v1800, %v1796
    %v3137 = vpack.c.b16 %v1805, %v1801
    %v3138 = vpack.c.b16 %v1806, %v1802
    %v3139 = vpack.c.b16 %v1807, %v1803
    %v3140 = vpack.c.b16 %v1808, %v1804
    %v3141 = vpack.c.b16 %v1813, %v1809
    %v3142 = vpack.c.b16 %v1814, %v1810
    %v3143 = vpack.c.b16 %v1815, %v1811
    %v3144 = vpack.c.b16 %v1816, %v1812
    %v3145 = vpack.c.b16 %v1821, %v1817
    %v3146 = vpack.c.b16 %v1822, %v1818
    %v3147 = vpack.c.b16 %v1823, %v1819
    %v3148 = vpack.c.b16 %v1824, %v1820
    %v3149 = vpack.c.b16 %v1829, %v1825
    %v3150 = vpack.c.b16 %v1830, %v1826
    %v3151 = vpack.c.b16 %v1831, %v1827
    %v3152 = vpack.c.b16 %v1832, %v1828
    %v3153 = vpack.c.b16 %v1837, %v1833
    %v3154 = vpack.c.b16 %v1838, %v1834
    %v3155 = vpack.c.b16 %v1839, %v1835
    %v3156 = vpack.c.b16 %v1840, %v1836
    %v3157 = vpack.c.b16 %v1845, %v1841
    %v3158 = vpack.c.b16 %v1846, %v1842
    %v3159 = vpack.c.b16 %v1847, %v1843
    %v3160 = vpack.c.b16 %v1848, %v1844
    %v3161 = vpack.c.b16 %v1853, %v1849
    %v3162 = vpack.c.b16 %v1854, %v1850
    %v3163 = vpack.c.b16 %v1855, %v1851
    %v3164 = vpack.c.b16 %v1856, %v1852
    %v3165 = vpack.c.b16 %v1861, %v1857
    %v3166 = vpack.c.b16 %v1862, %v1858
    %v3167 = vpack.c.b16 %v1863, %v1859
    %v3168 = vpack.c.b16 %v1864, %v1860
    %v3169 = vpack.c.b16 %v1869, %v1865
    %v3170 = vpack.c.b16 %v1870, %v1866
    %v3171 = vpack.c.b16 %v1871, %v1867
    %v3172 = vpack.c.b16 %v1872, %v1868
    %v3173 = vpack.c.b16 %v1877, %v1873
    %v3174 = vpack.c.b16 %v1878, %v1874
    %v3175 = vpack.c.b16 %v1879, %v1875
    %v3176 = vpack.c.b16 %v1880, %v1876
    %v3177 = vpack.c.b16 %v1885, %v1881
    %v3178 = vpack.c.b16 %v1886, %v1882
    %v3179 = vpack.c.b16 %v1887, %v1883
    %v3180 = vpack.c.b16 %v1888, %v1884
    %v3181 = vpack.c.b16 %v1893, %v1889
    %v3182 = vpack.c.b16 %v1894, %v1890
    %v3183 = vpack.c.b16 %v1895, %v1891
    %v3184 = vpack.c.b16 %v1896, %v1892
    %v3185 = vpack.c.b16 %v1901, %v1897
    %v3186 = vpack.c.b16 %v1902, %v1898
    %v3187 = vpack.c.b16 %v1903, %v1899
    %v3188 = vpack.c.b16 %v1904, %v1900
    %v3189 = vpack.c.b16 %v1909, %v1905
    %v3190 = vpack.c.b16 %v1910, %v1906
    %v3191 = vpack.c.b16 %v1911, %v1907
    %v3192 = vpack.c.b16 %v1912, %v1908
    %v3193 = vpack.c.b16 %v1917, %v1913
    %v3194 = vpack.c.b16 %v1918, %v1914
    %v3195 = vpack.c.b16 %v1919, %v1915
    %v3196 = vpack.c.b16 %v1920, %v1916
    %v3197 = vpack.c.b16 %v1925, %v1921
    %v3198 = vpack.c.b16 %v1926, %v1922
    %v3199 = vpack.c.b16 %v1927, %v1923
    %v3200 = vpack.c.b16 %v1928, %v1924
    %v3201 = vpack.c.b16 %v1933, %v1929
    %v3202 = vpack.c.b16 %v1934, %v1930
    %v3203 = vpack.c.b16 %v1935, %v1931
    %v3204 = vpack.c.b16 %v1936, %v1932
    %v3205 = vpack.c.b16 %v1941, %v1937
    %v3206 = vpack.c.b16 %v1942, %v1938
    %v3207 = vpack.c.b16 %v1943, %v1939
    %v3208 = vpack.c.b16 %v1944, %v1940
    %v3209 = vpack.c.b16 %v1949, %v1945
    %v3210 = vpack.c.b16 %v1950, %v1946
    %v3211 = vpack.c.b16 %v1951, %v1947
    %v3212 = vpack.c.b16 %v1952, %v1948
    %v3213 = vpack.c.b16 %v1957, %v1953
    %v3214 = vpack.c.b16 %v1958, %v1954
    %v3215 = vpack.c.b16 %v1959, %v1955
    %v3216 = vpack.c.b16 %v1960, %v1956
    %v3217 = vpack.c.b16 %v1965, %v1961
    %v3218 = vpack.c.b16 %v1966, %v1962
    %v3219 = vpack.c.b16 %v1967, %v1963
    %v3220 = vpack.c.b16 %v1968, %v1964
    %v3221 = vpack.c.b16 %v1973, %v1969
    %v3222 = vpack.c.b16 %v1974, %v1970
    %v3223 = vpack.c.b16 %v1975, %v1971
    %v3224 = vpack.c.b16 %v1976, %v1972
    %v3225 = vpack.c.b16 %v1981, %v1977
    %v3226 = vpack.c.b16 %v1982, %v1978
    %v3227 = vpack.c.b16 %v1983, %v1979
    %v3228 = vpack.c.b16 %v1984, %v1980
    %v3229 = vpack.c.b16 %v1989, %v1985
    %v3230 = vpack.c.b16 %v1990, %v1986
    %v3231 = vpack.c.b16 %v1991, %v1987
    %v3232 = vpack.c.b16 %v1992, %v1988
    %v3233 = vpack.c.b16 %v1997, %v1993
    %v3234 = vpack.c.b16 %v1998, %v1994
    %v3235 = vpack.c.b16 %v1999, %v1995
    %v3236 = vpack.c.b16 %v2000, %v1996
    %v3237 = vpack.c.b16 %v2005, %v2001
    %v3238 = vpack.c.b16 %v2006, %v2002
    %v3239 = vpack.c.b16 %v2007, %v2003
    %v3240 = vpack.c.b16 %v2008, %v2004
    %v3241 = vpack.c.b16 %v2013, %v2009
    %v3242 = vpack.c.b16 %v2014, %v2010
    %v3243 = vpack.c.b16 %v2015, %v2011
    %v3244 = vpack.c.b16 %v2016, %v2012
    %v3245 = vpack.c.b16 %v2021, %v2017
    %v3246 = vpack.c.b16 %v2022, %v2018
    %v3247 = vpack.c.b16 %v2023, %v2019
    %v3248 = vpack.c.b16 %v2024, %v2020
    %v3249 = vpack.c.b16 %v2029, %v2025
    %v3250 = vpack.c.b16 %v2030, %v2026
    %v3251 = vpack.c.b16 %v2031, %v2027
    %v3252 = vpack.c.b16 %v2032, %v2028
    %v3253 = vpack.c.b16 %v2037, %v2033
    %v3254 = vpack.c.b16 %v2038, %v2034
    %v3255 = vpack.c.b16 %v2039, %v2035
    %v3256 = vpack.c.b16 %v2040, %v2036
    %v3257 = vpack.c.b16 %v2045, %v2041
    %v3258 = vpack.c.b16 %v2046, %v2042
    %v3259 = vpack.c.b16 %v2047, %v2043
    %v3260 = vpack.c.b16 %v2048, %v2044
    %v3261 = vpack.c.b16 %v2053, %v2049
    %v3262 = vpack.c.b16 %v2054, %v2050
    %v3263 = vpack.c.b16 %v2055, %v2051
    %v3264 = vpack.c.b16 %v2056, %v2052
    %v3265 = vpack.c.b16 %v2061, %v2057
    %v3266 = vpack.c.b16 %v2062, %v2058
    %v3267 = vpack.c.b16 %v2063, %v2059
    %v3268 = vpack.c.b16 %v2064, %v2060
    %v3269 = vpack.c.b16 %v2069, %v2065
    %v3270 = vpack.c.b16 %v2070, %v2066
    %v3271 = vpack.c.b16 %v2071, %v2067
    %v3272 = vpack.c.b16 %v2072, %v2068
    %v3273 = vpack.c.b16 %v2077, %v2073
    %v3274 = vpack.c.b16 %v2078, %v2074
    %v3275 = vpack.c.b16 %v2079, %v2075
    %v3276 = vpack.c.b16 %v2080, %v2076
    %v3277 = vpack.c.b16 %v2085, %v2081
    %v3278 = vpack.c.b16 %v2086, %v2082
    %v3279 = vpack.c.b16 %v2087, %v2083
    %v3280 = vpack.c.b16 %v2088, %v2084
    %v3281 = vpack.c.b16 %v2093, %v2089
    %v3282 = vpack.c.b16 %v2094, %v2090
    %v3283 = vpack.c.b16 %v2095, %v2091
    %v3284 = vpack.c.b16 %v2096, %v2092
    %v3285 = vpack.c.b16 %v2101, %v2097
    %v3286 = vpack.c.b16 %v2102, %v2098
    %v3287 = vpack.c.b16 %v2103, %v2099
    %v3288 = vpack.c.b16 %v2104, %v2100
    %v3289 = vpack.c.b16 %v2109, %v2105
    %v3290 = vpack.c.b16 %v2110, %v2106
    %v3291 = vpack.c.b16 %v2111, %v2107
    %v3292 = vpack.c.b16 %v2112, %v2108
    %v3293 = vpack.c.b16 %v2117, %v2113
    %v3294 = vpack.c.b16 %v2118, %v2114
    %v3295 = vpack.c.b16 %v2119, %v2115
    %v3296 = vpack.c.b16 %v2120, %v2116
    %v3297 = vpack.c.b16 %v2125, %v2121
    %v3298 = vpack.c.b16 %v2126, %v2122
    %v3299 = vpack.c.b16 %v2127, %v2123
    %v3300 = vpack.c.b16 %v2128, %v2124
    %v3301 = vpack.c.b16 %v2133, %v2129
    %v3302 = vpack.c.b16 %v2134, %v2130
    %v3303 = vpack.c.b16 %v2135, %v2131
    %v3304 = vpack.c.b16 %v2136, %v2132
    %v3305 = vpack.c.b16 %v2141, %v2137
    %v3306 = vpack.c.b16 %v2142, %v2138
    %v3307 = vpack.c.b16 %v2143, %v2139
    %v3308 = vpack.c.b16 %v2144, %v2140
    %v3309 = vpack.c.b16 %v2149, %v2145
    %v3310 = vpack.c.b16 %v2150, %v2146
    %v3311 = vpack.c.b16 %v2151, %v2147
    %v3312 = vpack.c.b16 %v2152, %v2148
    %v3313 = vpack.c.b16 %v2157, %v2153
    %v3314 = vpack.c.b16 %v2158, %v2154
    %v3315 = vpack.c.b16 %v2159, %v2155
    %v3316 = vpack.c.b16 %v2160, %v2156
    %v3317 = vpack.c.b16 %v2165, %v2161
    %v3318 = vpack.c.b16 %v2166, %v2162
    %v3319 = vpack.c.b16 %v2167, %v2163
    %v3320 = vpack.c.b16 %v2168, %v2164
    %v3321 = vpack.c.b16 %v2173, %v2169
    %v3322 = vpack.c.b16 %v2174, %v2170
    %v3323 = vpack.c.b16 %v2175, %v2171
    %v3324 = vpack.c.b16 %v2176, %v2172
    %v3325 = vpack.c.b16 %v2181, %v2177
    %v3326 = vpack.c.b16 %v2182, %v2178
    %v3327 = vpack.c.b16 %v2183, %v2179
    %v3328 = vpack.c.b16 %v2184, %v2180
    %v3329 = vpack.c.b16 %v2189, %v2185
    %v3330 = vpack.c.b16 %v2190, %v2186
    %v3331 = vpack.c.b16 %v2191, %v2187
    %v3332 = vpack.c.b16 %v2192, %v2188
    %v3333 = vpack.c.b16 %v2197, %v2193
    %v3334 = vpack.c.b16 %v2198, %v2194
    %v3335 = vpack.c.b16 %v2199, %v2195
    %v3336 = vpack.c.b16 %v2200, %v2196
    %v3337 = vpack.c.b16 %v2205, %v2201
    %v3338 = vpack.c.b16 %v2206, %v2202
    %v3339 = vpack.c.b16 %v2207, %v2203
    %v3340 = vpack.c.b16 %v2208, %v2204
    %v3341 = vpack.c.b16 %v2213, %v2209
    %v3342 = vpack.c.b16 %v2214, %v2210
    %v3343 = vpack.c.b16 %v2215, %v2211
    %v3344 = vpack.c.b16 %v2216, %v2212
    %v3345 = vpack.c.b16 %v2221, %v2217
    %v3346 = vpack.c.b16 %v2222, %v2218
    %v3347 = vpack.c.b16 %v2223, %v2219
    %v3348 = vpack.c.b16 %v2224, %v2220
    %v3349 = vpack.c.b16 %v2229, %v2225
    %v3350 = vpack.c.b16 %v2230, %v2226
    %v3351 = vpack.c.b16 %v2231, %v2227
    %v3352 = vpack.c.b16 %v2232, %v2228
    %v3353 = vpack.c.b16 %v2237, %v2233
    %v3354 = vpack.c.b16 %v2238, %v2234
    %v3355 = vpack.c.b16 %v2239, %v2235
    %v3356 = vpack.c.b16 %v2240, %v2236
    %v3357 = vpack.c.b16 %v2245, %v2241
    %v3358 = vpack.c.b16 %v2246, %v2242
    %v3359 = vpack.c.b16 %v2247, %v2243
    %v3360 = vpack.c.b16 %v2248, %v2244
    %v3361 = vpack.c.b16 %v2253, %v2249
    %v3362 = vpack.c.b16 %v2254, %v2250
    %v3363 = vpack.c.b16 %v2255, %v2251
    %v3364 = vpack.c.b16 %v2256, %v2252
    %v3365 = vpack.c.b16 %v2261, %v2257
    %v3366 = vpack.c.b16 %v2262, %v2258
    %v3367 = vpack.c.b16 %v2263, %v2259
    %v3368 = vpack.c.b16 %v2264, %v2260
    %v3369 = vpack.c.b16 %v2269, %v2265
    %v3370 = vpack.c.b16 %v2270, %v2266
    %v3371 = vpack.c.b16 %v2271, %v2267
    %v3372 = vpack.c.b16 %v2272, %v2268
    %v3373 = vpack.c.b16 %v2277, %v2273
    %v3374 = vpack.c.b16 %v2278, %v2274
    %v3375 = vpack.c.b16 %v2279, %v2275
    %v3376 = vpack.c.b16 %v2280, %v2276
    %v3377 = vpack.c.b16 %v2285, %v2281
    %v3378 = vpack.c.b16 %v2286, %v2282
    %v3379 = vpack.c.b16 %v2287, %v2283
    %v3380 = vpack.c.b16 %v2288, %v2284
    %v3381 = vpack.c.b16 %v2293, %v2289
    %v3382 = vpack.c.b16 %v2294, %v2290
    %v3383 = vpack.c.b16 %v2295, %v2291
    %v3384 = vpack.c.b16 %v2296, %v2292
    %v3385 = vpack.c.b16 %v2301, %v2297
    %v3386 = vpack.c.b16 %v2302, %v2298
    %v3387 = vpack.c.b16 %v2303, %v2299
    %v3388 = vpack.c.b16 %v2304, %v2300
    %v3389 = vpack.c.b16 %v2309, %v2305
    %v3390 = vpack.c.b16 %v2310, %v2306
    %v3391 = vpack.c.b16 %v2311, %v2307
    %v3392 = vpack.c.b16 %v2312, %v2308
    %v3393 = vpack.c.b16 %v2317, %v2313
    %v3394 = vpack.c.b16 %v2318, %v2314
    %v3395 = vpack.c.b16 %v2319, %v2315
    %v3396 = vpack.c.b16 %v2320, %v2316
    %v3397 = vpack.c.b16 %v2325, %v2321
    %v3398 = vpack.c.b16 %v2326, %v2322
    %v3399 = vpack.c.b16 %v2327, %v2323
    %v3400 = vpack.c.b16 %v2328, %v2324
    %v3401 = vpack.c.b16 %v2333, %v2329
    %v3402 = vpack.c.b16 %v2334, %v2330
    %v3403 = vpack.c.b16 %v2335, %v2331
    %v3404 = vpack.c.b16 %v2336, %v2332
    %v3405 = vpack.c.b16 %v2341, %v2337
    %v3406 = vpack.c.b16 %v2342, %v2338
    %v3407 = vpack.c.b16 %v2343, %v2339
    %v3408 = vpack.c.b16 %v2344, %v2340
    %v3409 = vpack.c.b16 %v2349, %v2345
    %v3410 = vpack.c.b16 %v2350, %v2346
    %v3411 = vpack.c.b16 %v2351, %v2347
    %v3412 = vpack.c.b16 %v2352, %v2348
    %v3413 = vpack.c.b16 %v2357, %v2353
    %v3414 = vpack.c.b16 %v2358, %v2354
    %v3415 = vpack.c.b16 %v2359, %v2355
    %v3416 = vpack.c.b16 %v2360, %v2356
    %v3417 = vpack.c.b16 %v2365, %v2361
    %v3418 = vpack.c.b16 %v2366, %v2362
    %v3419 = vpack.c.b16 %v2367, %v2363
    %v3420 = vpack.c.b16 %v2368, %v2364
    %v3421 = vpack.c.b16 %v2373, %v2369
    %v3422 = vpack.c.b16 %v2374, %v2370
    %v3423 = vpack.c.b16 %v2375, %v2371
    %v3424 = vpack.c.b16 %v2376, %v2372
    %v3425 = vpack.c.b16 %v2381, %v2377
    %v3426 = vpack.c.b16 %v2382, %v2378
    %v3427 = vpack.c.b16 %v2383, %v2379
    %v3428 = vpack.c.b16 %v2384, %v2380
    %v3429 = vpack.c.b16 %v2389, %v2385
    %v3430 = vpack.c.b16 %v2390, %v2386
    %v3431 = vpack.c.b16 %v2391, %v2387
    %v3432 = vpack.c.b16 %v2392, %v2388
    %v3433 = vpack.c.b16 %v2397, %v2393
    %v3434 = vpack.c.b16 %v2398, %v2394
    %v3435 = vpack.c.b16 %v2399, %v2395
    %v3436 = vpack.c.b16 %v2400, %v2396
    %v3437 = vpack.c.b16 %v2405, %v2401
    %v3438 = vpack.c.b16 %v2406, %v2402
    %v3439 = vpack.c.b16 %v2407, %v2403
    %v3440 = vpack.c.b16 %v2408, %v2404
    %v3441 = vpack.c.b16 %v2413, %v2409
    %v3442 = vpack.c.b16 %v2414, %v2410
    %v3443 = vpack.c.b16 %v2415, %v2411
    %v3444 = vpack.c.b16 %v2416, %v2412
    %v3445 = vpack.c.b16 %v2421, %v2417
    %v3446 = vpack.c.b16 %v2422, %v2418
    %v3447 = vpack.c.b16 %v2423, %v2419
    %v3448 = vpack.c.b16 %v2424, %v2420
    %v3449 = vpack.c.b16 %v2429, %v2425
    %v3450 = vpack.c.b16 %v2430, %v2426
    %v3451 = vpack.c.b16 %v2431, %v2427
    %v3452 = vpack.c.b16 %v2432, %v2428
    %v3453 = vpack.c.b16 %v2437, %v2433
    %v3454 = vpack.c.b16 %v2438, %v2434
    %v3455 = vpack.c.b16 %v2439, %v2435
    %v3456 = vpack.c.b16 %v2440, %v2436
    %v3457 = vpack.c.b16 %v2445, %v2441
    %v3458 = vpack.c.b16 %v2446, %v2442
    %v3459 = vpack.c.b16 %v2447, %v2443
    %v3460 = vpack.c.b16 %v2448, %v2444
    %v3461 = vpack.c.b16 %v2453, %v2449
    %v3462 = vpack.c.b16 %v2454, %v2450
    %v3463 = vpack.c.b16 %v2455, %v2451
    %v3464 = vpack.c.b16 %v2456, %v2452
    %v3465 = vpack.c.b16 %v2461, %v2457
    %v3466 = vpack.c.b16 %v2462, %v2458
    %v3467 = vpack.c.b16 %v2463, %v2459
    %v3468 = vpack.c.b16 %v2464, %v2460
    %v3469 = vpack.c.b16 %v2469, %v2465
    %v3470 = vpack.c.b16 %v2470, %v2466
    %v3471 = vpack.c.b16 %v2471, %v2467
    %v3472 = vpack.c.b16 %v2472, %v2468
    %v3473 = vpack.c.b16 %v2477, %v2473
    %v3474 = vpack.c.b16 %v2478, %v2474
    %v3475 = vpack.c.b16 %v2479, %v2475
    %v3476 = vpack.c.b16 %v2480, %v2476
    %v3477 = vpack.c.b16 %v2485, %v2481
    %v3478 = vpack.c.b16 %v2486, %v2482
    %v3479 = vpack.c.b16 %v2487, %v2483
    %v3480 = vpack.c.b16 %v2488, %v2484
    %v3481 = vpack.c.b16 %v2493, %v2489
    %v3482 = vpack.c.b16 %v2494, %v2490
    %v3483 = vpack.c.b16 %v2495, %v2491
    %v3484 = vpack.c.b16 %v2496, %v2492
    %v3485 = vpack.c.b16 %v2501, %v2497
    %v3486 = vpack.c.b16 %v2502, %v2498
    %v3487 = vpack.c.b16 %v2503, %v2499
    %v3488 = vpack.c.b16 %v2504, %v2500
    %v3489 = vpack.c.b16 %v2509, %v2505
    %v3490 = vpack.c.b16 %v2510, %v2506
    %v3491 = vpack.c.b16 %v2511, %v2507
    %v3492 = vpack.c.b16 %v2512, %v2508
    %v3493 = vpack.c.b16 %v2517, %v2513
    %v3494 = vpack.c.b16 %v2518, %v2514
    %v3495 = vpack.c.b16 %v2519, %v2515
    %v3496 = vpack.c.b16 %v2520, %v2516
    %v3497 = vpack.c.b16 %v2525, %v2521
    %v3498 = vpack.c.b16 %v2526, %v2522
    %v3499 = vpack.c.b16 %v2527, %v2523
    %v3500 = vpack.c.b16 %v2528, %v2524
    %v3501 = vpack.c.b16 %v2533, %v2529
    %v3502 = vpack.c.b16 %v2534, %v2530
    %v3503 = vpack.c.b16 %v2535, %v2531
    %v3504 = vpack.c.b16 %v2536, %v2532
    %v3505 = vpack.c.b16 %v2541, %v2537
    %v3506 = vpack.c.b16 %v2542, %v2538
    %v3507 = vpack.c.b16 %v2543, %v2539
    %v3508 = vpack.c.b16 %v2544, %v2540
    %v3509 = vpack.c.b16 %v2549, %v2545
    %v3510 = vpack.c.b16 %v2550, %v2546
    %v3511 = vpack.c.b16 %v2551, %v2547
    %v3512 = vpack.c.b16 %v2552, %v2548
    %v3513 = vpack.c.b16 %v2557, %v2553
    %v3514 = vpack.c.b16 %v2558, %v2554
    %v3515 = vpack.c.b16 %v2559, %v2555
    %v3516 = vpack.c.b16 %v2560, %v2556
    %v3517 = vpack.c.b16 %v2565, %v2561
    %v3518 = vpack.c.b16 %v2566, %v2562
    %v3519 = vpack.c.b16 %v2567, %v2563
    %v3520 = vpack.c.b16 %v2568, %v2564
    %v3521 = vpack.c.b16 %v2573, %v2569
    %v3522 = vpack.c.b16 %v2574, %v2570
    %v3523 = vpack.c.b16 %v2575, %v2571
    %v3524 = vpack.c.b16 %v2576, %v2572
    %v3525 = vpack.c.b16 %v2581, %v2577
    %v3526 = vpack.c.b16 %v2582, %v2578
    %v3527 = vpack.c.b16 %v2583, %v2579
    %v3528 = vpack.c.b16 %v2584, %v2580
    %v3529 = vpack.c.b16 %v2589, %v2585
    %v3530 = vpack.c.b16 %v2590, %v2586
    %v3531 = vpack.c.b16 %v2591, %v2587
    %v3532 = vpack.c.b16 %v2592, %v2588
    %v3533 = vpack.c.b16 %v2597, %v2593
    %v3534 = vpack.c.b16 %v2598, %v2594
    %v3535 = vpack.c.b16 %v2599, %v2595
    %v3536 = vpack.c.b16 %v2600, %v2596
    %v3537 = vpack.c.b16 %v2605, %v2601
    %v3538 = vpack.c.b16 %v2606, %v2602
    %v3539 = vpack.c.b16 %v2607, %v2603
    %v3540 = vpack.c.b16 %v2608, %v2604
    %v3541 = vpack.c.b16 %v2613, %v2609
    %v3542 = vpack.c.b16 %v2614, %v2610
    %v3543 = vpack.c.b16 %v2615, %v2611
    %v3544 = vpack.c.b16 %v2616, %v2612
    %v3545 = vpack.c.b16 %v2621, %v2617
    %v3546 = vpack.c.b16 %v2622, %v2618
    %v3547 = vpack.c.b16 %v2623, %v2619
    %v3548 = vpack.c.b16 %v2624, %v2620
    %v3549 = vpack.c.b16 %v2629, %v2625
    %v3550 = vpack.c.b16 %v2630, %v2626
    %v3551 = vpack.c.b16 %v2631, %v2627
    %v3552 = vpack.c.b16 %v2632, %v2628
    %v3553 = vpack.c.b16 %v2637, %v2633
    %v3554 = vpack.c.b16 %v2638, %v2634
    %v3555 = vpack.c.b16 %v2639, %v2635
    %v3556 = vpack.c.b16 %v2640, %v2636
    %v3557 = vpack.c.b16 %v2645, %v2641
    %v3558 = vpack.c.b16 %v2646, %v2642
    %v3559 = vpack.c.b16 %v2647, %v2643
    %v3560 = vpack.c.b16 %v2648, %v2644
    %v3561 = vpack.c.b16 %v2653, %v2649
    %v3562 = vpack.c.b16 %v2654, %v2650
    %v3563 = vpack.c.b16 %v2655, %v2651
    %v3564 = vpack.c.b16 %v2656, %v2652
    %v3565 = vpack.c.b16 %v2661, %v2657
    %v3566 = vpack.c.b16 %v2662, %v2658
    %v3567 = vpack.c.b16 %v2663, %v2659
    %v3568 = vpack.c.b16 %v2664, %v2660
    %v3569 = vpack.c.b16 %v2669, %v2665
    %v3570 = vpack.c.b16 %v2670, %v2666
    %v3571 = vpack.c.b16 %v2671, %v2667
    %v3572 = vpack.c.b16 %v2672, %v2668
    %v3573 = vpack.c.b16 %v2677, %v2673
    %v3574 = vpack.c.b16 %v2678, %v2674
    %v3575 = vpack.c.b16 %v2679, %v2675
    %v3576 = vpack.c.b16 %v2680, %v2676
    %v3577 = vpack.c.b16 %v2685, %v2681
    %v3578 = vpack.c.b16 %v2686, %v2682
    %v3579 = vpack.c.b16 %v2687, %v2683
    %v3580 = vpack.c.b16 %v2688, %v2684
    %v3581 = vpack.c.b16 %v2693, %v2689
    %v3582 = vpack.c.b16 %v2694, %v2690
    %v3583 = vpack.c.b16 %v2695, %v2691
    %v3584 = vpack.c.b16 %v2696, %v2692
    %v3585 = vpack.c.b16 %v2701, %v2697
    %v3586 = vpack.c.b16 %v2702, %v2698
    %v3587 = vpack.c.b16 %v2703, %v2699
    %v3588 = vpack.c.b16 %v2704, %v2700
    %v3589 = vpack.c.b16 %v2709, %v2705
    %v3590 = vpack.c.b16 %v2710, %v2706
    %v3591 = vpack.c.b16 %v2711, %v2707
    %v3592 = vpack.c.b16 %v2712, %v2708
    %v3593 = vpack.c.b16 %v2717, %v2713
    %v3594 = vpack.c.b16 %v2718, %v2714
    %v3595 = vpack.c.b16 %v2719, %v2715
    %v3596 = vpack.c.b16 %v2720, %v2716
    %v3597 = vpack.c.b16 %v2725, %v2721
    %v3598 = vpack.c.b16 %v2726, %v2722
    %v3599 = vpack.c.b16 %v2727, %v2723
    %v3600 = vpack.c.b16 %v2728, %v2724
    %v3601 = vpack.c.b16 %v2733, %v2729
    %v3602 = vpack.c.b16 %v2734, %v2730
    %v3603 = vpack.c.b16 %v2735, %v2731
    %v3604 = vpack.c.b16 %v2736, %v2732
    %v3605 = vpack.c.b16 %v2741, %v2737
    %v3606 = vpack.c.b16 %v2742, %v2738
    %v3607 = vpack.c.b16 %v2743, %v2739
    %v3608 = vpack.c.b16 %v2744, %v2740
    %v3609 = vpack.c.b16 %v2749, %v2745
    %v3610 = vpack.c.b16 %v2750, %v2746
    %v3611 = vpack.c.b16 %v2751, %v2747
    %v3612 = vpack.c.b16 %v2752, %v2748
    %v3613 = vpack.c.b16 %v2757, %v2753
    %v3614 = vpack.c.b16 %v2758, %v2754
    %v3615 = vpack.c.b16 %v2759, %v2755
    %v3616 = vpack.c.b16 %v2760, %v2756
    %v3617 = vpack.c.b16 %v2765, %v2761
    %v3618 = vpack.c.b16 %v2766, %v2762
    %v3619 = vpack.c.b16 %v2767, %v2763
    %v3620 = vpack.c.b16 %v2768, %v2764
    %v3621 = vpack.c.b16 %v2773, %v2769
    %v3622 = vpack.c.b16 %v2774, %v2770
    %v3623 = vpack.c.b16 %v2775, %v2771
    %v3624 = vpack.c.b16 %v2776, %v2772
    %v3625 = vpack.c.b16 %v2781, %v2777
    %v3626 = vpack.c.b16 %v2782, %v2778
    %v3627 = vpack.c.b16 %v2783, %v2779
    %v3628 = vpack.c.b16 %v2784, %v2780
    %v3629 = vpack.c.b16 %v2789, %v2785
    %v3630 = vpack.c.b16 %v2790, %v2786
    %v3631 = vpack.c.b16 %v2791, %v2787
    %v3632 = vpack.c.b16 %v2792, %v2788
    %v3633 = vpack.c.b16 %v2797, %v2793
    %v3634 = vpack.c.b16 %v2798, %v2794
    %v3635 = vpack.c.b16 %v2799, %v2795
    %v3636 = vpack.c.b16 %v2800, %v2796
    %v3637 = vpack.c.b16 %v2805, %v2801
    %v3638 = vpack.c.b16 %v2806, %v2802
    %v3639 = vpack.c.b16 %v2807, %v2803
    %v3640 = vpack.c.b16 %v2808, %v2804
    %v3641 = vpack.c.b16 %v2813, %v2809
    %v3642 = vpack.c.b16 %v2814, %v2810
    %v3643 = vpack.c.b16 %v2815, %v2811
    %v3644 = vpack.c.b16 %v2816, %v2812
    %v3645 = vpack.c.b16 %v2821, %v2817
    %v3646 = vpack.c.b16 %v2822, %v2818
    %v3647 = vpack.c.b16 %v2823, %v2819
    %v3648 = vpack.c.b16 %v2824, %v2820
    %v3649 = vpack.c.b16 %v2829, %v2825
    %v3650 = vpack.c.b16 %v2830, %v2826
    %v3651 = vpack.c.b16 %v2831, %v2827
    %v3652 = vpack.c.b16 %v2832, %v2828
    %v3653 = vpack.c.b16 %v2837, %v2833
    %v3654 = vpack.c.b16 %v2838, %v2834
    %v3655 = vpack.c.b16 %v2839, %v2835
    %v3656 = vpack.c.b16 %v2840, %v2836
    %v3657 = vpack.c.b16 %v2845, %v2841
    %v3658 = vpack.c.b16 %v2846, %v2842
    %v3659 = vpack.c.b16 %v2847, %v2843
    %v3660 = vpack.c.b16 %v2848, %v2844
    %v3661 = vpack.c.b16 %v2853, %v2849
    %v3662 = vpack.c.b16 %v2854, %v2850
    %v3663 = vpack.c.b16 %v2855, %v2851
    %v3664 = vpack.c.b16 %v2856, %v2852
    %v3665 = vpack.c.b16 %v2861, %v2857
    %v3666 = vpack.c.b16 %v2862, %v2858
    %v3667 = vpack.c.b16 %v2863, %v2859
    %v3668 = vpack.c.b16 %v2864, %v2860
    %v3669 = vpack.c.b16 %v2869, %v2865
    %v3670 = vpack.c.b16 %v2870, %v2866
    %v3671 = vpack.c.b16 %v2871, %v2867
    %v3672 = vpack.c.b16 %v2872, %v2868
    %v3673 = vpack.c.b16 %v2877, %v2873
    %v3674 = vpack.c.b16 %v2878, %v2874
    %v3675 = vpack.c.b16 %v2879, %v2875
    %v3676 = vpack.c.b16 %v2880, %v2876
    %v3677 = vpack.c.b16 %v2885, %v2881
    %v3678 = vpack.c.b16 %v2886, %v2882
    %v3679 = vpack.c.b16 %v2887, %v2883
    %v3680 = vpack.c.b16 %v2888, %v2884
    %v3681 = vpack.c.b16 %v2893, %v2889
    %v3682 = vpack.c.b16 %v2894, %v2890
    %v3683 = vpack.c.b16 %v2895, %v2891
    %v3684 = vpack.c.b16 %v2896, %v2892
    %v3685 = vpack.c.b16 %v2901, %v2897
    %v3686 = vpack.c.b16 %v2902, %v2898
    %v3687 = vpack.c.b16 %v2903, %v2899
    %v3688 = vpack.c.b16 %v2904, %v2900
    %v3689 = vpack.c.b16 %v2909, %v2905
    %v3690 = vpack.c.b16 %v2910, %v2906
    %v3691 = vpack.c.b16 %v2911, %v2907
    %v3692 = vpack.c.b16 %v2912, %v2908
    %v3693 = vpack.c.b16 %v2917, %v2913
    %v3694 = vpack.c.b16 %v2918, %v2914
    %v3695 = vpack.c.b16 %v2919, %v2915
    %v3696 = vpack.c.b16 %v2920, %v2916
    %v3697 = vpack.c.b16 %v2925, %v2921
    %v3698 = vpack.c.b16 %v2926, %v2922
    %v3699 = vpack.c.b16 %v2927, %v2923
    %v3700 = vpack.c.b16 %v2928, %v2924
    %v3701 = vpack.c.b16 %v2933, %v2929
    %v3702 = vpack.c.b16 %v2934, %v2930
    %v3703 = vpack.c.b16 %v2935, %v2931
    %v3704 = vpack.c.b16 %v2936, %v2932
    %v3705 = vpack.c.b16 %v2941, %v2937
    %v3706 = vpack.c.b16 %v2942, %v2938
    %v3707 = vpack.c.b16 %v2943, %v2939
    %v3708 = vpack.c.b16 %v2944, %v2940
    %v3709 = vpack.c.b16 %v2949, %v2945
    %v3710 = vpack.c.b16 %v2950, %v2946
    %v3711 = vpack.c.b16 %v2951, %v2947
    %v3712 = vpack.c.b16 %v2952, %v2948
    %v3713 = vpack.c.b16 %v2957, %v2953
    %v3714 = vpack.c.b16 %v2958, %v2954
    %v3715 = vpack.c.b16 %v2959, %v2955
    %v3716 = vpack.c.b16 %v2960, %v2956
    %v3717 = vpack.c.b16 %v2965, %v2961
    %v3718 = vpack.c.b16 %v2966, %v2962
    %v3719 = vpack.c.b16 %v2967, %v2963
    %v3720 = vpack.c.b16 %v2968, %v2964
    %v3721 = vpack.c.b16 %v2973, %v2969
    %v3722 = vpack.c.b16 %v2974, %v2970
    %v3723 = vpack.c.b16 %v2975, %v2971
    %v3724 = vpack.c.b16 %v2976, %v2972
    %v3725 = vpack.c.b16 %v2981, %v2977
    %v3726 = vpack.c.b16 %v2982, %v2978
    %v3727 = vpack.c.b16 %v2983, %v2979
    %v3728 = vpack.c.b16 %v2984, %v2980
    %v3729 = vpack.c.b16 %v2989, %v2985
    %v3730 = vpack.c.b16 %v2990, %v2986
    %v3731 = vpack.c.b16 %v2991, %v2987
    %v3732 = vpack.c.b16 %v2992, %v2988
    %v3733 = vpack.c.b16 %v2997, %v2993
    %v3734 = vpack.c.b16 %v2998, %v2994
    %v3735 = vpack.c.b16 %v2999, %v2995
    %v3736 = vpack.c.b16 %v3000, %v2996
    %v3737 = vpack.c.b16 %v3005, %v3001
    %v3738 = vpack.c.b16 %v3006, %v3002
    %v3739 = vpack.c.b16 %v3007, %v3003
    %v3740 = vpack.c.b16 %v3008, %v3004
    %v3741 = vpack.c.b16 %v3013, %v3009
    %v3742 = vpack.c.b16 %v3014, %v3010
    %v3743 = vpack.c.b16 %v3015, %v3011
    %v3744 = vpack.c.b16 %v3016, %v3012
    %v3745 = vpack.c.b16 %v3021, %v3017
    %v3746 = vpack.c.b16 %v3022, %v3018
    %v3747 = vpack.c.b16 %v3023, %v3019
    %v3748 = vpack.c.b16 %v3024, %v3020
    %v3749 = vpack.c.b16 %v3029, %v3025
    %v3750 = vpack.c.b16 %v3030, %v3026
    %v3751 = vpack.c.b16 %v3031, %v3027
    %v3752 = vpack.c.b16 %v3032, %v3028
    %v3753 = vpack.c.b16 %v3037, %v3033
    %v3754 = vpack.c.b16 %v3038, %v3034
    %v3755 = vpack.c.b16 %v3039, %v3035
    %v3756 = vpack.c.b16 %v3040, %v3036
    %v3757 = vpack.c.b16 %v3045, %v3041
    %v3758 = vpack.c.b16 %v3046, %v3042
    %v3759 = vpack.c.b16 %v3047, %v3043
    %v3760 = vpack.c.b16 %v3048, %v3044
    %v3761 = vpack.c.b16 %v3053, %v3049
    %v3762 = vpack.c.b16 %v3054, %v3050
    %v3763 = vpack.c.b16 %v3055, %v3051
    %v3764 = vpack.c.b16 %v3056, %v3052
    %v3765 = vpack.c.b16 %v3061, %v3057
    %v3766 = vpack.c.b16 %v3062, %v3058
    %v3767 = vpack.c.b16 %v3063, %v3059
    %v3768 = vpack.c.b16 %v3064, %v3060
    %v3769 = vpack.c.b16 %v3069, %v3065
    %v3770 = vpack.c.b16 %v3070, %v3066
    %v3771 = vpack.c.b16 %v3071, %v3067
    %v3772 = vpack.c.b16 %v3072, %v3068
    %vm4473 = vcmask 916480
    %v4475 = vsel %vm4473, %v951, 0
    %4477 = vmatpush.bf16.msra.mxu0 %v3101
    %4478 = vmatpush.bf16.msra.mxu0 %v3097
    %4479 = vmatpush.bf16.msra.mxu0 %v3093
    %4480 = vmatpush.bf16.msra.mxu0 %v3089
    %4481 = vmatpush.bf16.msra.mxu0 %v3085
    %4482 = vmatpush.bf16.msra.mxu0 %v3081
    %4483 = vmatpush.bf16.msra.mxu0 %v3077
    %4484 = vmatpush.bf16.msra.mxu0 %v3073
    %4485 = vmatmul.bf16.gmra.mxu0 %v930
    %v4486 = vpop.f32.mrf.mxu0
    %v4487 = vadd.f32 %v889, %v4486
    %v4488 = vpop.f32.mrf.mxu0
    %4489 = vdwg.mxu0
    %4490 = vmatpush.bf16.msra.mxu0 %v3133
    %4491 = vmatpush.bf16.msra.mxu0 %v3129
    %4492 = vmatpush.bf16.msra.mxu0 %v3125
    %4493 = vmatpush.bf16.msra.mxu0 %v3121
    %4494 = vmatpush.bf16.msra.mxu0 %v3117
    %4495 = vmatpush.bf16.msra.mxu0 %v3113
    %4496 = vmatpush.bf16.msra.mxu0 %v3109
    %4497 = vmatpush.bf16.msra.mxu0 %v3105
    %4498 = vmatmul.bf16.gmra.mxu0 %v931
    %v4499 = vpop.f32.mrf.mxu0
    %v4500 = vadd.f32 %v4487, %v4499
    %v4501 = vpop.f32.mrf.mxu0
    %4502 = vdwg.mxu0
    %4503 = vmatpush.bf16.msra.mxu0 %v3165
    %4504 = vmatpush.bf16.msra.mxu0 %v3161
    %4505 = vmatpush.bf16.msra.mxu0 %v3157
    %4506 = vmatpush.bf16.msra.mxu0 %v3153
    %4507 = vmatpush.bf16.msra.mxu0 %v3149
    %4508 = vmatpush.bf16.msra.mxu0 %v3145
    %4509 = vmatpush.bf16.msra.mxu0 %v3141
    %4510 = vmatpush.bf16.msra.mxu0 %v3137
    %4511 = vmatmul.bf16.gmra.mxu0 %v932
    %v4512 = vpop.f32.mrf.mxu0
    %v4513 = vadd.f32 %v4500, %v4512
    %v4514 = vpop.f32.mrf.mxu0
    %4515 = vdwg.mxu0
    %4516 = vmatpush.bf16.msra.mxu0 %v3197
    %4517 = vmatpush.bf16.msra.mxu0 %v3193
    %4518 = vmatpush.bf16.msra.mxu0 %v3189
    %4519 = vmatpush.bf16.msra.mxu0 %v3185
    %4520 = vmatpush.bf16.msra.mxu0 %v3181
    %4521 = vmatpush.bf16.msra.mxu0 %v3177
    %4522 = vmatpush.bf16.msra.mxu0 %v3173
    %4523 = vmatpush.bf16.msra.mxu0 %v3169
    %4524 = vmatmul.bf16.gmra.mxu0 %v933
    %v4525 = vpop.f32.mrf.mxu0
    %v4526 = vadd.f32 %v4513, %v4525
    %v4527 = vpop.f32.mrf.mxu0
    %4528 = vdwg.mxu0
    %4529 = vmatpush.bf16.msra.mxu0 %v3229
    %4530 = vmatpush.bf16.msra.mxu0 %v3225
    %4531 = vmatpush.bf16.msra.mxu0 %v3221
    %4532 = vmatpush.bf16.msra.mxu0 %v3217
    %4533 = vmatpush.bf16.msra.mxu0 %v3213
    %4534 = vmatpush.bf16.msra.mxu0 %v3209
    %4535 = vmatpush.bf16.msra.mxu0 %v3205
    %4536 = vmatpush.bf16.msra.mxu0 %v3201
    %4537 = vmatmul.bf16.gmra.mxu0 %v934
    %v4538 = vpop.f32.mrf.mxu0
    %v4539 = vadd.f32 %v4526, %v4538
    %v4540 = vpop.f32.mrf.mxu0
    %4541 = vdwg.mxu0
    %4542 = vmatpush.bf16.msra.mxu0 %v3261
    %4543 = vmatpush.bf16.msra.mxu0 %v3257
    %4544 = vmatpush.bf16.msra.mxu0 %v3253
    %4545 = vmatpush.bf16.msra.mxu0 %v3249
    %4546 = vmatpush.bf16.msra.mxu0 %v3245
    %4547 = vmatpush.bf16.msra.mxu0 %v3241
    %4548 = vmatpush.bf16.msra.mxu0 %v3237
    %4549 = vmatpush.bf16.msra.mxu0 %v3233
    %4550 = vmatmul.bf16.gmra.mxu0 %v935
    %v4551 = vpop.f32.mrf.mxu0
    %v4552 = vadd.f32 %v4539, %v4551
    %v4553 = vpop.f32.mrf.mxu0
    %4554 = vdwg.mxu0
    %4555 = vmatpush.bf16.msra.mxu0 %v3293
    %4556 = vmatpush.bf16.msra.mxu0 %v3289
    %4557 = vmatpush.bf16.msra.mxu0 %v3285
    %4558 = vmatpush.bf16.msra.mxu0 %v3281
    %4559 = vmatpush.bf16.msra.mxu0 %v3277
    %4560 = vmatpush.bf16.msra.mxu0 %v3273
    %4561 = vmatpush.bf16.msra.mxu0 %v3269
    %4562 = vmatpush.bf16.msra.mxu0 %v3265
    %4563 = vmatmul.bf16.gmra.mxu0 %v936
    %v4564 = vpop.f32.mrf.mxu0
    %v4565 = vadd.f32 %v4552, %v4564
    %v4566 = vpop.f32.mrf.mxu0
    %4567 = vdwg.mxu0
    %4568 = vmatpush.bf16.msra.mxu0 %v3325
    %4569 = vmatpush.bf16.msra.mxu0 %v3321
    %4570 = vmatpush.bf16.msra.mxu0 %v3317
    %4571 = vmatpush.bf16.msra.mxu0 %v3313
    %4572 = vmatpush.bf16.msra.mxu0 %v3309
    %4573 = vmatpush.bf16.msra.mxu0 %v3305
    %4574 = vmatpush.bf16.msra.mxu0 %v3301
    %4575 = vmatpush.bf16.msra.mxu0 %v3297
    %4576 = vmatmul.bf16.gmra.mxu0 %v937
    %v4577 = vpop.f32.mrf.mxu0
    %v4578 = vadd.f32 %v4565, %v4577
    %v4579 = vpop.f32.mrf.mxu0
    %4580 = vdwg.mxu0
    %4581 = vmatpush.bf16.msra.mxu0 %v3357
    %4582 = vmatpush.bf16.msra.mxu0 %v3353
    %4583 = vmatpush.bf16.msra.mxu0 %v3349
    %4584 = vmatpush.bf16.msra.mxu0 %v3345
    %4585 = vmatpush.bf16.msra.mxu0 %v3341
    %4586 = vmatpush.bf16.msra.mxu0 %v3337
    %4587 = vmatpush.bf16.msra.mxu0 %v3333
    %4588 = vmatpush.bf16.msra.mxu0 %v3329
    %4589 = vmatmul.bf16.gmra.mxu0 %v938
    %v4590 = vpop.f32.mrf.mxu0
    %v4591 = vadd.f32 %v4578, %v4590
    %v4592 = vpop.f32.mrf.mxu0
    %4593 = vdwg.mxu0
    %4594 = vmatpush.bf16.msra.mxu0 %v3389
    %4595 = vmatpush.bf16.msra.mxu0 %v3385
    %4596 = vmatpush.bf16.msra.mxu0 %v3381
    %4597 = vmatpush.bf16.msra.mxu0 %v3377
    %4598 = vmatpush.bf16.msra.mxu0 %v3373
    %4599 = vmatpush.bf16.msra.mxu0 %v3369
    %4600 = vmatpush.bf16.msra.mxu0 %v3365
    %4601 = vmatpush.bf16.msra.mxu0 %v3361
    %4602 = vmatmul.bf16.gmra.mxu0 %v939
    %v4603 = vpop.f32.mrf.mxu0
    %v4604 = vadd.f32 %v4591, %v4603
    %v4605 = vpop.f32.mrf.mxu0
    %4606 = vdwg.mxu0
    %4607 = vmatpush.bf16.msra.mxu0 %v3421
    %4608 = vmatpush.bf16.msra.mxu0 %v3417
    %4609 = vmatpush.bf16.msra.mxu0 %v3413
    %4610 = vmatpush.bf16.msra.mxu0 %v3409
    %4611 = vmatpush.bf16.msra.mxu0 %v3405
    %4612 = vmatpush.bf16.msra.mxu0 %v3401
    %4613 = vmatpush.bf16.msra.mxu0 %v3397
    %4614 = vmatpush.bf16.msra.mxu0 %v3393
    %4615 = vmatmul.bf16.gmra.mxu0 %v940
    %v4616 = vpop.f32.mrf.mxu0
    %v4617 = vadd.f32 %v4604, %v4616
    %v4618 = vpop.f32.mrf.mxu0
    %4619 = vdwg.mxu0
    %4620 = vmatpush.bf16.msra.mxu0 %v3453
    %4621 = vmatpush.bf16.msra.mxu0 %v3449
    %4622 = vmatpush.bf16.msra.mxu0 %v3445
    %4623 = vmatpush.bf16.msra.mxu0 %v3441
    %4624 = vmatpush.bf16.msra.mxu0 %v3437
    %4625 = vmatpush.bf16.msra.mxu0 %v3433
    %4626 = vmatpush.bf16.msra.mxu0 %v3429
    %4627 = vmatpush.bf16.msra.mxu0 %v3425
    %4628 = vmatmul.bf16.gmra.mxu0 %v941
    %v4629 = vpop.f32.mrf.mxu0
    %v4630 = vadd.f32 %v4617, %v4629
    %v4631 = vpop.f32.mrf.mxu0
    %4632 = vdwg.mxu0
    %4633 = vmatpush.bf16.msra.mxu0 %v3485
    %4634 = vmatpush.bf16.msra.mxu0 %v3481
    %4635 = vmatpush.bf16.msra.mxu0 %v3477
    %4636 = vmatpush.bf16.msra.mxu0 %v3473
    %4637 = vmatpush.bf16.msra.mxu0 %v3469
    %4638 = vmatpush.bf16.msra.mxu0 %v3465
    %4639 = vmatpush.bf16.msra.mxu0 %v3461
    %4640 = vmatpush.bf16.msra.mxu0 %v3457
    %4641 = vmatmul.bf16.gmra.mxu0 %v942
    %v4642 = vpop.f32.mrf.mxu0
    %v4643 = vadd.f32 %v4630, %v4642
    %v4644 = vpop.f32.mrf.mxu0
    %4645 = vdwg.mxu0
    %4646 = vmatpush.bf16.msra.mxu0 %v3517
    %4647 = vmatpush.bf16.msra.mxu0 %v3513
    %4648 = vmatpush.bf16.msra.mxu0 %v3509
    %4649 = vmatpush.bf16.msra.mxu0 %v3505
    %4650 = vmatpush.bf16.msra.mxu0 %v3501
    %4651 = vmatpush.bf16.msra.mxu0 %v3497
    %4652 = vmatpush.bf16.msra.mxu0 %v3493
    %4653 = vmatpush.bf16.msra.mxu0 %v3489
    %4654 = vmatmul.bf16.gmra.mxu0 %v943
    %v4655 = vpop.f32.mrf.mxu0
    %v4656 = vadd.f32 %v4643, %v4655
    %v4657 = vpop.f32.mrf.mxu0
    %4658 = vdwg.mxu0
    %4659 = vmatpush.bf16.msra.mxu0 %v3549
    %4660 = vmatpush.bf16.msra.mxu0 %v3545
    %4661 = vmatpush.bf16.msra.mxu0 %v3541
    %4662 = vmatpush.bf16.msra.mxu0 %v3537
    %4663 = vmatpush.bf16.msra.mxu0 %v3533
    %4664 = vmatpush.bf16.msra.mxu0 %v3529
    %4665 = vmatpush.bf16.msra.mxu0 %v3525
    %4666 = vmatpush.bf16.msra.mxu0 %v3521
    %4667 = vmatmul.bf16.gmra.mxu0 %v944
    %v4668 = vpop.f32.mrf.mxu0
    %v4669 = vadd.f32 %v4656, %v4668
    %v4670 = vpop.f32.mrf.mxu0
    %4671 = vdwg.mxu0
    %4672 = vmatpush.bf16.msra.mxu0 %v3581
    %4673 = vmatpush.bf16.msra.mxu0 %v3577
    %4674 = vmatpush.bf16.msra.mxu0 %v3573
    %4675 = vmatpush.bf16.msra.mxu0 %v3569
    %4676 = vmatpush.bf16.msra.mxu0 %v3565
    %4677 = vmatpush.bf16.msra.mxu0 %v3561
    %4678 = vmatpush.bf16.msra.mxu0 %v3557
    %4679 = vmatpush.bf16.msra.mxu0 %v3553
    %4680 = vmatmul.bf16.gmra.mxu0 %v945
    %v4681 = vpop.f32.mrf.mxu0
    %v4682 = vadd.f32 %v4669, %v4681
    %v4683 = vpop.f32.mrf.mxu0
    %4684 = vdwg.mxu0
    %4685 = vmatpush.bf16.msra.mxu0 %v3613
    %4686 = vmatpush.bf16.msra.mxu0 %v3609
    %4687 = vmatpush.bf16.msra.mxu0 %v3605
    %4688 = vmatpush.bf16.msra.mxu0 %v3601
    %4689 = vmatpush.bf16.msra.mxu0 %v3597
    %4690 = vmatpush.bf16.msra.mxu0 %v3593
    %4691 = vmatpush.bf16.msra.mxu0 %v3589
    %4692 = vmatpush.bf16.msra.mxu0 %v3585
    %4693 = vmatmul.bf16.gmra.mxu0 %v946
    %v4694 = vpop.f32.mrf.mxu0
    %v4695 = vadd.f32 %v4682, %v4694
    %v4696 = vpop.f32.mrf.mxu0
    %4697 = vdwg.mxu0
    %4698 = vmatpush.bf16.msra.mxu0 %v3645
    %4699 = vmatpush.bf16.msra.mxu0 %v3641
    %4700 = vmatpush.bf16.msra.mxu0 %v3637
    %4701 = vmatpush.bf16.msra.mxu0 %v3633
    %4702 = vmatpush.bf16.msra.mxu0 %v3629
    %4703 = vmatpush.bf16.msra.mxu0 %v3625
    %4704 = vmatpush.bf16.msra.mxu0 %v3621
    %4705 = vmatpush.bf16.msra.mxu0 %v3617
    %4706 = vmatmul.bf16.gmra.mxu0 %v947
    %v4707 = vpop.f32.mrf.mxu0
    %v4708 = vadd.f32 %v4695, %v4707
    %v4709 = vpop.f32.mrf.mxu0
    %4710 = vdwg.mxu0
    %4711 = vmatpush.bf16.msra.mxu0 %v3677
    %4712 = vmatpush.bf16.msra.mxu0 %v3673
    %4713 = vmatpush.bf16.msra.mxu0 %v3669
    %4714 = vmatpush.bf16.msra.mxu0 %v3665
    %4715 = vmatpush.bf16.msra.mxu0 %v3661
    %4716 = vmatpush.bf16.msra.mxu0 %v3657
    %4717 = vmatpush.bf16.msra.mxu0 %v3653
    %4718 = vmatpush.bf16.msra.mxu0 %v3649
    %4719 = vmatmul.bf16.gmra.mxu0 %v948
    %v4720 = vpop.f32.mrf.mxu0
    %v4721 = vadd.f32 %v4708, %v4720
    %v4722 = vpop.f32.mrf.mxu0
    %4723 = vdwg.mxu0
    %4724 = vmatpush.bf16.msra.mxu0 %v3709
    %4725 = vmatpush.bf16.msra.mxu0 %v3705
    %4726 = vmatpush.bf16.msra.mxu0 %v3701
    %4727 = vmatpush.bf16.msra.mxu0 %v3697
    %4728 = vmatpush.bf16.msra.mxu0 %v3693
    %4729 = vmatpush.bf16.msra.mxu0 %v3689
    %4730 = vmatpush.bf16.msra.mxu0 %v3685
    %4731 = vmatpush.bf16.msra.mxu0 %v3681
    %4732 = vmatmul.bf16.gmra.mxu0 %v949
    %v4733 = vpop.f32.mrf.mxu0
    %v4734 = vadd.f32 %v4721, %v4733
    %v4735 = vpop.f32.mrf.mxu0
    %4736 = vdwg.mxu0
    %4737 = vmatpush.bf16.msra.mxu0 %v3741
    %4738 = vmatpush.bf16.msra.mxu0 %v3737
    %4739 = vmatpush.bf16.msra.mxu0 %v3733
    %4740 = vmatpush.bf16.msra.mxu0 %v3729
    %4741 = vmatpush.bf16.msra.mxu0 %v3725
    %4742 = vmatpush.bf16.msra.mxu0 %v3721
    %4743 = vmatpush.bf16.msra.mxu0 %v3717
    %4744 = vmatpush.bf16.msra.mxu0 %v3713
    %4745 = vmatmul.bf16.gmra.mxu0 %v950
    %v4746 = vpop.f32.mrf.mxu0
    %v4747 = vadd.f32 %v4734, %v4746
    %v4748 = vpop.f32.mrf.mxu0
    %4749 = vdwg.mxu0
    %4750 = vmatpush.bf16.msra.mxu0 0
    %4751 = vmatpush.bf16.msra.mxu0 %v3769
    %4752 = vmatpush.bf16.msra.mxu0 %v3765
    %4753 = vmatpush.bf16.msra.mxu0 %v3761
    %4754 = vmatpush.bf16.msra.mxu0 %v3757
    %4755 = vmatpush.bf16.msra.mxu0 %v3753
    %4756 = vmatpush.bf16.msra.mxu0 %v3749
    %4757 = vmatpush.bf16.msra.mxu0 %v3745
    %4758 = vmatmul.bf16.gmra.mxu0 %v4475
    %v4759 = vpop.f32.mrf.mxu0
    %v4760 = vadd.f32 %v4747, %v4759
    %v4761 = vpop.f32.mrf.mxu0
    %4762 = vdwg.mxu0
    %4763 = vmatpush.bf16.msra.mxu0 %v3102
    %4764 = vmatpush.bf16.msra.mxu0 %v3098
    %4765 = vmatpush.bf16.msra.mxu0 %v3094
    %4766 = vmatpush.bf16.msra.mxu0 %v3090
    %4767 = vmatpush.bf16.msra.mxu0 %v3086
    %4768 = vmatpush.bf16.msra.mxu0 %v3082
    %4769 = vmatpush.bf16.msra.mxu0 %v3078
    %4770 = vmatpush.bf16.msra.mxu0 %v3074
    %4771 = vmatmul.bf16.gmra.mxu0 %v930
    %v4772 = vpop.f32.mrf.mxu0
    %v4773 = vadd.f32 %v890, %v4772
    %v4774 = vpop.f32.mrf.mxu0
    %4775 = vdwg.mxu0
    %4776 = vmatpush.bf16.msra.mxu0 %v3134
    %4777 = vmatpush.bf16.msra.mxu0 %v3130
    %4778 = vmatpush.bf16.msra.mxu0 %v3126
    %4779 = vmatpush.bf16.msra.mxu0 %v3122
    %4780 = vmatpush.bf16.msra.mxu0 %v3118
    %4781 = vmatpush.bf16.msra.mxu0 %v3114
    %4782 = vmatpush.bf16.msra.mxu0 %v3110
    %4783 = vmatpush.bf16.msra.mxu0 %v3106
    %4784 = vmatmul.bf16.gmra.mxu0 %v931
    %v4785 = vpop.f32.mrf.mxu0
    %v4786 = vadd.f32 %v4773, %v4785
    %v4787 = vpop.f32.mrf.mxu0
    %4788 = vdwg.mxu0
    %4789 = vmatpush.bf16.msra.mxu0 %v3166
    %4790 = vmatpush.bf16.msra.mxu0 %v3162
    %4791 = vmatpush.bf16.msra.mxu0 %v3158
    %4792 = vmatpush.bf16.msra.mxu0 %v3154
    %4793 = vmatpush.bf16.msra.mxu0 %v3150
    %4794 = vmatpush.bf16.msra.mxu0 %v3146
    %4795 = vmatpush.bf16.msra.mxu0 %v3142
    %4796 = vmatpush.bf16.msra.mxu0 %v3138
    %4797 = vmatmul.bf16.gmra.mxu0 %v932
    %v4798 = vpop.f32.mrf.mxu0
    %v4799 = vadd.f32 %v4786, %v4798
    %v4800 = vpop.f32.mrf.mxu0
    %4801 = vdwg.mxu0
    %4802 = vmatpush.bf16.msra.mxu0 %v3198
    %4803 = vmatpush.bf16.msra.mxu0 %v3194
    %4804 = vmatpush.bf16.msra.mxu0 %v3190
    %4805 = vmatpush.bf16.msra.mxu0 %v3186
    %4806 = vmatpush.bf16.msra.mxu0 %v3182
    %4807 = vmatpush.bf16.msra.mxu0 %v3178
    %4808 = vmatpush.bf16.msra.mxu0 %v3174
    %4809 = vmatpush.bf16.msra.mxu0 %v3170
    %4810 = vmatmul.bf16.gmra.mxu0 %v933
    %v4811 = vpop.f32.mrf.mxu0
    %v4812 = vadd.f32 %v4799, %v4811
    %v4813 = vpop.f32.mrf.mxu0
    %4814 = vdwg.mxu0
    %4815 = vmatpush.bf16.msra.mxu0 %v3230
    %4816 = vmatpush.bf16.msra.mxu0 %v3226
    %4817 = vmatpush.bf16.msra.mxu0 %v3222
    %4818 = vmatpush.bf16.msra.mxu0 %v3218
    %4819 = vmatpush.bf16.msra.mxu0 %v3214
    %4820 = vmatpush.bf16.msra.mxu0 %v3210
    %4821 = vmatpush.bf16.msra.mxu0 %v3206
    %4822 = vmatpush.bf16.msra.mxu0 %v3202
    %4823 = vmatmul.bf16.gmra.mxu0 %v934
    %v4824 = vpop.f32.mrf.mxu0
    %v4825 = vadd.f32 %v4812, %v4824
    %v4826 = vpop.f32.mrf.mxu0
    %4827 = vdwg.mxu0
    %4828 = vmatpush.bf16.msra.mxu0 %v3262
    %4829 = vmatpush.bf16.msra.mxu0 %v3258
    %4830 = vmatpush.bf16.msra.mxu0 %v3254
    %4831 = vmatpush.bf16.msra.mxu0 %v3250
    %4832 = vmatpush.bf16.msra.mxu0 %v3246
    %4833 = vmatpush.bf16.msra.mxu0 %v3242
    %4834 = vmatpush.bf16.msra.mxu0 %v3238
    %4835 = vmatpush.bf16.msra.mxu0 %v3234
    %4836 = vmatmul.bf16.gmra.mxu0 %v935
    %v4837 = vpop.f32.mrf.mxu0
    %v4838 = vadd.f32 %v4825, %v4837
    %v4839 = vpop.f32.mrf.mxu0
    %4840 = vdwg.mxu0
    %4841 = vmatpush.bf16.msra.mxu0 %v3294
    %4842 = vmatpush.bf16.msra.mxu0 %v3290
    %4843 = vmatpush.bf16.msra.mxu0 %v3286
    %4844 = vmatpush.bf16.msra.mxu0 %v3282
    %4845 = vmatpush.bf16.msra.mxu0 %v3278
    %4846 = vmatpush.bf16.msra.mxu0 %v3274
    %4847 = vmatpush.bf16.msra.mxu0 %v3270
    %4848 = vmatpush.bf16.msra.mxu0 %v3266
    %4849 = vmatmul.bf16.gmra.mxu0 %v936
    %v4850 = vpop.f32.mrf.mxu0
    %v4851 = vadd.f32 %v4838, %v4850
    %v4852 = vpop.f32.mrf.mxu0
    %4853 = vdwg.mxu0
    %4854 = vmatpush.bf16.msra.mxu0 %v3326
    %4855 = vmatpush.bf16.msra.mxu0 %v3322
    %4856 = vmatpush.bf16.msra.mxu0 %v3318
    %4857 = vmatpush.bf16.msra.mxu0 %v3314
    %4858 = vmatpush.bf16.msra.mxu0 %v3310
    %4859 = vmatpush.bf16.msra.mxu0 %v3306
    %4860 = vmatpush.bf16.msra.mxu0 %v3302
    %4861 = vmatpush.bf16.msra.mxu0 %v3298
    %4862 = vmatmul.bf16.gmra.mxu0 %v937
    %v4863 = vpop.f32.mrf.mxu0
    %v4864 = vadd.f32 %v4851, %v4863
    %v4865 = vpop.f32.mrf.mxu0
    %4866 = vdwg.mxu0
    %4867 = vmatpush.bf16.msra.mxu0 %v3358
    %4868 = vmatpush.bf16.msra.mxu0 %v3354
    %4869 = vmatpush.bf16.msra.mxu0 %v3350
    %4870 = vmatpush.bf16.msra.mxu0 %v3346
    %4871 = vmatpush.bf16.msra.mxu0 %v3342
    %4872 = vmatpush.bf16.msra.mxu0 %v3338
    %4873 = vmatpush.bf16.msra.mxu0 %v3334
    %4874 = vmatpush.bf16.msra.mxu0 %v3330
    %4875 = vmatmul.bf16.gmra.mxu0 %v938
    %v4876 = vpop.f32.mrf.mxu0
    %v4877 = vadd.f32 %v4864, %v4876
    %v4878 = vpop.f32.mrf.mxu0
    %4879 = vdwg.mxu0
    %4880 = vmatpush.bf16.msra.mxu0 %v3390
    %4881 = vmatpush.bf16.msra.mxu0 %v3386
    %4882 = vmatpush.bf16.msra.mxu0 %v3382
    %4883 = vmatpush.bf16.msra.mxu0 %v3378
    %4884 = vmatpush.bf16.msra.mxu0 %v3374
    %4885 = vmatpush.bf16.msra.mxu0 %v3370
    %4886 = vmatpush.bf16.msra.mxu0 %v3366
    %4887 = vmatpush.bf16.msra.mxu0 %v3362
    %4888 = vmatmul.bf16.gmra.mxu0 %v939
    %v4889 = vpop.f32.mrf.mxu0
    %v4890 = vadd.f32 %v4877, %v4889
    %v4891 = vpop.f32.mrf.mxu0
    %4892 = vdwg.mxu0
    %4893 = vmatpush.bf16.msra.mxu0 %v3422
    %4894 = vmatpush.bf16.msra.mxu0 %v3418
    %4895 = vmatpush.bf16.msra.mxu0 %v3414
    %4896 = vmatpush.bf16.msra.mxu0 %v3410
    %4897 = vmatpush.bf16.msra.mxu0 %v3406
    %4898 = vmatpush.bf16.msra.mxu0 %v3402
    %4899 = vmatpush.bf16.msra.mxu0 %v3398
    %4900 = vmatpush.bf16.msra.mxu0 %v3394
    %4901 = vmatmul.bf16.gmra.mxu0 %v940
    %v4902 = vpop.f32.mrf.mxu0
    %v4903 = vadd.f32 %v4890, %v4902
    %v4904 = vpop.f32.mrf.mxu0
    %4905 = vdwg.mxu0
    %4906 = vmatpush.bf16.msra.mxu0 %v3454
    %4907 = vmatpush.bf16.msra.mxu0 %v3450
    %4908 = vmatpush.bf16.msra.mxu0 %v3446
    %4909 = vmatpush.bf16.msra.mxu0 %v3442
    %4910 = vmatpush.bf16.msra.mxu0 %v3438
    %4911 = vmatpush.bf16.msra.mxu0 %v3434
    %4912 = vmatpush.bf16.msra.mxu0 %v3430
    %4913 = vmatpush.bf16.msra.mxu0 %v3426
    %4914 = vmatmul.bf16.gmra.mxu0 %v941
    %v4915 = vpop.f32.mrf.mxu0
    %v4916 = vadd.f32 %v4903, %v4915
    %v4917 = vpop.f32.mrf.mxu0
    %4918 = vdwg.mxu0
    %4919 = vmatpush.bf16.msra.mxu0 %v3486
    %4920 = vmatpush.bf16.msra.mxu0 %v3482
    %4921 = vmatpush.bf16.msra.mxu0 %v3478
    %4922 = vmatpush.bf16.msra.mxu0 %v3474
    %4923 = vmatpush.bf16.msra.mxu0 %v3470
    %4924 = vmatpush.bf16.msra.mxu0 %v3466
    %4925 = vmatpush.bf16.msra.mxu0 %v3462
    %4926 = vmatpush.bf16.msra.mxu0 %v3458
    %4927 = vmatmul.bf16.gmra.mxu0 %v942
    %v4928 = vpop.f32.mrf.mxu0
    %v4929 = vadd.f32 %v4916, %v4928
    %v4930 = vpop.f32.mrf.mxu0
    %4931 = vdwg.mxu0
    %4932 = vmatpush.bf16.msra.mxu0 %v3518
    %4933 = vmatpush.bf16.msra.mxu0 %v3514
    %4934 = vmatpush.bf16.msra.mxu0 %v3510
    %4935 = vmatpush.bf16.msra.mxu0 %v3506
    %4936 = vmatpush.bf16.msra.mxu0 %v3502
    %4937 = vmatpush.bf16.msra.mxu0 %v3498
    %4938 = vmatpush.bf16.msra.mxu0 %v3494
    %4939 = vmatpush.bf16.msra.mxu0 %v3490
    %4940 = vmatmul.bf16.gmra.mxu0 %v943
    %v4941 = vpop.f32.mrf.mxu0
    %v4942 = vadd.f32 %v4929, %v4941
    %v4943 = vpop.f32.mrf.mxu0
    %4944 = vdwg.mxu0
    %4945 = vmatpush.bf16.msra.mxu0 %v3550
    %4946 = vmatpush.bf16.msra.mxu0 %v3546
    %4947 = vmatpush.bf16.msra.mxu0 %v3542
    %4948 = vmatpush.bf16.msra.mxu0 %v3538
    %4949 = vmatpush.bf16.msra.mxu0 %v3534
    %4950 = vmatpush.bf16.msra.mxu0 %v3530
    %4951 = vmatpush.bf16.msra.mxu0 %v3526
    %4952 = vmatpush.bf16.msra.mxu0 %v3522
    %4953 = vmatmul.bf16.gmra.mxu0 %v944
    %v4954 = vpop.f32.mrf.mxu0
    %v4955 = vadd.f32 %v4942, %v4954
    %v4956 = vpop.f32.mrf.mxu0
    %4957 = vdwg.mxu0
    %4958 = vmatpush.bf16.msra.mxu0 %v3582
    %4959 = vmatpush.bf16.msra.mxu0 %v3578
    %4960 = vmatpush.bf16.msra.mxu0 %v3574
    %4961 = vmatpush.bf16.msra.mxu0 %v3570
    %4962 = vmatpush.bf16.msra.mxu0 %v3566
    %4963 = vmatpush.bf16.msra.mxu0 %v3562
    %4964 = vmatpush.bf16.msra.mxu0 %v3558
    %4965 = vmatpush.bf16.msra.mxu0 %v3554
    %4966 = vmatmul.bf16.gmra.mxu0 %v945
    %v4967 = vpop.f32.mrf.mxu0
    %v4968 = vadd.f32 %v4955, %v4967
    %v4969 = vpop.f32.mrf.mxu0
    %4970 = vdwg.mxu0
    %4971 = vmatpush.bf16.msra.mxu0 %v3614
    %4972 = vmatpush.bf16.msra.mxu0 %v3610
    %4973 = vmatpush.bf16.msra.mxu0 %v3606
    %4974 = vmatpush.bf16.msra.mxu0 %v3602
    %4975 = vmatpush.bf16.msra.mxu0 %v3598
    %4976 = vmatpush.bf16.msra.mxu0 %v3594
    %4977 = vmatpush.bf16.msra.mxu0 %v3590
    %4978 = vmatpush.bf16.msra.mxu0 %v3586
    %4979 = vmatmul.bf16.gmra.mxu0 %v946
    %v4980 = vpop.f32.mrf.mxu0
    %v4981 = vadd.f32 %v4968, %v4980
    %v4982 = vpop.f32.mrf.mxu0
    %4983 = vdwg.mxu0
    %4984 = vmatpush.bf16.msra.mxu0 %v3646
    %4985 = vmatpush.bf16.msra.mxu0 %v3642
    %4986 = vmatpush.bf16.msra.mxu0 %v3638
    %4987 = vmatpush.bf16.msra.mxu0 %v3634
    %4988 = vmatpush.bf16.msra.mxu0 %v3630
    %4989 = vmatpush.bf16.msra.mxu0 %v3626
    %4990 = vmatpush.bf16.msra.mxu0 %v3622
    %4991 = vmatpush.bf16.msra.mxu0 %v3618
    %4992 = vmatmul.bf16.gmra.mxu0 %v947
    %v4993 = vpop.f32.mrf.mxu0
    %v4994 = vadd.f32 %v4981, %v4993
    %v4995 = vpop.f32.mrf.mxu0
    %4996 = vdwg.mxu0
    %4997 = vmatpush.bf16.msra.mxu0 %v3678
    %4998 = vmatpush.bf16.msra.mxu0 %v3674
    %4999 = vmatpush.bf16.msra.mxu0 %v3670
    %5000 = vmatpush.bf16.msra.mxu0 %v3666
    %5001 = vmatpush.bf16.msra.mxu0 %v3662
    %5002 = vmatpush.bf16.msra.mxu0 %v3658
    %5003 = vmatpush.bf16.msra.mxu0 %v3654
    %5004 = vmatpush.bf16.msra.mxu0 %v3650
    %5005 = vmatmul.bf16.gmra.mxu0 %v948
    %v5006 = vpop.f32.mrf.mxu0
    %v5007 = vadd.f32 %v4994, %v5006
    %v5008 = vpop.f32.mrf.mxu0
    %5009 = vdwg.mxu0
    %5010 = vmatpush.bf16.msra.mxu0 %v3710
    %5011 = vmatpush.bf16.msra.mxu0 %v3706
    %5012 = vmatpush.bf16.msra.mxu0 %v3702
    %5013 = vmatpush.bf16.msra.mxu0 %v3698
    %5014 = vmatpush.bf16.msra.mxu0 %v3694
    %5015 = vmatpush.bf16.msra.mxu0 %v3690
    %5016 = vmatpush.bf16.msra.mxu0 %v3686
    %5017 = vmatpush.bf16.msra.mxu0 %v3682
    %5018 = vmatmul.bf16.gmra.mxu0 %v949
    %v5019 = vpop.f32.mrf.mxu0
    %v5020 = vadd.f32 %v5007, %v5019
    %v5021 = vpop.f32.mrf.mxu0
    %5022 = vdwg.mxu0
    %5023 = vmatpush.bf16.msra.mxu0 %v3742
    %5024 = vmatpush.bf16.msra.mxu0 %v3738
    %5025 = vmatpush.bf16.msra.mxu0 %v3734
    %5026 = vmatpush.bf16.msra.mxu0 %v3730
    %5027 = vmatpush.bf16.msra.mxu0 %v3726
    %5028 = vmatpush.bf16.msra.mxu0 %v3722
    %5029 = vmatpush.bf16.msra.mxu0 %v3718
    %5030 = vmatpush.bf16.msra.mxu0 %v3714
    %5031 = vmatmul.bf16.gmra.mxu0 %v950
    %v5032 = vpop.f32.mrf.mxu0
    %v5033 = vadd.f32 %v5020, %v5032
    %v5034 = vpop.f32.mrf.mxu0
    %5035 = vdwg.mxu0
    %5036 = vmatpush.bf16.msra.mxu0 0
    %5037 = vmatpush.bf16.msra.mxu0 %v3770
    %5038 = vmatpush.bf16.msra.mxu0 %v3766
    %5039 = vmatpush.bf16.msra.mxu0 %v3762
    %5040 = vmatpush.bf16.msra.mxu0 %v3758
    %5041 = vmatpush.bf16.msra.mxu0 %v3754
    %5042 = vmatpush.bf16.msra.mxu0 %v3750
    %5043 = vmatpush.bf16.msra.mxu0 %v3746
    %5044 = vmatmul.bf16.gmra.mxu0 %v4475
    %v5045 = vpop.f32.mrf.mxu0
    %v5046 = vadd.f32 %v5033, %v5045
    %v5047 = vpop.f32.mrf.mxu0
    %5048 = vdwg.mxu0
    %5049 = vmatpush.bf16.msra.mxu0 %v3103
    %5050 = vmatpush.bf16.msra.mxu0 %v3099
    %5051 = vmatpush.bf16.msra.mxu0 %v3095
    %5052 = vmatpush.bf16.msra.mxu0 %v3091
    %5053 = vmatpush.bf16.msra.mxu0 %v3087
    %5054 = vmatpush.bf16.msra.mxu0 %v3083
    %5055 = vmatpush.bf16.msra.mxu0 %v3079
    %5056 = vmatpush.bf16.msra.mxu0 %v3075
    %5057 = vmatmul.bf16.gmra.mxu0 %v930
    %v5058 = vpop.f32.mrf.mxu0
    %v5059 = vadd.f32 %v891, %v5058
    %v5060 = vpop.f32.mrf.mxu0
    %5061 = vdwg.mxu0
    %5062 = vmatpush.bf16.msra.mxu0 %v3135
    %5063 = vmatpush.bf16.msra.mxu0 %v3131
    %5064 = vmatpush.bf16.msra.mxu0 %v3127
    %5065 = vmatpush.bf16.msra.mxu0 %v3123
    %5066 = vmatpush.bf16.msra.mxu0 %v3119
    %5067 = vmatpush.bf16.msra.mxu0 %v3115
    %5068 = vmatpush.bf16.msra.mxu0 %v3111
    %5069 = vmatpush.bf16.msra.mxu0 %v3107
    %5070 = vmatmul.bf16.gmra.mxu0 %v931
    %v5071 = vpop.f32.mrf.mxu0
    %v5072 = vadd.f32 %v5059, %v5071
    %v5073 = vpop.f32.mrf.mxu0
    %5074 = vdwg.mxu0
    %5075 = vmatpush.bf16.msra.mxu0 %v3167
    %5076 = vmatpush.bf16.msra.mxu0 %v3163
    %5077 = vmatpush.bf16.msra.mxu0 %v3159
    %5078 = vmatpush.bf16.msra.mxu0 %v3155
    %5079 = vmatpush.bf16.msra.mxu0 %v3151
    %5080 = vmatpush.bf16.msra.mxu0 %v3147
    %5081 = vmatpush.bf16.msra.mxu0 %v3143
    %5082 = vmatpush.bf16.msra.mxu0 %v3139
    %5083 = vmatmul.bf16.gmra.mxu0 %v932
    %v5084 = vpop.f32.mrf.mxu0
    %v5085 = vadd.f32 %v5072, %v5084
    %v5086 = vpop.f32.mrf.mxu0
    %5087 = vdwg.mxu0
    %5088 = vmatpush.bf16.msra.mxu0 %v3199
    %5089 = vmatpush.bf16.msra.mxu0 %v3195
    %5090 = vmatpush.bf16.msra.mxu0 %v3191
    %5091 = vmatpush.bf16.msra.mxu0 %v3187
    %5092 = vmatpush.bf16.msra.mxu0 %v3183
    %5093 = vmatpush.bf16.msra.mxu0 %v3179
    %5094 = vmatpush.bf16.msra.mxu0 %v3175
    %5095 = vmatpush.bf16.msra.mxu0 %v3171
    %5096 = vmatmul.bf16.gmra.mxu0 %v933
    %v5097 = vpop.f32.mrf.mxu0
    %v5098 = vadd.f32 %v5085, %v5097
    %v5099 = vpop.f32.mrf.mxu0
    %5100 = vdwg.mxu0
    %5101 = vmatpush.bf16.msra.mxu0 %v3231
    %5102 = vmatpush.bf16.msra.mxu0 %v3227
    %5103 = vmatpush.bf16.msra.mxu0 %v3223
    %5104 = vmatpush.bf16.msra.mxu0 %v3219
    %5105 = vmatpush.bf16.msra.mxu0 %v3215
    %5106 = vmatpush.bf16.msra.mxu0 %v3211
    %5107 = vmatpush.bf16.msra.mxu0 %v3207
    %5108 = vmatpush.bf16.msra.mxu0 %v3203
    %5109 = vmatmul.bf16.gmra.mxu0 %v934
    %v5110 = vpop.f32.mrf.mxu0
    %v5111 = vadd.f32 %v5098, %v5110
    %v5112 = vpop.f32.mrf.mxu0
    %5113 = vdwg.mxu0
    %5114 = vmatpush.bf16.msra.mxu0 %v3263
    %5115 = vmatpush.bf16.msra.mxu0 %v3259
    %5116 = vmatpush.bf16.msra.mxu0 %v3255
    %5117 = vmatpush.bf16.msra.mxu0 %v3251
    %5118 = vmatpush.bf16.msra.mxu0 %v3247
    %5119 = vmatpush.bf16.msra.mxu0 %v3243
    %5120 = vmatpush.bf16.msra.mxu0 %v3239
    %5121 = vmatpush.bf16.msra.mxu0 %v3235
    %5122 = vmatmul.bf16.gmra.mxu0 %v935
    %v5123 = vpop.f32.mrf.mxu0
    %v5124 = vadd.f32 %v5111, %v5123
    %v5125 = vpop.f32.mrf.mxu0
    %5126 = vdwg.mxu0
    %5127 = vmatpush.bf16.msra.mxu0 %v3295
    %5128 = vmatpush.bf16.msra.mxu0 %v3291
    %5129 = vmatpush.bf16.msra.mxu0 %v3287
    %5130 = vmatpush.bf16.msra.mxu0 %v3283
    %5131 = vmatpush.bf16.msra.mxu0 %v3279
    %5132 = vmatpush.bf16.msra.mxu0 %v3275
    %5133 = vmatpush.bf16.msra.mxu0 %v3271
    %5134 = vmatpush.bf16.msra.mxu0 %v3267
    %5135 = vmatmul.bf16.gmra.mxu0 %v936
    %v5136 = vpop.f32.mrf.mxu0
    %v5137 = vadd.f32 %v5124, %v5136
    %v5138 = vpop.f32.mrf.mxu0
    %5139 = vdwg.mxu0
    %5140 = vmatpush.bf16.msra.mxu0 %v3327
    %5141 = vmatpush.bf16.msra.mxu0 %v3323
    %5142 = vmatpush.bf16.msra.mxu0 %v3319
    %5143 = vmatpush.bf16.msra.mxu0 %v3315
    %5144 = vmatpush.bf16.msra.mxu0 %v3311
    %5145 = vmatpush.bf16.msra.mxu0 %v3307
    %5146 = vmatpush.bf16.msra.mxu0 %v3303
    %5147 = vmatpush.bf16.msra.mxu0 %v3299
    %5148 = vmatmul.bf16.gmra.mxu0 %v937
    %v5149 = vpop.f32.mrf.mxu0
    %v5150 = vadd.f32 %v5137, %v5149
    %v5151 = vpop.f32.mrf.mxu0
    %5152 = vdwg.mxu0
    %5153 = vmatpush.bf16.msra.mxu0 %v3359
    %5154 = vmatpush.bf16.msra.mxu0 %v3355
    %5155 = vmatpush.bf16.msra.mxu0 %v3351
    %5156 = vmatpush.bf16.msra.mxu0 %v3347
    %5157 = vmatpush.bf16.msra.mxu0 %v3343
    %5158 = vmatpush.bf16.msra.mxu0 %v3339
    %5159 = vmatpush.bf16.msra.mxu0 %v3335
    %5160 = vmatpush.bf16.msra.mxu0 %v3331
    %5161 = vmatmul.bf16.gmra.mxu0 %v938
    %v5162 = vpop.f32.mrf.mxu0
    %v5163 = vadd.f32 %v5150, %v5162
    %v5164 = vpop.f32.mrf.mxu0
    %5165 = vdwg.mxu0
    %5166 = vmatpush.bf16.msra.mxu0 %v3391
    %5167 = vmatpush.bf16.msra.mxu0 %v3387
    %5168 = vmatpush.bf16.msra.mxu0 %v3383
    %5169 = vmatpush.bf16.msra.mxu0 %v3379
    %5170 = vmatpush.bf16.msra.mxu0 %v3375
    %5171 = vmatpush.bf16.msra.mxu0 %v3371
    %5172 = vmatpush.bf16.msra.mxu0 %v3367
    %5173 = vmatpush.bf16.msra.mxu0 %v3363
    %5174 = vmatmul.bf16.gmra.mxu0 %v939
    %v5175 = vpop.f32.mrf.mxu0
    %v5176 = vadd.f32 %v5163, %v5175
    %v5177 = vpop.f32.mrf.mxu0
    %5178 = vdwg.mxu0
    %5179 = vmatpush.bf16.msra.mxu0 %v3423
    %5180 = vmatpush.bf16.msra.mxu0 %v3419
    %5181 = vmatpush.bf16.msra.mxu0 %v3415
    %5182 = vmatpush.bf16.msra.mxu0 %v3411
    %5183 = vmatpush.bf16.msra.mxu0 %v3407
    %5184 = vmatpush.bf16.msra.mxu0 %v3403
    %5185 = vmatpush.bf16.msra.mxu0 %v3399
    %5186 = vmatpush.bf16.msra.mxu0 %v3395
    %5187 = vmatmul.bf16.gmra.mxu0 %v940
    %v5188 = vpop.f32.mrf.mxu0
    %v5189 = vadd.f32 %v5176, %v5188
    %v5190 = vpop.f32.mrf.mxu0
    %5191 = vdwg.mxu0
    %5192 = vmatpush.bf16.msra.mxu0 %v3455
    %5193 = vmatpush.bf16.msra.mxu0 %v3451
    %5194 = vmatpush.bf16.msra.mxu0 %v3447
    %5195 = vmatpush.bf16.msra.mxu0 %v3443
    %5196 = vmatpush.bf16.msra.mxu0 %v3439
    %5197 = vmatpush.bf16.msra.mxu0 %v3435
    %5198 = vmatpush.bf16.msra.mxu0 %v3431
    %5199 = vmatpush.bf16.msra.mxu0 %v3427
    %5200 = vmatmul.bf16.gmra.mxu0 %v941
    %v5201 = vpop.f32.mrf.mxu0
    %v5202 = vadd.f32 %v5189, %v5201
    %v5203 = vpop.f32.mrf.mxu0
    %5204 = vdwg.mxu0
    %5205 = vmatpush.bf16.msra.mxu0 %v3487
    %5206 = vmatpush.bf16.msra.mxu0 %v3483
    %5207 = vmatpush.bf16.msra.mxu0 %v3479
    %5208 = vmatpush.bf16.msra.mxu0 %v3475
    %5209 = vmatpush.bf16.msra.mxu0 %v3471
    %5210 = vmatpush.bf16.msra.mxu0 %v3467
    %5211 = vmatpush.bf16.msra.mxu0 %v3463
    %5212 = vmatpush.bf16.msra.mxu0 %v3459
    %5213 = vmatmul.bf16.gmra.mxu0 %v942
    %v5214 = vpop.f32.mrf.mxu0
    %v5215 = vadd.f32 %v5202, %v5214
    %v5216 = vpop.f32.mrf.mxu0
    %5217 = vdwg.mxu0
    %5218 = vmatpush.bf16.msra.mxu0 %v3519
    %5219 = vmatpush.bf16.msra.mxu0 %v3515
    %5220 = vmatpush.bf16.msra.mxu0 %v3511
    %5221 = vmatpush.bf16.msra.mxu0 %v3507
    %5222 = vmatpush.bf16.msra.mxu0 %v3503
    %5223 = vmatpush.bf16.msra.mxu0 %v3499
    %5224 = vmatpush.bf16.msra.mxu0 %v3495
    %5225 = vmatpush.bf16.msra.mxu0 %v3491
    %5226 = vmatmul.bf16.gmra.mxu0 %v943
    %v5227 = vpop.f32.mrf.mxu0
    %v5228 = vadd.f32 %v5215, %v5227
    %v5229 = vpop.f32.mrf.mxu0
    %5230 = vdwg.mxu0
    %5231 = vmatpush.bf16.msra.mxu0 %v3551
    %5232 = vmatpush.bf16.msra.mxu0 %v3547
    %5233 = vmatpush.bf16.msra.mxu0 %v3543
    %5234 = vmatpush.bf16.msra.mxu0 %v3539
    %5235 = vmatpush.bf16.msra.mxu0 %v3535
    %5236 = vmatpush.bf16.msra.mxu0 %v3531
    %5237 = vmatpush.bf16.msra.mxu0 %v3527
    %5238 = vmatpush.bf16.msra.mxu0 %v3523
    %5239 = vmatmul.bf16.gmra.mxu0 %v944
    %v5240 = vpop.f32.mrf.mxu0
    %v5241 = vadd.f32 %v5228, %v5240
    %v5242 = vpop.f32.mrf.mxu0
    %5243 = vdwg.mxu0
    %5244 = vmatpush.bf16.msra.mxu0 %v3583
    %5245 = vmatpush.bf16.msra.mxu0 %v3579
    %5246 = vmatpush.bf16.msra.mxu0 %v3575
    %5247 = vmatpush.bf16.msra.mxu0 %v3571
    %5248 = vmatpush.bf16.msra.mxu0 %v3567
    %5249 = vmatpush.bf16.msra.mxu0 %v3563
    %5250 = vmatpush.bf16.msra.mxu0 %v3559
    %5251 = vmatpush.bf16.msra.mxu0 %v3555
    %5252 = vmatmul.bf16.gmra.mxu0 %v945
    %v5253 = vpop.f32.mrf.mxu0
    %v5254 = vadd.f32 %v5241, %v5253
    %v5255 = vpop.f32.mrf.mxu0
    %5256 = vdwg.mxu0
    %5257 = vmatpush.bf16.msra.mxu0 %v3615
    %5258 = vmatpush.bf16.msra.mxu0 %v3611
    %5259 = vmatpush.bf16.msra.mxu0 %v3607
    %5260 = vmatpush.bf16.msra.mxu0 %v3603
    %5261 = vmatpush.bf16.msra.mxu0 %v3599
    %5262 = vmatpush.bf16.msra.mxu0 %v3595
    %5263 = vmatpush.bf16.msra.mxu0 %v3591
    %5264 = vmatpush.bf16.msra.mxu0 %v3587
    %5265 = vmatmul.bf16.gmra.mxu0 %v946
    %v5266 = vpop.f32.mrf.mxu0
    %v5267 = vadd.f32 %v5254, %v5266
    %v5268 = vpop.f32.mrf.mxu0
    %5269 = vdwg.mxu0
    %5270 = vmatpush.bf16.msra.mxu0 %v3647
    %5271 = vmatpush.bf16.msra.mxu0 %v3643
    %5272 = vmatpush.bf16.msra.mxu0 %v3639
    %5273 = vmatpush.bf16.msra.mxu0 %v3635
    %5274 = vmatpush.bf16.msra.mxu0 %v3631
    %5275 = vmatpush.bf16.msra.mxu0 %v3627
    %5276 = vmatpush.bf16.msra.mxu0 %v3623
    %5277 = vmatpush.bf16.msra.mxu0 %v3619
    %5278 = vmatmul.bf16.gmra.mxu0 %v947
    %v5279 = vpop.f32.mrf.mxu0
    %v5280 = vadd.f32 %v5267, %v5279
    %v5281 = vpop.f32.mrf.mxu0
    %5282 = vdwg.mxu0
    %5283 = vmatpush.bf16.msra.mxu0 %v3679
    %5284 = vmatpush.bf16.msra.mxu0 %v3675
    %5285 = vmatpush.bf16.msra.mxu0 %v3671
    %5286 = vmatpush.bf16.msra.mxu0 %v3667
    %5287 = vmatpush.bf16.msra.mxu0 %v3663
    %5288 = vmatpush.bf16.msra.mxu0 %v3659
    %5289 = vmatpush.bf16.msra.mxu0 %v3655
    %5290 = vmatpush.bf16.msra.mxu0 %v3651
    %5291 = vmatmul.bf16.gmra.mxu0 %v948
    %v5292 = vpop.f32.mrf.mxu0
    %v5293 = vadd.f32 %v5280, %v5292
    %v5294 = vpop.f32.mrf.mxu0
    %5295 = vdwg.mxu0
    %5296 = vmatpush.bf16.msra.mxu0 %v3711
    %5297 = vmatpush.bf16.msra.mxu0 %v3707
    %5298 = vmatpush.bf16.msra.mxu0 %v3703
    %5299 = vmatpush.bf16.msra.mxu0 %v3699
    %5300 = vmatpush.bf16.msra.mxu0 %v3695
    %5301 = vmatpush.bf16.msra.mxu0 %v3691
    %5302 = vmatpush.bf16.msra.mxu0 %v3687
    %5303 = vmatpush.bf16.msra.mxu0 %v3683
    %5304 = vmatmul.bf16.gmra.mxu0 %v949
    %v5305 = vpop.f32.mrf.mxu0
    %v5306 = vadd.f32 %v5293, %v5305
    %v5307 = vpop.f32.mrf.mxu0
    %5308 = vdwg.mxu0
    %5309 = vmatpush.bf16.msra.mxu0 %v3743
    %5310 = vmatpush.bf16.msra.mxu0 %v3739
    %5311 = vmatpush.bf16.msra.mxu0 %v3735
    %5312 = vmatpush.bf16.msra.mxu0 %v3731
    %5313 = vmatpush.bf16.msra.mxu0 %v3727
    %5314 = vmatpush.bf16.msra.mxu0 %v3723
    %5315 = vmatpush.bf16.msra.mxu0 %v3719
    %5316 = vmatpush.bf16.msra.mxu0 %v3715
    %5317 = vmatmul.bf16.gmra.mxu0 %v950
    %v5318 = vpop.f32.mrf.mxu0
    %v5319 = vadd.f32 %v5306, %v5318
    %v5320 = vpop.f32.mrf.mxu0
    %5321 = vdwg.mxu0
    %5322 = vmatpush.bf16.msra.mxu0 0
    %5323 = vmatpush.bf16.msra.mxu0 %v3771
    %5324 = vmatpush.bf16.msra.mxu0 %v3767
    %5325 = vmatpush.bf16.msra.mxu0 %v3763
    %5326 = vmatpush.bf16.msra.mxu0 %v3759
    %5327 = vmatpush.bf16.msra.mxu0 %v3755
    %5328 = vmatpush.bf16.msra.mxu0 %v3751
    %5329 = vmatpush.bf16.msra.mxu0 %v3747
    %5330 = vmatmul.bf16.gmra.mxu0 %v4475
    %v5331 = vpop.f32.mrf.mxu0
    %v5332 = vadd.f32 %v5319, %v5331
    %v5333 = vpop.f32.mrf.mxu0
    %5334 = vdwg.mxu0
    %5335 = vmatpush.bf16.msra.mxu0 %v3104
    %5336 = vmatpush.bf16.msra.mxu0 %v3100
    %5337 = vmatpush.bf16.msra.mxu0 %v3096
    %5338 = vmatpush.bf16.msra.mxu0 %v3092
    %5339 = vmatpush.bf16.msra.mxu0 %v3088
    %5340 = vmatpush.bf16.msra.mxu0 %v3084
    %5341 = vmatpush.bf16.msra.mxu0 %v3080
    %5342 = vmatpush.bf16.msra.mxu0 %v3076
    %5343 = vmatmul.bf16.gmra.mxu0 %v930
    %v5344 = vpop.f32.mrf.mxu0
    %v5345 = vadd.f32 %v892, %v5344
    %v5346 = vpop.f32.mrf.mxu0
    %5347 = vdwg.mxu0
    %5348 = vmatpush.bf16.msra.mxu0 %v3136
    %5349 = vmatpush.bf16.msra.mxu0 %v3132
    %5350 = vmatpush.bf16.msra.mxu0 %v3128
    %5351 = vmatpush.bf16.msra.mxu0 %v3124
    %5352 = vmatpush.bf16.msra.mxu0 %v3120
    %5353 = vmatpush.bf16.msra.mxu0 %v3116
    %5354 = vmatpush.bf16.msra.mxu0 %v3112
    %5355 = vmatpush.bf16.msra.mxu0 %v3108
    %5356 = vmatmul.bf16.gmra.mxu0 %v931
    %v5357 = vpop.f32.mrf.mxu0
    %v5358 = vadd.f32 %v5345, %v5357
    %v5359 = vpop.f32.mrf.mxu0
    %5360 = vdwg.mxu0
    %5361 = vmatpush.bf16.msra.mxu0 %v3168
    %5362 = vmatpush.bf16.msra.mxu0 %v3164
    %5363 = vmatpush.bf16.msra.mxu0 %v3160
    %5364 = vmatpush.bf16.msra.mxu0 %v3156
    %5365 = vmatpush.bf16.msra.mxu0 %v3152
    %5366 = vmatpush.bf16.msra.mxu0 %v3148
    %5367 = vmatpush.bf16.msra.mxu0 %v3144
    %5368 = vmatpush.bf16.msra.mxu0 %v3140
    %5369 = vmatmul.bf16.gmra.mxu0 %v932
    %v5370 = vpop.f32.mrf.mxu0
    %v5371 = vadd.f32 %v5358, %v5370
    %v5372 = vpop.f32.mrf.mxu0
    %5373 = vdwg.mxu0
    %5374 = vmatpush.bf16.msra.mxu0 %v3200
    %5375 = vmatpush.bf16.msra.mxu0 %v3196
    %5376 = vmatpush.bf16.msra.mxu0 %v3192
    %5377 = vmatpush.bf16.msra.mxu0 %v3188
    %5378 = vmatpush.bf16.msra.mxu0 %v3184
    %5379 = vmatpush.bf16.msra.mxu0 %v3180
    %5380 = vmatpush.bf16.msra.mxu0 %v3176
    %5381 = vmatpush.bf16.msra.mxu0 %v3172
    %5382 = vmatmul.bf16.gmra.mxu0 %v933
    %v5383 = vpop.f32.mrf.mxu0
    %v5384 = vadd.f32 %v5371, %v5383
    %v5385 = vpop.f32.mrf.mxu0
    %5386 = vdwg.mxu0
    %5387 = vmatpush.bf16.msra.mxu0 %v3232
    %5388 = vmatpush.bf16.msra.mxu0 %v3228
    %5389 = vmatpush.bf16.msra.mxu0 %v3224
    %5390 = vmatpush.bf16.msra.mxu0 %v3220
    %5391 = vmatpush.bf16.msra.mxu0 %v3216
    %5392 = vmatpush.bf16.msra.mxu0 %v3212
    %5393 = vmatpush.bf16.msra.mxu0 %v3208
    %5394 = vmatpush.bf16.msra.mxu0 %v3204
    %5395 = vmatmul.bf16.gmra.mxu0 %v934
    %v5396 = vpop.f32.mrf.mxu0
    %v5397 = vadd.f32 %v5384, %v5396
    %v5398 = vpop.f32.mrf.mxu0
    %5399 = vdwg.mxu0
    %5400 = vmatpush.bf16.msra.mxu0 %v3264
    %5401 = vmatpush.bf16.msra.mxu0 %v3260
    %5402 = vmatpush.bf16.msra.mxu0 %v3256
    %5403 = vmatpush.bf16.msra.mxu0 %v3252
    %5404 = vmatpush.bf16.msra.mxu0 %v3248
    %5405 = vmatpush.bf16.msra.mxu0 %v3244
    %5406 = vmatpush.bf16.msra.mxu0 %v3240
    %5407 = vmatpush.bf16.msra.mxu0 %v3236
    %5408 = vmatmul.bf16.gmra.mxu0 %v935
    %v5409 = vpop.f32.mrf.mxu0
    %v5410 = vadd.f32 %v5397, %v5409
    %v5411 = vpop.f32.mrf.mxu0
    %5412 = vdwg.mxu0
    %5413 = vmatpush.bf16.msra.mxu0 %v3296
    %5414 = vmatpush.bf16.msra.mxu0 %v3292
    %5415 = vmatpush.bf16.msra.mxu0 %v3288
    %5416 = vmatpush.bf16.msra.mxu0 %v3284
    %5417 = vmatpush.bf16.msra.mxu0 %v3280
    %5418 = vmatpush.bf16.msra.mxu0 %v3276
    %5419 = vmatpush.bf16.msra.mxu0 %v3272
    %5420 = vmatpush.bf16.msra.mxu0 %v3268
    %5421 = vmatmul.bf16.gmra.mxu0 %v936
    %v5422 = vpop.f32.mrf.mxu0
    %v5423 = vadd.f32 %v5410, %v5422
    %v5424 = vpop.f32.mrf.mxu0
    %5425 = vdwg.mxu0
    %5426 = vmatpush.bf16.msra.mxu0 %v3328
    %5427 = vmatpush.bf16.msra.mxu0 %v3324
    %5428 = vmatpush.bf16.msra.mxu0 %v3320
    %5429 = vmatpush.bf16.msra.mxu0 %v3316
    %5430 = vmatpush.bf16.msra.mxu0 %v3312
    %5431 = vmatpush.bf16.msra.mxu0 %v3308
    %5432 = vmatpush.bf16.msra.mxu0 %v3304
    %5433 = vmatpush.bf16.msra.mxu0 %v3300
    %5434 = vmatmul.bf16.gmra.mxu0 %v937
    %v5435 = vpop.f32.mrf.mxu0
    %v5436 = vadd.f32 %v5423, %v5435
    %v5437 = vpop.f32.mrf.mxu0
    %5438 = vdwg.mxu0
    %5439 = vmatpush.bf16.msra.mxu0 %v3360
    %5440 = vmatpush.bf16.msra.mxu0 %v3356
    %5441 = vmatpush.bf16.msra.mxu0 %v3352
    %5442 = vmatpush.bf16.msra.mxu0 %v3348
    %5443 = vmatpush.bf16.msra.mxu0 %v3344
    %5444 = vmatpush.bf16.msra.mxu0 %v3340
    %5445 = vmatpush.bf16.msra.mxu0 %v3336
    %5446 = vmatpush.bf16.msra.mxu0 %v3332
    %5447 = vmatmul.bf16.gmra.mxu0 %v938
    %v5448 = vpop.f32.mrf.mxu0
    %v5449 = vadd.f32 %v5436, %v5448
    %v5450 = vpop.f32.mrf.mxu0
    %5451 = vdwg.mxu0
    %5452 = vmatpush.bf16.msra.mxu0 %v3392
    %5453 = vmatpush.bf16.msra.mxu0 %v3388
    %5454 = vmatpush.bf16.msra.mxu0 %v3384
    %5455 = vmatpush.bf16.msra.mxu0 %v3380
    %5456 = vmatpush.bf16.msra.mxu0 %v3376
    %5457 = vmatpush.bf16.msra.mxu0 %v3372
    %5458 = vmatpush.bf16.msra.mxu0 %v3368
    %5459 = vmatpush.bf16.msra.mxu0 %v3364
    %5460 = vmatmul.bf16.gmra.mxu0 %v939
    %v5461 = vpop.f32.mrf.mxu0
    %v5462 = vadd.f32 %v5449, %v5461
    %v5463 = vpop.f32.mrf.mxu0
    %5464 = vdwg.mxu0
    %5465 = vmatpush.bf16.msra.mxu0 %v3424
    %5466 = vmatpush.bf16.msra.mxu0 %v3420
    %5467 = vmatpush.bf16.msra.mxu0 %v3416
    %5468 = vmatpush.bf16.msra.mxu0 %v3412
    %5469 = vmatpush.bf16.msra.mxu0 %v3408
    %5470 = vmatpush.bf16.msra.mxu0 %v3404
    %5471 = vmatpush.bf16.msra.mxu0 %v3400
    %5472 = vmatpush.bf16.msra.mxu0 %v3396
    %5473 = vmatmul.bf16.gmra.mxu0 %v940
    %v5474 = vpop.f32.mrf.mxu0
    %v5475 = vadd.f32 %v5462, %v5474
    %v5476 = vpop.f32.mrf.mxu0
    %5477 = vdwg.mxu0
    %5478 = vmatpush.bf16.msra.mxu0 %v3456
    %5479 = vmatpush.bf16.msra.mxu0 %v3452
    %5480 = vmatpush.bf16.msra.mxu0 %v3448
    %5481 = vmatpush.bf16.msra.mxu0 %v3444
    %5482 = vmatpush.bf16.msra.mxu0 %v3440
    %5483 = vmatpush.bf16.msra.mxu0 %v3436
    %5484 = vmatpush.bf16.msra.mxu0 %v3432
    %5485 = vmatpush.bf16.msra.mxu0 %v3428
    %5486 = vmatmul.bf16.gmra.mxu0 %v941
    %v5487 = vpop.f32.mrf.mxu0
    %v5488 = vadd.f32 %v5475, %v5487
    %v5489 = vpop.f32.mrf.mxu0
    %5490 = vdwg.mxu0
    %5491 = vmatpush.bf16.msra.mxu0 %v3488
    %5492 = vmatpush.bf16.msra.mxu0 %v3484
    %5493 = vmatpush.bf16.msra.mxu0 %v3480
    %5494 = vmatpush.bf16.msra.mxu0 %v3476
    %5495 = vmatpush.bf16.msra.mxu0 %v3472
    %5496 = vmatpush.bf16.msra.mxu0 %v3468
    %5497 = vmatpush.bf16.msra.mxu0 %v3464
    %5498 = vmatpush.bf16.msra.mxu0 %v3460
    %5499 = vmatmul.bf16.gmra.mxu0 %v942
    %v5500 = vpop.f32.mrf.mxu0
    %v5501 = vadd.f32 %v5488, %v5500
    %v5502 = vpop.f32.mrf.mxu0
    %5503 = vdwg.mxu0
    %5504 = vmatpush.bf16.msra.mxu0 %v3520
    %5505 = vmatpush.bf16.msra.mxu0 %v3516
    %5506 = vmatpush.bf16.msra.mxu0 %v3512
    %5507 = vmatpush.bf16.msra.mxu0 %v3508
    %5508 = vmatpush.bf16.msra.mxu0 %v3504
    %5509 = vmatpush.bf16.msra.mxu0 %v3500
    %5510 = vmatpush.bf16.msra.mxu0 %v3496
    %5511 = vmatpush.bf16.msra.mxu0 %v3492
    %5512 = vmatmul.bf16.gmra.mxu0 %v943
    %v5513 = vpop.f32.mrf.mxu0
    %v5514 = vadd.f32 %v5501, %v5513
    %v5515 = vpop.f32.mrf.mxu0
    %5516 = vdwg.mxu0
    %5517 = vmatpush.bf16.msra.mxu0 %v3552
    %5518 = vmatpush.bf16.msra.mxu0 %v3548
    %5519 = vmatpush.bf16.msra.mxu0 %v3544
    %5520 = vmatpush.bf16.msra.mxu0 %v3540
    %5521 = vmatpush.bf16.msra.mxu0 %v3536
    %5522 = vmatpush.bf16.msra.mxu0 %v3532
    %5523 = vmatpush.bf16.msra.mxu0 %v3528
    %5524 = vmatpush.bf16.msra.mxu0 %v3524
    %5525 = vmatmul.bf16.gmra.mxu0 %v944
    %v5526 = vpop.f32.mrf.mxu0
    %v5527 = vadd.f32 %v5514, %v5526
    %v5528 = vpop.f32.mrf.mxu0
    %5529 = vdwg.mxu0
    %5530 = vmatpush.bf16.msra.mxu0 %v3584
    %5531 = vmatpush.bf16.msra.mxu0 %v3580
    %5532 = vmatpush.bf16.msra.mxu0 %v3576
    %5533 = vmatpush.bf16.msra.mxu0 %v3572
    %5534 = vmatpush.bf16.msra.mxu0 %v3568
    %5535 = vmatpush.bf16.msra.mxu0 %v3564
    %5536 = vmatpush.bf16.msra.mxu0 %v3560
    %5537 = vmatpush.bf16.msra.mxu0 %v3556
    %5538 = vmatmul.bf16.gmra.mxu0 %v945
    %v5539 = vpop.f32.mrf.mxu0
    %v5540 = vadd.f32 %v5527, %v5539
    %v5541 = vpop.f32.mrf.mxu0
    %5542 = vdwg.mxu0
    %5543 = vmatpush.bf16.msra.mxu0 %v3616
    %5544 = vmatpush.bf16.msra.mxu0 %v3612
    %5545 = vmatpush.bf16.msra.mxu0 %v3608
    %5546 = vmatpush.bf16.msra.mxu0 %v3604
    %5547 = vmatpush.bf16.msra.mxu0 %v3600
    %5548 = vmatpush.bf16.msra.mxu0 %v3596
    %5549 = vmatpush.bf16.msra.mxu0 %v3592
    %5550 = vmatpush.bf16.msra.mxu0 %v3588
    %5551 = vmatmul.bf16.gmra.mxu0 %v946
    %v5552 = vpop.f32.mrf.mxu0
    %v5553 = vadd.f32 %v5540, %v5552
    %v5554 = vpop.f32.mrf.mxu0
    %5555 = vdwg.mxu0
    %5556 = vmatpush.bf16.msra.mxu0 %v3648
    %5557 = vmatpush.bf16.msra.mxu0 %v3644
    %5558 = vmatpush.bf16.msra.mxu0 %v3640
    %5559 = vmatpush.bf16.msra.mxu0 %v3636
    %5560 = vmatpush.bf16.msra.mxu0 %v3632
    %5561 = vmatpush.bf16.msra.mxu0 %v3628
    %5562 = vmatpush.bf16.msra.mxu0 %v3624
    %5563 = vmatpush.bf16.msra.mxu0 %v3620
    %5564 = vmatmul.bf16.gmra.mxu0 %v947
    %v5565 = vpop.f32.mrf.mxu0
    %v5566 = vadd.f32 %v5553, %v5565
    %v5567 = vpop.f32.mrf.mxu0
    %5568 = vdwg.mxu0
    %5569 = vmatpush.bf16.msra.mxu0 %v3680
    %5570 = vmatpush.bf16.msra.mxu0 %v3676
    %5571 = vmatpush.bf16.msra.mxu0 %v3672
    %5572 = vmatpush.bf16.msra.mxu0 %v3668
    %5573 = vmatpush.bf16.msra.mxu0 %v3664
    %5574 = vmatpush.bf16.msra.mxu0 %v3660
    %5575 = vmatpush.bf16.msra.mxu0 %v3656
    %5576 = vmatpush.bf16.msra.mxu0 %v3652
    %5577 = vmatmul.bf16.gmra.mxu0 %v948
    %v5578 = vpop.f32.mrf.mxu0
    %v5579 = vadd.f32 %v5566, %v5578
    %v5580 = vpop.f32.mrf.mxu0
    %5581 = vdwg.mxu0
    %5582 = vmatpush.bf16.msra.mxu0 %v3712
    %5583 = vmatpush.bf16.msra.mxu0 %v3708
    %5584 = vmatpush.bf16.msra.mxu0 %v3704
    %5585 = vmatpush.bf16.msra.mxu0 %v3700
    %5586 = vmatpush.bf16.msra.mxu0 %v3696
    %5587 = vmatpush.bf16.msra.mxu0 %v3692
    %5588 = vmatpush.bf16.msra.mxu0 %v3688
    %5589 = vmatpush.bf16.msra.mxu0 %v3684
    %5590 = vmatmul.bf16.gmra.mxu0 %v949
    %v5591 = vpop.f32.mrf.mxu0
    %v5592 = vadd.f32 %v5579, %v5591
    %v5593 = vpop.f32.mrf.mxu0
    %5594 = vdwg.mxu0
    %5595 = vmatpush.bf16.msra.mxu0 %v3744
    %5596 = vmatpush.bf16.msra.mxu0 %v3740
    %5597 = vmatpush.bf16.msra.mxu0 %v3736
    %5598 = vmatpush.bf16.msra.mxu0 %v3732
    %5599 = vmatpush.bf16.msra.mxu0 %v3728
    %5600 = vmatpush.bf16.msra.mxu0 %v3724
    %5601 = vmatpush.bf16.msra.mxu0 %v3720
    %5602 = vmatpush.bf16.msra.mxu0 %v3716
    %5603 = vmatmul.bf16.gmra.mxu0 %v950
    %v5604 = vpop.f32.mrf.mxu0
    %v5605 = vadd.f32 %v5592, %v5604
    %v5606 = vpop.f32.mrf.mxu0
    %5607 = vdwg.mxu0
    %5608 = vmatpush.bf16.msra.mxu0 0
    %5609 = vmatpush.bf16.msra.mxu0 %v3772
    %5610 = vmatpush.bf16.msra.mxu0 %v3768
    %5611 = vmatpush.bf16.msra.mxu0 %v3764
    %5612 = vmatpush.bf16.msra.mxu0 %v3760
    %5613 = vmatpush.bf16.msra.mxu0 %v3756
    %5614 = vmatpush.bf16.msra.mxu0 %v3752
    %5615 = vmatpush.bf16.msra.mxu0 %v3748
    %5616 = vmatmul.bf16.gmra.mxu0 %v4475
    %v5617 = vpop.f32.mrf.mxu0
    %v5618 = vadd.f32 %v5605, %v5617
    %v5619 = vpop.f32.mrf.mxu0
    %5620 = vdwg.mxu0
    %s5621 = sld [smem:[#allocation2]]
    %vm5622 = vcmp.ge.f32.partialorder %v4760, 0.0
    %vm5623 = vcmp.ge.f32.partialorder %v5046, 0.0
    %vm5624 = vcmp.ge.f32.partialorder %v5332, 0.0
    %vm5625 = vcmp.ge.f32.partialorder %v5618, 0.0
    %v5626 = vstv %s5621
    %v5627 = vmul.f32 %v5626, %v4760
    %v5628 = vmul.f32 %v5626, %v5046
    %v5629 = vmul.f32 %v5626, %v5332
    %v5630 = vmul.f32 %v5626, %v5618
    %v5631 = vsel %vm5622, %v4760, %v5627
    %v5632 = vsel %vm5623, %v5046, %v5628
    %v5633 = vsel %vm5624, %v5332, %v5629
    %v5634 = vsel %vm5625, %v5618, %v5630
    %v5635 = vpack.c.bf16 %v5631, %v5631
    %v5636 = vpack.c.bf16 %v5632, %v5632
    %v5637 = vpack.c.bf16 %v5633, %v5633
    %v5638 = vpack.c.bf16 %v5634, %v5634
    %v5639 = vld [vmem:[#allocation11] sm:$0xff]
    %v5640 = vld [vmem:[#allocation11 + $0x8] sm:$0xff]
    %v5641 = vld [vmem:[#allocation11 + $0x10] sm:$0xff]
    %v5642 = vld [vmem:[#allocation11 + $0x18] sm:$0xff]
    %v5643 = vld [vmem:[#allocation11 + $0x20] sm:$0xff]
    %v5644 = vld [vmem:[#allocation11 + $0x28] sm:$0xff]
    %v5645 = vld [vmem:[#allocation11 + $0x30] sm:$0xff]
    %v5646 = vld [vmem:[#allocation11 + $0x38] sm:$0xff]
    %v5647 = vld [vmem:[#allocation11 + $0x40] sm:$0xff]
    %v5648 = vld [vmem:[#allocation11 + $0x48] sm:$0xff]
    %v5649 = vld [vmem:[#allocation11 + $0x50] sm:$0xff]
    %v5650 = vld [vmem:[#allocation11 + $0x58] sm:$0xff]
    %v5651 = vld [vmem:[#allocation11 + $0x60] sm:$0xff]
    %v5652 = vld [vmem:[#allocation11 + $0x68] sm:$0xff]
    %v5653 = vld [vmem:[#allocation11 + $0x70] sm:$0xff]
    %v5654 = vld [vmem:[#allocation11 + $0x78] sm:$0xff]
    %v5655 = vld [vmem:[#allocation11 + $0x80] sm:$0xff]
    %v5656 = vld [vmem:[#allocation11 + $0x88] sm:$0xff]
    %v5657 = vld [vmem:[#allocation11 + $0x90] sm:$0xff]
    %v5658 = vld [vmem:[#allocation11 + $0x98] sm:$0xff]
    %v5659 = vld [vmem:[#allocation11 + $0xa0] sm:$0xff]
    %v5660 = vld [vmem:[#allocation11 + $0xa8] sm:$0xff]
    %v5661 = vld [vmem:[#allocation11 + $0xb0] sm:$0xff]
    %v5662 = vld [vmem:[#allocation11 + $0xb8] sm:$0xff]
    %v5663 = vld [vmem:[#allocation11 + $0xc0] sm:$0xff]
    %v5664 = vld [vmem:[#allocation11 + $0xc8] sm:$0xff]
    %v5665 = vld [vmem:[#allocation11 + $0xd0] sm:$0xff]
    %v5666 = vld [vmem:[#allocation11 + $0xd8] sm:$0xff]
    %v5667 = vld [vmem:[#allocation11 + $0xe0] sm:$0xff]
    %v5668 = vld [vmem:[#allocation11 + $0xe8] sm:$0xff]
    %v5669 = vld [vmem:[#allocation11 + $0xf0] sm:$0xff]
    %v5670 = vld [vmem:[#allocation11 + $0xf8] sm:$0xff]
    %v5671 = vld [vmem:[#allocation11 + $0x100] sm:$0xff]
    %v5672 = vld [vmem:[#allocation11 + $0x108] sm:$0xff]
    %v5673 = vld [vmem:[#allocation11 + $0x110] sm:$0xff]
    %v5674 = vld [vmem:[#allocation11 + $0x118] sm:$0xff]
    %v5675 = vld [vmem:[#allocation11 + $0x120] sm:$0xff]
    %v5676 = vld [vmem:[#allocation11 + $0x128] sm:$0xff]
    %v5677 = vld [vmem:[#allocation11 + $0x130] sm:$0xff]
    %v5678 = vld [vmem:[#allocation11 + $0x138] sm:$0xff]
    %v5679 = vld [vmem:[#allocation11 + $0x140] sm:$0xff]
    %v5680 = vld [vmem:[#allocation11 + $0x148] sm:$0xff]
    %v5681 = vld [vmem:[#allocation11 + $0x150] sm:$0xff]
    %v5682 = vld [vmem:[#allocation11 + $0x158] sm:$0xff]
    %v5683 = vld [vmem:[#allocation11 + $0x160] sm:$0xff]
    %v5684 = vld [vmem:[#allocation11 + $0x168] sm:$0xff]
    %v5685 = vld [vmem:[#allocation11 + $0x170] sm:$0xff]
    %v5686 = vld [vmem:[#allocation11 + $0x178] sm:$0xff]
    %v5687 = vld [vmem:[#allocation11 + $0x180] sm:$0xff]
    %v5688 = vld [vmem:[#allocation11 + $0x188] sm:$0xff]
    %v5689 = vld [vmem:[#allocation11 + $0x190] sm:$0xff]
    %v5690 = vld [vmem:[#allocation11 + $0x198] sm:$0xff]
    %v5691 = vld [vmem:[#allocation11 + $0x1a0] sm:$0xff]
    %v5692 = vld [vmem:[#allocation11 + $0x1a8] sm:$0xff]
    %v5693 = vld [vmem:[#allocation11 + $0x1b0] sm:$0xff]
    %v5694 = vld [vmem:[#allocation11 + $0x1b8] sm:$0xff]
    %v5695 = vld [vmem:[#allocation11 + $0x1c0] sm:$0xff]
    %v5696 = vld [vmem:[#allocation11 + $0x1c8] sm:$0xff]
    %v5697 = vld [vmem:[#allocation11 + $0x1d0] sm:$0xff]
    %v5698 = vld [vmem:[#allocation11 + $0x1d8] sm:$0xff]
    %v5699 = vld [vmem:[#allocation11 + $0x1e0] sm:$0xff]
    %v5700 = vld [vmem:[#allocation11 + $0x1e8] sm:$0xff]
    %v5701 = vld [vmem:[#allocation11 + $0x1f0] sm:$0xff]
    %v5702 = vld [vmem:[#allocation11 + $0x1f8] sm:$0xff]
    %v5703 = vld [vmem:[#allocation13] sm:$0x3]
    %v5705 = vperm.slane %v5703, 0
    %v5706 = vperm.slane %v5703, 1
    %v5773 = vunpack.c.l.b16 %v5639
    %v5774 = vunpack.c.h.b16 %v5639
    %v5775 = vunpack.c.l.b16 %v5640
    %v5776 = vunpack.c.h.b16 %v5640
    %v5777 = vunpack.c.l.b16 %v5641
    %v5778 = vunpack.c.h.b16 %v5641
    %v5779 = vunpack.c.l.b16 %v5642
    %v5780 = vunpack.c.h.b16 %v5642
    %v5781 = vunpack.c.l.b16 %v5643
    %v5782 = vunpack.c.h.b16 %v5643
    %v5783 = vunpack.c.l.b16 %v5644
    %v5784 = vunpack.c.h.b16 %v5644
    %v5785 = vunpack.c.l.b16 %v5645
    %v5786 = vunpack.c.h.b16 %v5645
    %v5787 = vunpack.c.l.b16 %v5646
    %v5788 = vunpack.c.h.b16 %v5646
    %v5789 = vunpack.c.l.b16 %v5647
    %v5790 = vunpack.c.h.b16 %v5647
    %v5791 = vunpack.c.l.b16 %v5648
    %v5792 = vunpack.c.h.b16 %v5648
    %v5793 = vunpack.c.l.b16 %v5649
    %v5794 = vunpack.c.h.b16 %v5649
    %v5795 = vunpack.c.l.b16 %v5650
    %v5796 = vunpack.c.h.b16 %v5650
    %v5797 = vunpack.c.l.b16 %v5651
    %v5798 = vunpack.c.h.b16 %v5651
    %v5799 = vunpack.c.l.b16 %v5652
    %v5800 = vunpack.c.h.b16 %v5652
    %v5801 = vunpack.c.l.b16 %v5653
    %v5802 = vunpack.c.h.b16 %v5653
    %v5803 = vunpack.c.l.b16 %v5654
    %v5804 = vunpack.c.h.b16 %v5654
    %v5805 = vunpack.c.l.b16 %v5655
    %v5806 = vunpack.c.h.b16 %v5655
    %v5807 = vunpack.c.l.b16 %v5656
    %v5808 = vunpack.c.h.b16 %v5656
    %v5809 = vunpack.c.l.b16 %v5657
    %v5810 = vunpack.c.h.b16 %v5657
    %v5811 = vunpack.c.l.b16 %v5658
    %v5812 = vunpack.c.h.b16 %v5658
    %v5813 = vunpack.c.l.b16 %v5659
    %v5814 = vunpack.c.h.b16 %v5659
    %v5815 = vunpack.c.l.b16 %v5660
    %v5816 = vunpack.c.h.b16 %v5660
    %v5817 = vunpack.c.l.b16 %v5661
    %v5818 = vunpack.c.h.b16 %v5661
    %v5819 = vunpack.c.l.b16 %v5662
    %v5820 = vunpack.c.h.b16 %v5662
    %v5821 = vunpack.c.l.b16 %v5663
    %v5822 = vunpack.c.h.b16 %v5663
    %v5823 = vunpack.c.l.b16 %v5664
    %v5824 = vunpack.c.h.b16 %v5664
    %v5825 = vunpack.c.l.b16 %v5665
    %v5826 = vunpack.c.h.b16 %v5665
    %v5827 = vunpack.c.l.b16 %v5666
    %v5828 = vunpack.c.h.b16 %v5666
    %v5829 = vunpack.c.l.b16 %v5667
    %v5830 = vunpack.c.h.b16 %v5667
    %v5831 = vunpack.c.l.b16 %v5668
    %v5832 = vunpack.c.h.b16 %v5668
    %v5833 = vunpack.c.l.b16 %v5669
    %v5834 = vunpack.c.h.b16 %v5669
    %v5835 = vunpack.c.l.b16 %v5670
    %v5836 = vunpack.c.h.b16 %v5670
    %v5837 = vunpack.c.l.b16 %v5671
    %v5838 = vunpack.c.h.b16 %v5671
    %v5839 = vunpack.c.l.b16 %v5672
    %v5840 = vunpack.c.h.b16 %v5672
    %v5841 = vunpack.c.l.b16 %v5673
    %v5842 = vunpack.c.h.b16 %v5673
    %v5843 = vunpack.c.l.b16 %v5674
    %v5844 = vunpack.c.h.b16 %v5674
    %v5845 = vunpack.c.l.b16 %v5675
    %v5846 = vunpack.c.h.b16 %v5675
    %v5847 = vunpack.c.l.b16 %v5676
    %v5848 = vunpack.c.h.b16 %v5676
    %v5849 = vunpack.c.l.b16 %v5677
    %v5850 = vunpack.c.h.b16 %v5677
    %v5851 = vunpack.c.l.b16 %v5678
    %v5852 = vunpack.c.h.b16 %v5678
    %v5853 = vunpack.c.l.b16 %v5679
    %v5854 = vunpack.c.h.b16 %v5679
    %v5855 = vunpack.c.l.b16 %v5680
    %v5856 = vunpack.c.h.b16 %v5680
    %v5857 = vunpack.c.l.b16 %v5681
    %v5858 = vunpack.c.h.b16 %v5681
    %v5859 = vunpack.c.l.b16 %v5682
    %v5860 = vunpack.c.h.b16 %v5682
    %v5861 = vunpack.c.l.b16 %v5683
    %v5862 = vunpack.c.h.b16 %v5683
    %v5863 = vunpack.c.l.b16 %v5684
    %v5864 = vunpack.c.h.b16 %v5684
    %v5865 = vunpack.c.l.b16 %v5685
    %v5866 = vunpack.c.h.b16 %v5685
    %v5867 = vunpack.c.l.b16 %v5686
    %v5868 = vunpack.c.h.b16 %v5686
    %v5869 = vunpack.c.l.b16 %v5687
    %v5870 = vunpack.c.h.b16 %v5687
    %v5871 = vunpack.c.l.b16 %v5688
    %v5872 = vunpack.c.h.b16 %v5688
    %v5873 = vunpack.c.l.b16 %v5689
    %v5874 = vunpack.c.h.b16 %v5689
    %v5875 = vunpack.c.l.b16 %v5690
    %v5876 = vunpack.c.h.b16 %v5690
    %v5877 = vunpack.c.l.b16 %v5691
    %v5878 = vunpack.c.h.b16 %v5691
    %v5879 = vunpack.c.l.b16 %v5692
    %v5880 = vunpack.c.h.b16 %v5692
    %v5881 = vunpack.c.l.b16 %v5693
    %v5882 = vunpack.c.h.b16 %v5693
    %v5883 = vunpack.c.l.b16 %v5694
    %v5884 = vunpack.c.h.b16 %v5694
    %v5885 = vunpack.c.l.b16 %v5695
    %v5886 = vunpack.c.h.b16 %v5695
    %v5887 = vunpack.c.l.b16 %v5696
    %v5888 = vunpack.c.h.b16 %v5696
    %v5889 = vunpack.c.l.b16 %v5697
    %v5890 = vunpack.c.h.b16 %v5697
    %v5891 = vunpack.c.l.b16 %v5698
    %v5892 = vunpack.c.h.b16 %v5698
    %v5893 = vunpack.c.l.b16 %v5699
    %v5894 = vunpack.c.h.b16 %v5699
    %v5895 = vunpack.c.l.b16 %v5700
    %v5896 = vunpack.c.h.b16 %v5700
    %v5897 = vunpack.c.l.b16 %v5701
    %v5898 = vunpack.c.h.b16 %v5701
    %v5899 = vunpack.c.l.b16 %v5702
    %v5900 = vunpack.c.h.b16 %v5702
    %v5901 = vpack.c.b16 %v5775, %v5773
    %v5902 = vpack.c.b16 %v5776, %v5774
    %v5903 = vpack.c.b16 %v5779, %v5777
    %v5904 = vpack.c.b16 %v5780, %v5778
    %v5905 = vpack.c.b16 %v5783, %v5781
    %v5906 = vpack.c.b16 %v5784, %v5782
    %v5907 = vpack.c.b16 %v5787, %v5785
    %v5908 = vpack.c.b16 %v5788, %v5786
    %v5909 = vpack.c.b16 %v5791, %v5789
    %v5910 = vpack.c.b16 %v5792, %v5790
    %v5911 = vpack.c.b16 %v5795, %v5793
    %v5912 = vpack.c.b16 %v5796, %v5794
    %v5913 = vpack.c.b16 %v5799, %v5797
    %v5914 = vpack.c.b16 %v5800, %v5798
    %v5915 = vpack.c.b16 %v5803, %v5801
    %v5916 = vpack.c.b16 %v5804, %v5802
    %v5917 = vpack.c.b16 %v5807, %v5805
    %v5918 = vpack.c.b16 %v5808, %v5806
    %v5919 = vpack.c.b16 %v5811, %v5809
    %v5920 = vpack.c.b16 %v5812, %v5810
    %v5921 = vpack.c.b16 %v5815, %v5813
    %v5922 = vpack.c.b16 %v5816, %v5814
    %v5923 = vpack.c.b16 %v5819, %v5817
    %v5924 = vpack.c.b16 %v5820, %v5818
    %v5925 = vpack.c.b16 %v5823, %v5821
    %v5926 = vpack.c.b16 %v5824, %v5822
    %v5927 = vpack.c.b16 %v5827, %v5825
    %v5928 = vpack.c.b16 %v5828, %v5826
    %v5929 = vpack.c.b16 %v5831, %v5829
    %v5930 = vpack.c.b16 %v5832, %v5830
    %v5931 = vpack.c.b16 %v5835, %v5833
    %v5932 = vpack.c.b16 %v5836, %v5834
    %v5933 = vpack.c.b16 %v5839, %v5837
    %v5934 = vpack.c.b16 %v5840, %v5838
    %v5935 = vpack.c.b16 %v5843, %v5841
    %v5936 = vpack.c.b16 %v5844, %v5842
    %v5937 = vpack.c.b16 %v5847, %v5845
    %v5938 = vpack.c.b16 %v5848, %v5846
    %v5939 = vpack.c.b16 %v5851, %v5849
    %v5940 = vpack.c.b16 %v5852, %v5850
    %v5941 = vpack.c.b16 %v5855, %v5853
    %v5942 = vpack.c.b16 %v5856, %v5854
    %v5943 = vpack.c.b16 %v5859, %v5857
    %v5944 = vpack.c.b16 %v5860, %v5858
    %v5945 = vpack.c.b16 %v5863, %v5861
    %v5946 = vpack.c.b16 %v5864, %v5862
    %v5947 = vpack.c.b16 %v5867, %v5865
    %v5948 = vpack.c.b16 %v5868, %v5866
    %v5949 = vpack.c.b16 %v5871, %v5869
    %v5950 = vpack.c.b16 %v5872, %v5870
    %v5951 = vpack.c.b16 %v5875, %v5873
    %v5952 = vpack.c.b16 %v5876, %v5874
    %v5953 = vpack.c.b16 %v5879, %v5877
    %v5954 = vpack.c.b16 %v5880, %v5878
    %v5955 = vpack.c.b16 %v5883, %v5881
    %v5956 = vpack.c.b16 %v5884, %v5882
    %v5957 = vpack.c.b16 %v5887, %v5885
    %v5958 = vpack.c.b16 %v5888, %v5886
    %v5959 = vpack.c.b16 %v5891, %v5889
    %v5960 = vpack.c.b16 %v5892, %v5890
    %v5961 = vpack.c.b16 %v5895, %v5893
    %v5962 = vpack.c.b16 %v5896, %v5894
    %v5963 = vpack.c.b16 %v5899, %v5897
    %v5964 = vpack.c.b16 %v5900, %v5898
    %6029 = vmatpush.bf16.msra.mxu0 %v5915
    %6030 = vmatpush.bf16.msra.mxu0 %v5913
    %6031 = vmatpush.bf16.msra.mxu0 %v5911
    %6032 = vmatpush.bf16.msra.mxu0 %v5909
    %6033 = vmatpush.bf16.msra.mxu0 %v5907
    %6034 = vmatpush.bf16.msra.mxu0 %v5905
    %6035 = vmatpush.bf16.msra.mxu0 %v5903
    %6036 = vmatpush.bf16.msra.mxu0 %v5901
    %6037 = vmatmul.bf16.gmra.mxu0 %v5635
    %v6038 = vpop.f32.mrf.mxu0
    %v6039 = vadd.f32 %v5705, %v6038
    %v6040 = vpop.f32.mrf.mxu0
    %6041 = vdwg.mxu0
    %6042 = vmatpush.bf16.msra.mxu0 %v5931
    %6043 = vmatpush.bf16.msra.mxu0 %v5929
    %6044 = vmatpush.bf16.msra.mxu0 %v5927
    %6045 = vmatpush.bf16.msra.mxu0 %v5925
    %6046 = vmatpush.bf16.msra.mxu0 %v5923
    %6047 = vmatpush.bf16.msra.mxu0 %v5921
    %6048 = vmatpush.bf16.msra.mxu0 %v5919
    %6049 = vmatpush.bf16.msra.mxu0 %v5917
    %6050 = vmatmul.bf16.gmra.mxu0 %v5636
    %v6051 = vpop.f32.mrf.mxu0
    %v6052 = vadd.f32 %v6039, %v6051
    %v6053 = vpop.f32.mrf.mxu0
    %6054 = vdwg.mxu0
    %6055 = vmatpush.bf16.msra.mxu0 %v5947
    %6056 = vmatpush.bf16.msra.mxu0 %v5945
    %6057 = vmatpush.bf16.msra.mxu0 %v5943
    %6058 = vmatpush.bf16.msra.mxu0 %v5941
    %6059 = vmatpush.bf16.msra.mxu0 %v5939
    %6060 = vmatpush.bf16.msra.mxu0 %v5937
    %6061 = vmatpush.bf16.msra.mxu0 %v5935
    %6062 = vmatpush.bf16.msra.mxu0 %v5933
    %6063 = vmatmul.bf16.gmra.mxu0 %v5637
    %v6064 = vpop.f32.mrf.mxu0
    %v6065 = vadd.f32 %v6052, %v6064
    %v6066 = vpop.f32.mrf.mxu0
    %6067 = vdwg.mxu0
    %6068 = vmatpush.bf16.msra.mxu0 %v5963
    %6069 = vmatpush.bf16.msra.mxu0 %v5961
    %6070 = vmatpush.bf16.msra.mxu0 %v5959
    %6071 = vmatpush.bf16.msra.mxu0 %v5957
    %6072 = vmatpush.bf16.msra.mxu0 %v5955
    %6073 = vmatpush.bf16.msra.mxu0 %v5953
    %6074 = vmatpush.bf16.msra.mxu0 %v5951
    %6075 = vmatpush.bf16.msra.mxu0 %v5949
    %6076 = vmatmul.bf16.gmra.mxu0 %v5638
    %v6077 = vpop.f32.mrf.mxu0
    %v6078 = vadd.f32 %v6065, %v6077
    %v6079 = vpop.f32.mrf.mxu0
    %6080 = vdwg.mxu0
    %6081 = vmatpush.bf16.msra.mxu0 %v5916
    %6082 = vmatpush.bf16.msra.mxu0 %v5914
    %6083 = vmatpush.bf16.msra.mxu0 %v5912
    %6084 = vmatpush.bf16.msra.mxu0 %v5910
    %6085 = vmatpush.bf16.msra.mxu0 %v5908
    %6086 = vmatpush.bf16.msra.mxu0 %v5906
    %6087 = vmatpush.bf16.msra.mxu0 %v5904
    %6088 = vmatpush.bf16.msra.mxu0 %v5902
    %6089 = vmatmul.bf16.gmra.mxu0 %v5635
    %v6090 = vpop.f32.mrf.mxu0
    %v6091 = vadd.f32 %v5706, %v6090
    %v6092 = vpop.f32.mrf.mxu0
    %6093 = vdwg.mxu0
    %6094 = vmatpush.bf16.msra.mxu0 %v5932
    %6095 = vmatpush.bf16.msra.mxu0 %v5930
    %6096 = vmatpush.bf16.msra.mxu0 %v5928
    %6097 = vmatpush.bf16.msra.mxu0 %v5926
    %6098 = vmatpush.bf16.msra.mxu0 %v5924
    %6099 = vmatpush.bf16.msra.mxu0 %v5922
    %6100 = vmatpush.bf16.msra.mxu0 %v5920
    %6101 = vmatpush.bf16.msra.mxu0 %v5918
    %6102 = vmatmul.bf16.gmra.mxu0 %v5636
    %v6103 = vpop.f32.mrf.mxu0
    %v6104 = vadd.f32 %v6091, %v6103
    %v6105 = vpop.f32.mrf.mxu0
    %6106 = vdwg.mxu0
    %6107 = vmatpush.bf16.msra.mxu0 %v5948
    %6108 = vmatpush.bf16.msra.mxu0 %v5946
    %6109 = vmatpush.bf16.msra.mxu0 %v5944
    %6110 = vmatpush.bf16.msra.mxu0 %v5942
    %6111 = vmatpush.bf16.msra.mxu0 %v5940
    %6112 = vmatpush.bf16.msra.mxu0 %v5938
    %6113 = vmatpush.bf16.msra.mxu0 %v5936
    %6114 = vmatpush.bf16.msra.mxu0 %v5934
    %6115 = vmatmul.bf16.gmra.mxu0 %v5637
    %v6116 = vpop.f32.mrf.mxu0
    %v6117 = vadd.f32 %v6104, %v6116
    %v6118 = vpop.f32.mrf.mxu0
    %6119 = vdwg.mxu0
    %6120 = vmatpush.bf16.msra.mxu0 %v5964
    %6121 = vmatpush.bf16.msra.mxu0 %v5962
    %6122 = vmatpush.bf16.msra.mxu0 %v5960
    %6123 = vmatpush.bf16.msra.mxu0 %v5958
    %6124 = vmatpush.bf16.msra.mxu0 %v5956
    %6125 = vmatpush.bf16.msra.mxu0 %v5954
    %6126 = vmatpush.bf16.msra.mxu0 %v5952
    %6127 = vmatpush.bf16.msra.mxu0 %v5950
    %6128 = vmatmul.bf16.gmra.mxu0 %v5638
    %v6129 = vpop.f32.mrf.mxu0
    %v6130 = vadd.f32 %v6117, %v6129
    %v6131 = vpop.f32.mrf.mxu0
    %6132 = vdwg.mxu0
    %s6133 = sld [smem:[#allocation3]]
    %vm6134 = vcmp.ge.f32.partialorder %v6078, 0.0
    %vm6135 = vcmp.ge.f32.partialorder %v6130, 0.0
    %v6136 = vstv %s6133
    %v6137 = vmul.f32 %v6136, %v6078
    %v6138 = vmul.f32 %v6136, %v6130
    %v6139 = vsel %vm6134, %v6078, %v6137
    %v6140 = vsel %vm6135, %v6130, %v6138
    %v6141 = vpack.c.bf16 %v6139, %v6139
    %v6142 = vpack.c.bf16 %v6140, %v6140
    %v6143 = vld [vmem:[#allocation14] sm:$0xf]
    %v6144 = vld [vmem:[#allocation14 + $0x4] sm:$0xf]
    %v6145 = vld [vmem:[#allocation14 + $0x8] sm:$0xf]
    %v6146 = vld [vmem:[#allocation14 + $0xc] sm:$0xf]
    %v6147 = vld [vmem:[#allocation14 + $0x10] sm:$0xf]
    %v6148 = vld [vmem:[#allocation14 + $0x14] sm:$0xf]
    %v6149 = vld [vmem:[#allocation14 + $0x18] sm:$0xf]
    %v6150 = vld [vmem:[#allocation14 + $0x1c] sm:$0xf]
    %v6151 = vld [vmem:[#allocation14 + $0x20] sm:$0xf]
    %v6152 = vld [vmem:[#allocation14 + $0x24] sm:$0xf]
    %v6153 = vld [vmem:[#allocation14 + $0x28] sm:$0xf]
    %v6154 = vld [vmem:[#allocation14 + $0x2c] sm:$0xf]
    %v6155 = vld [vmem:[#allocation14 + $0x30] sm:$0xf]
    %v6156 = vld [vmem:[#allocation14 + $0x34] sm:$0xf]
    %v6157 = vld [vmem:[#allocation14 + $0x38] sm:$0xf]
    %v6158 = vld [vmem:[#allocation14 + $0x3c] sm:$0xf]
    %v6159 = vld [vmem:[#allocation14 + $0x40] sm:$0xf]
    %v6160 = vld [vmem:[#allocation14 + $0x44] sm:$0xf]
    %v6161 = vld [vmem:[#allocation14 + $0x48] sm:$0xf]
    %v6162 = vld [vmem:[#allocation14 + $0x4c] sm:$0xf]
    %v6163 = vld [vmem:[#allocation14 + $0x50] sm:$0xf]
    %v6164 = vld [vmem:[#allocation14 + $0x54] sm:$0xf]
    %v6165 = vld [vmem:[#allocation14 + $0x58] sm:$0xf]
    %v6166 = vld [vmem:[#allocation14 + $0x5c] sm:$0xf]
    %v6167 = vld [vmem:[#allocation14 + $0x60] sm:$0xf]
    %v6168 = vld [vmem:[#allocation14 + $0x64] sm:$0xf]
    %v6169 = vld [vmem:[#allocation14 + $0x68] sm:$0xf]
    %v6170 = vld [vmem:[#allocation14 + $0x6c] sm:$0xf]
    %v6171 = vld [vmem:[#allocation14 + $0x70] sm:$0xf]
    %v6172 = vld [vmem:[#allocation14 + $0x74] sm:$0xf]
    %v6173 = vld [vmem:[#allocation14 + $0x78] sm:$0xf]
    %v6174 = vld [vmem:[#allocation14 + $0x7c] sm:$0xf]
    %v6175 = vld [vmem:[#allocation16] sm:$0x1]
    %v6177 = vperm.slane %v6175, 0
    %v6211 = vunpack.c.l.b16 %v6143
    %v6212 = vunpack.c.l.b16 %v6144
    %v6213 = vunpack.c.l.b16 %v6145
    %v6214 = vunpack.c.l.b16 %v6146
    %v6215 = vunpack.c.l.b16 %v6147
    %v6216 = vunpack.c.l.b16 %v6148
    %v6217 = vunpack.c.l.b16 %v6149
    %v6218 = vunpack.c.l.b16 %v6150
    %v6219 = vunpack.c.l.b16 %v6151
    %v6220 = vunpack.c.l.b16 %v6152
    %v6221 = vunpack.c.l.b16 %v6153
    %v6222 = vunpack.c.l.b16 %v6154
    %v6223 = vunpack.c.l.b16 %v6155
    %v6224 = vunpack.c.l.b16 %v6156
    %v6225 = vunpack.c.l.b16 %v6157
    %v6226 = vunpack.c.l.b16 %v6158
    %v6227 = vunpack.c.l.b16 %v6159
    %v6228 = vunpack.c.l.b16 %v6160
    %v6229 = vunpack.c.l.b16 %v6161
    %v6230 = vunpack.c.l.b16 %v6162
    %v6231 = vunpack.c.l.b16 %v6163
    %v6232 = vunpack.c.l.b16 %v6164
    %v6233 = vunpack.c.l.b16 %v6165
    %v6234 = vunpack.c.l.b16 %v6166
    %v6235 = vunpack.c.l.b16 %v6167
    %v6236 = vunpack.c.l.b16 %v6168
    %v6237 = vunpack.c.l.b16 %v6169
    %v6238 = vunpack.c.l.b16 %v6170
    %v6239 = vunpack.c.l.b16 %v6171
    %v6240 = vunpack.c.l.b16 %v6172
    %v6241 = vunpack.c.l.b16 %v6173
    %v6242 = vunpack.c.l.b16 %v6174
    %v6243 = vpack.c.b16 %v6212, %v6211
    %v6244 = vpack.c.b16 %v6214, %v6213
    %v6245 = vpack.c.b16 %v6216, %v6215
    %v6246 = vpack.c.b16 %v6218, %v6217
    %v6247 = vpack.c.b16 %v6220, %v6219
    %v6248 = vpack.c.b16 %v6222, %v6221
    %v6249 = vpack.c.b16 %v6224, %v6223
    %v6250 = vpack.c.b16 %v6226, %v6225
    %v6251 = vpack.c.b16 %v6228, %v6227
    %v6252 = vpack.c.b16 %v6230, %v6229
    %v6253 = vpack.c.b16 %v6232, %v6231
    %v6254 = vpack.c.b16 %v6234, %v6233
    %v6255 = vpack.c.b16 %v6236, %v6235
    %v6256 = vpack.c.b16 %v6238, %v6237
    %v6257 = vpack.c.b16 %v6240, %v6239
    %v6258 = vpack.c.b16 %v6242, %v6241
    %6275 = vmatpush.bf16.msra.mxu0 %v6250
    %6276 = vmatpush.bf16.msra.mxu0 %v6249
    %6277 = vmatpush.bf16.msra.mxu0 %v6248
    %6278 = vmatpush.bf16.msra.mxu0 %v6247
    %6279 = vmatpush.bf16.msra.mxu0 %v6246
    %6280 = vmatpush.bf16.msra.mxu0 %v6245
    %6281 = vmatpush.bf16.msra.mxu0 %v6244
    %6282 = vmatpush.bf16.msra.mxu0 %v6243
    %6283 = vmatmul.bf16.gmra.mxu0 %v6141
    %v6284 = vpop.f32.mrf.mxu0
    %v6285 = vadd.f32 %v6177, %v6284
    %v6286 = vpop.f32.mrf.mxu0
    %6287 = vdwg.mxu0
    %6288 = vmatpush.bf16.msra.mxu0 %v6258
    %6289 = vmatpush.bf16.msra.mxu0 %v6257
    %6290 = vmatpush.bf16.msra.mxu0 %v6256
    %6291 = vmatpush.bf16.msra.mxu0 %v6255
    %6292 = vmatpush.bf16.msra.mxu0 %v6254
    %6293 = vmatpush.bf16.msra.mxu0 %v6253
    %6294 = vmatpush.bf16.msra.mxu0 %v6252
    %6295 = vmatpush.bf16.msra.mxu0 %v6251
    %6296 = vmatmul.bf16.gmra.mxu0 %v6142
    %v6297 = vpop.f32.mrf.mxu0
    %v6298 = vadd.f32 %v6285, %v6297
    %v6299 = vpop.f32.mrf.mxu0
    %6300 = vdwg.mxu0
    %s6301 = sld [smem:[#allocation4]]
    %vm6302 = vcmp.ge.f32.partialorder %v6298, 0.0
    %v6303 = vstv %s6301
    %v6304 = vmul.f32 %v6303, %v6298
    %v6305 = vsel %vm6302, %v6298, %v6304
    %v6306 = vpack.c.bf16 %v6305, %v6305
    %v6307 = vld [vmem:[#allocation17] sm:$0xf]
    %v6308 = vld [vmem:[#allocation17 + $0x4] sm:$0xf]
    %v6309 = vld [vmem:[#allocation17 + $0x8] sm:$0xf]
    %v6310 = vld [vmem:[#allocation17 + $0xc] sm:$0xf]
    %v6311 = vld [vmem:[#allocation17 + $0x10] sm:$0xf]
    %v6312 = vld [vmem:[#allocation17 + $0x14] sm:$0xf]
    %v6313 = vld [vmem:[#allocation17 + $0x18] sm:$0xf]
    %v6314 = vld [vmem:[#allocation17 + $0x1c] sm:$0xf]
    %v6315 = vld [vmem:[#allocation17 + $0x20] sm:$0xf]
    %v6316 = vld [vmem:[#allocation17 + $0x24] sm:$0xf]
    %v6317 = vld [vmem:[#allocation17 + $0x28] sm:$0xf]
    %v6318 = vld [vmem:[#allocation17 + $0x2c] sm:$0xf]
    %v6319 = vld [vmem:[#allocation17 + $0x30] sm:$0xf]
    %v6320 = vld [vmem:[#allocation17 + $0x34] sm:$0xf]
    %v6321 = vld [vmem:[#allocation17 + $0x38] sm:$0xf]
    %v6322 = vld [vmem:[#allocation17 + $0x3c] sm:$0xf]
    %v6323 = vld [vmem:[#allocation19] sm:$0x1]
    %v6325 = vperm.slane %v6323, 0
    %v6343 = vunpack.c.l.b16 %v6307
    %v6344 = vunpack.c.l.b16 %v6308
    %v6345 = vunpack.c.l.b16 %v6309
    %v6346 = vunpack.c.l.b16 %v6310
    %v6347 = vunpack.c.l.b16 %v6311
    %v6348 = vunpack.c.l.b16 %v6312
    %v6349 = vunpack.c.l.b16 %v6313
    %v6350 = vunpack.c.l.b16 %v6314
    %v6351 = vunpack.c.l.b16 %v6315
    %v6352 = vunpack.c.l.b16 %v6316
    %v6353 = vunpack.c.l.b16 %v6317
    %v6354 = vunpack.c.l.b16 %v6318
    %v6355 = vunpack.c.l.b16 %v6319
    %v6356 = vunpack.c.l.b16 %v6320
    %v6357 = vunpack.c.l.b16 %v6321
    %v6358 = vunpack.c.l.b16 %v6322
    %v6359 = vpack.c.b16 %v6344, %v6343
    %v6360 = vpack.c.b16 %v6346, %v6345
    %v6361 = vpack.c.b16 %v6348, %v6347
    %v6362 = vpack.c.b16 %v6350, %v6349
    %v6363 = vpack.c.b16 %v6352, %v6351
    %v6364 = vpack.c.b16 %v6354, %v6353
    %v6365 = vpack.c.b16 %v6356, %v6355
    %v6366 = vpack.c.b16 %v6358, %v6357
    %6375 = vmatpush.bf16.msra.mxu0 %v6366
    %6376 = vmatpush.bf16.msra.mxu0 %v6365
    %6377 = vmatpush.bf16.msra.mxu0 %v6364
    %6378 = vmatpush.bf16.msra.mxu0 %v6363
    %6379 = vmatpush.bf16.msra.mxu0 %v6362
    %6380 = vmatpush.bf16.msra.mxu0 %v6361
    %6381 = vmatpush.bf16.msra.mxu0 %v6360
    %6382 = vmatpush.bf16.msra.mxu0 %v6359
    %6383 = vmatmul.bf16.gmra.mxu0 %v6306
    %v6384 = vpop.f32.mrf.mxu0
    %v6385 = vadd.f32 %v6325, %v6384
    %v6386 = vpop.f32.mrf.mxu0
    %6387 = vdwg.mxu0
    %6388 = vst [vmem:[#allocation20] sm:$0xff] %v6385
    // Predicated region
    $region86: #{tpu_custom_call.1} parent=1 // pred_check
      _
    $region87: #{tpu_custom_call.1} parent=1 // pred_check_branch
      %6390 = sbr.rel (0) target = $region89
    $region88: #{tpu_custom_call.1} parent=1 // pred_region
      %6392 = vsyncadd [#allocation7], 0
      %s6394 = sshll.u32 [#allocation20], 4
      %s6395 = int_to_ptr.vmem [resolvable:$true] %s6394
      %s6396 = sshll.u32 %s12, 4
      %s6397 = int_to_ptr.hbm [resolvable:$true] %s6396
      %6399 = dma.vmem_to_hbm [thread:$0]  %s6395, 128, %s6397, [#allocation7]
    $region89: #{tpu_custom_call.1} parent=1 // pred_fallthru
      _
    // Predicated region
    $region90: #{tpu_custom_call.1} parent=1 // pred_check
      _
    $region91: #{tpu_custom_call.1} parent=1 // pred_check_branch
      %6401 = sbr.rel (0) target = $region93
    $region92: #{tpu_custom_call.1} parent=1 // pred_region
      %6403 = dma.done [#allocation7], 128
    $region93: #{tpu_custom_call.1} parent=1 // pred_fallthru
      _
    %6404 = vsyncpa [#allocation6], 1
    %6405 = vsyncpa [#allocation9], 1
    %6406 = vsyncpa [#allocation12], 1
    %6407 = vsyncpa [#allocation15], 1
    %6408 = vsyncpa [#allocation18], 1
    %6409 = vsyncpa [#allocation7], 1

</llo_original>
